<compile_context>
chip_gen: v7x
topology: tpu7x:2x2x1
jax: 0.10.0
libtpu: 0.0.40
codegen_flags: <defaults>
</compile_context>

<pallas_src>
import functools

import jax
import jax.numpy as jnp
from jax.experimental import pallas as pl
from jax.experimental.pallas import tpu as pltpu

PASSWORD_LENGTH = 20
H1, H2, H3 = 512, 1024, 2048
_LAYER_SIZES = ((PASSWORD_LENGTH, H1), (H1, H2), (H2, H3), (H3, 1))
_FLOPS_PER_ROW = 2 * sum(fi * fo for fi, fo in _LAYER_SIZES)


def _round_up(x, m):
    return ((x + m - 1) // m) * m


def _cdiv(a, b):
    return -(-a // b)


def _leaky_relu(x, slope=0.2):
    # slope < 1  =>  max(x, slope*x) == LeakyReLU(x); 2 VALU ops instead of 3.
    return jnp.maximum(x, slope * x)


def _sigmoid(x):
    # Numerically stable sigmoid: only exponentiates a non-positive argument.
    z = jnp.exp(-jnp.abs(x))
    return jnp.where(x >= 0, 1.0 / (1.0 + z), z / (1.0 + z))


# ----------------------------------------------------------------------------- kernel
def discriminator_kernel(x_ref,
                         w1_ref, b1_ref,
                         w2_ref, b2_ref,
                         w3_ref, b3_ref,
                         w4_ref, b4_ref,
                         o_ref):
    x = x_ref[...]                                            # (bt, 20) bf16 (pre-cast)

    # Linear(20 -> 512) + LeakyReLU(0.2)   (bf16 MXU inputs, f32 accumulation)
    h = jnp.dot(x, w1_ref[...], preferred_element_type=jnp.float32) + b1_ref[...]
    h = _leaky_relu(h)

    # Linear(512 -> 1024) + LeakyReLU(0.2)
    h = jnp.dot(h.astype(jnp.bfloat16), w2_ref[...],
                preferred_element_type=jnp.float32) + b2_ref[...]
    h = _leaky_relu(h)

    # Linear(1024 -> 2048) + LeakyReLU(0.2)
    h = jnp.dot(h.astype(jnp.bfloat16), w3_ref[...],
                preferred_element_type=jnp.float32) + b3_ref[...]
    h = _leaky_relu(h)

    # Linear(2048 -> 1) + Sigmoid.  M=1 on the MXU wastes weight-push cycles and an
    # extra (bt, 2048) bf16 cast, so do it on the VPU/XLU (broadcast multiply by f32
    # w4, then a lane reduction); these slots have slack under the layer-3 matmul.
    logit = jnp.sum(h * w4_ref[...], axis=-1, keepdims=True) + b4_ref[...]   # (bt, 1)
    o_ref[...] = _sigmoid(logit)


# ----------------------------------------------------------------- hardware awareness
@functools.lru_cache(maxsize=1)
def _hw_info():
    """(tensorcores_per_chip, vmem_capacity_bytes) with conservative fallbacks."""
    cores, vmem = 1, 64 << 20
    try:
        info = pltpu.get_tpu_info()
        vmem = int(getattr(info, "vmem_capacity_bytes", vmem))
        for attr in ("num_cores", "num_tensorcores", "tensorcores_per_chip",
                     "cores_per_chip"):
            v = getattr(info, attr, None)
            if isinstance(v, int) and v > 0:
                cores = v
                break
    except Exception:  # hardware query only; never affects correctness
        pass
    if cores == 1:
        try:
            kind = jax.devices()[0].device_kind.lower().replace(" ", "")
            if "v7" in kind or "tpu7" in kind:
                cores = 2          # v7x-class parts have 2 TensorCores per chip
        except Exception:
            pass
    return cores, vmem


_BUFFERED_SUPPORTED = None


def _buffered_single_supported():
    """One-time feature probe for pl.Buffered(1) (single-buffered resident blocks).

    Probing a tiny dedicated kernel once replaces the previous broad try/except
    around the *real* kernel, which could silently mask genuine compile / VMEM
    errors and recompile twice.
    """
    global _BUFFERED_SUPPORTED
    if _BUFFERED_SUPPORTED is not None:
        return _BUFFERED_SUPPORTED
    if not hasattr(pl, "Buffered"):
        _BUFFERED_SUPPORTED = False
        return False

    def probe_kernel(w_ref, x_ref, o_ref):
        o_ref[...] = x_ref[...] + w_ref[...]

    try:
        w = jnp.ones((8, 128), jnp.float32)
        x = jnp.zeros((16, 128), jnp.float32)
        fn = pl.pallas_call(
            probe_kernel,
            out_shape=jax.ShapeDtypeStruct((16, 128), jnp.float32),
            grid=(2,),
            in_specs=[pl.BlockSpec((8, 128), lambda i: (0, 0),
                                   pipeline_mode=pl.Buffered(1)),
                      pl.BlockSpec((8, 128), lambda i: (i, 0))],
            out_specs=pl.BlockSpec((8, 128), lambda i: (i, 0)),
        )
        out = jax.block_until_ready(fn(w, x))
        _BUFFERED_SUPPORTED = bool(jnp.all(out == 1.0))
    except Exception:  # probe only; the real kernel never falls back silently
        _BUFFERED_SUPPORTED = False
    return _BUFFERED_SUPPORTED


# ------------------------------------------------------------------------ tile policy
def _choose_batch_tile(B, num_cores, max_tile):
    B8 = _round_up(B, 8)
    if B8 <= max_tile:
        # Small batch: one tile per TensorCore.  Single-TC chips (v5e/v6e) get a
        # single grid step -- splitting there only adds per-step overhead and halves
        # the MXU M dimension of the dominant 1024x2048 matmul.
        if num_cores > 1 and B8 >= 128 * num_cores:
            return _round_up(_cdiv(B8, num_cores), 16)
        return B8
    # Large batch: pick the tile that (a) minimizes padded (wasted) rows, then
    # (b) gives a step count divisible by the TensorCore count (balance), then
    # (c) is largest (amortizes per-step overhead and MXU weight reloads).
    candidates = [t for t in (1024, 512, 256, 128) if t <= max_tile]
    best_key, best_t = None, candidates[-1]
    for t in candidates:
        steps = _cdiv(B8, t)
        pad = steps * t - B8
        key = (pad, 0 if steps % num_cores == 0 else 1, -t)
        if best_key is None or key < best_key:
            best_key, best_t = key, t
    return best_t


def _plan(B, batch_tile_hint=None):
    cores, vmem = _hw_info()
    big_vmem = (cores == 1 and vmem >= (100 << 20))     # v5e/v6e: 128 MiB per TC
    max_tile = 1024 if big_vmem else 512                # v7x: keep bt <= 512 (64 MiB)
    vmem_limit = (80 << 20) if big_vmem else (48 << 20)
    if batch_tile_hint is not None:
        max_tile = min(max_tile, max(8, _round_up(int(batch_tile_hint), 8)))
    return _choose_batch_tile(B, cores, max_tile), vmem_limit


# ---------------------------------------------------------------------------- wrapper
def _const_spec(shape, single_buffer):
    """Whole-array resident block (constant index_map across the batch grid)."""
    nd = len(shape)
    kwargs = {}
    if single_buffer:
        # Block never changes -> no revolving buffer; saves ~5 MiB of VMEM.
        kwargs["pipeline_mode"] = pl.Buffered(1)
    return pl.BlockSpec(shape, lambda i: (0,) * nd, **kwargs)


def _build_call(B_pad, bt, params, vmem_limit, single_buffer_weights):
    grid = (B_pad // bt,)
    in_specs = [pl.BlockSpec((bt, PASSWORD_LENGTH), lambda i: (i, 0))]
    in_specs += [_const_spec(p.shape, single_buffer_weights) for p in params]
    out_specs = pl.BlockSpec((bt, 1), lambda i: (i, 0))

    weight_bytes = sum(int(p.size) * p.dtype.itemsize for p in params)
    cost = pl.CostEstimate(
        flops=int(_FLOPS_PER_ROW) * int(B_pad),
        transcendentals=int(B_pad),
        bytes_accessed=int(weight_bytes + B_pad * PASSWORD_LENGTH * 2 + B_pad * 4),
    )

    return pl.pallas_call(
        discriminator_kernel,
        out_shape=jax.ShapeDtypeStruct((B_pad, 1), jnp.float32),
        grid_spec=pltpu.PrefetchScalarGridSpec(
            num_scalar_prefetch=0,
            grid=grid,
            in_specs=in_specs,
            out_specs=out_specs,
        ),
        compiler_params=pltpu.CompilerParams(
            dimension_semantics=("parallel",),
            vmem_limit_bytes=vmem_limit,
        ),
        cost_estimate=cost,
    )


def discriminator_forward(x, params, *, batch_tile=None):
    """x: (B, 20) f32/bf16; params from cast_params_for_kernel. Returns (B, 1) f32."""
    B, F = x.shape
    assert F == PASSWORD_LENGTH
    bt, vmem_limit = _plan(B, batch_tile)
    B_pad = _round_up(_round_up(B, 8), bt)

    xb = x.astype(jnp.bfloat16)              # halves the per-step activation DMA
    if B_pad != B:
        xb = jnp.pad(xb, ((0, B_pad - B), (0, 0)))

    call = _build_call(B_pad, bt, params, vmem_limit, _buffered_single_supported())
    out = call(xb, *params)                  # (B_pad, 1) f32
    return out[:B]


# ------------------------------------------------------------------------------ params
def init_params(key):
    """Deterministic synthetic init (PyTorch-Linear-like uniform bounds), f32 masters.

    Layouts: w1..w3 are (in, out) so the kernel computes x @ W; w4 is (1, 2048)
    (the torch nn.Linear(2048, 1) weight layout) and is applied on the VPU.
    """
    params = []
    for li, (fan_in, fan_out) in enumerate(_LAYER_SIZES):
        key, kw, kb = jax.random.split(key, 3)
        bound = 1.0 / (fan_in ** 0.5)
        w_shape = (fan_in, fan_out) if li < 3 else (fan_out, fan_in)
        w = jax.random.uniform(kw, w_shape, jnp.float32, -bound, bound)
        b = jax.random.uniform(kb, (1, fan_out), jnp.float32, -bound, bound)
        params += [w, b]
    return tuple(params)


def cast_params_for_kernel(params):
    """bf16 for the three large MXU weight matrices; w4 (VPU path) + biases stay f32."""
    w1, b1, w2, b2, w3, b3, w4, b4 = params
    # TODO(synk): optional fp8 (v7x) / int8 (v5e/v6e) weight storage for w2/w3 to halve
    # the one-time weight DMA on small batches; needs accuracy re-validation.
    return (w1.astype(jnp.bfloat16), b1,
            w2.astype(jnp.bfloat16), b2,
            w3.astype(jnp.bfloat16), b3,
            w4, b4)


# -------------------------------------------------------------------------- references
def reference_forward_matched(x, kparams):
    """Pure-JAX reference with the same numerics as the kernel (bf16 MXU, f32 acc,
    f32 VPU final layer)."""
    w1, b1, w2, b2, w3, b3, w4, b4 = kparams

    def mx(a, w):
        return jnp.dot(a.astype(jnp.bfloat16), w, preferred_element_type=jnp.float32)

    h = _leaky_relu(mx(x, w1) + b1)
    h = _leaky_relu(mx(h, w2) + b2)
    h = _leaky_relu(mx(h, w3) + b3)
    logit = jnp.sum(h * w4, axis=-1, keepdims=True) + b4
    return _sigmoid(logit)


def reference_forward_f32(x, params):
    """Full-f32 reference matching the PyTorch module's math."""
    w1, b1, w2, b2, w3, b3, w4, b4 = params
    h = _leaky_relu(x @ w1 + b1)
    h = _leaky_relu(h @ w2 + b2)
    h = _leaky_relu(h @ w3 + b3)
    return jax.nn.sigmoid(h @ w4.T + b4)


# -------------------------------------------------------------------------------- main
if __name__ == "__main__":
    key = jax.random.PRNGKey(0)
    key, kx = jax.random.split(key)

    params_f32 = init_params(key)
    kparams = cast_params_for_kernel(params_f32)

    # Small batch: single-tile path.
    B = 8
    x = jax.random.normal(kx, (B, PASSWORD_LENGTH), jnp.float32)
    out = jax.block_until_ready(discriminator_forward(x, kparams))
    assert out.shape == (B, 1)
    assert jnp.allclose(out, reference_forward_matched(x, kparams),
                        atol=2e-3, rtol=1e-3), "mismatch vs bf16 reference (B=8)"
    assert jnp.allclose(out, reference_forward_f32(x, params_f32),
                        atol=5e-2, rtol=0.0), "mismatch vs f32 reference (B=8)"

    # Awkward batch size: exercises the padding-minimizing / core-split policy.
    key, kx2 = jax.random.split(key)
    B2 = 300
    x2 = jax.random.normal(kx2, (B2, PASSWORD_LENGTH), jnp.float32)
    out2 = jax.block_until_ready(discriminator_forward(x2, kparams))
    assert out2.shape == (B2, 1)
    assert jnp.allclose(out2, reference_forward_matched(x2, kparams),
                        atol=2e-3, rtol=1e-3), "mismatch vs bf16 reference (B=300)"

    # Large batch: exercises the multi-step tiled grid path.
    key, kx3 = jax.random.split(key)
    B3 = 1536
    x3 = jax.random.normal(kx3, (B3, PASSWORD_LENGTH), jnp.float32)
    out3 = jax.block_until_ready(discriminator_forward(x3, kparams))
    assert out3.shape == (B3, 1)
    assert jnp.allclose(out3, reference_forward_matched(x3, kparams),
                        atol=2e-3, rtol=1e-3), "mismatch vs bf16 reference (B=1536)"

    print("KERNEL_OK")
</pallas_src>

<mosaic_0001>
module attributes {stable_mosaic.version = 11 : i64} {
  func.func @probe_kernel(%arg0: i32, %arg1: memref<8x128xf32, #tpu.memory_space<vmem>>, %arg2: memref<8x128xf32, #tpu.memory_space<vmem>>, %arg3: memref<8x128xf32, #tpu.memory_space<vmem>>) attributes {dimension_semantics = [#tpu.dimension_semantics<arbitrary>], iteration_bounds = array<i64: 2>, scalar_prefetch = 0 : i64, scratch_operands = 0 : i64, tpu.core_type = #tpu.core_type<tc>, window_params = [{pipeline_mode = #tpu.pipeline_mode<synchronous>, transform_indices = @transform_0, window_bounds = array<i64: 8, 128>}, {transform_indices = @transform_1, window_bounds = array<i64: 8, 128>}, {transform_indices = @transform_2, window_bounds = array<i64: 8, 128>}]} {
    %c0 = arith.constant 0 : index
    %c0_0 = arith.constant 0 : index
    %0 = vector.load %arg2[%c0, %c0_0] : memref<8x128xf32, #tpu.memory_space<vmem>>, vector<8x128xf32>
    %c0_1 = arith.constant 0 : index
    %c0_2 = arith.constant 0 : index
    %1 = vector.load %arg1[%c0_1, %c0_2] : memref<8x128xf32, #tpu.memory_space<vmem>>, vector<8x128xf32>
    %2 = arith.addf %0, %1 : vector<8x128xf32>
    %c0_3 = arith.constant 0 : index
    %c0_4 = arith.constant 0 : index
    %3 = vector.load %arg3[%c0_3, %c0_4] : memref<8x128xf32, #tpu.memory_space<vmem>>, vector<8x128xf32>
    tpu.vector_store %arg3[%c0_3, %c0_4], %2 {strides = array<i32>} : memref<8x128xf32, #tpu.memory_space<vmem>>, vector<8x128xf32>,
    return
  }
  func.func @transform_0(%arg0: i32) -> (i32, i32) {
    %c0_i32 = arith.constant 0 : i32
    %c0_i32_0 = arith.constant 0 : i32
    %c0_i32_1 = arith.constant 0 : i32
    return %c0_i32, %c0_i32_0 : i32, i32
  }
  func.func @transform_1(%arg0: i32) -> (i32, i32) {
    %c0_i32 = arith.constant 0 : i32
    %c0_i32_0 = arith.constant 0 : i32
    return %arg0, %c0_i32 : i32, i32
  }
  func.func @transform_2(%arg0: i32) -> (i32, i32) {
    %c0_i32 = arith.constant 0 : i32
    %c0_i32_0 = arith.constant 0 : i32
    return %arg0, %c0_i32 : i32, i32
  }
}

module attributes {stable_mosaic.version = 11 : i64} {
  func.func @discriminator_kernel(%arg0: i32, %arg1: memref<8x20xbf16, #tpu.memory_space<vmem>>, %arg2: memref<20x512xbf16, #tpu.memory_space<vmem>>, %arg3: memref<1x512xf32, #tpu.memory_space<vmem>>, %arg4: memref<512x1024xbf16, #tpu.memory_space<vmem>>, %arg5: memref<1x1024xf32, #tpu.memory_space<vmem>>, %arg6: memref<1024x2048xbf16, #tpu.memory_space<vmem>>, %arg7: memref<1x2048xf32, #tpu.memory_space<vmem>>, %arg8: memref<1x2048xf32, #tpu.memory_space<vmem>>, %arg9: memref<1x1xf32, #tpu.memory_space<vmem>>, %arg10: memref<8x1xf32, #tpu.memory_space<vmem>>) attributes {dimension_semantics = [#tpu.dimension_semantics<parallel>], iteration_bounds = array<i64: 1>, scalar_prefetch = 0 : i64, scratch_operands = 0 : i64, tpu.core_type = #tpu.core_type<tc>, window_params = [{transform_indices = @transform_0, window_bounds = array<i64: 8, 20>}, {pipeline_mode = #tpu.pipeline_mode<synchronous>, transform_indices = @transform_1, window_bounds = array<i64: 20, 512>}, {pipeline_mode = #tpu.pipeline_mode<synchronous>, transform_indices = @transform_2, window_bounds = array<i64: 1, 512>}, {pipeline_mode = #tpu.pipeline_mode<synchronous>, transform_indices = @transform_3, window_bounds = array<i64: 512, 1024>}, {pipeline_mode = #tpu.pipeline_mode<synchronous>, transform_indices = @transform_4, window_bounds = array<i64: 1, 1024>}, {pipeline_mode = #tpu.pipeline_mode<synchronous>, transform_indices = @transform_5, window_bounds = array<i64: 1024, 2048>}, {pipeline_mode = #tpu.pipeline_mode<synchronous>, transform_indices = @transform_6, window_bounds = array<i64: 1, 2048>}, {pipeline_mode = #tpu.pipeline_mode<synchronous>, transform_indices = @transform_7, window_bounds = array<i64: 1, 2048>}, {pipeline_mode = #tpu.pipeline_mode<synchronous>, transform_indices = @transform_8, window_bounds = array<i64: 1, 1>}, {transform_indices = @transform_9, window_bounds = array<i64: 8, 1>}]} {
    %c0 = arith.constant 0 : index
    %c0_0 = arith.constant 0 : index
    %0 = vector.load %arg1[%c0, %c0_0] : memref<8x20xbf16, #tpu.memory_space<vmem>>, vector<8x20xbf16>
    %c0_1 = arith.constant 0 : index
    %c0_2 = arith.constant 0 : index
    %1 = vector.load %arg2[%c0_1, %c0_2] : memref<20x512xbf16, #tpu.memory_space<vmem>>, vector<20x512xbf16>
    %cst = arith.constant dense<0.000000e+00> : vector<8x512xf32>
    %2 = tpu.matmul %0, %1, %cst {dimension_numbers = #tpu.dot_dimension_numbers<[1], [0], [0], [1], [0, 0, 1, 1], [], []>} : vector<8x20xbf16>, vector<20x512xbf16>, vector<8x512xf32> -> vector<8x512xf32>
    %c0_3 = arith.constant 0 : index
    %c0_4 = arith.constant 0 : index
    %3 = vector.load %arg3[%c0_3, %c0_4] : memref<1x512xf32, #tpu.memory_space<vmem>>, vector<1x512xf32>
    %4 = vector.broadcast %3 : vector<1x512xf32> to vector<8x512xf32>
    %5 = arith.addf %2, %4 : vector<8x512xf32>
    %cst_5 = arith.constant 2.000000e-01 : f32
    %6 = vector.broadcast %cst_5 : f32 to vector<8x512xf32>
    %7 = arith.mulf %6, %5 : vector<8x512xf32>
    %8 = arith.maximumf %5, %7 : vector<8x512xf32>
    %9 = arith.truncf %8 : vector<8x512xf32> to vector<8x512xbf16>
    %c0_6 = arith.constant 0 : index
    %c0_7 = arith.constant 0 : index
    %10 = vector.load %arg4[%c0_6, %c0_7] : memref<512x1024xbf16, #tpu.memory_space<vmem>>, vector<512x1024xbf16>
    %cst_8 = arith.constant dense<0.000000e+00> : vector<8x1024xf32>
    %11 = tpu.matmul %9, %10, %cst_8 {dimension_numbers = #tpu.dot_dimension_numbers<[1], [0], [0], [1], [0, 0, 1, 1], [], []>} : vector<8x512xbf16>, vector<512x1024xbf16>, vector<8x1024xf32> -> vector<8x1024xf32>
    %c0_9 = arith.constant 0 : index
    %c0_10 = arith.constant 0 : index
    %12 = vector.load %arg5[%c0_9, %c0_10] : memref<1x1024xf32, #tpu.memory_space<vmem>>, vector<1x1024xf32>
    %13 = vector.broadcast %12 : vector<1x1024xf32> to vector<8x1024xf32>
    %14 = arith.addf %11, %13 : vector<8x1024xf32>
    %cst_11 = arith.constant 2.000000e-01 : f32
    %15 = vector.broadcast %cst_11 : f32 to vector<8x1024xf32>
    %16 = arith.mulf %15, %14 : vector<8x1024xf32>
    %17 = arith.maximumf %14, %16 : vector<8x1024xf32>
    %18 = arith.truncf %17 : vector<8x1024xf32> to vector<8x1024xbf16>
    %c0_12 = arith.constant 0 : index
    %c0_13 = arith.constant 0 : index
    %19 = vector.load %arg6[%c0_12, %c0_13] : memref<1024x2048xbf16, #tpu.memory_space<vmem>>, vector<1024x2048xbf16>
    %cst_14 = arith.constant dense<0.000000e+00> : vector<8x2048xf32>
    %20 = tpu.matmul %18, %19, %cst_14 {dimension_numbers = #tpu.dot_dimension_numbers<[1], [0], [0], [1], [0, 0, 1, 1], [], []>} : vector<8x1024xbf16>, vector<1024x2048xbf16>, vector<8x2048xf32> -> vector<8x2048xf32>
    %c0_15 = arith.constant 0 : index
    %c0_16 = arith.constant 0 : index
    %21 = vector.load %arg7[%c0_15, %c0_16] : memref<1x2048xf32, #tpu.memory_space<vmem>>, vector<1x2048xf32>
    %22 = vector.broadcast %21 : vector<1x2048xf32> to vector<8x2048xf32>
    %23 = arith.addf %20, %22 : vector<8x2048xf32>
    %cst_17 = arith.constant 2.000000e-01 : f32
    %24 = vector.broadcast %cst_17 : f32 to vector<8x2048xf32>
    %25 = arith.mulf %24, %23 : vector<8x2048xf32>
    %26 = arith.maximumf %23, %25 : vector<8x2048xf32>
    %c0_18 = arith.constant 0 : index
    %c0_19 = arith.constant 0 : index
    %27 = vector.load %arg8[%c0_18, %c0_19] : memref<1x2048xf32, #tpu.memory_space<vmem>>, vector<1x2048xf32>
    %28 = vector.broadcast %27 : vector<1x2048xf32> to vector<8x2048xf32>
    %29 = arith.mulf %26, %28 : vector<8x2048xf32>
    %cst_20 = arith.constant dense<0.000000e+00> : vector<8xf32>
    %30 = vector.multi_reduction <add>, %29, %cst_20 [1] : vector<8x2048xf32> to vector<8xf32>
    %31 = vector.shape_cast %30 : vector<8xf32> to vector<8x1xf32>
    %c0_21 = arith.constant 0 : index
    %c0_22 = arith.constant 0 : index
    %32 = vector.load %arg9[%c0_21, %c0_22] : memref<1x1xf32, #tpu.memory_space<vmem>>, vector<1x1xf32>
    %33 = vector.broadcast %32 : vector<1x1xf32> to vector<8x1xf32>
    %34 = arith.addf %31, %33 : vector<8x1xf32>
    %35 = math.absf %34 : vector<8x1xf32>
    %cst_23 = arith.constant 0.000000e+00 : f32
    %36 = vector.broadcast %cst_23 : f32 to vector<8x1xf32>
    %37 = arith.subf %36, %35 : vector<8x1xf32>
    %38 = math.exp %37 : vector<8x1xf32>
    %cst_24 = arith.constant 0.000000e+00 : f32
    %39 = vector.broadcast %cst_24 : f32 to vector<8x1xf32>
    %40 = arith.cmpf oge, %34, %39 : vector<8x1xf32>
    %cst_25 = arith.constant 1.000000e+00 : f32
    %41 = vector.broadcast %cst_25 : f32 to vector<8x1xf32>
    %42 = arith.addf %41, %38 : vector<8x1xf32>
    %cst_26 = arith.constant 1.000000e+00 : f32
    %43 = vector.broadcast %cst_26 : f32 to vector<8x1xf32>
    %44 = arith.divf %43, %42 : vector<8x1xf32>
    %cst_27 = arith.constant 1.000000e+00 : f32
    %45 = vector.broadcast %cst_27 : f32 to vector<8x1xf32>
    %46 = arith.addf %45, %38 : vector<8x1xf32>
    %47 = arith.divf %38, %46 : vector<8x1xf32>
    %48 = arith.select %40, %44, %47 : vector<8x1xi1>, vector<8x1xf32>
    %c0_28 = arith.constant 0 : index
    %c0_29 = arith.constant 0 : index
    %49 = vector.load %arg10[%c0_28, %c0_29] : memref<8x1xf32, #tpu.memory_space<vmem>>, vector<8x1xf32>
    tpu.vector_store %arg10[%c0_28, %c0_29], %48 {strides = array<i32>} : memref<8x1xf32, #tpu.memory_space<vmem>>, vector<8x1xf32>,
    return
  }
  func.func @transform_0(%arg0: i32) -> (i32, i32) {
    %c0_i32 = arith.constant 0 : i32
    %c0_i32_0 = arith.constant 0 : i32
    return %arg0, %c0_i32 : i32, i32
  }
  func.func @transform_1(%arg0: i32) -> (i32, i32) {
    %c0_i32 = arith.constant 0 : i32
    %c0_i32_0 = arith.constant 0 : i32
    %c0_i32_1 = arith.constant 0 : i32
    return %c0_i32, %c0_i32_0 : i32, i32
  }
  func.func @transform_2(%arg0: i32) -> (i32, i32) {
    %c0_i32 = arith.constant 0 : i32
    %c0_i32_0 = arith.constant 0 : i32
    %c0_i32_1 = arith.constant 0 : i32
    return %c0_i32, %c0_i32_0 : i32, i32
  }
  func.func @transform_3(%arg0: i32) -> (i32, i32) {
    %c0_i32 = arith.constant 0 : i32
    %c0_i32_0 = arith.constant 0 : i32
    %c0_i32_1 = arith.constant 0 : i32
    return %c0_i32, %c0_i32_0 : i32, i32
  }
  func.func @transform_4(%arg0: i32) -> (i32, i32) {
    %c0_i32 = arith.constant 0 : i32
    %c0_i32_0 = arith.constant 0 : i32
    %c0_i32_1 = arith.constant 0 : i32
    return %c0_i32, %c0_i32_0 : i32, i32
  }
  func.func @transform_5(%arg0: i32) -> (i32, i32) {
    %c0_i32 = arith.constant 0 : i32
    %c0_i32_0 = arith.constant 0 : i32
    %c0_i32_1 = arith.constant 0 : i32
    return %c0_i32, %c0_i32_0 : i32, i32
  }
  func.func @transform_6(%arg0: i32) -> (i32, i32) {
    %c0_i32 = arith.constant 0 : i32
    %c0_i32_0 = arith.constant 0 : i32
    %c0_i32_1 = arith.constant 0 : i32
    return %c0_i32, %c0_i32_0 : i32, i32
  }
  func.func @transform_7(%arg0: i32) -> (i32, i32) {
    %c0_i32 = arith.constant 0 : i32
    %c0_i32_0 = arith.constant 0 : i32
    %c0_i32_1 = arith.constant 0 : i32
    return %c0_i32, %c0_i32_0 : i32, i32
  }
  func.func @transform_8(%arg0: i32) -> (i32, i32) {
    %c0_i32 = arith.constant 0 : i32
    %c0_i32_0 = arith.constant 0 : i32
    %c0_i32_1 = arith.constant 0 : i32
    return %c0_i32, %c0_i32_0 : i32, i32
  }
  func.func @transform_9(%arg0: i32) -> (i32, i32) {
    %c0_i32 = arith.constant 0 : i32
    %c0_i32_0 = arith.constant 0 : i32
    return %arg0, %c0_i32 : i32, i32
  }
}

</mosaic_0001>

<llo_original>
// kernel: tpu_custom_call.1
$region0: #{tpu_custom_call.1}
  #allocation0 [shape = 'u32[]', space=smem, size = 0x4, offset = 0x4, fixed_abs, tag = 'smem constant byte address 0x4 - core index']
  #allocation1 [shape = 'u32[144,128]{1,0:T(1,128)}', space=vmem, size = 0x12000, scoped, tag = 'internal scratch']
  %s0 = inlined_call_operand.hbm [shape: f32[8,128], index: 0, kind: input, shape index: {}]
  %s1 = inlined_call_operand.hbm [shape: f32[16,128], index: 1, kind: input, shape index: {}]
  %s2 = inlined_call_operand.hbm [shape: f32[16,128], index: 2, kind: output, shape index: {}]
  %s3 = sld [smem:[#allocation0]]
  $region49: #{tpu_custom_call.1} parent=0
    _
  %s5 = ssub.s32 1, %s3
  %s6 = scalar_select 0, %s5, %s3
  $region1: #{tpu_custom_call.1} parent=0
    #allocation2 [shape = 'u8[4096]{0}', space=vmem, size = 0x1000, scoped, tag = 'input window, operand 0, single buffered']
    #allocation3 [shape = 's32[2]{0}', space=sflag, size = 0x8, scoped, tag = 'scoped memory for tpu_custom_call.1']
    #allocation4 [shape = 's32[2]{0}', space=sflag, size = 0x8, scoped, tag = 'scoped memory for tpu_custom_call.1']
    #allocation5 [shape = 'u8[8192]{0}', space=vmem, size = 0x2000, scoped, tag = 'input window, operand 1']
    #allocation6 [shape = 's32[2]{0}', space=sflag, size = 0x8, scoped, tag = 'scoped memory for tpu_custom_call.1']
    #allocation7 [shape = 'u8[8192]{0}', space=vmem, size = 0x2000, scoped, tag = 'output window, operand 0']
    %7 = vsyncpa [#allocation3], 0
    %8 = vsyncpa [#allocation6], 0
    %s9 = scalar_lea.sflag [#allocation6], 1
    %10 = vsyncpa %s9, 0
    %11 = vsyncpa [#allocation4], 0
    %s12 = scalar_lea.sflag [#allocation4], 1
    %13 = vsyncpa %s12, 0
    loop: start=0, step=1, limit=4
    $region2: #{tpu_custom_call.1} parent=1 // loop_pre_header
      _
    $region3: #{tpu_custom_call.1} parent=1 // loop_header
      %s15 = sphi 0, %s19
      %p16 = scmp.ge.s32.totalorder %s15, 4
      %s23 = sphi 0, %s23
      %s25 = sphi 0, %s23
      %s26 = sphi 0, %s25
      %s40 = sphi 0, %s26
      %s46 = sphi 0, %s48
      %s49 = sphi 0, %s46
      %s50 = sphi 0, %s49
      %s66 = sphi 0, %s50
      %s72 = sphi 0, %s74
      %s75 = sphi 0, %s72
      %s76 = sphi 0, %s75
      %s92 = sphi 0, %s76
    $region4: #{tpu_custom_call.1} parent=1 // loop_header_branch
      %18 = sbr.rel (%p16) target = $region8
    $region5: #{tpu_custom_call.1} parent=1 // loop_body
      %s20 = ssub.s32 %s15, 1
      %s21 = ssub.s32 %s15, 2
      %s22 = sadd.s32 %s15, 1
      %s24 = sadd.s32 %s23, 1
      %p27 = scmp.eq.s32.totalorder %s15, 1
      %p28 = scmp.ne.s32.totalorder %s23, %s25
      %p29 = scmp.eq.s32.totalorder %s15, 0
      %p30 = por %p28, %p29
      %p31 = scmp.ne.s32.totalorder %s23, %s25
      %p32 = scmp.eq.s32.totalorder %s20, 1
      %p33 = por %p31, %p32
      %p34 = scmp.ne.s32.totalorder %s25, %s26
      %p35 = scmp.eq.s32.totalorder %s20, 0
      %p36 = por %p34, %p35
      %p37 = scmp.ne.s32.totalorder %s25, %s26
      %p38 = scmp.eq.s32.totalorder %s21, 1
      %p39 = por %p37, %p38
      %p41 = scmp.ne.s32.totalorder %s26, %s40
      %p42 = scmp.eq.s32.totalorder %s21, 0
      %p43 = por %p41, %p42
      %s44 = ssub.s32 %s15, %s22
      %p45 = scmp.eq.s32.totalorder %s44, 0
      %s47 = sadd.s32 %s46, 1
      %s48 = scalar_select %p45, %s46, %s47
      %p51 = pneg %p45
      %p52 = scmp.eq.s32.totalorder %s15, 1
      %p53 = por %p51, %p52
      %p54 = scmp.ne.s32.totalorder %s46, %s49
      %p55 = scmp.eq.s32.totalorder %s15, 0
      %p56 = por %p54, %p55
      %p57 = scmp.ne.s32.totalorder %s46, %s49
      %p58 = scmp.eq.s32.totalorder %s20, 1
      %p59 = por %p57, %p58
      %p60 = scmp.ne.s32.totalorder %s49, %s50
      %p61 = scmp.eq.s32.totalorder %s20, 0
      %p62 = por %p60, %p61
      %p63 = scmp.ne.s32.totalorder %s49, %s50
      %p64 = scmp.eq.s32.totalorder %s21, 1
      %p65 = por %p63, %p64
      %p67 = scmp.ne.s32.totalorder %s50, %s66
      %p68 = scmp.eq.s32.totalorder %s21, 0
      %p69 = por %p67, %p68
      %s70 = ssub.s32 %s15, %s22
      %p71 = scmp.eq.s32.totalorder %s70, 0
      %s73 = sadd.s32 %s72, 1
      %s74 = scalar_select %p71, %s72, %s73
      %p77 = pneg %p71
      %p78 = scmp.eq.s32.totalorder %s15, 1
      %p79 = por %p77, %p78
      %p80 = scmp.ne.s32.totalorder %s72, %s75
      %p81 = scmp.eq.s32.totalorder %s15, 0
      %p82 = por %p80, %p81
      %p83 = scmp.ne.s32.totalorder %s72, %s75
      %p84 = scmp.eq.s32.totalorder %s20, 1
      %p85 = por %p83, %p84
      %p86 = scmp.ne.s32.totalorder %s75, %s76
      %p87 = scmp.eq.s32.totalorder %s20, 0
      %p88 = por %p86, %p87
      %p89 = scmp.ne.s32.totalorder %s75, %s76
      %p90 = scmp.eq.s32.totalorder %s21, 1
      %p91 = por %p89, %p90
      %p93 = scmp.ne.s32.totalorder %s76, %s92
      %p94 = scmp.eq.s32.totalorder %s21, 0
      %p95 = por %p93, %p94
      %p96 = scmp.le.s32.totalorder 1, %s15
      %p97 = scmp.lt.s32.totalorder %s15, 3
      %p98 = pnand %p96, %p97
      %p99 = pneg %p98
      // Predicated region
      $region9: #{tpu_custom_call.1} parent=5 // pred_check
        _
      $region10: #{tpu_custom_call.1} parent=5 // pred_check_branch
        %101 = sbr.rel (%p98) target = $region12
      $region11: #{tpu_custom_call.1} parent=5 // pred_region
        %s102 = ssub.s32 %s15, 1
        // Predicated region
        $region13: #{tpu_custom_call.1} parent=11 // pred_check
          %p103 = pneg %p36
        $region14: #{tpu_custom_call.1} parent=11 // pred_check_branch
          %105 = sbr.rel (%p103) target = $region16
        $region15: #{tpu_custom_call.1} parent=11 // pred_region
          %s107 = ssub.s32 128, 128
          %108 = vsyncadd [#allocation3], %s107
          %s110 = sshll.u32 [#allocation2], 4
          %s111 = int_to_ptr.vmem [resolvable:$true] %s110
          %113 = dma.hbm_to_vmem [thread:$0]  %s0, 128, %s111, [#allocation3]
        $region16: #{tpu_custom_call.1} parent=11 // pred_fallthru
          _
      $region12: #{tpu_custom_call.1} parent=5 // pred_fallthru
        _
      %p114 = scmp.lt.s32.totalorder %s15, 2
      // Predicated region
      $region17: #{tpu_custom_call.1} parent=5 // pred_check
        %p115 = pneg %p114
      $region18: #{tpu_custom_call.1} parent=5 // pred_check_branch
        %117 = sbr.rel (%p115) target = $region20
      $region19: #{tpu_custom_call.1} parent=5 // pred_region
        // Predicated region
        $region21: #{tpu_custom_call.1} parent=19 // pred_check
          %p118 = pneg %p56
        $region22: #{tpu_custom_call.1} parent=19 // pred_check_branch
          %120 = sbr.rel (%p118) target = $region24
        $region23: #{tpu_custom_call.1} parent=19 // pred_region
          %s121 = sand.u32 %s46, 1
          %s122 = scalar_lea.sflag [#allocation6], %s121
          %s123 = sand.u32 %s46, 1
          %s124 = smul.addr %s123, 8
          %s125 = scalar_lea.vmem [#allocation5], %s124
          %s127 = ssub.s32 128, 128
          %128 = vsyncadd %s122, %s127
          %s129 = smul.addr %s15, 128
          %s130 = scalar_lea.hbm %s1, %s129
          %s132 = sshll.u32 %s125, 4
          %s133 = int_to_ptr.vmem [resolvable:$true] %s132
          %135 = dma.hbm_to_vmem [thread:$0]  %s130, 128, %s133, %s122
        $region24: #{tpu_custom_call.1} parent=19 // pred_fallthru
          _
      $region20: #{tpu_custom_call.1} parent=5 // pred_fallthru
        _
      %p136 = scmp.le.s32.totalorder 1, %s15
      %p137 = scmp.lt.s32.totalorder %s15, 3
      %p138 = pnand %p136, %p137
      %p139 = pneg %p138
      // Predicated region
      $region25: #{tpu_custom_call.1} parent=5 // pred_check
        _
      $region26: #{tpu_custom_call.1} parent=5 // pred_check_branch
        %141 = sbr.rel (%p138) target = $region28
      $region27: #{tpu_custom_call.1} parent=5 // pred_region
        %s142 = ssub.s32 %s15, 1
        // Predicated region
        $region29: #{tpu_custom_call.1} parent=27 // pred_check
          %p143 = pneg %p36
        $region30: #{tpu_custom_call.1} parent=27 // pred_check_branch
          %145 = sbr.rel (%p143) target = $region32
        $region31: #{tpu_custom_call.1} parent=27 // pred_region
          %146 = dma.done [#allocation3], 128
        $region32: #{tpu_custom_call.1} parent=27 // pred_fallthru
          _
        %s147 = sand.u32 %s49, 1
        %s148 = scalar_lea.sflag [#allocation6], %s147
        %s149 = sand.u32 %s49, 1
        %s150 = smul.addr %s149, 8
        %s151 = scalar_lea.vmem [#allocation5], %s150
        // Predicated region
        $region33: #{tpu_custom_call.1} parent=27 // pred_check
          %p152 = pneg %p62
        $region34: #{tpu_custom_call.1} parent=27 // pred_check_branch
          %154 = sbr.rel (%p152) target = $region36
        $region35: #{tpu_custom_call.1} parent=27 // pred_region
          %155 = dma.done %s148, 128
        $region36: #{tpu_custom_call.1} parent=27 // pred_fallthru
          _
        %p156 = pneg %p36
        %p157 = pneg %p33
        %s158 = sand.u32 %s49, 1
        %s159 = scalar_lea.sflag [#allocation6], %s158
        %s160 = sand.u32 %s49, 1
        %s161 = smul.addr %s160, 8
        %s162 = scalar_lea.vmem [#allocation5], %s161
        %p163 = pneg %p62
        %p164 = pneg %p59
        %p165 = pneg %p88
        %p166 = pneg %p85
        %s167 = sand.u32 %s75, 1
        %s168 = scalar_lea.sflag [#allocation4], %s167
        %s169 = sand.u32 %s75, 1
        %s170 = smul.addr %s169, 8
        %s171 = scalar_lea.vmem [#allocation7], %s170
        %v172 = vld [vmem:[%s151] sm:$0xff]
        %v173 = vld [vmem:[#allocation2] sm:$0xff]
        %v174 = vadd.f32 %v172, %v173
        %175 = vst [vmem:[%s171] sm:$0xff] %v174
        %s176 = sand.u32 %s75, 1
        %s177 = scalar_lea.sflag [#allocation4], %s176
        %s178 = sand.u32 %s75, 1
        %s179 = smul.addr %s178, 8
        %s180 = scalar_lea.vmem [#allocation7], %s179
        // Predicated region
        $region37: #{tpu_custom_call.1} parent=27 // pred_check
          %p181 = pneg %p85
        $region38: #{tpu_custom_call.1} parent=27 // pred_check_branch
          %183 = sbr.rel (%p181) target = $region40
        $region39: #{tpu_custom_call.1} parent=27 // pred_region
          %s185 = ssub.s32 128, 128
          %186 = vsyncadd %s177, %s185
          %s187 = smul.addr %s20, 128
          %s188 = scalar_lea.hbm %s2, %s187
          %s190 = sshll.u32 %s180, 4
          %s191 = int_to_ptr.vmem [resolvable:$true] %s190
          %193 = dma.vmem_to_hbm [thread:$0]  %s191, 128, %s188, %s177
        $region40: #{tpu_custom_call.1} parent=27 // pred_fallthru
          _
      $region28: #{tpu_custom_call.1} parent=5 // pred_fallthru
        _
      %p194 = scmp.le.s32.totalorder 2, %s15
      // Predicated region
      $region41: #{tpu_custom_call.1} parent=5 // pred_check
        %p195 = pneg %p194
      $region42: #{tpu_custom_call.1} parent=5 // pred_check_branch
        %197 = sbr.rel (%p195) target = $region44
      $region43: #{tpu_custom_call.1} parent=5 // pred_region
        %s198 = ssub.s32 %s15, 2
        // Predicated region
        $region45: #{tpu_custom_call.1} parent=43 // pred_check
          %p199 = pneg %p91
        $region46: #{tpu_custom_call.1} parent=43 // pred_check_branch
          %201 = sbr.rel (%p199) target = $region48
        $region47: #{tpu_custom_call.1} parent=43 // pred_region
          %s202 = sand.u32 %s76, 1
          %s203 = scalar_lea.sflag [#allocation4], %s202
          %s204 = sand.u32 %s76, 1
          %s205 = smul.addr %s204, 8
          %s206 = scalar_lea.vmem [#allocation7], %s205
          %207 = dma.done %s203, 128
        $region48: #{tpu_custom_call.1} parent=43 // pred_fallthru
          _
      $region44: #{tpu_custom_call.1} parent=5 // pred_fallthru
        _
    $region6: #{tpu_custom_call.1} parent=1 // loop_footer
      %s19 = sadd.s32 1, %s15
    $region7: #{tpu_custom_call.1} parent=1 // loop_footer_branch
      %14 = sbr.rel target = $region3
    $region8: #{tpu_custom_call.1} parent=1 // loop_exit
      _
    %208 = vsyncpa [#allocation3], 1
    %s209 = scalar_lea.sflag [#allocation3], 1
    %210 = vsyncpa %s209, 1
    %211 = vsyncpa [#allocation6], 1
    %s212 = scalar_lea.sflag [#allocation6], 1
    %213 = vsyncpa %s212, 1
    %214 = vsyncpa [#allocation4], 1
    %s215 = scalar_lea.sflag [#allocation4], 1
    %216 = vsyncpa %s215, 1

// kernel: tpu_custom_call.1
$region0: #{tpu_custom_call.1}
  #allocation0 [shape = 'u32[]', space=smem, size = 0x4, offset = 0x4, fixed_abs, tag = 'smem constant byte address 0x4 - core index']
  #allocation1 [shape = 'u32[144,128]{1,0:T(1,128)}', space=vmem, size = 0x12000, scoped, tag = 'internal scratch']
  #allocation2 [shape = 'f32[1,1]{1,0:T(1,128)S(1)}', space=vmem, size = 0x200, scoped, tag = 'scoped memory for tpu_custom_call.1']
  %s0 = inlined_call_operand.hbm [shape: bf16[8,20], index: 0, kind: input, shape index: {}]
  %s1 = inlined_call_operand.hbm [shape: bf16[20,512], index: 1, kind: input, shape index: {}]
  %s2 = inlined_call_operand.hbm [shape: f32[1,512], index: 2, kind: input, shape index: {}]
  %s3 = inlined_call_operand.hbm [shape: bf16[512,1024], index: 3, kind: input, shape index: {}]
  %s4 = inlined_call_operand.hbm [shape: f32[1,1024], index: 4, kind: input, shape index: {}]
  %s5 = inlined_call_operand.hbm [shape: bf16[1024,2048], index: 5, kind: input, shape index: {}]
  %s6 = inlined_call_operand.hbm [shape: f32[1,2048], index: 6, kind: input, shape index: {}]
  %s7 = inlined_call_operand.hbm [shape: f32[1,2048], index: 7, kind: input, shape index: {}]
  %s8 = inlined_call_operand.<no memory space> [shape: f32[1,1], index: 8, kind: input, shape index: {}]
  %s9 = inlined_call_operand.vmem [shape: f32[8,1], index: 9, kind: output, shape index: {}]
  %s10 = sld [smem:[#allocation0]]
  $region78: #{tpu_custom_call.1} parent=0
    _
  %s12 = ssub.s32 1, %s10
  %s13 = scalar_select 0, %s12, %s10
  %v14 = vstv %s8
  %15 = vst [vmem:[#allocation2] sm:$0x1] %v14
  $region1: #{tpu_custom_call.1} parent=0
    #allocation3 [shape = 'u8[2048]{0}', space=vmem, size = 0x800, scoped, tag = 'input window, operand 0, single buffered']
    #allocation4 [shape = 's32[1]{0}', space=sflag, size = 0x4, scoped, tag = 'scoped memory for tpu_custom_call.1']
    #allocation5 [shape = 'u8[24576]{0}', space=vmem, size = 0x6000, scoped, tag = 'input window, operand 1, single buffered']
    #allocation6 [shape = 's32[1]{0}', space=sflag, size = 0x4, scoped, tag = 'scoped memory for tpu_custom_call.1']
    #allocation7 [shape = 'u8[2048]{0}', space=vmem, size = 0x800, scoped, tag = 'input window, operand 2, single buffered']
    #allocation8 [shape = 'u8[1048576]{0}', space=vmem, size = 0x100000, scoped, tag = 'input window, operand 3, single buffered']
    #allocation9 [shape = 's32[1]{0}', space=sflag, size = 0x4, scoped, tag = 'scoped memory for tpu_custom_call.1']
    #allocation10 [shape = 'u8[4096]{0}', space=vmem, size = 0x1000, scoped, tag = 'input window, operand 4, single buffered']
    #allocation11 [shape = 'u8[4194304]{0}', space=vmem, size = 0x400000, scoped, tag = 'input window, operand 5, single buffered']
    #allocation12 [shape = 's32[1]{0}', space=sflag, size = 0x4, scoped, tag = 'scoped memory for tpu_custom_call.1']
    #allocation13 [shape = 'u8[8192]{0}', space=vmem, size = 0x2000, scoped, tag = 'input window, operand 6, single buffered']
    #allocation14 [shape = 'u8[8192]{0}', space=vmem, size = 0x2000, scoped, tag = 'input window, operand 7, single buffered']
    #allocation15 [shape = 's32[1]{0}', space=sflag, size = 0x4, scoped, tag = 'scoped memory for tpu_custom_call.1']
    %16 = vsyncpa [#allocation4], 0
    %17 = vsyncpa [#allocation6], 0
    %18 = vsyncpa [#allocation9], 0
    %19 = vsyncpa [#allocation12], 0
    %20 = vsyncpa [#allocation15], 0
    // Predicated region
    $region2: #{tpu_custom_call.1} parent=1 // pred_check
      _
    $region3: #{tpu_custom_call.1} parent=1 // pred_check_branch
      %22 = sbr.rel (0) target = $region5
    $region4: #{tpu_custom_call.1} parent=1 // pred_region
      %s24 = ssub.s32 64, 64
      %25 = vsyncadd [#allocation4], %s24
      %s27 = sshll.u32 [#allocation3], 4
      %s28 = int_to_ptr.vmem [resolvable:$true] %s27
      %30 = dma.hbm_to_vmem [thread:$0]  %s0, 64, %s28, [#allocation4]
    $region5: #{tpu_custom_call.1} parent=1 // pred_fallthru
      _
    // Predicated region
    $region6: #{tpu_custom_call.1} parent=1 // pred_check
      _
    $region7: #{tpu_custom_call.1} parent=1 // pred_check_branch
      %32 = sbr.rel (0) target = $region9
    $region8: #{tpu_custom_call.1} parent=1 // pred_region
      %s34 = ssub.s32 768, 768
      %35 = vsyncadd [#allocation6], %s34
      %s36 = sshll.u32 [#allocation5], 4
      %s37 = int_to_ptr.vmem [resolvable:$true] %s36
      %42 = dma.hbm_to_vmem [thread:$0]  %s1, 768, %s37, [#allocation6], 256, 256, 16
    $region9: #{tpu_custom_call.1} parent=1 // pred_fallthru
      _
    // Predicated region
    $region10: #{tpu_custom_call.1} parent=1 // pred_check
      _
    $region11: #{tpu_custom_call.1} parent=1 // pred_check_branch
      %44 = sbr.rel (0) target = $region13
    $region12: #{tpu_custom_call.1} parent=1 // pred_region
      %s46 = ssub.s32 64, 64
      %47 = vsyncadd [#allocation6], %s46
      %s49 = sshll.u32 [#allocation7], 4
      %s50 = int_to_ptr.vmem [resolvable:$true] %s49
      %52 = dma.hbm_to_vmem [thread:$0]  %s2, 64, %s50, [#allocation6]
    $region13: #{tpu_custom_call.1} parent=1 // pred_fallthru
      _
    // Predicated region
    $region14: #{tpu_custom_call.1} parent=1 // pred_check
      _
    $region15: #{tpu_custom_call.1} parent=1 // pred_check_branch
      %54 = sbr.rel (0) target = $region17
    $region16: #{tpu_custom_call.1} parent=1 // pred_region
      %s56 = ssub.s32 32768, 32768
      %57 = vsyncadd [#allocation9], %s56
      %s58 = sshll.u32 [#allocation8], 4
      %s59 = int_to_ptr.vmem [resolvable:$true] %s58
      %64 = dma.hbm_to_vmem [thread:$0]  %s3, 32768, %s59, [#allocation9], 512, 512, 32
    $region17: #{tpu_custom_call.1} parent=1 // pred_fallthru
      _
    // Predicated region
    $region18: #{tpu_custom_call.1} parent=1 // pred_check
      _
    $region19: #{tpu_custom_call.1} parent=1 // pred_check_branch
      %66 = sbr.rel (0) target = $region21
    $region20: #{tpu_custom_call.1} parent=1 // pred_region
      %s68 = ssub.s32 128, 128
      %69 = vsyncadd [#allocation9], %s68
      %s71 = sshll.u32 [#allocation10], 4
      %s72 = int_to_ptr.vmem [resolvable:$true] %s71
      %74 = dma.hbm_to_vmem [thread:$0]  %s4, 128, %s72, [#allocation9]
    $region21: #{tpu_custom_call.1} parent=1 // pred_fallthru
      _
    // Predicated region
    $region22: #{tpu_custom_call.1} parent=1 // pred_check
      _
    $region23: #{tpu_custom_call.1} parent=1 // pred_check_branch
      %76 = sbr.rel (0) target = $region25
    $region24: #{tpu_custom_call.1} parent=1 // pred_region
      %s78 = ssub.s32 131072, 131072
      %79 = vsyncadd [#allocation12], %s78
      %s80 = sshll.u32 [#allocation11], 4
      %s81 = int_to_ptr.vmem [resolvable:$true] %s80
      %86 = dma.hbm_to_vmem [thread:$0]  %s5, 131072, %s81, [#allocation12], 1024, 1024, 64
    $region25: #{tpu_custom_call.1} parent=1 // pred_fallthru
      _
    // Predicated region
    $region26: #{tpu_custom_call.1} parent=1 // pred_check
      _
    $region27: #{tpu_custom_call.1} parent=1 // pred_check_branch
      %88 = sbr.rel (0) target = $region29
    $region28: #{tpu_custom_call.1} parent=1 // pred_region
      %s90 = ssub.s32 256, 256
      %91 = vsyncadd [#allocation12], %s90
      %s93 = sshll.u32 [#allocation13], 4
      %s94 = int_to_ptr.vmem [resolvable:$true] %s93
      %96 = dma.hbm_to_vmem [thread:$0]  %s6, 256, %s94, [#allocation12]
    $region29: #{tpu_custom_call.1} parent=1 // pred_fallthru
      _
    // Predicated region
    $region30: #{tpu_custom_call.1} parent=1 // pred_check
      _
    $region31: #{tpu_custom_call.1} parent=1 // pred_check_branch
      %98 = sbr.rel (0) target = $region33
    $region32: #{tpu_custom_call.1} parent=1 // pred_region
      %s100 = ssub.s32 256, 256
      %101 = vsyncadd [#allocation15], %s100
      %s103 = sshll.u32 [#allocation14], 4
      %s104 = int_to_ptr.vmem [resolvable:$true] %s103
      %106 = dma.hbm_to_vmem [thread:$0]  %s7, 256, %s104, [#allocation15]
    $region33: #{tpu_custom_call.1} parent=1 // pred_fallthru
      _
    // Predicated region
    $region34: #{tpu_custom_call.1} parent=1 // pred_check
      _
    $region35: #{tpu_custom_call.1} parent=1 // pred_check_branch
      %108 = sbr.rel (0) target = $region37
    $region36: #{tpu_custom_call.1} parent=1 // pred_region
      _
    $region37: #{tpu_custom_call.1} parent=1 // pred_fallthru
      _
    // Predicated region
    $region38: #{tpu_custom_call.1} parent=1 // pred_check
      _
    $region39: #{tpu_custom_call.1} parent=1 // pred_check_branch
      %110 = sbr.rel (0) target = $region41
    $region40: #{tpu_custom_call.1} parent=1 // pred_region
      %111 = dma.done [#allocation4], 64
    $region41: #{tpu_custom_call.1} parent=1 // pred_fallthru
      _
    // Predicated region
    $region42: #{tpu_custom_call.1} parent=1 // pred_check
      _
    $region43: #{tpu_custom_call.1} parent=1 // pred_check_branch
      %113 = sbr.rel (0) target = $region45
    $region44: #{tpu_custom_call.1} parent=1 // pred_region
      %114 = dma.done [#allocation6], 768
    $region45: #{tpu_custom_call.1} parent=1 // pred_fallthru
      _
    // Predicated region
    $region46: #{tpu_custom_call.1} parent=1 // pred_check
      _
    $region47: #{tpu_custom_call.1} parent=1 // pred_check_branch
      %116 = sbr.rel (0) target = $region49
    $region48: #{tpu_custom_call.1} parent=1 // pred_region
      %117 = dma.done [#allocation6], 64
    $region49: #{tpu_custom_call.1} parent=1 // pred_fallthru
      _
    // Predicated region
    $region50: #{tpu_custom_call.1} parent=1 // pred_check
      _
    $region51: #{tpu_custom_call.1} parent=1 // pred_check_branch
      %119 = sbr.rel (0) target = $region53
    $region52: #{tpu_custom_call.1} parent=1 // pred_region
      %120 = dma.done [#allocation9], 32768
    $region53: #{tpu_custom_call.1} parent=1 // pred_fallthru
      _
    // Predicated region
    $region54: #{tpu_custom_call.1} parent=1 // pred_check
      _
    $region55: #{tpu_custom_call.1} parent=1 // pred_check_branch
      %122 = sbr.rel (0) target = $region57
    $region56: #{tpu_custom_call.1} parent=1 // pred_region
      %123 = dma.done [#allocation9], 128
    $region57: #{tpu_custom_call.1} parent=1 // pred_fallthru
      _
    // Predicated region
    $region58: #{tpu_custom_call.1} parent=1 // pred_check
      _
    $region59: #{tpu_custom_call.1} parent=1 // pred_check_branch
      %125 = sbr.rel (0) target = $region61
    $region60: #{tpu_custom_call.1} parent=1 // pred_region
      %126 = dma.done [#allocation12], 131072
    $region61: #{tpu_custom_call.1} parent=1 // pred_fallthru
      _
    // Predicated region
    $region62: #{tpu_custom_call.1} parent=1 // pred_check
      _
    $region63: #{tpu_custom_call.1} parent=1 // pred_check_branch
      %128 = sbr.rel (0) target = $region65
    $region64: #{tpu_custom_call.1} parent=1 // pred_region
      %129 = dma.done [#allocation12], 256
    $region65: #{tpu_custom_call.1} parent=1 // pred_fallthru
      _
    // Predicated region
    $region66: #{tpu_custom_call.1} parent=1 // pred_check
      _
    $region67: #{tpu_custom_call.1} parent=1 // pred_check_branch
      %131 = sbr.rel (0) target = $region69
    $region68: #{tpu_custom_call.1} parent=1 // pred_region
      %132 = dma.done [#allocation15], 256
    $region69: #{tpu_custom_call.1} parent=1 // pred_fallthru
      _
    %v134 = vld [vmem:[#allocation3] sm:$0xf]
    %v135 = vld [vmem:[#allocation5] sm:$0xff]
    %v136 = vld [vmem:[#allocation5 + $0x8] sm:$0xff]
    %v137 = vld [vmem:[#allocation5 + $0x10] sm:$0xff]
    %v138 = vld [vmem:[#allocation5 + $0x18] sm:$0xff]
    %v139 = vld [vmem:[#allocation5 + $0x20] sm:$0x33]
    %v140 = vld [vmem:[#allocation5 + $0x28] sm:$0x33]
    %v141 = vld [vmem:[#allocation7] sm:$0xf]
    %v143 = vlaneseq
    %v144 = vshrl.u32 %v143, 7
    %v145 = vsub.s32 0, %v144
    %v146 = vrot.slane %v141, %v145
    %v147 = vlaneseq
    %v148 = vshrl.u32 %v147, 7
    %v149 = vsub.s32 1, %v148
    %v150 = vrot.slane %v141, %v149
    %v151 = vlaneseq
    %v152 = vshrl.u32 %v151, 7
    %v153 = vsub.s32 2, %v152
    %v154 = vrot.slane %v141, %v153
    %v155 = vlaneseq
    %v156 = vshrl.u32 %v155, 7
    %v157 = vsub.s32 3, %v156
    %v158 = vrot.slane %v141, %v157
    %v169 = vunpack.c.l.b16 %v135
    %v170 = vunpack.c.h.b16 %v135
    %v171 = vunpack.c.l.b16 %v136
    %v172 = vunpack.c.h.b16 %v136
    %v173 = vunpack.c.l.b16 %v137
    %v174 = vunpack.c.h.b16 %v137
    %v175 = vunpack.c.l.b16 %v138
    %v176 = vunpack.c.h.b16 %v138
    %v177 = vunpack.c.l.b16 %v139
    %v178 = vunpack.c.h.b16 %v139
    %v179 = vunpack.c.l.b16 %v140
    %v180 = vunpack.c.h.b16 %v140
    %v181 = vpack.c.b16 %v173, %v169
    %v182 = vpack.c.b16 %v174, %v170
    %v183 = vpack.c.b16 %v175, %v171
    %v184 = vpack.c.b16 %v176, %v172
    %v185 = vpack.c.b16 %v177, %v177
    %v186 = vpack.c.b16 %v178, %v178
    %v187 = vpack.c.b16 %v179, %v179
    %v188 = vpack.c.b16 %v180, %v180
    %vm193 = vcmask 162816
    %v195 = vsel %vm193, %v134, 0
    %vm197 = vcmask 1041408
    %v199 = vsel %vm197, %v185, 0
    %v202 = vsel %vm197, %v186, 0
    %v205 = vsel %vm197, %v187, 0
    %v208 = vsel %vm197, %v188, 0
    %210 = vmatprep.subr.bf16.mxu0 %v182
    %211 = vmatpush1.bf16.msra.mxu0 %v181
    %212 = vmatprep.subr.bf16.mxu0 %v202
    %213 = vmatpush1.bf16.msra.mxu0 %v199
    %214 = vmatprep.subr.bf16.mxu0 0
    %215 = vmatpush1.bf16.msra.mxu0 0
    %216 = vmatprep.subr.bf16.mxu0 0
    %217 = vmatpush1.bf16.msra.mxu0 0
    %218 = vmatprep.subr.bf16.mxu0 0
    %219 = vmatpush1.bf16.msra.mxu0 0
    %220 = vmatprep.subr.bf16.mxu0 0
    %221 = vmatpush1.bf16.msra.mxu0 0
    %222 = vmatprep.subr.bf16.mxu0 0
    %223 = vmatpush1.bf16.msra.mxu0 0
    %224 = vmatprep.subr.bf16.mxu0 0
    %225 = vmatpush1.bf16.msra.mxu0 0
    %226 = vmatprep.subr.bf16.mxu0 0
    %227 = vmatpush1.bf16.msra.mxu0 0
    %228 = vmatprep.subr.bf16.mxu0 0
    %229 = vmatpush1.bf16.msra.mxu0 0
    %230 = vmatprep.subr.bf16.mxu0 0
    %231 = vmatpush1.bf16.msra.mxu0 0
    %232 = vmatprep.subr.bf16.mxu0 0
    %233 = vmatpush1.bf16.msra.mxu0 0
    %234 = vmatprep.subr.bf16.mxu0 0
    %235 = vmatpush1.bf16.msra.mxu0 0
    %236 = vmatprep.subr.bf16.mxu0 0
    %237 = vmatpush1.bf16.msra.mxu0 0
    %238 = vmatprep.subr.bf16.mxu0 0
    %239 = vmatpush1.bf16.msra.mxu0 0
    %240 = vmatprep.subr.bf16.mxu0 0
    %241 = vmatpush1.bf16.msra.mxu0 0
    %242 = vmatprep.mubr.bf16.mxu0 0
    %243 = vmatmul.mubr.bf16.gmra.mrb[0].mxu0 %v195
    %v244 = vpop.f32.mrb[0].mxu0
    %v245 = vadd.f32 %v146, %v244
    %v246 = vpop.f32.mrb[0].mxu0
    %v247 = vadd.f32 %v150, %v246
    %v248 = vpop.f32.mrb[0].mxu0
    %v249 = vpop.f32.mrb[0].mxu0
    %250 = vdwg.mxu0
    %251 = vmatprep.subr.bf16.mxu0 %v184
    %252 = vmatpush1.bf16.msra.mxu0 %v183
    %253 = vmatprep.subr.bf16.mxu0 %v208
    %254 = vmatpush1.bf16.msra.mxu0 %v205
    %255 = vmatprep.subr.bf16.mxu0 0
    %256 = vmatpush1.bf16.msra.mxu0 0
    %257 = vmatprep.subr.bf16.mxu0 0
    %258 = vmatpush1.bf16.msra.mxu0 0
    %259 = vmatprep.subr.bf16.mxu0 0
    %260 = vmatpush1.bf16.msra.mxu0 0
    %261 = vmatprep.subr.bf16.mxu0 0
    %262 = vmatpush1.bf16.msra.mxu0 0
    %263 = vmatprep.subr.bf16.mxu0 0
    %264 = vmatpush1.bf16.msra.mxu0 0
    %265 = vmatprep.subr.bf16.mxu0 0
    %266 = vmatpush1.bf16.msra.mxu0 0
    %267 = vmatprep.subr.bf16.mxu0 0
    %268 = vmatpush1.bf16.msra.mxu0 0
    %269 = vmatprep.subr.bf16.mxu0 0
    %270 = vmatpush1.bf16.msra.mxu0 0
    %271 = vmatprep.subr.bf16.mxu0 0
    %272 = vmatpush1.bf16.msra.mxu0 0
    %273 = vmatprep.subr.bf16.mxu0 0
    %274 = vmatpush1.bf16.msra.mxu0 0
    %275 = vmatprep.subr.bf16.mxu0 0
    %276 = vmatpush1.bf16.msra.mxu0 0
    %277 = vmatprep.subr.bf16.mxu0 0
    %278 = vmatpush1.bf16.msra.mxu0 0
    %279 = vmatprep.subr.bf16.mxu0 0
    %280 = vmatpush1.bf16.msra.mxu0 0
    %281 = vmatprep.subr.bf16.mxu0 0
    %282 = vmatpush1.bf16.msra.mxu0 0
    %283 = vmatprep.mubr.bf16.mxu0 0
    %284 = vmatmul.mubr.bf16.gmra.mrb[0].mxu0 %v195
    %v285 = vpop.f32.mrb[0].mxu0
    %v286 = vadd.f32 %v154, %v285
    %v287 = vpop.f32.mrb[0].mxu0
    %v288 = vadd.f32 %v158, %v287
    %v289 = vpop.f32.mrb[0].mxu0
    %v290 = vpop.f32.mrb[0].mxu0
    %291 = vdwg.mxu0
    %v292 = vmul.f32 %v245, 0.2
    %v293 = vmul.f32 %v247, 0.2
    %v294 = vmul.f32 %v286, 0.2
    %v295 = vmul.f32 %v288, 0.2
    %v296 = vmax.f32 %v245, %v292
    %v297 = vmax.f32 %v247, %v293
    %v298 = vmax.f32 %v286, %v294
    %v299 = vmax.f32 %v288, %v295
    %v300 = vpack.c.bf16 %v296, %v296
    %v301 = vpack.c.bf16 %v297, %v297
    %v302 = vpack.c.bf16 %v298, %v298
    %v303 = vpack.c.bf16 %v299, %v299
    %v304 = vld [vmem:[#allocation8] sm:$0xff]
    %v305 = vld [vmem:[#allocation8 + $0x8] sm:$0xff]
    %v306 = vld [vmem:[#allocation8 + $0x10] sm:$0xff]
    %v307 = vld [vmem:[#allocation8 + $0x18] sm:$0xff]
    %v308 = vld [vmem:[#allocation8 + $0x20] sm:$0xff]
    %v309 = vld [vmem:[#allocation8 + $0x28] sm:$0xff]
    %v310 = vld [vmem:[#allocation8 + $0x30] sm:$0xff]
    %v311 = vld [vmem:[#allocation8 + $0x38] sm:$0xff]
    %v312 = vld [vmem:[#allocation8 + $0x40] sm:$0xff]
    %v313 = vld [vmem:[#allocation8 + $0x48] sm:$0xff]
    %v314 = vld [vmem:[#allocation8 + $0x50] sm:$0xff]
    %v315 = vld [vmem:[#allocation8 + $0x58] sm:$0xff]
    %v316 = vld [vmem:[#allocation8 + $0x60] sm:$0xff]
    %v317 = vld [vmem:[#allocation8 + $0x68] sm:$0xff]
    %v318 = vld [vmem:[#allocation8 + $0x70] sm:$0xff]
    %v319 = vld [vmem:[#allocation8 + $0x78] sm:$0xff]
    %v320 = vld [vmem:[#allocation8 + $0x80] sm:$0xff]
    %v321 = vld [vmem:[#allocation8 + $0x88] sm:$0xff]
    %v322 = vld [vmem:[#allocation8 + $0x90] sm:$0xff]
    %v323 = vld [vmem:[#allocation8 + $0x98] sm:$0xff]
    %v324 = vld [vmem:[#allocation8 + $0xa0] sm:$0xff]
    %v325 = vld [vmem:[#allocation8 + $0xa8] sm:$0xff]
    %v326 = vld [vmem:[#allocation8 + $0xb0] sm:$0xff]
    %v327 = vld [vmem:[#allocation8 + $0xb8] sm:$0xff]
    %v328 = vld [vmem:[#allocation8 + $0xc0] sm:$0xff]
    %v329 = vld [vmem:[#allocation8 + $0xc8] sm:$0xff]
    %v330 = vld [vmem:[#allocation8 + $0xd0] sm:$0xff]
    %v331 = vld [vmem:[#allocation8 + $0xd8] sm:$0xff]
    %v332 = vld [vmem:[#allocation8 + $0xe0] sm:$0xff]
    %v333 = vld [vmem:[#allocation8 + $0xe8] sm:$0xff]
    %v334 = vld [vmem:[#allocation8 + $0xf0] sm:$0xff]
    %v335 = vld [vmem:[#allocation8 + $0xf8] sm:$0xff]
    %v336 = vld [vmem:[#allocation8 + $0x100] sm:$0xff]
    %v337 = vld [vmem:[#allocation8 + $0x108] sm:$0xff]
    %v338 = vld [vmem:[#allocation8 + $0x110] sm:$0xff]
    %v339 = vld [vmem:[#allocation8 + $0x118] sm:$0xff]
    %v340 = vld [vmem:[#allocation8 + $0x120] sm:$0xff]
    %v341 = vld [vmem:[#allocation8 + $0x128] sm:$0xff]
    %v342 = vld [vmem:[#allocation8 + $0x130] sm:$0xff]
    %v343 = vld [vmem:[#allocation8 + $0x138] sm:$0xff]
    %v344 = vld [vmem:[#allocation8 + $0x140] sm:$0xff]
    %v345 = vld [vmem:[#allocation8 + $0x148] sm:$0xff]
    %v346 = vld [vmem:[#allocation8 + $0x150] sm:$0xff]
    %v347 = vld [vmem:[#allocation8 + $0x158] sm:$0xff]
    %v348 = vld [vmem:[#allocation8 + $0x160] sm:$0xff]
    %v349 = vld [vmem:[#allocation8 + $0x168] sm:$0xff]
    %v350 = vld [vmem:[#allocation8 + $0x170] sm:$0xff]
    %v351 = vld [vmem:[#allocation8 + $0x178] sm:$0xff]
    %v352 = vld [vmem:[#allocation8 + $0x180] sm:$0xff]
    %v353 = vld [vmem:[#allocation8 + $0x188] sm:$0xff]
    %v354 = vld [vmem:[#allocation8 + $0x190] sm:$0xff]
    %v355 = vld [vmem:[#allocation8 + $0x198] sm:$0xff]
    %v356 = vld [vmem:[#allocation8 + $0x1a0] sm:$0xff]
    %v357 = vld [vmem:[#allocation8 + $0x1a8] sm:$0xff]
    %v358 = vld [vmem:[#allocation8 + $0x1b0] sm:$0xff]
    %v359 = vld [vmem:[#allocation8 + $0x1b8] sm:$0xff]
    %v360 = vld [vmem:[#allocation8 + $0x1c0] sm:$0xff]
    %v361 = vld [vmem:[#allocation8 + $0x1c8] sm:$0xff]
    %v362 = vld [vmem:[#allocation8 + $0x1d0] sm:$0xff]
    %v363 = vld [vmem:[#allocation8 + $0x1d8] sm:$0xff]
    %v364 = vld [vmem:[#allocation8 + $0x1e0] sm:$0xff]
    %v365 = vld [vmem:[#allocation8 + $0x1e8] sm:$0xff]
    %v366 = vld [vmem:[#allocation8 + $0x1f0] sm:$0xff]
    %v367 = vld [vmem:[#allocation8 + $0x1f8] sm:$0xff]
    %v368 = vld [vmem:[#allocation8 + $0x200] sm:$0xff]
    %v369 = vld [vmem:[#allocation8 + $0x208] sm:$0xff]
    %v370 = vld [vmem:[#allocation8 + $0x210] sm:$0xff]
    %v371 = vld [vmem:[#allocation8 + $0x218] sm:$0xff]
    %v372 = vld [vmem:[#allocation8 + $0x220] sm:$0xff]
    %v373 = vld [vmem:[#allocation8 + $0x228] sm:$0xff]
    %v374 = vld [vmem:[#allocation8 + $0x230] sm:$0xff]
    %v375 = vld [vmem:[#allocation8 + $0x238] sm:$0xff]
    %v376 = vld [vmem:[#allocation8 + $0x240] sm:$0xff]
    %v377 = vld [vmem:[#allocation8 + $0x248] sm:$0xff]
    %v378 = vld [vmem:[#allocation8 + $0x250] sm:$0xff]
    %v379 = vld [vmem:[#allocation8 + $0x258] sm:$0xff]
    %v380 = vld [vmem:[#allocation8 + $0x260] sm:$0xff]
    %v381 = vld [vmem:[#allocation8 + $0x268] sm:$0xff]
    %v382 = vld [vmem:[#allocation8 + $0x270] sm:$0xff]
    %v383 = vld [vmem:[#allocation8 + $0x278] sm:$0xff]
    %v384 = vld [vmem:[#allocation8 + $0x280] sm:$0xff]
    %v385 = vld [vmem:[#allocation8 + $0x288] sm:$0xff]
    %v386 = vld [vmem:[#allocation8 + $0x290] sm:$0xff]
    %v387 = vld [vmem:[#allocation8 + $0x298] sm:$0xff]
    %v388 = vld [vmem:[#allocation8 + $0x2a0] sm:$0xff]
    %v389 = vld [vmem:[#allocation8 + $0x2a8] sm:$0xff]
    %v390 = vld [vmem:[#allocation8 + $0x2b0] sm:$0xff]
    %v391 = vld [vmem:[#allocation8 + $0x2b8] sm:$0xff]
    %v392 = vld [vmem:[#allocation8 + $0x2c0] sm:$0xff]
    %v393 = vld [vmem:[#allocation8 + $0x2c8] sm:$0xff]
    %v394 = vld [vmem:[#allocation8 + $0x2d0] sm:$0xff]
    %v395 = vld [vmem:[#allocation8 + $0x2d8] sm:$0xff]
    %v396 = vld [vmem:[#allocation8 + $0x2e0] sm:$0xff]
    %v397 = vld [vmem:[#allocation8 + $0x2e8] sm:$0xff]
    %v398 = vld [vmem:[#allocation8 + $0x2f0] sm:$0xff]
    %v399 = vld [vmem:[#allocation8 + $0x2f8] sm:$0xff]
    %v400 = vld [vmem:[#allocation8 + $0x300] sm:$0xff]
    %v401 = vld [vmem:[#allocation8 + $0x308] sm:$0xff]
    %v402 = vld [vmem:[#allocation8 + $0x310] sm:$0xff]
    %v403 = vld [vmem:[#allocation8 + $0x318] sm:$0xff]
    %v404 = vld [vmem:[#allocation8 + $0x320] sm:$0xff]
    %v405 = vld [vmem:[#allocation8 + $0x328] sm:$0xff]
    %v406 = vld [vmem:[#allocation8 + $0x330] sm:$0xff]
    %v407 = vld [vmem:[#allocation8 + $0x338] sm:$0xff]
    %v408 = vld [vmem:[#allocation8 + $0x340] sm:$0xff]
    %v409 = vld [vmem:[#allocation8 + $0x348] sm:$0xff]
    %v410 = vld [vmem:[#allocation8 + $0x350] sm:$0xff]
    %v411 = vld [vmem:[#allocation8 + $0x358] sm:$0xff]
    %v412 = vld [vmem:[#allocation8 + $0x360] sm:$0xff]
    %v413 = vld [vmem:[#allocation8 + $0x368] sm:$0xff]
    %v414 = vld [vmem:[#allocation8 + $0x370] sm:$0xff]
    %v415 = vld [vmem:[#allocation8 + $0x378] sm:$0xff]
    %v416 = vld [vmem:[#allocation8 + $0x380] sm:$0xff]
    %v417 = vld [vmem:[#allocation8 + $0x388] sm:$0xff]
    %v418 = vld [vmem:[#allocation8 + $0x390] sm:$0xff]
    %v419 = vld [vmem:[#allocation8 + $0x398] sm:$0xff]
    %v420 = vld [vmem:[#allocation8 + $0x3a0] sm:$0xff]
    %v421 = vld [vmem:[#allocation8 + $0x3a8] sm:$0xff]
    %v422 = vld [vmem:[#allocation8 + $0x3b0] sm:$0xff]
    %v423 = vld [vmem:[#allocation8 + $0x3b8] sm:$0xff]
    %v424 = vld [vmem:[#allocation8 + $0x3c0] sm:$0xff]
    %v425 = vld [vmem:[#allocation8 + $0x3c8] sm:$0xff]
    %v426 = vld [vmem:[#allocation8 + $0x3d0] sm:$0xff]
    %v427 = vld [vmem:[#allocation8 + $0x3d8] sm:$0xff]
    %v428 = vld [vmem:[#allocation8 + $0x3e0] sm:$0xff]
    %v429 = vld [vmem:[#allocation8 + $0x3e8] sm:$0xff]
    %v430 = vld [vmem:[#allocation8 + $0x3f0] sm:$0xff]
    %v431 = vld [vmem:[#allocation8 + $0x3f8] sm:$0xff]
    %v432 = vld [vmem:[#allocation8 + $0x400] sm:$0xff]
    %v433 = vld [vmem:[#allocation8 + $0x408] sm:$0xff]
    %v434 = vld [vmem:[#allocation8 + $0x410] sm:$0xff]
    %v435 = vld [vmem:[#allocation8 + $0x418] sm:$0xff]
    %v436 = vld [vmem:[#allocation8 + $0x420] sm:$0xff]
    %v437 = vld [vmem:[#allocation8 + $0x428] sm:$0xff]
    %v438 = vld [vmem:[#allocation8 + $0x430] sm:$0xff]
    %v439 = vld [vmem:[#allocation8 + $0x438] sm:$0xff]
    %v440 = vld [vmem:[#allocation8 + $0x440] sm:$0xff]
    %v441 = vld [vmem:[#allocation8 + $0x448] sm:$0xff]
    %v442 = vld [vmem:[#allocation8 + $0x450] sm:$0xff]
    %v443 = vld [vmem:[#allocation8 + $0x458] sm:$0xff]
    %v444 = vld [vmem:[#allocation8 + $0x460] sm:$0xff]
    %v445 = vld [vmem:[#allocation8 + $0x468] sm:$0xff]
    %v446 = vld [vmem:[#allocation8 + $0x470] sm:$0xff]
    %v447 = vld [vmem:[#allocation8 + $0x478] sm:$0xff]
    %v448 = vld [vmem:[#allocation8 + $0x480] sm:$0xff]
    %v449 = vld [vmem:[#allocation8 + $0x488] sm:$0xff]
    %v450 = vld [vmem:[#allocation8 + $0x490] sm:$0xff]
    %v451 = vld [vmem:[#allocation8 + $0x498] sm:$0xff]
    %v452 = vld [vmem:[#allocation8 + $0x4a0] sm:$0xff]
    %v453 = vld [vmem:[#allocation8 + $0x4a8] sm:$0xff]
    %v454 = vld [vmem:[#allocation8 + $0x4b0] sm:$0xff]
    %v455 = vld [vmem:[#allocation8 + $0x4b8] sm:$0xff]
    %v456 = vld [vmem:[#allocation8 + $0x4c0] sm:$0xff]
    %v457 = vld [vmem:[#allocation8 + $0x4c8] sm:$0xff]
    %v458 = vld [vmem:[#allocation8 + $0x4d0] sm:$0xff]
    %v459 = vld [vmem:[#allocation8 + $0x4d8] sm:$0xff]
    %v460 = vld [vmem:[#allocation8 + $0x4e0] sm:$0xff]
    %v461 = vld [vmem:[#allocation8 + $0x4e8] sm:$0xff]
    %v462 = vld [vmem:[#allocation8 + $0x4f0] sm:$0xff]
    %v463 = vld [vmem:[#allocation8 + $0x4f8] sm:$0xff]
    %v464 = vld [vmem:[#allocation8 + $0x500] sm:$0xff]
    %v465 = vld [vmem:[#allocation8 + $0x508] sm:$0xff]
    %v466 = vld [vmem:[#allocation8 + $0x510] sm:$0xff]
    %v467 = vld [vmem:[#allocation8 + $0x518] sm:$0xff]
    %v468 = vld [vmem:[#allocation8 + $0x520] sm:$0xff]
    %v469 = vld [vmem:[#allocation8 + $0x528] sm:$0xff]
    %v470 = vld [vmem:[#allocation8 + $0x530] sm:$0xff]
    %v471 = vld [vmem:[#allocation8 + $0x538] sm:$0xff]
    %v472 = vld [vmem:[#allocation8 + $0x540] sm:$0xff]
    %v473 = vld [vmem:[#allocation8 + $0x548] sm:$0xff]
    %v474 = vld [vmem:[#allocation8 + $0x550] sm:$0xff]
    %v475 = vld [vmem:[#allocation8 + $0x558] sm:$0xff]
    %v476 = vld [vmem:[#allocation8 + $0x560] sm:$0xff]
    %v477 = vld [vmem:[#allocation8 + $0x568] sm:$0xff]
    %v478 = vld [vmem:[#allocation8 + $0x570] sm:$0xff]
    %v479 = vld [vmem:[#allocation8 + $0x578] sm:$0xff]
    %v480 = vld [vmem:[#allocation8 + $0x580] sm:$0xff]
    %v481 = vld [vmem:[#allocation8 + $0x588] sm:$0xff]
    %v482 = vld [vmem:[#allocation8 + $0x590] sm:$0xff]
    %v483 = vld [vmem:[#allocation8 + $0x598] sm:$0xff]
    %v484 = vld [vmem:[#allocation8 + $0x5a0] sm:$0xff]
    %v485 = vld [vmem:[#allocation8 + $0x5a8] sm:$0xff]
    %v486 = vld [vmem:[#allocation8 + $0x5b0] sm:$0xff]
    %v487 = vld [vmem:[#allocation8 + $0x5b8] sm:$0xff]
    %v488 = vld [vmem:[#allocation8 + $0x5c0] sm:$0xff]
    %v489 = vld [vmem:[#allocation8 + $0x5c8] sm:$0xff]
    %v490 = vld [vmem:[#allocation8 + $0x5d0] sm:$0xff]
    %v491 = vld [vmem:[#allocation8 + $0x5d8] sm:$0xff]
    %v492 = vld [vmem:[#allocation8 + $0x5e0] sm:$0xff]
    %v493 = vld [vmem:[#allocation8 + $0x5e8] sm:$0xff]
    %v494 = vld [vmem:[#allocation8 + $0x5f0] sm:$0xff]
    %v495 = vld [vmem:[#allocation8 + $0x5f8] sm:$0xff]
    %v496 = vld [vmem:[#allocation8 + $0x600] sm:$0xff]
    %v497 = vld [vmem:[#allocation8 + $0x608] sm:$0xff]
    %v498 = vld [vmem:[#allocation8 + $0x610] sm:$0xff]
    %v499 = vld [vmem:[#allocation8 + $0x618] sm:$0xff]
    %v500 = vld [vmem:[#allocation8 + $0x620] sm:$0xff]
    %v501 = vld [vmem:[#allocation8 + $0x628] sm:$0xff]
    %v502 = vld [vmem:[#allocation8 + $0x630] sm:$0xff]
    %v503 = vld [vmem:[#allocation8 + $0x638] sm:$0xff]
    %v504 = vld [vmem:[#allocation8 + $0x640] sm:$0xff]
    %v505 = vld [vmem:[#allocation8 + $0x648] sm:$0xff]
    %v506 = vld [vmem:[#allocation8 + $0x650] sm:$0xff]
    %v507 = vld [vmem:[#allocation8 + $0x658] sm:$0xff]
    %v508 = vld [vmem:[#allocation8 + $0x660] sm:$0xff]
    %v509 = vld [vmem:[#allocation8 + $0x668] sm:$0xff]
    %v510 = vld [vmem:[#allocation8 + $0x670] sm:$0xff]
    %v511 = vld [vmem:[#allocation8 + $0x678] sm:$0xff]
    %v512 = vld [vmem:[#allocation8 + $0x680] sm:$0xff]
    %v513 = vld [vmem:[#allocation8 + $0x688] sm:$0xff]
    %v514 = vld [vmem:[#allocation8 + $0x690] sm:$0xff]
    %v515 = vld [vmem:[#allocation8 + $0x698] sm:$0xff]
    %v516 = vld [vmem:[#allocation8 + $0x6a0] sm:$0xff]
    %v517 = vld [vmem:[#allocation8 + $0x6a8] sm:$0xff]
    %v518 = vld [vmem:[#allocation8 + $0x6b0] sm:$0xff]
    %v519 = vld [vmem:[#allocation8 + $0x6b8] sm:$0xff]
    %v520 = vld [vmem:[#allocation8 + $0x6c0] sm:$0xff]
    %v521 = vld [vmem:[#allocation8 + $0x6c8] sm:$0xff]
    %v522 = vld [vmem:[#allocation8 + $0x6d0] sm:$0xff]
    %v523 = vld [vmem:[#allocation8 + $0x6d8] sm:$0xff]
    %v524 = vld [vmem:[#allocation8 + $0x6e0] sm:$0xff]
    %v525 = vld [vmem:[#allocation8 + $0x6e8] sm:$0xff]
    %v526 = vld [vmem:[#allocation8 + $0x6f0] sm:$0xff]
    %v527 = vld [vmem:[#allocation8 + $0x6f8] sm:$0xff]
    %v528 = vld [vmem:[#allocation8 + $0x700] sm:$0xff]
    %v529 = vld [vmem:[#allocation8 + $0x708] sm:$0xff]
    %v530 = vld [vmem:[#allocation8 + $0x710] sm:$0xff]
    %v531 = vld [vmem:[#allocation8 + $0x718] sm:$0xff]
    %v532 = vld [vmem:[#allocation8 + $0x720] sm:$0xff]
    %v533 = vld [vmem:[#allocation8 + $0x728] sm:$0xff]
    %v534 = vld [vmem:[#allocation8 + $0x730] sm:$0xff]
    %v535 = vld [vmem:[#allocation8 + $0x738] sm:$0xff]
    %v536 = vld [vmem:[#allocation8 + $0x740] sm:$0xff]
    %v537 = vld [vmem:[#allocation8 + $0x748] sm:$0xff]
    %v538 = vld [vmem:[#allocation8 + $0x750] sm:$0xff]
    %v539 = vld [vmem:[#allocation8 + $0x758] sm:$0xff]
    %v540 = vld [vmem:[#allocation8 + $0x760] sm:$0xff]
    %v541 = vld [vmem:[#allocation8 + $0x768] sm:$0xff]
    %v542 = vld [vmem:[#allocation8 + $0x770] sm:$0xff]
    %v543 = vld [vmem:[#allocation8 + $0x778] sm:$0xff]
    %v544 = vld [vmem:[#allocation8 + $0x780] sm:$0xff]
    %v545 = vld [vmem:[#allocation8 + $0x788] sm:$0xff]
    %v546 = vld [vmem:[#allocation8 + $0x790] sm:$0xff]
    %v547 = vld [vmem:[#allocation8 + $0x798] sm:$0xff]
    %v548 = vld [vmem:[#allocation8 + $0x7a0] sm:$0xff]
    %v549 = vld [vmem:[#allocation8 + $0x7a8] sm:$0xff]
    %v550 = vld [vmem:[#allocation8 + $0x7b0] sm:$0xff]
    %v551 = vld [vmem:[#allocation8 + $0x7b8] sm:$0xff]
    %v552 = vld [vmem:[#allocation8 + $0x7c0] sm:$0xff]
    %v553 = vld [vmem:[#allocation8 + $0x7c8] sm:$0xff]
    %v554 = vld [vmem:[#allocation8 + $0x7d0] sm:$0xff]
    %v555 = vld [vmem:[#allocation8 + $0x7d8] sm:$0xff]
    %v556 = vld [vmem:[#allocation8 + $0x7e0] sm:$0xff]
    %v557 = vld [vmem:[#allocation8 + $0x7e8] sm:$0xff]
    %v558 = vld [vmem:[#allocation8 + $0x7f0] sm:$0xff]
    %v559 = vld [vmem:[#allocation8 + $0x7f8] sm:$0xff]
    %v560 = vld [vmem:[#allocation10] sm:$0xff]
    %v562 = vlaneseq
    %v563 = vshrl.u32 %v562, 7
    %v564 = vsub.s32 0, %v563
    %v565 = vrot.slane %v560, %v564
    %v566 = vlaneseq
    %v567 = vshrl.u32 %v566, 7
    %v568 = vsub.s32 1, %v567
    %v569 = vrot.slane %v560, %v568
    %v570 = vlaneseq
    %v571 = vshrl.u32 %v570, 7
    %v572 = vsub.s32 2, %v571
    %v573 = vrot.slane %v560, %v572
    %v574 = vlaneseq
    %v575 = vshrl.u32 %v574, 7
    %v576 = vsub.s32 3, %v575
    %v577 = vrot.slane %v560, %v576
    %v578 = vlaneseq
    %v579 = vshrl.u32 %v578, 7
    %v580 = vsub.s32 4, %v579
    %v581 = vrot.slane %v560, %v580
    %v582 = vlaneseq
    %v583 = vshrl.u32 %v582, 7
    %v584 = vsub.s32 5, %v583
    %v585 = vrot.slane %v560, %v584
    %v586 = vlaneseq
    %v587 = vshrl.u32 %v586, 7
    %v588 = vsub.s32 6, %v587
    %v589 = vrot.slane %v560, %v588
    %v590 = vlaneseq
    %v591 = vshrl.u32 %v590, 7
    %v592 = vsub.s32 7, %v591
    %v593 = vrot.slane %v560, %v592
    %v858 = vunpack.c.l.b16 %v304
    %v859 = vunpack.c.h.b16 %v304
    %v860 = vunpack.c.l.b16 %v305
    %v861 = vunpack.c.h.b16 %v305
    %v862 = vunpack.c.l.b16 %v306
    %v863 = vunpack.c.h.b16 %v306
    %v864 = vunpack.c.l.b16 %v307
    %v865 = vunpack.c.h.b16 %v307
    %v866 = vunpack.c.l.b16 %v308
    %v867 = vunpack.c.h.b16 %v308
    %v868 = vunpack.c.l.b16 %v309
    %v869 = vunpack.c.h.b16 %v309
    %v870 = vunpack.c.l.b16 %v310
    %v871 = vunpack.c.h.b16 %v310
    %v872 = vunpack.c.l.b16 %v311
    %v873 = vunpack.c.h.b16 %v311
    %v874 = vunpack.c.l.b16 %v312
    %v875 = vunpack.c.h.b16 %v312
    %v876 = vunpack.c.l.b16 %v313
    %v877 = vunpack.c.h.b16 %v313
    %v878 = vunpack.c.l.b16 %v314
    %v879 = vunpack.c.h.b16 %v314
    %v880 = vunpack.c.l.b16 %v315
    %v881 = vunpack.c.h.b16 %v315
    %v882 = vunpack.c.l.b16 %v316
    %v883 = vunpack.c.h.b16 %v316
    %v884 = vunpack.c.l.b16 %v317
    %v885 = vunpack.c.h.b16 %v317
    %v886 = vunpack.c.l.b16 %v318
    %v887 = vunpack.c.h.b16 %v318
    %v888 = vunpack.c.l.b16 %v319
    %v889 = vunpack.c.h.b16 %v319
    %v890 = vunpack.c.l.b16 %v320
    %v891 = vunpack.c.h.b16 %v320
    %v892 = vunpack.c.l.b16 %v321
    %v893 = vunpack.c.h.b16 %v321
    %v894 = vunpack.c.l.b16 %v322
    %v895 = vunpack.c.h.b16 %v322
    %v896 = vunpack.c.l.b16 %v323
    %v897 = vunpack.c.h.b16 %v323
    %v898 = vunpack.c.l.b16 %v324
    %v899 = vunpack.c.h.b16 %v324
    %v900 = vunpack.c.l.b16 %v325
    %v901 = vunpack.c.h.b16 %v325
    %v902 = vunpack.c.l.b16 %v326
    %v903 = vunpack.c.h.b16 %v326
    %v904 = vunpack.c.l.b16 %v327
    %v905 = vunpack.c.h.b16 %v327
    %v906 = vunpack.c.l.b16 %v328
    %v907 = vunpack.c.h.b16 %v328
    %v908 = vunpack.c.l.b16 %v329
    %v909 = vunpack.c.h.b16 %v329
    %v910 = vunpack.c.l.b16 %v330
    %v911 = vunpack.c.h.b16 %v330
    %v912 = vunpack.c.l.b16 %v331
    %v913 = vunpack.c.h.b16 %v331
    %v914 = vunpack.c.l.b16 %v332
    %v915 = vunpack.c.h.b16 %v332
    %v916 = vunpack.c.l.b16 %v333
    %v917 = vunpack.c.h.b16 %v333
    %v918 = vunpack.c.l.b16 %v334
    %v919 = vunpack.c.h.b16 %v334
    %v920 = vunpack.c.l.b16 %v335
    %v921 = vunpack.c.h.b16 %v335
    %v922 = vunpack.c.l.b16 %v336
    %v923 = vunpack.c.h.b16 %v336
    %v924 = vunpack.c.l.b16 %v337
    %v925 = vunpack.c.h.b16 %v337
    %v926 = vunpack.c.l.b16 %v338
    %v927 = vunpack.c.h.b16 %v338
    %v928 = vunpack.c.l.b16 %v339
    %v929 = vunpack.c.h.b16 %v339
    %v930 = vunpack.c.l.b16 %v340
    %v931 = vunpack.c.h.b16 %v340
    %v932 = vunpack.c.l.b16 %v341
    %v933 = vunpack.c.h.b16 %v341
    %v934 = vunpack.c.l.b16 %v342
    %v935 = vunpack.c.h.b16 %v342
    %v936 = vunpack.c.l.b16 %v343
    %v937 = vunpack.c.h.b16 %v343
    %v938 = vunpack.c.l.b16 %v344
    %v939 = vunpack.c.h.b16 %v344
    %v940 = vunpack.c.l.b16 %v345
    %v941 = vunpack.c.h.b16 %v345
    %v942 = vunpack.c.l.b16 %v346
    %v943 = vunpack.c.h.b16 %v346
    %v944 = vunpack.c.l.b16 %v347
    %v945 = vunpack.c.h.b16 %v347
    %v946 = vunpack.c.l.b16 %v348
    %v947 = vunpack.c.h.b16 %v348
    %v948 = vunpack.c.l.b16 %v349
    %v949 = vunpack.c.h.b16 %v349
    %v950 = vunpack.c.l.b16 %v350
    %v951 = vunpack.c.h.b16 %v350
    %v952 = vunpack.c.l.b16 %v351
    %v953 = vunpack.c.h.b16 %v351
    %v954 = vunpack.c.l.b16 %v352
    %v955 = vunpack.c.h.b16 %v352
    %v956 = vunpack.c.l.b16 %v353
    %v957 = vunpack.c.h.b16 %v353
    %v958 = vunpack.c.l.b16 %v354
    %v959 = vunpack.c.h.b16 %v354
    %v960 = vunpack.c.l.b16 %v355
    %v961 = vunpack.c.h.b16 %v355
    %v962 = vunpack.c.l.b16 %v356
    %v963 = vunpack.c.h.b16 %v356
    %v964 = vunpack.c.l.b16 %v357
    %v965 = vunpack.c.h.b16 %v357
    %v966 = vunpack.c.l.b16 %v358
    %v967 = vunpack.c.h.b16 %v358
    %v968 = vunpack.c.l.b16 %v359
    %v969 = vunpack.c.h.b16 %v359
    %v970 = vunpack.c.l.b16 %v360
    %v971 = vunpack.c.h.b16 %v360
    %v972 = vunpack.c.l.b16 %v361
    %v973 = vunpack.c.h.b16 %v361
    %v974 = vunpack.c.l.b16 %v362
    %v975 = vunpack.c.h.b16 %v362
    %v976 = vunpack.c.l.b16 %v363
    %v977 = vunpack.c.h.b16 %v363
    %v978 = vunpack.c.l.b16 %v364
    %v979 = vunpack.c.h.b16 %v364
    %v980 = vunpack.c.l.b16 %v365
    %v981 = vunpack.c.h.b16 %v365
    %v982 = vunpack.c.l.b16 %v366
    %v983 = vunpack.c.h.b16 %v366
    %v984 = vunpack.c.l.b16 %v367
    %v985 = vunpack.c.h.b16 %v367
    %v986 = vunpack.c.l.b16 %v368
    %v987 = vunpack.c.h.b16 %v368
    %v988 = vunpack.c.l.b16 %v369
    %v989 = vunpack.c.h.b16 %v369
    %v990 = vunpack.c.l.b16 %v370
    %v991 = vunpack.c.h.b16 %v370
    %v992 = vunpack.c.l.b16 %v371
    %v993 = vunpack.c.h.b16 %v371
    %v994 = vunpack.c.l.b16 %v372
    %v995 = vunpack.c.h.b16 %v372
    %v996 = vunpack.c.l.b16 %v373
    %v997 = vunpack.c.h.b16 %v373
    %v998 = vunpack.c.l.b16 %v374
    %v999 = vunpack.c.h.b16 %v374
    %v1000 = vunpack.c.l.b16 %v375
    %v1001 = vunpack.c.h.b16 %v375
    %v1002 = vunpack.c.l.b16 %v376
    %v1003 = vunpack.c.h.b16 %v376
    %v1004 = vunpack.c.l.b16 %v377
    %v1005 = vunpack.c.h.b16 %v377
    %v1006 = vunpack.c.l.b16 %v378
    %v1007 = vunpack.c.h.b16 %v378
    %v1008 = vunpack.c.l.b16 %v379
    %v1009 = vunpack.c.h.b16 %v379
    %v1010 = vunpack.c.l.b16 %v380
    %v1011 = vunpack.c.h.b16 %v380
    %v1012 = vunpack.c.l.b16 %v381
    %v1013 = vunpack.c.h.b16 %v381
    %v1014 = vunpack.c.l.b16 %v382
    %v1015 = vunpack.c.h.b16 %v382
    %v1016 = vunpack.c.l.b16 %v383
    %v1017 = vunpack.c.h.b16 %v383
    %v1018 = vunpack.c.l.b16 %v384
    %v1019 = vunpack.c.h.b16 %v384
    %v1020 = vunpack.c.l.b16 %v385
    %v1021 = vunpack.c.h.b16 %v385
    %v1022 = vunpack.c.l.b16 %v386
    %v1023 = vunpack.c.h.b16 %v386
    %v1024 = vunpack.c.l.b16 %v387
    %v1025 = vunpack.c.h.b16 %v387
    %v1026 = vunpack.c.l.b16 %v388
    %v1027 = vunpack.c.h.b16 %v388
    %v1028 = vunpack.c.l.b16 %v389
    %v1029 = vunpack.c.h.b16 %v389
    %v1030 = vunpack.c.l.b16 %v390
    %v1031 = vunpack.c.h.b16 %v390
    %v1032 = vunpack.c.l.b16 %v391
    %v1033 = vunpack.c.h.b16 %v391
    %v1034 = vunpack.c.l.b16 %v392
    %v1035 = vunpack.c.h.b16 %v392
    %v1036 = vunpack.c.l.b16 %v393
    %v1037 = vunpack.c.h.b16 %v393
    %v1038 = vunpack.c.l.b16 %v394
    %v1039 = vunpack.c.h.b16 %v394
    %v1040 = vunpack.c.l.b16 %v395
    %v1041 = vunpack.c.h.b16 %v395
    %v1042 = vunpack.c.l.b16 %v396
    %v1043 = vunpack.c.h.b16 %v396
    %v1044 = vunpack.c.l.b16 %v397
    %v1045 = vunpack.c.h.b16 %v397
    %v1046 = vunpack.c.l.b16 %v398
    %v1047 = vunpack.c.h.b16 %v398
    %v1048 = vunpack.c.l.b16 %v399
    %v1049 = vunpack.c.h.b16 %v399
    %v1050 = vunpack.c.l.b16 %v400
    %v1051 = vunpack.c.h.b16 %v400
    %v1052 = vunpack.c.l.b16 %v401
    %v1053 = vunpack.c.h.b16 %v401
    %v1054 = vunpack.c.l.b16 %v402
    %v1055 = vunpack.c.h.b16 %v402
    %v1056 = vunpack.c.l.b16 %v403
    %v1057 = vunpack.c.h.b16 %v403
    %v1058 = vunpack.c.l.b16 %v404
    %v1059 = vunpack.c.h.b16 %v404
    %v1060 = vunpack.c.l.b16 %v405
    %v1061 = vunpack.c.h.b16 %v405
    %v1062 = vunpack.c.l.b16 %v406
    %v1063 = vunpack.c.h.b16 %v406
    %v1064 = vunpack.c.l.b16 %v407
    %v1065 = vunpack.c.h.b16 %v407
    %v1066 = vunpack.c.l.b16 %v408
    %v1067 = vunpack.c.h.b16 %v408
    %v1068 = vunpack.c.l.b16 %v409
    %v1069 = vunpack.c.h.b16 %v409
    %v1070 = vunpack.c.l.b16 %v410
    %v1071 = vunpack.c.h.b16 %v410
    %v1072 = vunpack.c.l.b16 %v411
    %v1073 = vunpack.c.h.b16 %v411
    %v1074 = vunpack.c.l.b16 %v412
    %v1075 = vunpack.c.h.b16 %v412
    %v1076 = vunpack.c.l.b16 %v413
    %v1077 = vunpack.c.h.b16 %v413
    %v1078 = vunpack.c.l.b16 %v414
    %v1079 = vunpack.c.h.b16 %v414
    %v1080 = vunpack.c.l.b16 %v415
    %v1081 = vunpack.c.h.b16 %v415
    %v1082 = vunpack.c.l.b16 %v416
    %v1083 = vunpack.c.h.b16 %v416
    %v1084 = vunpack.c.l.b16 %v417
    %v1085 = vunpack.c.h.b16 %v417
    %v1086 = vunpack.c.l.b16 %v418
    %v1087 = vunpack.c.h.b16 %v418
    %v1088 = vunpack.c.l.b16 %v419
    %v1089 = vunpack.c.h.b16 %v419
    %v1090 = vunpack.c.l.b16 %v420
    %v1091 = vunpack.c.h.b16 %v420
    %v1092 = vunpack.c.l.b16 %v421
    %v1093 = vunpack.c.h.b16 %v421
    %v1094 = vunpack.c.l.b16 %v422
    %v1095 = vunpack.c.h.b16 %v422
    %v1096 = vunpack.c.l.b16 %v423
    %v1097 = vunpack.c.h.b16 %v423
    %v1098 = vunpack.c.l.b16 %v424
    %v1099 = vunpack.c.h.b16 %v424
    %v1100 = vunpack.c.l.b16 %v425
    %v1101 = vunpack.c.h.b16 %v425
    %v1102 = vunpack.c.l.b16 %v426
    %v1103 = vunpack.c.h.b16 %v426
    %v1104 = vunpack.c.l.b16 %v427
    %v1105 = vunpack.c.h.b16 %v427
    %v1106 = vunpack.c.l.b16 %v428
    %v1107 = vunpack.c.h.b16 %v428
    %v1108 = vunpack.c.l.b16 %v429
    %v1109 = vunpack.c.h.b16 %v429
    %v1110 = vunpack.c.l.b16 %v430
    %v1111 = vunpack.c.h.b16 %v430
    %v1112 = vunpack.c.l.b16 %v431
    %v1113 = vunpack.c.h.b16 %v431
    %v1114 = vunpack.c.l.b16 %v432
    %v1115 = vunpack.c.h.b16 %v432
    %v1116 = vunpack.c.l.b16 %v433
    %v1117 = vunpack.c.h.b16 %v433
    %v1118 = vunpack.c.l.b16 %v434
    %v1119 = vunpack.c.h.b16 %v434
    %v1120 = vunpack.c.l.b16 %v435
    %v1121 = vunpack.c.h.b16 %v435
    %v1122 = vunpack.c.l.b16 %v436
    %v1123 = vunpack.c.h.b16 %v436
    %v1124 = vunpack.c.l.b16 %v437
    %v1125 = vunpack.c.h.b16 %v437
    %v1126 = vunpack.c.l.b16 %v438
    %v1127 = vunpack.c.h.b16 %v438
    %v1128 = vunpack.c.l.b16 %v439
    %v1129 = vunpack.c.h.b16 %v439
    %v1130 = vunpack.c.l.b16 %v440
    %v1131 = vunpack.c.h.b16 %v440
    %v1132 = vunpack.c.l.b16 %v441
    %v1133 = vunpack.c.h.b16 %v441
    %v1134 = vunpack.c.l.b16 %v442
    %v1135 = vunpack.c.h.b16 %v442
    %v1136 = vunpack.c.l.b16 %v443
    %v1137 = vunpack.c.h.b16 %v443
    %v1138 = vunpack.c.l.b16 %v444
    %v1139 = vunpack.c.h.b16 %v444
    %v1140 = vunpack.c.l.b16 %v445
    %v1141 = vunpack.c.h.b16 %v445
    %v1142 = vunpack.c.l.b16 %v446
    %v1143 = vunpack.c.h.b16 %v446
    %v1144 = vunpack.c.l.b16 %v447
    %v1145 = vunpack.c.h.b16 %v447
    %v1146 = vunpack.c.l.b16 %v448
    %v1147 = vunpack.c.h.b16 %v448
    %v1148 = vunpack.c.l.b16 %v449
    %v1149 = vunpack.c.h.b16 %v449
    %v1150 = vunpack.c.l.b16 %v450
    %v1151 = vunpack.c.h.b16 %v450
    %v1152 = vunpack.c.l.b16 %v451
    %v1153 = vunpack.c.h.b16 %v451
    %v1154 = vunpack.c.l.b16 %v452
    %v1155 = vunpack.c.h.b16 %v452
    %v1156 = vunpack.c.l.b16 %v453
    %v1157 = vunpack.c.h.b16 %v453
    %v1158 = vunpack.c.l.b16 %v454
    %v1159 = vunpack.c.h.b16 %v454
    %v1160 = vunpack.c.l.b16 %v455
    %v1161 = vunpack.c.h.b16 %v455
    %v1162 = vunpack.c.l.b16 %v456
    %v1163 = vunpack.c.h.b16 %v456
    %v1164 = vunpack.c.l.b16 %v457
    %v1165 = vunpack.c.h.b16 %v457
    %v1166 = vunpack.c.l.b16 %v458
    %v1167 = vunpack.c.h.b16 %v458
    %v1168 = vunpack.c.l.b16 %v459
    %v1169 = vunpack.c.h.b16 %v459
    %v1170 = vunpack.c.l.b16 %v460
    %v1171 = vunpack.c.h.b16 %v460
    %v1172 = vunpack.c.l.b16 %v461
    %v1173 = vunpack.c.h.b16 %v461
    %v1174 = vunpack.c.l.b16 %v462
    %v1175 = vunpack.c.h.b16 %v462
    %v1176 = vunpack.c.l.b16 %v463
    %v1177 = vunpack.c.h.b16 %v463
    %v1178 = vunpack.c.l.b16 %v464
    %v1179 = vunpack.c.h.b16 %v464
    %v1180 = vunpack.c.l.b16 %v465
    %v1181 = vunpack.c.h.b16 %v465
    %v1182 = vunpack.c.l.b16 %v466
    %v1183 = vunpack.c.h.b16 %v466
    %v1184 = vunpack.c.l.b16 %v467
    %v1185 = vunpack.c.h.b16 %v467
    %v1186 = vunpack.c.l.b16 %v468
    %v1187 = vunpack.c.h.b16 %v468
    %v1188 = vunpack.c.l.b16 %v469
    %v1189 = vunpack.c.h.b16 %v469
    %v1190 = vunpack.c.l.b16 %v470
    %v1191 = vunpack.c.h.b16 %v470
    %v1192 = vunpack.c.l.b16 %v471
    %v1193 = vunpack.c.h.b16 %v471
    %v1194 = vunpack.c.l.b16 %v472
    %v1195 = vunpack.c.h.b16 %v472
    %v1196 = vunpack.c.l.b16 %v473
    %v1197 = vunpack.c.h.b16 %v473
    %v1198 = vunpack.c.l.b16 %v474
    %v1199 = vunpack.c.h.b16 %v474
    %v1200 = vunpack.c.l.b16 %v475
    %v1201 = vunpack.c.h.b16 %v475
    %v1202 = vunpack.c.l.b16 %v476
    %v1203 = vunpack.c.h.b16 %v476
    %v1204 = vunpack.c.l.b16 %v477
    %v1205 = vunpack.c.h.b16 %v477
    %v1206 = vunpack.c.l.b16 %v478
    %v1207 = vunpack.c.h.b16 %v478
    %v1208 = vunpack.c.l.b16 %v479
    %v1209 = vunpack.c.h.b16 %v479
    %v1210 = vunpack.c.l.b16 %v480
    %v1211 = vunpack.c.h.b16 %v480
    %v1212 = vunpack.c.l.b16 %v481
    %v1213 = vunpack.c.h.b16 %v481
    %v1214 = vunpack.c.l.b16 %v482
    %v1215 = vunpack.c.h.b16 %v482
    %v1216 = vunpack.c.l.b16 %v483
    %v1217 = vunpack.c.h.b16 %v483
    %v1218 = vunpack.c.l.b16 %v484
    %v1219 = vunpack.c.h.b16 %v484
    %v1220 = vunpack.c.l.b16 %v485
    %v1221 = vunpack.c.h.b16 %v485
    %v1222 = vunpack.c.l.b16 %v486
    %v1223 = vunpack.c.h.b16 %v486
    %v1224 = vunpack.c.l.b16 %v487
    %v1225 = vunpack.c.h.b16 %v487
    %v1226 = vunpack.c.l.b16 %v488
    %v1227 = vunpack.c.h.b16 %v488
    %v1228 = vunpack.c.l.b16 %v489
    %v1229 = vunpack.c.h.b16 %v489
    %v1230 = vunpack.c.l.b16 %v490
    %v1231 = vunpack.c.h.b16 %v490
    %v1232 = vunpack.c.l.b16 %v491
    %v1233 = vunpack.c.h.b16 %v491
    %v1234 = vunpack.c.l.b16 %v492
    %v1235 = vunpack.c.h.b16 %v492
    %v1236 = vunpack.c.l.b16 %v493
    %v1237 = vunpack.c.h.b16 %v493
    %v1238 = vunpack.c.l.b16 %v494
    %v1239 = vunpack.c.h.b16 %v494
    %v1240 = vunpack.c.l.b16 %v495
    %v1241 = vunpack.c.h.b16 %v495
    %v1242 = vunpack.c.l.b16 %v496
    %v1243 = vunpack.c.h.b16 %v496
    %v1244 = vunpack.c.l.b16 %v497
    %v1245 = vunpack.c.h.b16 %v497
    %v1246 = vunpack.c.l.b16 %v498
    %v1247 = vunpack.c.h.b16 %v498
    %v1248 = vunpack.c.l.b16 %v499
    %v1249 = vunpack.c.h.b16 %v499
    %v1250 = vunpack.c.l.b16 %v500
    %v1251 = vunpack.c.h.b16 %v500
    %v1252 = vunpack.c.l.b16 %v501
    %v1253 = vunpack.c.h.b16 %v501
    %v1254 = vunpack.c.l.b16 %v502
    %v1255 = vunpack.c.h.b16 %v502
    %v1256 = vunpack.c.l.b16 %v503
    %v1257 = vunpack.c.h.b16 %v503
    %v1258 = vunpack.c.l.b16 %v504
    %v1259 = vunpack.c.h.b16 %v504
    %v1260 = vunpack.c.l.b16 %v505
    %v1261 = vunpack.c.h.b16 %v505
    %v1262 = vunpack.c.l.b16 %v506
    %v1263 = vunpack.c.h.b16 %v506
    %v1264 = vunpack.c.l.b16 %v507
    %v1265 = vunpack.c.h.b16 %v507
    %v1266 = vunpack.c.l.b16 %v508
    %v1267 = vunpack.c.h.b16 %v508
    %v1268 = vunpack.c.l.b16 %v509
    %v1269 = vunpack.c.h.b16 %v509
    %v1270 = vunpack.c.l.b16 %v510
    %v1271 = vunpack.c.h.b16 %v510
    %v1272 = vunpack.c.l.b16 %v511
    %v1273 = vunpack.c.h.b16 %v511
    %v1274 = vunpack.c.l.b16 %v512
    %v1275 = vunpack.c.h.b16 %v512
    %v1276 = vunpack.c.l.b16 %v513
    %v1277 = vunpack.c.h.b16 %v513
    %v1278 = vunpack.c.l.b16 %v514
    %v1279 = vunpack.c.h.b16 %v514
    %v1280 = vunpack.c.l.b16 %v515
    %v1281 = vunpack.c.h.b16 %v515
    %v1282 = vunpack.c.l.b16 %v516
    %v1283 = vunpack.c.h.b16 %v516
    %v1284 = vunpack.c.l.b16 %v517
    %v1285 = vunpack.c.h.b16 %v517
    %v1286 = vunpack.c.l.b16 %v518
    %v1287 = vunpack.c.h.b16 %v518
    %v1288 = vunpack.c.l.b16 %v519
    %v1289 = vunpack.c.h.b16 %v519
    %v1290 = vunpack.c.l.b16 %v520
    %v1291 = vunpack.c.h.b16 %v520
    %v1292 = vunpack.c.l.b16 %v521
    %v1293 = vunpack.c.h.b16 %v521
    %v1294 = vunpack.c.l.b16 %v522
    %v1295 = vunpack.c.h.b16 %v522
    %v1296 = vunpack.c.l.b16 %v523
    %v1297 = vunpack.c.h.b16 %v523
    %v1298 = vunpack.c.l.b16 %v524
    %v1299 = vunpack.c.h.b16 %v524
    %v1300 = vunpack.c.l.b16 %v525
    %v1301 = vunpack.c.h.b16 %v525
    %v1302 = vunpack.c.l.b16 %v526
    %v1303 = vunpack.c.h.b16 %v526
    %v1304 = vunpack.c.l.b16 %v527
    %v1305 = vunpack.c.h.b16 %v527
    %v1306 = vunpack.c.l.b16 %v528
    %v1307 = vunpack.c.h.b16 %v528
    %v1308 = vunpack.c.l.b16 %v529
    %v1309 = vunpack.c.h.b16 %v529
    %v1310 = vunpack.c.l.b16 %v530
    %v1311 = vunpack.c.h.b16 %v530
    %v1312 = vunpack.c.l.b16 %v531
    %v1313 = vunpack.c.h.b16 %v531
    %v1314 = vunpack.c.l.b16 %v532
    %v1315 = vunpack.c.h.b16 %v532
    %v1316 = vunpack.c.l.b16 %v533
    %v1317 = vunpack.c.h.b16 %v533
    %v1318 = vunpack.c.l.b16 %v534
    %v1319 = vunpack.c.h.b16 %v534
    %v1320 = vunpack.c.l.b16 %v535
    %v1321 = vunpack.c.h.b16 %v535
    %v1322 = vunpack.c.l.b16 %v536
    %v1323 = vunpack.c.h.b16 %v536
    %v1324 = vunpack.c.l.b16 %v537
    %v1325 = vunpack.c.h.b16 %v537
    %v1326 = vunpack.c.l.b16 %v538
    %v1327 = vunpack.c.h.b16 %v538
    %v1328 = vunpack.c.l.b16 %v539
    %v1329 = vunpack.c.h.b16 %v539
    %v1330 = vunpack.c.l.b16 %v540
    %v1331 = vunpack.c.h.b16 %v540
    %v1332 = vunpack.c.l.b16 %v541
    %v1333 = vunpack.c.h.b16 %v541
    %v1334 = vunpack.c.l.b16 %v542
    %v1335 = vunpack.c.h.b16 %v542
    %v1336 = vunpack.c.l.b16 %v543
    %v1337 = vunpack.c.h.b16 %v543
    %v1338 = vunpack.c.l.b16 %v544
    %v1339 = vunpack.c.h.b16 %v544
    %v1340 = vunpack.c.l.b16 %v545
    %v1341 = vunpack.c.h.b16 %v545
    %v1342 = vunpack.c.l.b16 %v546
    %v1343 = vunpack.c.h.b16 %v546
    %v1344 = vunpack.c.l.b16 %v547
    %v1345 = vunpack.c.h.b16 %v547
    %v1346 = vunpack.c.l.b16 %v548
    %v1347 = vunpack.c.h.b16 %v548
    %v1348 = vunpack.c.l.b16 %v549
    %v1349 = vunpack.c.h.b16 %v549
    %v1350 = vunpack.c.l.b16 %v550
    %v1351 = vunpack.c.h.b16 %v550
    %v1352 = vunpack.c.l.b16 %v551
    %v1353 = vunpack.c.h.b16 %v551
    %v1354 = vunpack.c.l.b16 %v552
    %v1355 = vunpack.c.h.b16 %v552
    %v1356 = vunpack.c.l.b16 %v553
    %v1357 = vunpack.c.h.b16 %v553
    %v1358 = vunpack.c.l.b16 %v554
    %v1359 = vunpack.c.h.b16 %v554
    %v1360 = vunpack.c.l.b16 %v555
    %v1361 = vunpack.c.h.b16 %v555
    %v1362 = vunpack.c.l.b16 %v556
    %v1363 = vunpack.c.h.b16 %v556
    %v1364 = vunpack.c.l.b16 %v557
    %v1365 = vunpack.c.h.b16 %v557
    %v1366 = vunpack.c.l.b16 %v558
    %v1367 = vunpack.c.h.b16 %v558
    %v1368 = vunpack.c.l.b16 %v559
    %v1369 = vunpack.c.h.b16 %v559
    %v1370 = vpack.c.b16 %v866, %v858
    %v1371 = vpack.c.b16 %v867, %v859
    %v1372 = vpack.c.b16 %v868, %v860
    %v1373 = vpack.c.b16 %v869, %v861
    %v1374 = vpack.c.b16 %v870, %v862
    %v1375 = vpack.c.b16 %v871, %v863
    %v1376 = vpack.c.b16 %v872, %v864
    %v1377 = vpack.c.b16 %v873, %v865
    %v1378 = vpack.c.b16 %v882, %v874
    %v1379 = vpack.c.b16 %v883, %v875
    %v1380 = vpack.c.b16 %v884, %v876
    %v1381 = vpack.c.b16 %v885, %v877
    %v1382 = vpack.c.b16 %v886, %v878
    %v1383 = vpack.c.b16 %v887, %v879
    %v1384 = vpack.c.b16 %v888, %v880
    %v1385 = vpack.c.b16 %v889, %v881
    %v1386 = vpack.c.b16 %v898, %v890
    %v1387 = vpack.c.b16 %v899, %v891
    %v1388 = vpack.c.b16 %v900, %v892
    %v1389 = vpack.c.b16 %v901, %v893
    %v1390 = vpack.c.b16 %v902, %v894
    %v1391 = vpack.c.b16 %v903, %v895
    %v1392 = vpack.c.b16 %v904, %v896
    %v1393 = vpack.c.b16 %v905, %v897
    %v1394 = vpack.c.b16 %v914, %v906
    %v1395 = vpack.c.b16 %v915, %v907
    %v1396 = vpack.c.b16 %v916, %v908
    %v1397 = vpack.c.b16 %v917, %v909
    %v1398 = vpack.c.b16 %v918, %v910
    %v1399 = vpack.c.b16 %v919, %v911
    %v1400 = vpack.c.b16 %v920, %v912
    %v1401 = vpack.c.b16 %v921, %v913
    %v1402 = vpack.c.b16 %v930, %v922
    %v1403 = vpack.c.b16 %v931, %v923
    %v1404 = vpack.c.b16 %v932, %v924
    %v1405 = vpack.c.b16 %v933, %v925
    %v1406 = vpack.c.b16 %v934, %v926
    %v1407 = vpack.c.b16 %v935, %v927
    %v1408 = vpack.c.b16 %v936, %v928
    %v1409 = vpack.c.b16 %v937, %v929
    %v1410 = vpack.c.b16 %v946, %v938
    %v1411 = vpack.c.b16 %v947, %v939
    %v1412 = vpack.c.b16 %v948, %v940
    %v1413 = vpack.c.b16 %v949, %v941
    %v1414 = vpack.c.b16 %v950, %v942
    %v1415 = vpack.c.b16 %v951, %v943
    %v1416 = vpack.c.b16 %v952, %v944
    %v1417 = vpack.c.b16 %v953, %v945
    %v1418 = vpack.c.b16 %v962, %v954
    %v1419 = vpack.c.b16 %v963, %v955
    %v1420 = vpack.c.b16 %v964, %v956
    %v1421 = vpack.c.b16 %v965, %v957
    %v1422 = vpack.c.b16 %v966, %v958
    %v1423 = vpack.c.b16 %v967, %v959
    %v1424 = vpack.c.b16 %v968, %v960
    %v1425 = vpack.c.b16 %v969, %v961
    %v1426 = vpack.c.b16 %v978, %v970
    %v1427 = vpack.c.b16 %v979, %v971
    %v1428 = vpack.c.b16 %v980, %v972
    %v1429 = vpack.c.b16 %v981, %v973
    %v1430 = vpack.c.b16 %v982, %v974
    %v1431 = vpack.c.b16 %v983, %v975
    %v1432 = vpack.c.b16 %v984, %v976
    %v1433 = vpack.c.b16 %v985, %v977
    %v1434 = vpack.c.b16 %v994, %v986
    %v1435 = vpack.c.b16 %v995, %v987
    %v1436 = vpack.c.b16 %v996, %v988
    %v1437 = vpack.c.b16 %v997, %v989
    %v1438 = vpack.c.b16 %v998, %v990
    %v1439 = vpack.c.b16 %v999, %v991
    %v1440 = vpack.c.b16 %v1000, %v992
    %v1441 = vpack.c.b16 %v1001, %v993
    %v1442 = vpack.c.b16 %v1010, %v1002
    %v1443 = vpack.c.b16 %v1011, %v1003
    %v1444 = vpack.c.b16 %v1012, %v1004
    %v1445 = vpack.c.b16 %v1013, %v1005
    %v1446 = vpack.c.b16 %v1014, %v1006
    %v1447 = vpack.c.b16 %v1015, %v1007
    %v1448 = vpack.c.b16 %v1016, %v1008
    %v1449 = vpack.c.b16 %v1017, %v1009
    %v1450 = vpack.c.b16 %v1026, %v1018
    %v1451 = vpack.c.b16 %v1027, %v1019
    %v1452 = vpack.c.b16 %v1028, %v1020
    %v1453 = vpack.c.b16 %v1029, %v1021
    %v1454 = vpack.c.b16 %v1030, %v1022
    %v1455 = vpack.c.b16 %v1031, %v1023
    %v1456 = vpack.c.b16 %v1032, %v1024
    %v1457 = vpack.c.b16 %v1033, %v1025
    %v1458 = vpack.c.b16 %v1042, %v1034
    %v1459 = vpack.c.b16 %v1043, %v1035
    %v1460 = vpack.c.b16 %v1044, %v1036
    %v1461 = vpack.c.b16 %v1045, %v1037
    %v1462 = vpack.c.b16 %v1046, %v1038
    %v1463 = vpack.c.b16 %v1047, %v1039
    %v1464 = vpack.c.b16 %v1048, %v1040
    %v1465 = vpack.c.b16 %v1049, %v1041
    %v1466 = vpack.c.b16 %v1058, %v1050
    %v1467 = vpack.c.b16 %v1059, %v1051
    %v1468 = vpack.c.b16 %v1060, %v1052
    %v1469 = vpack.c.b16 %v1061, %v1053
    %v1470 = vpack.c.b16 %v1062, %v1054
    %v1471 = vpack.c.b16 %v1063, %v1055
    %v1472 = vpack.c.b16 %v1064, %v1056
    %v1473 = vpack.c.b16 %v1065, %v1057
    %v1474 = vpack.c.b16 %v1074, %v1066
    %v1475 = vpack.c.b16 %v1075, %v1067
    %v1476 = vpack.c.b16 %v1076, %v1068
    %v1477 = vpack.c.b16 %v1077, %v1069
    %v1478 = vpack.c.b16 %v1078, %v1070
    %v1479 = vpack.c.b16 %v1079, %v1071
    %v1480 = vpack.c.b16 %v1080, %v1072
    %v1481 = vpack.c.b16 %v1081, %v1073
    %v1482 = vpack.c.b16 %v1090, %v1082
    %v1483 = vpack.c.b16 %v1091, %v1083
    %v1484 = vpack.c.b16 %v1092, %v1084
    %v1485 = vpack.c.b16 %v1093, %v1085
    %v1486 = vpack.c.b16 %v1094, %v1086
    %v1487 = vpack.c.b16 %v1095, %v1087
    %v1488 = vpack.c.b16 %v1096, %v1088
    %v1489 = vpack.c.b16 %v1097, %v1089
    %v1490 = vpack.c.b16 %v1106, %v1098
    %v1491 = vpack.c.b16 %v1107, %v1099
    %v1492 = vpack.c.b16 %v1108, %v1100
    %v1493 = vpack.c.b16 %v1109, %v1101
    %v1494 = vpack.c.b16 %v1110, %v1102
    %v1495 = vpack.c.b16 %v1111, %v1103
    %v1496 = vpack.c.b16 %v1112, %v1104
    %v1497 = vpack.c.b16 %v1113, %v1105
    %v1498 = vpack.c.b16 %v1122, %v1114
    %v1499 = vpack.c.b16 %v1123, %v1115
    %v1500 = vpack.c.b16 %v1124, %v1116
    %v1501 = vpack.c.b16 %v1125, %v1117
    %v1502 = vpack.c.b16 %v1126, %v1118
    %v1503 = vpack.c.b16 %v1127, %v1119
    %v1504 = vpack.c.b16 %v1128, %v1120
    %v1505 = vpack.c.b16 %v1129, %v1121
    %v1506 = vpack.c.b16 %v1138, %v1130
    %v1507 = vpack.c.b16 %v1139, %v1131
    %v1508 = vpack.c.b16 %v1140, %v1132
    %v1509 = vpack.c.b16 %v1141, %v1133
    %v1510 = vpack.c.b16 %v1142, %v1134
    %v1511 = vpack.c.b16 %v1143, %v1135
    %v1512 = vpack.c.b16 %v1144, %v1136
    %v1513 = vpack.c.b16 %v1145, %v1137
    %v1514 = vpack.c.b16 %v1154, %v1146
    %v1515 = vpack.c.b16 %v1155, %v1147
    %v1516 = vpack.c.b16 %v1156, %v1148
    %v1517 = vpack.c.b16 %v1157, %v1149
    %v1518 = vpack.c.b16 %v1158, %v1150
    %v1519 = vpack.c.b16 %v1159, %v1151
    %v1520 = vpack.c.b16 %v1160, %v1152
    %v1521 = vpack.c.b16 %v1161, %v1153
    %v1522 = vpack.c.b16 %v1170, %v1162
    %v1523 = vpack.c.b16 %v1171, %v1163
    %v1524 = vpack.c.b16 %v1172, %v1164
    %v1525 = vpack.c.b16 %v1173, %v1165
    %v1526 = vpack.c.b16 %v1174, %v1166
    %v1527 = vpack.c.b16 %v1175, %v1167
    %v1528 = vpack.c.b16 %v1176, %v1168
    %v1529 = vpack.c.b16 %v1177, %v1169
    %v1530 = vpack.c.b16 %v1186, %v1178
    %v1531 = vpack.c.b16 %v1187, %v1179
    %v1532 = vpack.c.b16 %v1188, %v1180
    %v1533 = vpack.c.b16 %v1189, %v1181
    %v1534 = vpack.c.b16 %v1190, %v1182
    %v1535 = vpack.c.b16 %v1191, %v1183
    %v1536 = vpack.c.b16 %v1192, %v1184
    %v1537 = vpack.c.b16 %v1193, %v1185
    %v1538 = vpack.c.b16 %v1202, %v1194
    %v1539 = vpack.c.b16 %v1203, %v1195
    %v1540 = vpack.c.b16 %v1204, %v1196
    %v1541 = vpack.c.b16 %v1205, %v1197
    %v1542 = vpack.c.b16 %v1206, %v1198
    %v1543 = vpack.c.b16 %v1207, %v1199
    %v1544 = vpack.c.b16 %v1208, %v1200
    %v1545 = vpack.c.b16 %v1209, %v1201
    %v1546 = vpack.c.b16 %v1218, %v1210
    %v1547 = vpack.c.b16 %v1219, %v1211
    %v1548 = vpack.c.b16 %v1220, %v1212
    %v1549 = vpack.c.b16 %v1221, %v1213
    %v1550 = vpack.c.b16 %v1222, %v1214
    %v1551 = vpack.c.b16 %v1223, %v1215
    %v1552 = vpack.c.b16 %v1224, %v1216
    %v1553 = vpack.c.b16 %v1225, %v1217
    %v1554 = vpack.c.b16 %v1234, %v1226
    %v1555 = vpack.c.b16 %v1235, %v1227
    %v1556 = vpack.c.b16 %v1236, %v1228
    %v1557 = vpack.c.b16 %v1237, %v1229
    %v1558 = vpack.c.b16 %v1238, %v1230
    %v1559 = vpack.c.b16 %v1239, %v1231
    %v1560 = vpack.c.b16 %v1240, %v1232
    %v1561 = vpack.c.b16 %v1241, %v1233
    %v1562 = vpack.c.b16 %v1250, %v1242
    %v1563 = vpack.c.b16 %v1251, %v1243
    %v1564 = vpack.c.b16 %v1252, %v1244
    %v1565 = vpack.c.b16 %v1253, %v1245
    %v1566 = vpack.c.b16 %v1254, %v1246
    %v1567 = vpack.c.b16 %v1255, %v1247
    %v1568 = vpack.c.b16 %v1256, %v1248
    %v1569 = vpack.c.b16 %v1257, %v1249
    %v1570 = vpack.c.b16 %v1266, %v1258
    %v1571 = vpack.c.b16 %v1267, %v1259
    %v1572 = vpack.c.b16 %v1268, %v1260
    %v1573 = vpack.c.b16 %v1269, %v1261
    %v1574 = vpack.c.b16 %v1270, %v1262
    %v1575 = vpack.c.b16 %v1271, %v1263
    %v1576 = vpack.c.b16 %v1272, %v1264
    %v1577 = vpack.c.b16 %v1273, %v1265
    %v1578 = vpack.c.b16 %v1282, %v1274
    %v1579 = vpack.c.b16 %v1283, %v1275
    %v1580 = vpack.c.b16 %v1284, %v1276
    %v1581 = vpack.c.b16 %v1285, %v1277
    %v1582 = vpack.c.b16 %v1286, %v1278
    %v1583 = vpack.c.b16 %v1287, %v1279
    %v1584 = vpack.c.b16 %v1288, %v1280
    %v1585 = vpack.c.b16 %v1289, %v1281
    %v1586 = vpack.c.b16 %v1298, %v1290
    %v1587 = vpack.c.b16 %v1299, %v1291
    %v1588 = vpack.c.b16 %v1300, %v1292
    %v1589 = vpack.c.b16 %v1301, %v1293
    %v1590 = vpack.c.b16 %v1302, %v1294
    %v1591 = vpack.c.b16 %v1303, %v1295
    %v1592 = vpack.c.b16 %v1304, %v1296
    %v1593 = vpack.c.b16 %v1305, %v1297
    %v1594 = vpack.c.b16 %v1314, %v1306
    %v1595 = vpack.c.b16 %v1315, %v1307
    %v1596 = vpack.c.b16 %v1316, %v1308
    %v1597 = vpack.c.b16 %v1317, %v1309
    %v1598 = vpack.c.b16 %v1318, %v1310
    %v1599 = vpack.c.b16 %v1319, %v1311
    %v1600 = vpack.c.b16 %v1320, %v1312
    %v1601 = vpack.c.b16 %v1321, %v1313
    %v1602 = vpack.c.b16 %v1330, %v1322
    %v1603 = vpack.c.b16 %v1331, %v1323
    %v1604 = vpack.c.b16 %v1332, %v1324
    %v1605 = vpack.c.b16 %v1333, %v1325
    %v1606 = vpack.c.b16 %v1334, %v1326
    %v1607 = vpack.c.b16 %v1335, %v1327
    %v1608 = vpack.c.b16 %v1336, %v1328
    %v1609 = vpack.c.b16 %v1337, %v1329
    %v1610 = vpack.c.b16 %v1346, %v1338
    %v1611 = vpack.c.b16 %v1347, %v1339
    %v1612 = vpack.c.b16 %v1348, %v1340
    %v1613 = vpack.c.b16 %v1349, %v1341
    %v1614 = vpack.c.b16 %v1350, %v1342
    %v1615 = vpack.c.b16 %v1351, %v1343
    %v1616 = vpack.c.b16 %v1352, %v1344
    %v1617 = vpack.c.b16 %v1353, %v1345
    %v1618 = vpack.c.b16 %v1362, %v1354
    %v1619 = vpack.c.b16 %v1363, %v1355
    %v1620 = vpack.c.b16 %v1364, %v1356
    %v1621 = vpack.c.b16 %v1365, %v1357
    %v1622 = vpack.c.b16 %v1366, %v1358
    %v1623 = vpack.c.b16 %v1367, %v1359
    %v1624 = vpack.c.b16 %v1368, %v1360
    %v1625 = vpack.c.b16 %v1369, %v1361
    %1882 = vmatprep.subr.bf16.mxu0 %v1371
    %1883 = vmatpush1.bf16.msra.mxu0 %v1370
    %1884 = vmatprep.subr.bf16.mxu0 %v1379
    %1885 = vmatpush1.bf16.msra.mxu0 %v1378
    %1886 = vmatprep.subr.bf16.mxu0 %v1387
    %1887 = vmatpush1.bf16.msra.mxu0 %v1386
    %1888 = vmatprep.subr.bf16.mxu0 %v1395
    %1889 = vmatpush1.bf16.msra.mxu0 %v1394
    %1890 = vmatprep.subr.bf16.mxu0 %v1403
    %1891 = vmatpush1.bf16.msra.mxu0 %v1402
    %1892 = vmatprep.subr.bf16.mxu0 %v1411
    %1893 = vmatpush1.bf16.msra.mxu0 %v1410
    %1894 = vmatprep.subr.bf16.mxu0 %v1419
    %1895 = vmatpush1.bf16.msra.mxu0 %v1418
    %1896 = vmatprep.subr.bf16.mxu0 %v1427
    %1897 = vmatpush1.bf16.msra.mxu0 %v1426
    %1898 = vmatprep.subr.bf16.mxu0 %v1435
    %1899 = vmatpush1.bf16.msra.mxu0 %v1434
    %1900 = vmatprep.subr.bf16.mxu0 %v1443
    %1901 = vmatpush1.bf16.msra.mxu0 %v1442
    %1902 = vmatprep.subr.bf16.mxu0 %v1451
    %1903 = vmatpush1.bf16.msra.mxu0 %v1450
    %1904 = vmatprep.subr.bf16.mxu0 %v1459
    %1905 = vmatpush1.bf16.msra.mxu0 %v1458
    %1906 = vmatprep.subr.bf16.mxu0 %v1467
    %1907 = vmatpush1.bf16.msra.mxu0 %v1466
    %1908 = vmatprep.subr.bf16.mxu0 %v1475
    %1909 = vmatpush1.bf16.msra.mxu0 %v1474
    %1910 = vmatprep.subr.bf16.mxu0 %v1483
    %1911 = vmatpush1.bf16.msra.mxu0 %v1482
    %1912 = vmatprep.subr.bf16.mxu0 %v1491
    %1913 = vmatpush1.bf16.msra.mxu0 %v1490
    %1914 = vmatprep.mubr.bf16.mxu0 %v301
    %1915 = vmatmul.mubr.bf16.gmra.mrb[0].mxu0 %v300
    %v1916 = vpop.f32.mrb[0].mxu0
    %v1917 = vadd.f32 %v565, %v1916
    %v1918 = vpop.f32.mrb[0].mxu0
    %v1919 = vadd.f32 %v569, %v1918
    %v1920 = vpop.f32.mrb[0].mxu0
    %v1921 = vpop.f32.mrb[0].mxu0
    %1922 = vdwg.mxu0
    %1923 = vmatprep.subr.bf16.mxu0 %v1499
    %1924 = vmatpush1.bf16.msra.mxu0 %v1498
    %1925 = vmatprep.subr.bf16.mxu0 %v1507
    %1926 = vmatpush1.bf16.msra.mxu0 %v1506
    %1927 = vmatprep.subr.bf16.mxu0 %v1515
    %1928 = vmatpush1.bf16.msra.mxu0 %v1514
    %1929 = vmatprep.subr.bf16.mxu0 %v1523
    %1930 = vmatpush1.bf16.msra.mxu0 %v1522
    %1931 = vmatprep.subr.bf16.mxu0 %v1531
    %1932 = vmatpush1.bf16.msra.mxu0 %v1530
    %1933 = vmatprep.subr.bf16.mxu0 %v1539
    %1934 = vmatpush1.bf16.msra.mxu0 %v1538
    %1935 = vmatprep.subr.bf16.mxu0 %v1547
    %1936 = vmatpush1.bf16.msra.mxu0 %v1546
    %1937 = vmatprep.subr.bf16.mxu0 %v1555
    %1938 = vmatpush1.bf16.msra.mxu0 %v1554
    %1939 = vmatprep.subr.bf16.mxu0 %v1563
    %1940 = vmatpush1.bf16.msra.mxu0 %v1562
    %1941 = vmatprep.subr.bf16.mxu0 %v1571
    %1942 = vmatpush1.bf16.msra.mxu0 %v1570
    %1943 = vmatprep.subr.bf16.mxu0 %v1579
    %1944 = vmatpush1.bf16.msra.mxu0 %v1578
    %1945 = vmatprep.subr.bf16.mxu0 %v1587
    %1946 = vmatpush1.bf16.msra.mxu0 %v1586
    %1947 = vmatprep.subr.bf16.mxu0 %v1595
    %1948 = vmatpush1.bf16.msra.mxu0 %v1594
    %1949 = vmatprep.subr.bf16.mxu0 %v1603
    %1950 = vmatpush1.bf16.msra.mxu0 %v1602
    %1951 = vmatprep.subr.bf16.mxu0 %v1611
    %1952 = vmatpush1.bf16.msra.mxu0 %v1610
    %1953 = vmatprep.subr.bf16.mxu0 %v1619
    %1954 = vmatpush1.bf16.msra.mxu0 %v1618
    %1955 = vmatprep.mubr.bf16.mxu0 %v303
    %1956 = vmatmul.mubr.bf16.gmra.mrb[0].mxu0 %v302
    %v1957 = vpop.f32.mrb[0].mxu0
    %v1958 = vadd.f32 %v1917, %v1957
    %v1959 = vpop.f32.mrb[0].mxu0
    %v1960 = vadd.f32 %v1919, %v1959
    %v1961 = vpop.f32.mrb[0].mxu0
    %v1962 = vpop.f32.mrb[0].mxu0
    %1963 = vdwg.mxu0
    %1964 = vmatprep.subr.bf16.mxu0 %v1373
    %1965 = vmatpush1.bf16.msra.mxu0 %v1372
    %1966 = vmatprep.subr.bf16.mxu0 %v1381
    %1967 = vmatpush1.bf16.msra.mxu0 %v1380
    %1968 = vmatprep.subr.bf16.mxu0 %v1389
    %1969 = vmatpush1.bf16.msra.mxu0 %v1388
    %1970 = vmatprep.subr.bf16.mxu0 %v1397
    %1971 = vmatpush1.bf16.msra.mxu0 %v1396
    %1972 = vmatprep.subr.bf16.mxu0 %v1405
    %1973 = vmatpush1.bf16.msra.mxu0 %v1404
    %1974 = vmatprep.subr.bf16.mxu0 %v1413
    %1975 = vmatpush1.bf16.msra.mxu0 %v1412
    %1976 = vmatprep.subr.bf16.mxu0 %v1421
    %1977 = vmatpush1.bf16.msra.mxu0 %v1420
    %1978 = vmatprep.subr.bf16.mxu0 %v1429
    %1979 = vmatpush1.bf16.msra.mxu0 %v1428
    %1980 = vmatprep.subr.bf16.mxu0 %v1437
    %1981 = vmatpush1.bf16.msra.mxu0 %v1436
    %1982 = vmatprep.subr.bf16.mxu0 %v1445
    %1983 = vmatpush1.bf16.msra.mxu0 %v1444
    %1984 = vmatprep.subr.bf16.mxu0 %v1453
    %1985 = vmatpush1.bf16.msra.mxu0 %v1452
    %1986 = vmatprep.subr.bf16.mxu0 %v1461
    %1987 = vmatpush1.bf16.msra.mxu0 %v1460
    %1988 = vmatprep.subr.bf16.mxu0 %v1469
    %1989 = vmatpush1.bf16.msra.mxu0 %v1468
    %1990 = vmatprep.subr.bf16.mxu0 %v1477
    %1991 = vmatpush1.bf16.msra.mxu0 %v1476
    %1992 = vmatprep.subr.bf16.mxu0 %v1485
    %1993 = vmatpush1.bf16.msra.mxu0 %v1484
    %1994 = vmatprep.subr.bf16.mxu0 %v1493
    %1995 = vmatpush1.bf16.msra.mxu0 %v1492
    %1996 = vmatprep.mubr.bf16.mxu0 %v301
    %1997 = vmatmul.mubr.bf16.gmra.mrb[0].mxu0 %v300
    %v1998 = vpop.f32.mrb[0].mxu0
    %v1999 = vadd.f32 %v573, %v1998
    %v2000 = vpop.f32.mrb[0].mxu0
    %v2001 = vadd.f32 %v577, %v2000
    %v2002 = vpop.f32.mrb[0].mxu0
    %v2003 = vpop.f32.mrb[0].mxu0
    %2004 = vdwg.mxu0
    %2005 = vmatprep.subr.bf16.mxu0 %v1501
    %2006 = vmatpush1.bf16.msra.mxu0 %v1500
    %2007 = vmatprep.subr.bf16.mxu0 %v1509
    %2008 = vmatpush1.bf16.msra.mxu0 %v1508
    %2009 = vmatprep.subr.bf16.mxu0 %v1517
    %2010 = vmatpush1.bf16.msra.mxu0 %v1516
    %2011 = vmatprep.subr.bf16.mxu0 %v1525
    %2012 = vmatpush1.bf16.msra.mxu0 %v1524
    %2013 = vmatprep.subr.bf16.mxu0 %v1533
    %2014 = vmatpush1.bf16.msra.mxu0 %v1532
    %2015 = vmatprep.subr.bf16.mxu0 %v1541
    %2016 = vmatpush1.bf16.msra.mxu0 %v1540
    %2017 = vmatprep.subr.bf16.mxu0 %v1549
    %2018 = vmatpush1.bf16.msra.mxu0 %v1548
    %2019 = vmatprep.subr.bf16.mxu0 %v1557
    %2020 = vmatpush1.bf16.msra.mxu0 %v1556
    %2021 = vmatprep.subr.bf16.mxu0 %v1565
    %2022 = vmatpush1.bf16.msra.mxu0 %v1564
    %2023 = vmatprep.subr.bf16.mxu0 %v1573
    %2024 = vmatpush1.bf16.msra.mxu0 %v1572
    %2025 = vmatprep.subr.bf16.mxu0 %v1581
    %2026 = vmatpush1.bf16.msra.mxu0 %v1580
    %2027 = vmatprep.subr.bf16.mxu0 %v1589
    %2028 = vmatpush1.bf16.msra.mxu0 %v1588
    %2029 = vmatprep.subr.bf16.mxu0 %v1597
    %2030 = vmatpush1.bf16.msra.mxu0 %v1596
    %2031 = vmatprep.subr.bf16.mxu0 %v1605
    %2032 = vmatpush1.bf16.msra.mxu0 %v1604
    %2033 = vmatprep.subr.bf16.mxu0 %v1613
    %2034 = vmatpush1.bf16.msra.mxu0 %v1612
    %2035 = vmatprep.subr.bf16.mxu0 %v1621
    %2036 = vmatpush1.bf16.msra.mxu0 %v1620
    %2037 = vmatprep.mubr.bf16.mxu0 %v303
    %2038 = vmatmul.mubr.bf16.gmra.mrb[0].mxu0 %v302
    %v2039 = vpop.f32.mrb[0].mxu0
    %v2040 = vadd.f32 %v1999, %v2039
    %v2041 = vpop.f32.mrb[0].mxu0
    %v2042 = vadd.f32 %v2001, %v2041
    %v2043 = vpop.f32.mrb[0].mxu0
    %v2044 = vpop.f32.mrb[0].mxu0
    %2045 = vdwg.mxu0
    %2046 = vmatprep.subr.bf16.mxu0 %v1375
    %2047 = vmatpush1.bf16.msra.mxu0 %v1374
    %2048 = vmatprep.subr.bf16.mxu0 %v1383
    %2049 = vmatpush1.bf16.msra.mxu0 %v1382
    %2050 = vmatprep.subr.bf16.mxu0 %v1391
    %2051 = vmatpush1.bf16.msra.mxu0 %v1390
    %2052 = vmatprep.subr.bf16.mxu0 %v1399
    %2053 = vmatpush1.bf16.msra.mxu0 %v1398
    %2054 = vmatprep.subr.bf16.mxu0 %v1407
    %2055 = vmatpush1.bf16.msra.mxu0 %v1406
    %2056 = vmatprep.subr.bf16.mxu0 %v1415
    %2057 = vmatpush1.bf16.msra.mxu0 %v1414
    %2058 = vmatprep.subr.bf16.mxu0 %v1423
    %2059 = vmatpush1.bf16.msra.mxu0 %v1422
    %2060 = vmatprep.subr.bf16.mxu0 %v1431
    %2061 = vmatpush1.bf16.msra.mxu0 %v1430
    %2062 = vmatprep.subr.bf16.mxu0 %v1439
    %2063 = vmatpush1.bf16.msra.mxu0 %v1438
    %2064 = vmatprep.subr.bf16.mxu0 %v1447
    %2065 = vmatpush1.bf16.msra.mxu0 %v1446
    %2066 = vmatprep.subr.bf16.mxu0 %v1455
    %2067 = vmatpush1.bf16.msra.mxu0 %v1454
    %2068 = vmatprep.subr.bf16.mxu0 %v1463
    %2069 = vmatpush1.bf16.msra.mxu0 %v1462
    %2070 = vmatprep.subr.bf16.mxu0 %v1471
    %2071 = vmatpush1.bf16.msra.mxu0 %v1470
    %2072 = vmatprep.subr.bf16.mxu0 %v1479
    %2073 = vmatpush1.bf16.msra.mxu0 %v1478
    %2074 = vmatprep.subr.bf16.mxu0 %v1487
    %2075 = vmatpush1.bf16.msra.mxu0 %v1486
    %2076 = vmatprep.subr.bf16.mxu0 %v1495
    %2077 = vmatpush1.bf16.msra.mxu0 %v1494
    %2078 = vmatprep.mubr.bf16.mxu0 %v301
    %2079 = vmatmul.mubr.bf16.gmra.mrb[0].mxu0 %v300
    %v2080 = vpop.f32.mrb[0].mxu0
    %v2081 = vadd.f32 %v581, %v2080
    %v2082 = vpop.f32.mrb[0].mxu0
    %v2083 = vadd.f32 %v585, %v2082
    %v2084 = vpop.f32.mrb[0].mxu0
    %v2085 = vpop.f32.mrb[0].mxu0
    %2086 = vdwg.mxu0
    %2087 = vmatprep.subr.bf16.mxu0 %v1503
    %2088 = vmatpush1.bf16.msra.mxu0 %v1502
    %2089 = vmatprep.subr.bf16.mxu0 %v1511
    %2090 = vmatpush1.bf16.msra.mxu0 %v1510
    %2091 = vmatprep.subr.bf16.mxu0 %v1519
    %2092 = vmatpush1.bf16.msra.mxu0 %v1518
    %2093 = vmatprep.subr.bf16.mxu0 %v1527
    %2094 = vmatpush1.bf16.msra.mxu0 %v1526
    %2095 = vmatprep.subr.bf16.mxu0 %v1535
    %2096 = vmatpush1.bf16.msra.mxu0 %v1534
    %2097 = vmatprep.subr.bf16.mxu0 %v1543
    %2098 = vmatpush1.bf16.msra.mxu0 %v1542
    %2099 = vmatprep.subr.bf16.mxu0 %v1551
    %2100 = vmatpush1.bf16.msra.mxu0 %v1550
    %2101 = vmatprep.subr.bf16.mxu0 %v1559
    %2102 = vmatpush1.bf16.msra.mxu0 %v1558
    %2103 = vmatprep.subr.bf16.mxu0 %v1567
    %2104 = vmatpush1.bf16.msra.mxu0 %v1566
    %2105 = vmatprep.subr.bf16.mxu0 %v1575
    %2106 = vmatpush1.bf16.msra.mxu0 %v1574
    %2107 = vmatprep.subr.bf16.mxu0 %v1583
    %2108 = vmatpush1.bf16.msra.mxu0 %v1582
    %2109 = vmatprep.subr.bf16.mxu0 %v1591
    %2110 = vmatpush1.bf16.msra.mxu0 %v1590
    %2111 = vmatprep.subr.bf16.mxu0 %v1599
    %2112 = vmatpush1.bf16.msra.mxu0 %v1598
    %2113 = vmatprep.subr.bf16.mxu0 %v1607
    %2114 = vmatpush1.bf16.msra.mxu0 %v1606
    %2115 = vmatprep.subr.bf16.mxu0 %v1615
    %2116 = vmatpush1.bf16.msra.mxu0 %v1614
    %2117 = vmatprep.subr.bf16.mxu0 %v1623
    %2118 = vmatpush1.bf16.msra.mxu0 %v1622
    %2119 = vmatprep.mubr.bf16.mxu0 %v303
    %2120 = vmatmul.mubr.bf16.gmra.mrb[0].mxu0 %v302
    %v2121 = vpop.f32.mrb[0].mxu0
    %v2122 = vadd.f32 %v2081, %v2121
    %v2123 = vpop.f32.mrb[0].mxu0
    %v2124 = vadd.f32 %v2083, %v2123
    %v2125 = vpop.f32.mrb[0].mxu0
    %v2126 = vpop.f32.mrb[0].mxu0
    %2127 = vdwg.mxu0
    %2128 = vmatprep.subr.bf16.mxu0 %v1377
    %2129 = vmatpush1.bf16.msra.mxu0 %v1376
    %2130 = vmatprep.subr.bf16.mxu0 %v1385
    %2131 = vmatpush1.bf16.msra.mxu0 %v1384
    %2132 = vmatprep.subr.bf16.mxu0 %v1393
    %2133 = vmatpush1.bf16.msra.mxu0 %v1392
    %2134 = vmatprep.subr.bf16.mxu0 %v1401
    %2135 = vmatpush1.bf16.msra.mxu0 %v1400
    %2136 = vmatprep.subr.bf16.mxu0 %v1409
    %2137 = vmatpush1.bf16.msra.mxu0 %v1408
    %2138 = vmatprep.subr.bf16.mxu0 %v1417
    %2139 = vmatpush1.bf16.msra.mxu0 %v1416
    %2140 = vmatprep.subr.bf16.mxu0 %v1425
    %2141 = vmatpush1.bf16.msra.mxu0 %v1424
    %2142 = vmatprep.subr.bf16.mxu0 %v1433
    %2143 = vmatpush1.bf16.msra.mxu0 %v1432
    %2144 = vmatprep.subr.bf16.mxu0 %v1441
    %2145 = vmatpush1.bf16.msra.mxu0 %v1440
    %2146 = vmatprep.subr.bf16.mxu0 %v1449
    %2147 = vmatpush1.bf16.msra.mxu0 %v1448
    %2148 = vmatprep.subr.bf16.mxu0 %v1457
    %2149 = vmatpush1.bf16.msra.mxu0 %v1456
    %2150 = vmatprep.subr.bf16.mxu0 %v1465
    %2151 = vmatpush1.bf16.msra.mxu0 %v1464
    %2152 = vmatprep.subr.bf16.mxu0 %v1473
    %2153 = vmatpush1.bf16.msra.mxu0 %v1472
    %2154 = vmatprep.subr.bf16.mxu0 %v1481
    %2155 = vmatpush1.bf16.msra.mxu0 %v1480
    %2156 = vmatprep.subr.bf16.mxu0 %v1489
    %2157 = vmatpush1.bf16.msra.mxu0 %v1488
    %2158 = vmatprep.subr.bf16.mxu0 %v1497
    %2159 = vmatpush1.bf16.msra.mxu0 %v1496
    %2160 = vmatprep.mubr.bf16.mxu0 %v301
    %2161 = vmatmul.mubr.bf16.gmra.mrb[0].mxu0 %v300
    %v2162 = vpop.f32.mrb[0].mxu0
    %v2163 = vadd.f32 %v589, %v2162
    %v2164 = vpop.f32.mrb[0].mxu0
    %v2165 = vadd.f32 %v593, %v2164
    %v2166 = vpop.f32.mrb[0].mxu0
    %v2167 = vpop.f32.mrb[0].mxu0
    %2168 = vdwg.mxu0
    %2169 = vmatprep.subr.bf16.mxu0 %v1505
    %2170 = vmatpush1.bf16.msra.mxu0 %v1504
    %2171 = vmatprep.subr.bf16.mxu0 %v1513
    %2172 = vmatpush1.bf16.msra.mxu0 %v1512
    %2173 = vmatprep.subr.bf16.mxu0 %v1521
    %2174 = vmatpush1.bf16.msra.mxu0 %v1520
    %2175 = vmatprep.subr.bf16.mxu0 %v1529
    %2176 = vmatpush1.bf16.msra.mxu0 %v1528
    %2177 = vmatprep.subr.bf16.mxu0 %v1537
    %2178 = vmatpush1.bf16.msra.mxu0 %v1536
    %2179 = vmatprep.subr.bf16.mxu0 %v1545
    %2180 = vmatpush1.bf16.msra.mxu0 %v1544
    %2181 = vmatprep.subr.bf16.mxu0 %v1553
    %2182 = vmatpush1.bf16.msra.mxu0 %v1552
    %2183 = vmatprep.subr.bf16.mxu0 %v1561
    %2184 = vmatpush1.bf16.msra.mxu0 %v1560
    %2185 = vmatprep.subr.bf16.mxu0 %v1569
    %2186 = vmatpush1.bf16.msra.mxu0 %v1568
    %2187 = vmatprep.subr.bf16.mxu0 %v1577
    %2188 = vmatpush1.bf16.msra.mxu0 %v1576
    %2189 = vmatprep.subr.bf16.mxu0 %v1585
    %2190 = vmatpush1.bf16.msra.mxu0 %v1584
    %2191 = vmatprep.subr.bf16.mxu0 %v1593
    %2192 = vmatpush1.bf16.msra.mxu0 %v1592
    %2193 = vmatprep.subr.bf16.mxu0 %v1601
    %2194 = vmatpush1.bf16.msra.mxu0 %v1600
    %2195 = vmatprep.subr.bf16.mxu0 %v1609
    %2196 = vmatpush1.bf16.msra.mxu0 %v1608
    %2197 = vmatprep.subr.bf16.mxu0 %v1617
    %2198 = vmatpush1.bf16.msra.mxu0 %v1616
    %2199 = vmatprep.subr.bf16.mxu0 %v1625
    %2200 = vmatpush1.bf16.msra.mxu0 %v1624
    %2201 = vmatprep.mubr.bf16.mxu0 %v303
    %2202 = vmatmul.mubr.bf16.gmra.mrb[0].mxu0 %v302
    %v2203 = vpop.f32.mrb[0].mxu0
    %v2204 = vadd.f32 %v2163, %v2203
    %v2205 = vpop.f32.mrb[0].mxu0
    %v2206 = vadd.f32 %v2165, %v2205
    %v2207 = vpop.f32.mrb[0].mxu0
    %v2208 = vpop.f32.mrb[0].mxu0
    %2209 = vdwg.mxu0
    %v2210 = vmul.f32 %v1958, 0.2
    %v2211 = vmul.f32 %v1960, 0.2
    %v2212 = vmul.f32 %v2040, 0.2
    %v2213 = vmul.f32 %v2042, 0.2
    %v2214 = vmul.f32 %v2122, 0.2
    %v2215 = vmul.f32 %v2124, 0.2
    %v2216 = vmul.f32 %v2204, 0.2
    %v2217 = vmul.f32 %v2206, 0.2
    %v2218 = vmax.f32 %v1958, %v2210
    %v2219 = vmax.f32 %v1960, %v2211
    %v2220 = vmax.f32 %v2040, %v2212
    %v2221 = vmax.f32 %v2042, %v2213
    %v2222 = vmax.f32 %v2122, %v2214
    %v2223 = vmax.f32 %v2124, %v2215
    %v2224 = vmax.f32 %v2204, %v2216
    %v2225 = vmax.f32 %v2206, %v2217
    %v2226 = vpack.c.bf16 %v2218, %v2218
    %v2227 = vpack.c.bf16 %v2219, %v2219
    %v2228 = vpack.c.bf16 %v2220, %v2220
    %v2229 = vpack.c.bf16 %v2221, %v2221
    %v2230 = vpack.c.bf16 %v2222, %v2222
    %v2231 = vpack.c.bf16 %v2223, %v2223
    %v2232 = vpack.c.bf16 %v2224, %v2224
    %v2233 = vpack.c.bf16 %v2225, %v2225
    %v2234 = vld [vmem:[#allocation11] sm:$0xff]
    %v2235 = vld [vmem:[#allocation11 + $0x8] sm:$0xff]
    %v2236 = vld [vmem:[#allocation11 + $0x10] sm:$0xff]
    %v2237 = vld [vmem:[#allocation11 + $0x18] sm:$0xff]
    %v2238 = vld [vmem:[#allocation11 + $0x20] sm:$0xff]
    %v2239 = vld [vmem:[#allocation11 + $0x28] sm:$0xff]
    %v2240 = vld [vmem:[#allocation11 + $0x30] sm:$0xff]
    %v2241 = vld [vmem:[#allocation11 + $0x38] sm:$0xff]
    %v2242 = vld [vmem:[#allocation11 + $0x40] sm:$0xff]
    %v2243 = vld [vmem:[#allocation11 + $0x48] sm:$0xff]
    %v2244 = vld [vmem:[#allocation11 + $0x50] sm:$0xff]
    %v2245 = vld [vmem:[#allocation11 + $0x58] sm:$0xff]
    %v2246 = vld [vmem:[#allocation11 + $0x60] sm:$0xff]
    %v2247 = vld [vmem:[#allocation11 + $0x68] sm:$0xff]
    %v2248 = vld [vmem:[#allocation11 + $0x70] sm:$0xff]
    %v2249 = vld [vmem:[#allocation11 + $0x78] sm:$0xff]
    %v2250 = vld [vmem:[#allocation11 + $0x80] sm:$0xff]
    %v2251 = vld [vmem:[#allocation11 + $0x88] sm:$0xff]
    %v2252 = vld [vmem:[#allocation11 + $0x90] sm:$0xff]
    %v2253 = vld [vmem:[#allocation11 + $0x98] sm:$0xff]
    %v2254 = vld [vmem:[#allocation11 + $0xa0] sm:$0xff]
    %v2255 = vld [vmem:[#allocation11 + $0xa8] sm:$0xff]
    %v2256 = vld [vmem:[#allocation11 + $0xb0] sm:$0xff]
    %v2257 = vld [vmem:[#allocation11 + $0xb8] sm:$0xff]
    %v2258 = vld [vmem:[#allocation11 + $0xc0] sm:$0xff]
    %v2259 = vld [vmem:[#allocation11 + $0xc8] sm:$0xff]
    %v2260 = vld [vmem:[#allocation11 + $0xd0] sm:$0xff]
    %v2261 = vld [vmem:[#allocation11 + $0xd8] sm:$0xff]
    %v2262 = vld [vmem:[#allocation11 + $0xe0] sm:$0xff]
    %v2263 = vld [vmem:[#allocation11 + $0xe8] sm:$0xff]
    %v2264 = vld [vmem:[#allocation11 + $0xf0] sm:$0xff]
    %v2265 = vld [vmem:[#allocation11 + $0xf8] sm:$0xff]
    %v2266 = vld [vmem:[#allocation11 + $0x100] sm:$0xff]
    %v2267 = vld [vmem:[#allocation11 + $0x108] sm:$0xff]
    %v2268 = vld [vmem:[#allocation11 + $0x110] sm:$0xff]
    %v2269 = vld [vmem:[#allocation11 + $0x118] sm:$0xff]
    %v2270 = vld [vmem:[#allocation11 + $0x120] sm:$0xff]
    %v2271 = vld [vmem:[#allocation11 + $0x128] sm:$0xff]
    %v2272 = vld [vmem:[#allocation11 + $0x130] sm:$0xff]
    %v2273 = vld [vmem:[#allocation11 + $0x138] sm:$0xff]
    %v2274 = vld [vmem:[#allocation11 + $0x140] sm:$0xff]
    %v2275 = vld [vmem:[#allocation11 + $0x148] sm:$0xff]
    %v2276 = vld [vmem:[#allocation11 + $0x150] sm:$0xff]
    %v2277 = vld [vmem:[#allocation11 + $0x158] sm:$0xff]
    %v2278 = vld [vmem:[#allocation11 + $0x160] sm:$0xff]
    %v2279 = vld [vmem:[#allocation11 + $0x168] sm:$0xff]
    %v2280 = vld [vmem:[#allocation11 + $0x170] sm:$0xff]
    %v2281 = vld [vmem:[#allocation11 + $0x178] sm:$0xff]
    %v2282 = vld [vmem:[#allocation11 + $0x180] sm:$0xff]
    %v2283 = vld [vmem:[#allocation11 + $0x188] sm:$0xff]
    %v2284 = vld [vmem:[#allocation11 + $0x190] sm:$0xff]
    %v2285 = vld [vmem:[#allocation11 + $0x198] sm:$0xff]
    %v2286 = vld [vmem:[#allocation11 + $0x1a0] sm:$0xff]
    %v2287 = vld [vmem:[#allocation11 + $0x1a8] sm:$0xff]
    %v2288 = vld [vmem:[#allocation11 + $0x1b0] sm:$0xff]
    %v2289 = vld [vmem:[#allocation11 + $0x1b8] sm:$0xff]
    %v2290 = vld [vmem:[#allocation11 + $0x1c0] sm:$0xff]
    %v2291 = vld [vmem:[#allocation11 + $0x1c8] sm:$0xff]
    %v2292 = vld [vmem:[#allocation11 + $0x1d0] sm:$0xff]
    %v2293 = vld [vmem:[#allocation11 + $0x1d8] sm:$0xff]
    %v2294 = vld [vmem:[#allocation11 + $0x1e0] sm:$0xff]
    %v2295 = vld [vmem:[#allocation11 + $0x1e8] sm:$0xff]
    %v2296 = vld [vmem:[#allocation11 + $0x1f0] sm:$0xff]
    %v2297 = vld [vmem:[#allocation11 + $0x1f8] sm:$0xff]
    %v2298 = vld [vmem:[#allocation11 + $0x200] sm:$0xff]
    %v2299 = vld [vmem:[#allocation11 + $0x208] sm:$0xff]
    %v2300 = vld [vmem:[#allocation11 + $0x210] sm:$0xff]
    %v2301 = vld [vmem:[#allocation11 + $0x218] sm:$0xff]
    %v2302 = vld [vmem:[#allocation11 + $0x220] sm:$0xff]
    %v2303 = vld [vmem:[#allocation11 + $0x228] sm:$0xff]
    %v2304 = vld [vmem:[#allocation11 + $0x230] sm:$0xff]
    %v2305 = vld [vmem:[#allocation11 + $0x238] sm:$0xff]
    %v2306 = vld [vmem:[#allocation11 + $0x240] sm:$0xff]
    %v2307 = vld [vmem:[#allocation11 + $0x248] sm:$0xff]
    %v2308 = vld [vmem:[#allocation11 + $0x250] sm:$0xff]
    %v2309 = vld [vmem:[#allocation11 + $0x258] sm:$0xff]
    %v2310 = vld [vmem:[#allocation11 + $0x260] sm:$0xff]
    %v2311 = vld [vmem:[#allocation11 + $0x268] sm:$0xff]
    %v2312 = vld [vmem:[#allocation11 + $0x270] sm:$0xff]
    %v2313 = vld [vmem:[#allocation11 + $0x278] sm:$0xff]
    %v2314 = vld [vmem:[#allocation11 + $0x280] sm:$0xff]
    %v2315 = vld [vmem:[#allocation11 + $0x288] sm:$0xff]
    %v2316 = vld [vmem:[#allocation11 + $0x290] sm:$0xff]
    %v2317 = vld [vmem:[#allocation11 + $0x298] sm:$0xff]
    %v2318 = vld [vmem:[#allocation11 + $0x2a0] sm:$0xff]
    %v2319 = vld [vmem:[#allocation11 + $0x2a8] sm:$0xff]
    %v2320 = vld [vmem:[#allocation11 + $0x2b0] sm:$0xff]
    %v2321 = vld [vmem:[#allocation11 + $0x2b8] sm:$0xff]
    %v2322 = vld [vmem:[#allocation11 + $0x2c0] sm:$0xff]
    %v2323 = vld [vmem:[#allocation11 + $0x2c8] sm:$0xff]
    %v2324 = vld [vmem:[#allocation11 + $0x2d0] sm:$0xff]
    %v2325 = vld [vmem:[#allocation11 + $0x2d8] sm:$0xff]
    %v2326 = vld [vmem:[#allocation11 + $0x2e0] sm:$0xff]
    %v2327 = vld [vmem:[#allocation11 + $0x2e8] sm:$0xff]
    %v2328 = vld [vmem:[#allocation11 + $0x2f0] sm:$0xff]
    %v2329 = vld [vmem:[#allocation11 + $0x2f8] sm:$0xff]
    %v2330 = vld [vmem:[#allocation11 + $0x300] sm:$0xff]
    %v2331 = vld [vmem:[#allocation11 + $0x308] sm:$0xff]
    %v2332 = vld [vmem:[#allocation11 + $0x310] sm:$0xff]
    %v2333 = vld [vmem:[#allocation11 + $0x318] sm:$0xff]
    %v2334 = vld [vmem:[#allocation11 + $0x320] sm:$0xff]
    %v2335 = vld [vmem:[#allocation11 + $0x328] sm:$0xff]
    %v2336 = vld [vmem:[#allocation11 + $0x330] sm:$0xff]
    %v2337 = vld [vmem:[#allocation11 + $0x338] sm:$0xff]
    %v2338 = vld [vmem:[#allocation11 + $0x340] sm:$0xff]
    %v2339 = vld [vmem:[#allocation11 + $0x348] sm:$0xff]
    %v2340 = vld [vmem:[#allocation11 + $0x350] sm:$0xff]
    %v2341 = vld [vmem:[#allocation11 + $0x358] sm:$0xff]
    %v2342 = vld [vmem:[#allocation11 + $0x360] sm:$0xff]
    %v2343 = vld [vmem:[#allocation11 + $0x368] sm:$0xff]
    %v2344 = vld [vmem:[#allocation11 + $0x370] sm:$0xff]
    %v2345 = vld [vmem:[#allocation11 + $0x378] sm:$0xff]
    %v2346 = vld [vmem:[#allocation11 + $0x380] sm:$0xff]
    %v2347 = vld [vmem:[#allocation11 + $0x388] sm:$0xff]
    %v2348 = vld [vmem:[#allocation11 + $0x390] sm:$0xff]
    %v2349 = vld [vmem:[#allocation11 + $0x398] sm:$0xff]
    %v2350 = vld [vmem:[#allocation11 + $0x3a0] sm:$0xff]
    %v2351 = vld [vmem:[#allocation11 + $0x3a8] sm:$0xff]
    %v2352 = vld [vmem:[#allocation11 + $0x3b0] sm:$0xff]
    %v2353 = vld [vmem:[#allocation11 + $0x3b8] sm:$0xff]
    %v2354 = vld [vmem:[#allocation11 + $0x3c0] sm:$0xff]
    %v2355 = vld [vmem:[#allocation11 + $0x3c8] sm:$0xff]
    %v2356 = vld [vmem:[#allocation11 + $0x3d0] sm:$0xff]
    %v2357 = vld [vmem:[#allocation11 + $0x3d8] sm:$0xff]
    %v2358 = vld [vmem:[#allocation11 + $0x3e0] sm:$0xff]
    %v2359 = vld [vmem:[#allocation11 + $0x3e8] sm:$0xff]
    %v2360 = vld [vmem:[#allocation11 + $0x3f0] sm:$0xff]
    %v2361 = vld [vmem:[#allocation11 + $0x3f8] sm:$0xff]
    %v2362 = vld [vmem:[#allocation11 + $0x400] sm:$0xff]
    %v2363 = vld [vmem:[#allocation11 + $0x408] sm:$0xff]
    %v2364 = vld [vmem:[#allocation11 + $0x410] sm:$0xff]
    %v2365 = vld [vmem:[#allocation11 + $0x418] sm:$0xff]
    %v2366 = vld [vmem:[#allocation11 + $0x420] sm:$0xff]
    %v2367 = vld [vmem:[#allocation11 + $0x428] sm:$0xff]
    %v2368 = vld [vmem:[#allocation11 + $0x430] sm:$0xff]
    %v2369 = vld [vmem:[#allocation11 + $0x438] sm:$0xff]
    %v2370 = vld [vmem:[#allocation11 + $0x440] sm:$0xff]
    %v2371 = vld [vmem:[#allocation11 + $0x448] sm:$0xff]
    %v2372 = vld [vmem:[#allocation11 + $0x450] sm:$0xff]
    %v2373 = vld [vmem:[#allocation11 + $0x458] sm:$0xff]
    %v2374 = vld [vmem:[#allocation11 + $0x460] sm:$0xff]
    %v2375 = vld [vmem:[#allocation11 + $0x468] sm:$0xff]
    %v2376 = vld [vmem:[#allocation11 + $0x470] sm:$0xff]
    %v2377 = vld [vmem:[#allocation11 + $0x478] sm:$0xff]
    %v2378 = vld [vmem:[#allocation11 + $0x480] sm:$0xff]
    %v2379 = vld [vmem:[#allocation11 + $0x488] sm:$0xff]
    %v2380 = vld [vmem:[#allocation11 + $0x490] sm:$0xff]
    %v2381 = vld [vmem:[#allocation11 + $0x498] sm:$0xff]
    %v2382 = vld [vmem:[#allocation11 + $0x4a0] sm:$0xff]
    %v2383 = vld [vmem:[#allocation11 + $0x4a8] sm:$0xff]
    %v2384 = vld [vmem:[#allocation11 + $0x4b0] sm:$0xff]
    %v2385 = vld [vmem:[#allocation11 + $0x4b8] sm:$0xff]
    %v2386 = vld [vmem:[#allocation11 + $0x4c0] sm:$0xff]
    %v2387 = vld [vmem:[#allocation11 + $0x4c8] sm:$0xff]
    %v2388 = vld [vmem:[#allocation11 + $0x4d0] sm:$0xff]
    %v2389 = vld [vmem:[#allocation11 + $0x4d8] sm:$0xff]
    %v2390 = vld [vmem:[#allocation11 + $0x4e0] sm:$0xff]
    %v2391 = vld [vmem:[#allocation11 + $0x4e8] sm:$0xff]
    %v2392 = vld [vmem:[#allocation11 + $0x4f0] sm:$0xff]
    %v2393 = vld [vmem:[#allocation11 + $0x4f8] sm:$0xff]
    %v2394 = vld [vmem:[#allocation11 + $0x500] sm:$0xff]
    %v2395 = vld [vmem:[#allocation11 + $0x508] sm:$0xff]
    %v2396 = vld [vmem:[#allocation11 + $0x510] sm:$0xff]
    %v2397 = vld [vmem:[#allocation11 + $0x518] sm:$0xff]
    %v2398 = vld [vmem:[#allocation11 + $0x520] sm:$0xff]
    %v2399 = vld [vmem:[#allocation11 + $0x528] sm:$0xff]
    %v2400 = vld [vmem:[#allocation11 + $0x530] sm:$0xff]
    %v2401 = vld [vmem:[#allocation11 + $0x538] sm:$0xff]
    %v2402 = vld [vmem:[#allocation11 + $0x540] sm:$0xff]
    %v2403 = vld [vmem:[#allocation11 + $0x548] sm:$0xff]
    %v2404 = vld [vmem:[#allocation11 + $0x550] sm:$0xff]
    %v2405 = vld [vmem:[#allocation11 + $0x558] sm:$0xff]
    %v2406 = vld [vmem:[#allocation11 + $0x560] sm:$0xff]
    %v2407 = vld [vmem:[#allocation11 + $0x568] sm:$0xff]
    %v2408 = vld [vmem:[#allocation11 + $0x570] sm:$0xff]
    %v2409 = vld [vmem:[#allocation11 + $0x578] sm:$0xff]
    %v2410 = vld [vmem:[#allocation11 + $0x580] sm:$0xff]
    %v2411 = vld [vmem:[#allocation11 + $0x588] sm:$0xff]
    %v2412 = vld [vmem:[#allocation11 + $0x590] sm:$0xff]
    %v2413 = vld [vmem:[#allocation11 + $0x598] sm:$0xff]
    %v2414 = vld [vmem:[#allocation11 + $0x5a0] sm:$0xff]
    %v2415 = vld [vmem:[#allocation11 + $0x5a8] sm:$0xff]
    %v2416 = vld [vmem:[#allocation11 + $0x5b0] sm:$0xff]
    %v2417 = vld [vmem:[#allocation11 + $0x5b8] sm:$0xff]
    %v2418 = vld [vmem:[#allocation11 + $0x5c0] sm:$0xff]
    %v2419 = vld [vmem:[#allocation11 + $0x5c8] sm:$0xff]
    %v2420 = vld [vmem:[#allocation11 + $0x5d0] sm:$0xff]
    %v2421 = vld [vmem:[#allocation11 + $0x5d8] sm:$0xff]
    %v2422 = vld [vmem:[#allocation11 + $0x5e0] sm:$0xff]
    %v2423 = vld [vmem:[#allocation11 + $0x5e8] sm:$0xff]
    %v2424 = vld [vmem:[#allocation11 + $0x5f0] sm:$0xff]
    %v2425 = vld [vmem:[#allocation11 + $0x5f8] sm:$0xff]
    %v2426 = vld [vmem:[#allocation11 + $0x600] sm:$0xff]
    %v2427 = vld [vmem:[#allocation11 + $0x608] sm:$0xff]
    %v2428 = vld [vmem:[#allocation11 + $0x610] sm:$0xff]
    %v2429 = vld [vmem:[#allocation11 + $0x618] sm:$0xff]
    %v2430 = vld [vmem:[#allocation11 + $0x620] sm:$0xff]
    %v2431 = vld [vmem:[#allocation11 + $0x628] sm:$0xff]
    %v2432 = vld [vmem:[#allocation11 + $0x630] sm:$0xff]
    %v2433 = vld [vmem:[#allocation11 + $0x638] sm:$0xff]
    %v2434 = vld [vmem:[#allocation11 + $0x640] sm:$0xff]
    %v2435 = vld [vmem:[#allocation11 + $0x648] sm:$0xff]
    %v2436 = vld [vmem:[#allocation11 + $0x650] sm:$0xff]
    %v2437 = vld [vmem:[#allocation11 + $0x658] sm:$0xff]
    %v2438 = vld [vmem:[#allocation11 + $0x660] sm:$0xff]
    %v2439 = vld [vmem:[#allocation11 + $0x668] sm:$0xff]
    %v2440 = vld [vmem:[#allocation11 + $0x670] sm:$0xff]
    %v2441 = vld [vmem:[#allocation11 + $0x678] sm:$0xff]
    %v2442 = vld [vmem:[#allocation11 + $0x680] sm:$0xff]
    %v2443 = vld [vmem:[#allocation11 + $0x688] sm:$0xff]
    %v2444 = vld [vmem:[#allocation11 + $0x690] sm:$0xff]
    %v2445 = vld [vmem:[#allocation11 + $0x698] sm:$0xff]
    %v2446 = vld [vmem:[#allocation11 + $0x6a0] sm:$0xff]
    %v2447 = vld [vmem:[#allocation11 + $0x6a8] sm:$0xff]
    %v2448 = vld [vmem:[#allocation11 + $0x6b0] sm:$0xff]
    %v2449 = vld [vmem:[#allocation11 + $0x6b8] sm:$0xff]
    %v2450 = vld [vmem:[#allocation11 + $0x6c0] sm:$0xff]
    %v2451 = vld [vmem:[#allocation11 + $0x6c8] sm:$0xff]
    %v2452 = vld [vmem:[#allocation11 + $0x6d0] sm:$0xff]
    %v2453 = vld [vmem:[#allocation11 + $0x6d8] sm:$0xff]
    %v2454 = vld [vmem:[#allocation11 + $0x6e0] sm:$0xff]
    %v2455 = vld [vmem:[#allocation11 + $0x6e8] sm:$0xff]
    %v2456 = vld [vmem:[#allocation11 + $0x6f0] sm:$0xff]
    %v2457 = vld [vmem:[#allocation11 + $0x6f8] sm:$0xff]
    %v2458 = vld [vmem:[#allocation11 + $0x700] sm:$0xff]
    %v2459 = vld [vmem:[#allocation11 + $0x708] sm:$0xff]
    %v2460 = vld [vmem:[#allocation11 + $0x710] sm:$0xff]
    %v2461 = vld [vmem:[#allocation11 + $0x718] sm:$0xff]
    %v2462 = vld [vmem:[#allocation11 + $0x720] sm:$0xff]
    %v2463 = vld [vmem:[#allocation11 + $0x728] sm:$0xff]
    %v2464 = vld [vmem:[#allocation11 + $0x730] sm:$0xff]
    %v2465 = vld [vmem:[#allocation11 + $0x738] sm:$0xff]
    %v2466 = vld [vmem:[#allocation11 + $0x740] sm:$0xff]
    %v2467 = vld [vmem:[#allocation11 + $0x748] sm:$0xff]
    %v2468 = vld [vmem:[#allocation11 + $0x750] sm:$0xff]
    %v2469 = vld [vmem:[#allocation11 + $0x758] sm:$0xff]
    %v2470 = vld [vmem:[#allocation11 + $0x760] sm:$0xff]
    %v2471 = vld [vmem:[#allocation11 + $0x768] sm:$0xff]
    %v2472 = vld [vmem:[#allocation11 + $0x770] sm:$0xff]
    %v2473 = vld [vmem:[#allocation11 + $0x778] sm:$0xff]
    %v2474 = vld [vmem:[#allocation11 + $0x780] sm:$0xff]
    %v2475 = vld [vmem:[#allocation11 + $0x788] sm:$0xff]
    %v2476 = vld [vmem:[#allocation11 + $0x790] sm:$0xff]
    %v2477 = vld [vmem:[#allocation11 + $0x798] sm:$0xff]
    %v2478 = vld [vmem:[#allocation11 + $0x7a0] sm:$0xff]
    %v2479 = vld [vmem:[#allocation11 + $0x7a8] sm:$0xff]
    %v2480 = vld [vmem:[#allocation11 + $0x7b0] sm:$0xff]
    %v2481 = vld [vmem:[#allocation11 + $0x7b8] sm:$0xff]
    %v2482 = vld [vmem:[#allocation11 + $0x7c0] sm:$0xff]
    %v2483 = vld [vmem:[#allocation11 + $0x7c8] sm:$0xff]
    %v2484 = vld [vmem:[#allocation11 + $0x7d0] sm:$0xff]
    %v2485 = vld [vmem:[#allocation11 + $0x7d8] sm:$0xff]
    %v2486 = vld [vmem:[#allocation11 + $0x7e0] sm:$0xff]
    %v2487 = vld [vmem:[#allocation11 + $0x7e8] sm:$0xff]
    %v2488 = vld [vmem:[#allocation11 + $0x7f0] sm:$0xff]
    %v2489 = vld [vmem:[#allocation11 + $0x7f8] sm:$0xff]
    %v2490 = vld [vmem:[#allocation11 + $0x800] sm:$0xff]
    %v2491 = vld [vmem:[#allocation11 + $0x808] sm:$0xff]
    %v2492 = vld [vmem:[#allocation11 + $0x810] sm:$0xff]
    %v2493 = vld [vmem:[#allocation11 + $0x818] sm:$0xff]
    %v2494 = vld [vmem:[#allocation11 + $0x820] sm:$0xff]
    %v2495 = vld [vmem:[#allocation11 + $0x828] sm:$0xff]
    %v2496 = vld [vmem:[#allocation11 + $0x830] sm:$0xff]
    %v2497 = vld [vmem:[#allocation11 + $0x838] sm:$0xff]
    %v2498 = vld [vmem:[#allocation11 + $0x840] sm:$0xff]
    %v2499 = vld [vmem:[#allocation11 + $0x848] sm:$0xff]
    %v2500 = vld [vmem:[#allocation11 + $0x850] sm:$0xff]
    %v2501 = vld [vmem:[#allocation11 + $0x858] sm:$0xff]
    %v2502 = vld [vmem:[#allocation11 + $0x860] sm:$0xff]
    %v2503 = vld [vmem:[#allocation11 + $0x868] sm:$0xff]
    %v2504 = vld [vmem:[#allocation11 + $0x870] sm:$0xff]
    %v2505 = vld [vmem:[#allocation11 + $0x878] sm:$0xff]
    %v2506 = vld [vmem:[#allocation11 + $0x880] sm:$0xff]
    %v2507 = vld [vmem:[#allocation11 + $0x888] sm:$0xff]
    %v2508 = vld [vmem:[#allocation11 + $0x890] sm:$0xff]
    %v2509 = vld [vmem:[#allocation11 + $0x898] sm:$0xff]
    %v2510 = vld [vmem:[#allocation11 + $0x8a0] sm:$0xff]
    %v2511 = vld [vmem:[#allocation11 + $0x8a8] sm:$0xff]
    %v2512 = vld [vmem:[#allocation11 + $0x8b0] sm:$0xff]
    %v2513 = vld [vmem:[#allocation11 + $0x8b8] sm:$0xff]
    %v2514 = vld [vmem:[#allocation11 + $0x8c0] sm:$0xff]
    %v2515 = vld [vmem:[#allocation11 + $0x8c8] sm:$0xff]
    %v2516 = vld [vmem:[#allocation11 + $0x8d0] sm:$0xff]
    %v2517 = vld [vmem:[#allocation11 + $0x8d8] sm:$0xff]
    %v2518 = vld [vmem:[#allocation11 + $0x8e0] sm:$0xff]
    %v2519 = vld [vmem:[#allocation11 + $0x8e8] sm:$0xff]
    %v2520 = vld [vmem:[#allocation11 + $0x8f0] sm:$0xff]
    %v2521 = vld [vmem:[#allocation11 + $0x8f8] sm:$0xff]
    %v2522 = vld [vmem:[#allocation11 + $0x900] sm:$0xff]
    %v2523 = vld [vmem:[#allocation11 + $0x908] sm:$0xff]
    %v2524 = vld [vmem:[#allocation11 + $0x910] sm:$0xff]
    %v2525 = vld [vmem:[#allocation11 + $0x918] sm:$0xff]
    %v2526 = vld [vmem:[#allocation11 + $0x920] sm:$0xff]
    %v2527 = vld [vmem:[#allocation11 + $0x928] sm:$0xff]
    %v2528 = vld [vmem:[#allocation11 + $0x930] sm:$0xff]
    %v2529 = vld [vmem:[#allocation11 + $0x938] sm:$0xff]
    %v2530 = vld [vmem:[#allocation11 + $0x940] sm:$0xff]
    %v2531 = vld [vmem:[#allocation11 + $0x948] sm:$0xff]
    %v2532 = vld [vmem:[#allocation11 + $0x950] sm:$0xff]
    %v2533 = vld [vmem:[#allocation11 + $0x958] sm:$0xff]
    %v2534 = vld [vmem:[#allocation11 + $0x960] sm:$0xff]
    %v2535 = vld [vmem:[#allocation11 + $0x968] sm:$0xff]
    %v2536 = vld [vmem:[#allocation11 + $0x970] sm:$0xff]
    %v2537 = vld [vmem:[#allocation11 + $0x978] sm:$0xff]
    %v2538 = vld [vmem:[#allocation11 + $0x980] sm:$0xff]
    %v2539 = vld [vmem:[#allocation11 + $0x988] sm:$0xff]
    %v2540 = vld [vmem:[#allocation11 + $0x990] sm:$0xff]
    %v2541 = vld [vmem:[#allocation11 + $0x998] sm:$0xff]
    %v2542 = vld [vmem:[#allocation11 + $0x9a0] sm:$0xff]
    %v2543 = vld [vmem:[#allocation11 + $0x9a8] sm:$0xff]
    %v2544 = vld [vmem:[#allocation11 + $0x9b0] sm:$0xff]
    %v2545 = vld [vmem:[#allocation11 + $0x9b8] sm:$0xff]
    %v2546 = vld [vmem:[#allocation11 + $0x9c0] sm:$0xff]
    %v2547 = vld [vmem:[#allocation11 + $0x9c8] sm:$0xff]
    %v2548 = vld [vmem:[#allocation11 + $0x9d0] sm:$0xff]
    %v2549 = vld [vmem:[#allocation11 + $0x9d8] sm:$0xff]
    %v2550 = vld [vmem:[#allocation11 + $0x9e0] sm:$0xff]
    %v2551 = vld [vmem:[#allocation11 + $0x9e8] sm:$0xff]
    %v2552 = vld [vmem:[#allocation11 + $0x9f0] sm:$0xff]
    %v2553 = vld [vmem:[#allocation11 + $0x9f8] sm:$0xff]
    %v2554 = vld [vmem:[#allocation11 + $0xa00] sm:$0xff]
    %v2555 = vld [vmem:[#allocation11 + $0xa08] sm:$0xff]
    %v2556 = vld [vmem:[#allocation11 + $0xa10] sm:$0xff]
    %v2557 = vld [vmem:[#allocation11 + $0xa18] sm:$0xff]
    %v2558 = vld [vmem:[#allocation11 + $0xa20] sm:$0xff]
    %v2559 = vld [vmem:[#allocation11 + $0xa28] sm:$0xff]
    %v2560 = vld [vmem:[#allocation11 + $0xa30] sm:$0xff]
    %v2561 = vld [vmem:[#allocation11 + $0xa38] sm:$0xff]
    %v2562 = vld [vmem:[#allocation11 + $0xa40] sm:$0xff]
    %v2563 = vld [vmem:[#allocation11 + $0xa48] sm:$0xff]
    %v2564 = vld [vmem:[#allocation11 + $0xa50] sm:$0xff]
    %v2565 = vld [vmem:[#allocation11 + $0xa58] sm:$0xff]
    %v2566 = vld [vmem:[#allocation11 + $0xa60] sm:$0xff]
    %v2567 = vld [vmem:[#allocation11 + $0xa68] sm:$0xff]
    %v2568 = vld [vmem:[#allocation11 + $0xa70] sm:$0xff]
    %v2569 = vld [vmem:[#allocation11 + $0xa78] sm:$0xff]
    %v2570 = vld [vmem:[#allocation11 + $0xa80] sm:$0xff]
    %v2571 = vld [vmem:[#allocation11 + $0xa88] sm:$0xff]
    %v2572 = vld [vmem:[#allocation11 + $0xa90] sm:$0xff]
    %v2573 = vld [vmem:[#allocation11 + $0xa98] sm:$0xff]
    %v2574 = vld [vmem:[#allocation11 + $0xaa0] sm:$0xff]
    %v2575 = vld [vmem:[#allocation11 + $0xaa8] sm:$0xff]
    %v2576 = vld [vmem:[#allocation11 + $0xab0] sm:$0xff]
    %v2577 = vld [vmem:[#allocation11 + $0xab8] sm:$0xff]
    %v2578 = vld [vmem:[#allocation11 + $0xac0] sm:$0xff]
    %v2579 = vld [vmem:[#allocation11 + $0xac8] sm:$0xff]
    %v2580 = vld [vmem:[#allocation11 + $0xad0] sm:$0xff]
    %v2581 = vld [vmem:[#allocation11 + $0xad8] sm:$0xff]
    %v2582 = vld [vmem:[#allocation11 + $0xae0] sm:$0xff]
    %v2583 = vld [vmem:[#allocation11 + $0xae8] sm:$0xff]
    %v2584 = vld [vmem:[#allocation11 + $0xaf0] sm:$0xff]
    %v2585 = vld [vmem:[#allocation11 + $0xaf8] sm:$0xff]
    %v2586 = vld [vmem:[#allocation11 + $0xb00] sm:$0xff]
    %v2587 = vld [vmem:[#allocation11 + $0xb08] sm:$0xff]
    %v2588 = vld [vmem:[#allocation11 + $0xb10] sm:$0xff]
    %v2589 = vld [vmem:[#allocation11 + $0xb18] sm:$0xff]
    %v2590 = vld [vmem:[#allocation11 + $0xb20] sm:$0xff]
    %v2591 = vld [vmem:[#allocation11 + $0xb28] sm:$0xff]
    %v2592 = vld [vmem:[#allocation11 + $0xb30] sm:$0xff]
    %v2593 = vld [vmem:[#allocation11 + $0xb38] sm:$0xff]
    %v2594 = vld [vmem:[#allocation11 + $0xb40] sm:$0xff]
    %v2595 = vld [vmem:[#allocation11 + $0xb48] sm:$0xff]
    %v2596 = vld [vmem:[#allocation11 + $0xb50] sm:$0xff]
    %v2597 = vld [vmem:[#allocation11 + $0xb58] sm:$0xff]
    %v2598 = vld [vmem:[#allocation11 + $0xb60] sm:$0xff]
    %v2599 = vld [vmem:[#allocation11 + $0xb68] sm:$0xff]
    %v2600 = vld [vmem:[#allocation11 + $0xb70] sm:$0xff]
    %v2601 = vld [vmem:[#allocation11 + $0xb78] sm:$0xff]
    %v2602 = vld [vmem:[#allocation11 + $0xb80] sm:$0xff]
    %v2603 = vld [vmem:[#allocation11 + $0xb88] sm:$0xff]
    %v2604 = vld [vmem:[#allocation11 + $0xb90] sm:$0xff]
    %v2605 = vld [vmem:[#allocation11 + $0xb98] sm:$0xff]
    %v2606 = vld [vmem:[#allocation11 + $0xba0] sm:$0xff]
    %v2607 = vld [vmem:[#allocation11 + $0xba8] sm:$0xff]
    %v2608 = vld [vmem:[#allocation11 + $0xbb0] sm:$0xff]
    %v2609 = vld [vmem:[#allocation11 + $0xbb8] sm:$0xff]
    %v2610 = vld [vmem:[#allocation11 + $0xbc0] sm:$0xff]
    %v2611 = vld [vmem:[#allocation11 + $0xbc8] sm:$0xff]
    %v2612 = vld [vmem:[#allocation11 + $0xbd0] sm:$0xff]
    %v2613 = vld [vmem:[#allocation11 + $0xbd8] sm:$0xff]
    %v2614 = vld [vmem:[#allocation11 + $0xbe0] sm:$0xff]
    %v2615 = vld [vmem:[#allocation11 + $0xbe8] sm:$0xff]
    %v2616 = vld [vmem:[#allocation11 + $0xbf0] sm:$0xff]
    %v2617 = vld [vmem:[#allocation11 + $0xbf8] sm:$0xff]
    %v2618 = vld [vmem:[#allocation11 + $0xc00] sm:$0xff]
    %v2619 = vld [vmem:[#allocation11 + $0xc08] sm:$0xff]
    %v2620 = vld [vmem:[#allocation11 + $0xc10] sm:$0xff]
    %v2621 = vld [vmem:[#allocation11 + $0xc18] sm:$0xff]
    %v2622 = vld [vmem:[#allocation11 + $0xc20] sm:$0xff]
    %v2623 = vld [vmem:[#allocation11 + $0xc28] sm:$0xff]
    %v2624 = vld [vmem:[#allocation11 + $0xc30] sm:$0xff]
    %v2625 = vld [vmem:[#allocation11 + $0xc38] sm:$0xff]
    %v2626 = vld [vmem:[#allocation11 + $0xc40] sm:$0xff]
    %v2627 = vld [vmem:[#allocation11 + $0xc48] sm:$0xff]
    %v2628 = vld [vmem:[#allocation11 + $0xc50] sm:$0xff]
    %v2629 = vld [vmem:[#allocation11 + $0xc58] sm:$0xff]
    %v2630 = vld [vmem:[#allocation11 + $0xc60] sm:$0xff]
    %v2631 = vld [vmem:[#allocation11 + $0xc68] sm:$0xff]
    %v2632 = vld [vmem:[#allocation11 + $0xc70] sm:$0xff]
    %v2633 = vld [vmem:[#allocation11 + $0xc78] sm:$0xff]
    %v2634 = vld [vmem:[#allocation11 + $0xc80] sm:$0xff]
    %v2635 = vld [vmem:[#allocation11 + $0xc88] sm:$0xff]
    %v2636 = vld [vmem:[#allocation11 + $0xc90] sm:$0xff]
    %v2637 = vld [vmem:[#allocation11 + $0xc98] sm:$0xff]
    %v2638 = vld [vmem:[#allocation11 + $0xca0] sm:$0xff]
    %v2639 = vld [vmem:[#allocation11 + $0xca8] sm:$0xff]
    %v2640 = vld [vmem:[#allocation11 + $0xcb0] sm:$0xff]
    %v2641 = vld [vmem:[#allocation11 + $0xcb8] sm:$0xff]
    %v2642 = vld [vmem:[#allocation11 + $0xcc0] sm:$0xff]
    %v2643 = vld [vmem:[#allocation11 + $0xcc8] sm:$0xff]
    %v2644 = vld [vmem:[#allocation11 + $0xcd0] sm:$0xff]
    %v2645 = vld [vmem:[#allocation11 + $0xcd8] sm:$0xff]
    %v2646 = vld [vmem:[#allocation11 + $0xce0] sm:$0xff]
    %v2647 = vld [vmem:[#allocation11 + $0xce8] sm:$0xff]
    %v2648 = vld [vmem:[#allocation11 + $0xcf0] sm:$0xff]
    %v2649 = vld [vmem:[#allocation11 + $0xcf8] sm:$0xff]
    %v2650 = vld [vmem:[#allocation11 + $0xd00] sm:$0xff]
    %v2651 = vld [vmem:[#allocation11 + $0xd08] sm:$0xff]
    %v2652 = vld [vmem:[#allocation11 + $0xd10] sm:$0xff]
    %v2653 = vld [vmem:[#allocation11 + $0xd18] sm:$0xff]
    %v2654 = vld [vmem:[#allocation11 + $0xd20] sm:$0xff]
    %v2655 = vld [vmem:[#allocation11 + $0xd28] sm:$0xff]
    %v2656 = vld [vmem:[#allocation11 + $0xd30] sm:$0xff]
    %v2657 = vld [vmem:[#allocation11 + $0xd38] sm:$0xff]
    %v2658 = vld [vmem:[#allocation11 + $0xd40] sm:$0xff]
    %v2659 = vld [vmem:[#allocation11 + $0xd48] sm:$0xff]
    %v2660 = vld [vmem:[#allocation11 + $0xd50] sm:$0xff]
    %v2661 = vld [vmem:[#allocation11 + $0xd58] sm:$0xff]
    %v2662 = vld [vmem:[#allocation11 + $0xd60] sm:$0xff]
    %v2663 = vld [vmem:[#allocation11 + $0xd68] sm:$0xff]
    %v2664 = vld [vmem:[#allocation11 + $0xd70] sm:$0xff]
    %v2665 = vld [vmem:[#allocation11 + $0xd78] sm:$0xff]
    %v2666 = vld [vmem:[#allocation11 + $0xd80] sm:$0xff]
    %v2667 = vld [vmem:[#allocation11 + $0xd88] sm:$0xff]
    %v2668 = vld [vmem:[#allocation11 + $0xd90] sm:$0xff]
    %v2669 = vld [vmem:[#allocation11 + $0xd98] sm:$0xff]
    %v2670 = vld [vmem:[#allocation11 + $0xda0] sm:$0xff]
    %v2671 = vld [vmem:[#allocation11 + $0xda8] sm:$0xff]
    %v2672 = vld [vmem:[#allocation11 + $0xdb0] sm:$0xff]
    %v2673 = vld [vmem:[#allocation11 + $0xdb8] sm:$0xff]
    %v2674 = vld [vmem:[#allocation11 + $0xdc0] sm:$0xff]
    %v2675 = vld [vmem:[#allocation11 + $0xdc8] sm:$0xff]
    %v2676 = vld [vmem:[#allocation11 + $0xdd0] sm:$0xff]
    %v2677 = vld [vmem:[#allocation11 + $0xdd8] sm:$0xff]
    %v2678 = vld [vmem:[#allocation11 + $0xde0] sm:$0xff]
    %v2679 = vld [vmem:[#allocation11 + $0xde8] sm:$0xff]
    %v2680 = vld [vmem:[#allocation11 + $0xdf0] sm:$0xff]
    %v2681 = vld [vmem:[#allocation11 + $0xdf8] sm:$0xff]
    %v2682 = vld [vmem:[#allocation11 + $0xe00] sm:$0xff]
    %v2683 = vld [vmem:[#allocation11 + $0xe08] sm:$0xff]
    %v2684 = vld [vmem:[#allocation11 + $0xe10] sm:$0xff]
    %v2685 = vld [vmem:[#allocation11 + $0xe18] sm:$0xff]
    %v2686 = vld [vmem:[#allocation11 + $0xe20] sm:$0xff]
    %v2687 = vld [vmem:[#allocation11 + $0xe28] sm:$0xff]
    %v2688 = vld [vmem:[#allocation11 + $0xe30] sm:$0xff]
    %v2689 = vld [vmem:[#allocation11 + $0xe38] sm:$0xff]
    %v2690 = vld [vmem:[#allocation11 + $0xe40] sm:$0xff]
    %v2691 = vld [vmem:[#allocation11 + $0xe48] sm:$0xff]
    %v2692 = vld [vmem:[#allocation11 + $0xe50] sm:$0xff]
    %v2693 = vld [vmem:[#allocation11 + $0xe58] sm:$0xff]
    %v2694 = vld [vmem:[#allocation11 + $0xe60] sm:$0xff]
    %v2695 = vld [vmem:[#allocation11 + $0xe68] sm:$0xff]
    %v2696 = vld [vmem:[#allocation11 + $0xe70] sm:$0xff]
    %v2697 = vld [vmem:[#allocation11 + $0xe78] sm:$0xff]
    %v2698 = vld [vmem:[#allocation11 + $0xe80] sm:$0xff]
    %v2699 = vld [vmem:[#allocation11 + $0xe88] sm:$0xff]
    %v2700 = vld [vmem:[#allocation11 + $0xe90] sm:$0xff]
    %v2701 = vld [vmem:[#allocation11 + $0xe98] sm:$0xff]
    %v2702 = vld [vmem:[#allocation11 + $0xea0] sm:$0xff]
    %v2703 = vld [vmem:[#allocation11 + $0xea8] sm:$0xff]
    %v2704 = vld [vmem:[#allocation11 + $0xeb0] sm:$0xff]
    %v2705 = vld [vmem:[#allocation11 + $0xeb8] sm:$0xff]
    %v2706 = vld [vmem:[#allocation11 + $0xec0] sm:$0xff]
    %v2707 = vld [vmem:[#allocation11 + $0xec8] sm:$0xff]
    %v2708 = vld [vmem:[#allocation11 + $0xed0] sm:$0xff]
    %v2709 = vld [vmem:[#allocation11 + $0xed8] sm:$0xff]
    %v2710 = vld [vmem:[#allocation11 + $0xee0] sm:$0xff]
    %v2711 = vld [vmem:[#allocation11 + $0xee8] sm:$0xff]
    %v2712 = vld [vmem:[#allocation11 + $0xef0] sm:$0xff]
    %v2713 = vld [vmem:[#allocation11 + $0xef8] sm:$0xff]
    %v2714 = vld [vmem:[#allocation11 + $0xf00] sm:$0xff]
    %v2715 = vld [vmem:[#allocation11 + $0xf08] sm:$0xff]
    %v2716 = vld [vmem:[#allocation11 + $0xf10] sm:$0xff]
    %v2717 = vld [vmem:[#allocation11 + $0xf18] sm:$0xff]
    %v2718 = vld [vmem:[#allocation11 + $0xf20] sm:$0xff]
    %v2719 = vld [vmem:[#allocation11 + $0xf28] sm:$0xff]
    %v2720 = vld [vmem:[#allocation11 + $0xf30] sm:$0xff]
    %v2721 = vld [vmem:[#allocation11 + $0xf38] sm:$0xff]
    %v2722 = vld [vmem:[#allocation11 + $0xf40] sm:$0xff]
    %v2723 = vld [vmem:[#allocation11 + $0xf48] sm:$0xff]
    %v2724 = vld [vmem:[#allocation11 + $0xf50] sm:$0xff]
    %v2725 = vld [vmem:[#allocation11 + $0xf58] sm:$0xff]
    %v2726 = vld [vmem:[#allocation11 + $0xf60] sm:$0xff]
    %v2727 = vld [vmem:[#allocation11 + $0xf68] sm:$0xff]
    %v2728 = vld [vmem:[#allocation11 + $0xf70] sm:$0xff]
    %v2729 = vld [vmem:[#allocation11 + $0xf78] sm:$0xff]
    %v2730 = vld [vmem:[#allocation11 + $0xf80] sm:$0xff]
    %v2731 = vld [vmem:[#allocation11 + $0xf88] sm:$0xff]
    %v2732 = vld [vmem:[#allocation11 + $0xf90] sm:$0xff]
    %v2733 = vld [vmem:[#allocation11 + $0xf98] sm:$0xff]
    %v2734 = vld [vmem:[#allocation11 + $0xfa0] sm:$0xff]
    %v2735 = vld [vmem:[#allocation11 + $0xfa8] sm:$0xff]
    %v2736 = vld [vmem:[#allocation11 + $0xfb0] sm:$0xff]
    %v2737 = vld [vmem:[#allocation11 + $0xfb8] sm:$0xff]
    %v2738 = vld [vmem:[#allocation11 + $0xfc0] sm:$0xff]
    %v2739 = vld [vmem:[#allocation11 + $0xfc8] sm:$0xff]
    %v2740 = vld [vmem:[#allocation11 + $0xfd0] sm:$0xff]
    %v2741 = vld [vmem:[#allocation11 + $0xfd8] sm:$0xff]
    %v2742 = vld [vmem:[#allocation11 + $0xfe0] sm:$0xff]
    %v2743 = vld [vmem:[#allocation11 + $0xfe8] sm:$0xff]
    %v2744 = vld [vmem:[#allocation11 + $0xff0] sm:$0xff]
    %v2745 = vld [vmem:[#allocation11 + $0xff8] sm:$0xff]
    %v2746 = vld [vmem:[#allocation11 + $0x1000] sm:$0xff]
    %v2747 = vld [vmem:[#allocation11 + $0x1008] sm:$0xff]
    %v2748 = vld [vmem:[#allocation11 + $0x1010] sm:$0xff]
    %v2749 = vld [vmem:[#allocation11 + $0x1018] sm:$0xff]
    %v2750 = vld [vmem:[#allocation11 + $0x1020] sm:$0xff]
    %v2751 = vld [vmem:[#allocation11 + $0x1028] sm:$0xff]
    %v2752 = vld [vmem:[#allocation11 + $0x1030] sm:$0xff]
    %v2753 = vld [vmem:[#allocation11 + $0x1038] sm:$0xff]
    %v2754 = vld [vmem:[#allocation11 + $0x1040] sm:$0xff]
    %v2755 = vld [vmem:[#allocation11 + $0x1048] sm:$0xff]
    %v2756 = vld [vmem:[#allocation11 + $0x1050] sm:$0xff]
    %v2757 = vld [vmem:[#allocation11 + $0x1058] sm:$0xff]
    %v2758 = vld [vmem:[#allocation11 + $0x1060] sm:$0xff]
    %v2759 = vld [vmem:[#allocation11 + $0x1068] sm:$0xff]
    %v2760 = vld [vmem:[#allocation11 + $0x1070] sm:$0xff]
    %v2761 = vld [vmem:[#allocation11 + $0x1078] sm:$0xff]
    %v2762 = vld [vmem:[#allocation11 + $0x1080] sm:$0xff]
    %v2763 = vld [vmem:[#allocation11 + $0x1088] sm:$0xff]
    %v2764 = vld [vmem:[#allocation11 + $0x1090] sm:$0xff]
    %v2765 = vld [vmem:[#allocation11 + $0x1098] sm:$0xff]
    %v2766 = vld [vmem:[#allocation11 + $0x10a0] sm:$0xff]
    %v2767 = vld [vmem:[#allocation11 + $0x10a8] sm:$0xff]
    %v2768 = vld [vmem:[#allocation11 + $0x10b0] sm:$0xff]
    %v2769 = vld [vmem:[#allocation11 + $0x10b8] sm:$0xff]
    %v2770 = vld [vmem:[#allocation11 + $0x10c0] sm:$0xff]
    %v2771 = vld [vmem:[#allocation11 + $0x10c8] sm:$0xff]
    %v2772 = vld [vmem:[#allocation11 + $0x10d0] sm:$0xff]
    %v2773 = vld [vmem:[#allocation11 + $0x10d8] sm:$0xff]
    %v2774 = vld [vmem:[#allocation11 + $0x10e0] sm:$0xff]
    %v2775 = vld [vmem:[#allocation11 + $0x10e8] sm:$0xff]
    %v2776 = vld [vmem:[#allocation11 + $0x10f0] sm:$0xff]
    %v2777 = vld [vmem:[#allocation11 + $0x10f8] sm:$0xff]
    %v2778 = vld [vmem:[#allocation11 + $0x1100] sm:$0xff]
    %v2779 = vld [vmem:[#allocation11 + $0x1108] sm:$0xff]
    %v2780 = vld [vmem:[#allocation11 + $0x1110] sm:$0xff]
    %v2781 = vld [vmem:[#allocation11 + $0x1118] sm:$0xff]
    %v2782 = vld [vmem:[#allocation11 + $0x1120] sm:$0xff]
    %v2783 = vld [vmem:[#allocation11 + $0x1128] sm:$0xff]
    %v2784 = vld [vmem:[#allocation11 + $0x1130] sm:$0xff]
    %v2785 = vld [vmem:[#allocation11 + $0x1138] sm:$0xff]
    %v2786 = vld [vmem:[#allocation11 + $0x1140] sm:$0xff]
    %v2787 = vld [vmem:[#allocation11 + $0x1148] sm:$0xff]
    %v2788 = vld [vmem:[#allocation11 + $0x1150] sm:$0xff]
    %v2789 = vld [vmem:[#allocation11 + $0x1158] sm:$0xff]
    %v2790 = vld [vmem:[#allocation11 + $0x1160] sm:$0xff]
    %v2791 = vld [vmem:[#allocation11 + $0x1168] sm:$0xff]
    %v2792 = vld [vmem:[#allocation11 + $0x1170] sm:$0xff]
    %v2793 = vld [vmem:[#allocation11 + $0x1178] sm:$0xff]
    %v2794 = vld [vmem:[#allocation11 + $0x1180] sm:$0xff]
    %v2795 = vld [vmem:[#allocation11 + $0x1188] sm:$0xff]
    %v2796 = vld [vmem:[#allocation11 + $0x1190] sm:$0xff]
    %v2797 = vld [vmem:[#allocation11 + $0x1198] sm:$0xff]
    %v2798 = vld [vmem:[#allocation11 + $0x11a0] sm:$0xff]
    %v2799 = vld [vmem:[#allocation11 + $0x11a8] sm:$0xff]
    %v2800 = vld [vmem:[#allocation11 + $0x11b0] sm:$0xff]
    %v2801 = vld [vmem:[#allocation11 + $0x11b8] sm:$0xff]
    %v2802 = vld [vmem:[#allocation11 + $0x11c0] sm:$0xff]
    %v2803 = vld [vmem:[#allocation11 + $0x11c8] sm:$0xff]
    %v2804 = vld [vmem:[#allocation11 + $0x11d0] sm:$0xff]
    %v2805 = vld [vmem:[#allocation11 + $0x11d8] sm:$0xff]
    %v2806 = vld [vmem:[#allocation11 + $0x11e0] sm:$0xff]
    %v2807 = vld [vmem:[#allocation11 + $0x11e8] sm:$0xff]
    %v2808 = vld [vmem:[#allocation11 + $0x11f0] sm:$0xff]
    %v2809 = vld [vmem:[#allocation11 + $0x11f8] sm:$0xff]
    %v2810 = vld [vmem:[#allocation11 + $0x1200] sm:$0xff]
    %v2811 = vld [vmem:[#allocation11 + $0x1208] sm:$0xff]
    %v2812 = vld [vmem:[#allocation11 + $0x1210] sm:$0xff]
    %v2813 = vld [vmem:[#allocation11 + $0x1218] sm:$0xff]
    %v2814 = vld [vmem:[#allocation11 + $0x1220] sm:$0xff]
    %v2815 = vld [vmem:[#allocation11 + $0x1228] sm:$0xff]
    %v2816 = vld [vmem:[#allocation11 + $0x1230] sm:$0xff]
    %v2817 = vld [vmem:[#allocation11 + $0x1238] sm:$0xff]
    %v2818 = vld [vmem:[#allocation11 + $0x1240] sm:$0xff]
    %v2819 = vld [vmem:[#allocation11 + $0x1248] sm:$0xff]
    %v2820 = vld [vmem:[#allocation11 + $0x1250] sm:$0xff]
    %v2821 = vld [vmem:[#allocation11 + $0x1258] sm:$0xff]
    %v2822 = vld [vmem:[#allocation11 + $0x1260] sm:$0xff]
    %v2823 = vld [vmem:[#allocation11 + $0x1268] sm:$0xff]
    %v2824 = vld [vmem:[#allocation11 + $0x1270] sm:$0xff]
    %v2825 = vld [vmem:[#allocation11 + $0x1278] sm:$0xff]
    %v2826 = vld [vmem:[#allocation11 + $0x1280] sm:$0xff]
    %v2827 = vld [vmem:[#allocation11 + $0x1288] sm:$0xff]
    %v2828 = vld [vmem:[#allocation11 + $0x1290] sm:$0xff]
    %v2829 = vld [vmem:[#allocation11 + $0x1298] sm:$0xff]
    %v2830 = vld [vmem:[#allocation11 + $0x12a0] sm:$0xff]
    %v2831 = vld [vmem:[#allocation11 + $0x12a8] sm:$0xff]
    %v2832 = vld [vmem:[#allocation11 + $0x12b0] sm:$0xff]
    %v2833 = vld [vmem:[#allocation11 + $0x12b8] sm:$0xff]
    %v2834 = vld [vmem:[#allocation11 + $0x12c0] sm:$0xff]
    %v2835 = vld [vmem:[#allocation11 + $0x12c8] sm:$0xff]
    %v2836 = vld [vmem:[#allocation11 + $0x12d0] sm:$0xff]
    %v2837 = vld [vmem:[#allocation11 + $0x12d8] sm:$0xff]
    %v2838 = vld [vmem:[#allocation11 + $0x12e0] sm:$0xff]
    %v2839 = vld [vmem:[#allocation11 + $0x12e8] sm:$0xff]
    %v2840 = vld [vmem:[#allocation11 + $0x12f0] sm:$0xff]
    %v2841 = vld [vmem:[#allocation11 + $0x12f8] sm:$0xff]
    %v2842 = vld [vmem:[#allocation11 + $0x1300] sm:$0xff]
    %v2843 = vld [vmem:[#allocation11 + $0x1308] sm:$0xff]
    %v2844 = vld [vmem:[#allocation11 + $0x1310] sm:$0xff]
    %v2845 = vld [vmem:[#allocation11 + $0x1318] sm:$0xff]
    %v2846 = vld [vmem:[#allocation11 + $0x1320] sm:$0xff]
    %v2847 = vld [vmem:[#allocation11 + $0x1328] sm:$0xff]
    %v2848 = vld [vmem:[#allocation11 + $0x1330] sm:$0xff]
    %v2849 = vld [vmem:[#allocation11 + $0x1338] sm:$0xff]
    %v2850 = vld [vmem:[#allocation11 + $0x1340] sm:$0xff]
    %v2851 = vld [vmem:[#allocation11 + $0x1348] sm:$0xff]
    %v2852 = vld [vmem:[#allocation11 + $0x1350] sm:$0xff]
    %v2853 = vld [vmem:[#allocation11 + $0x1358] sm:$0xff]
    %v2854 = vld [vmem:[#allocation11 + $0x1360] sm:$0xff]
    %v2855 = vld [vmem:[#allocation11 + $0x1368] sm:$0xff]
    %v2856 = vld [vmem:[#allocation11 + $0x1370] sm:$0xff]
    %v2857 = vld [vmem:[#allocation11 + $0x1378] sm:$0xff]
    %v2858 = vld [vmem:[#allocation11 + $0x1380] sm:$0xff]
    %v2859 = vld [vmem:[#allocation11 + $0x1388] sm:$0xff]
    %v2860 = vld [vmem:[#allocation11 + $0x1390] sm:$0xff]
    %v2861 = vld [vmem:[#allocation11 + $0x1398] sm:$0xff]
    %v2862 = vld [vmem:[#allocation11 + $0x13a0] sm:$0xff]
    %v2863 = vld [vmem:[#allocation11 + $0x13a8] sm:$0xff]
    %v2864 = vld [vmem:[#allocation11 + $0x13b0] sm:$0xff]
    %v2865 = vld [vmem:[#allocation11 + $0x13b8] sm:$0xff]
    %v2866 = vld [vmem:[#allocation11 + $0x13c0] sm:$0xff]
    %v2867 = vld [vmem:[#allocation11 + $0x13c8] sm:$0xff]
    %v2868 = vld [vmem:[#allocation11 + $0x13d0] sm:$0xff]
    %v2869 = vld [vmem:[#allocation11 + $0x13d8] sm:$0xff]
    %v2870 = vld [vmem:[#allocation11 + $0x13e0] sm:$0xff]
    %v2871 = vld [vmem:[#allocation11 + $0x13e8] sm:$0xff]
    %v2872 = vld [vmem:[#allocation11 + $0x13f0] sm:$0xff]
    %v2873 = vld [vmem:[#allocation11 + $0x13f8] sm:$0xff]
    %v2874 = vld [vmem:[#allocation11 + $0x1400] sm:$0xff]
    %v2875 = vld [vmem:[#allocation11 + $0x1408] sm:$0xff]
    %v2876 = vld [vmem:[#allocation11 + $0x1410] sm:$0xff]
    %v2877 = vld [vmem:[#allocation11 + $0x1418] sm:$0xff]
    %v2878 = vld [vmem:[#allocation11 + $0x1420] sm:$0xff]
    %v2879 = vld [vmem:[#allocation11 + $0x1428] sm:$0xff]
    %v2880 = vld [vmem:[#allocation11 + $0x1430] sm:$0xff]
    %v2881 = vld [vmem:[#allocation11 + $0x1438] sm:$0xff]
    %v2882 = vld [vmem:[#allocation11 + $0x1440] sm:$0xff]
    %v2883 = vld [vmem:[#allocation11 + $0x1448] sm:$0xff]
    %v2884 = vld [vmem:[#allocation11 + $0x1450] sm:$0xff]
    %v2885 = vld [vmem:[#allocation11 + $0x1458] sm:$0xff]
    %v2886 = vld [vmem:[#allocation11 + $0x1460] sm:$0xff]
    %v2887 = vld [vmem:[#allocation11 + $0x1468] sm:$0xff]
    %v2888 = vld [vmem:[#allocation11 + $0x1470] sm:$0xff]
    %v2889 = vld [vmem:[#allocation11 + $0x1478] sm:$0xff]
    %v2890 = vld [vmem:[#allocation11 + $0x1480] sm:$0xff]
    %v2891 = vld [vmem:[#allocation11 + $0x1488] sm:$0xff]
    %v2892 = vld [vmem:[#allocation11 + $0x1490] sm:$0xff]
    %v2893 = vld [vmem:[#allocation11 + $0x1498] sm:$0xff]
    %v2894 = vld [vmem:[#allocation11 + $0x14a0] sm:$0xff]
    %v2895 = vld [vmem:[#allocation11 + $0x14a8] sm:$0xff]
    %v2896 = vld [vmem:[#allocation11 + $0x14b0] sm:$0xff]
    %v2897 = vld [vmem:[#allocation11 + $0x14b8] sm:$0xff]
    %v2898 = vld [vmem:[#allocation11 + $0x14c0] sm:$0xff]
    %v2899 = vld [vmem:[#allocation11 + $0x14c8] sm:$0xff]
    %v2900 = vld [vmem:[#allocation11 + $0x14d0] sm:$0xff]
    %v2901 = vld [vmem:[#allocation11 + $0x14d8] sm:$0xff]
    %v2902 = vld [vmem:[#allocation11 + $0x14e0] sm:$0xff]
    %v2903 = vld [vmem:[#allocation11 + $0x14e8] sm:$0xff]
    %v2904 = vld [vmem:[#allocation11 + $0x14f0] sm:$0xff]
    %v2905 = vld [vmem:[#allocation11 + $0x14f8] sm:$0xff]
    %v2906 = vld [vmem:[#allocation11 + $0x1500] sm:$0xff]
    %v2907 = vld [vmem:[#allocation11 + $0x1508] sm:$0xff]
    %v2908 = vld [vmem:[#allocation11 + $0x1510] sm:$0xff]
    %v2909 = vld [vmem:[#allocation11 + $0x1518] sm:$0xff]
    %v2910 = vld [vmem:[#allocation11 + $0x1520] sm:$0xff]
    %v2911 = vld [vmem:[#allocation11 + $0x1528] sm:$0xff]
    %v2912 = vld [vmem:[#allocation11 + $0x1530] sm:$0xff]
    %v2913 = vld [vmem:[#allocation11 + $0x1538] sm:$0xff]
    %v2914 = vld [vmem:[#allocation11 + $0x1540] sm:$0xff]
    %v2915 = vld [vmem:[#allocation11 + $0x1548] sm:$0xff]
    %v2916 = vld [vmem:[#allocation11 + $0x1550] sm:$0xff]
    %v2917 = vld [vmem:[#allocation11 + $0x1558] sm:$0xff]
    %v2918 = vld [vmem:[#allocation11 + $0x1560] sm:$0xff]
    %v2919 = vld [vmem:[#allocation11 + $0x1568] sm:$0xff]
    %v2920 = vld [vmem:[#allocation11 + $0x1570] sm:$0xff]
    %v2921 = vld [vmem:[#allocation11 + $0x1578] sm:$0xff]
    %v2922 = vld [vmem:[#allocation11 + $0x1580] sm:$0xff]
    %v2923 = vld [vmem:[#allocation11 + $0x1588] sm:$0xff]
    %v2924 = vld [vmem:[#allocation11 + $0x1590] sm:$0xff]
    %v2925 = vld [vmem:[#allocation11 + $0x1598] sm:$0xff]
    %v2926 = vld [vmem:[#allocation11 + $0x15a0] sm:$0xff]
    %v2927 = vld [vmem:[#allocation11 + $0x15a8] sm:$0xff]
    %v2928 = vld [vmem:[#allocation11 + $0x15b0] sm:$0xff]
    %v2929 = vld [vmem:[#allocation11 + $0x15b8] sm:$0xff]
    %v2930 = vld [vmem:[#allocation11 + $0x15c0] sm:$0xff]
    %v2931 = vld [vmem:[#allocation11 + $0x15c8] sm:$0xff]
    %v2932 = vld [vmem:[#allocation11 + $0x15d0] sm:$0xff]
    %v2933 = vld [vmem:[#allocation11 + $0x15d8] sm:$0xff]
    %v2934 = vld [vmem:[#allocation11 + $0x15e0] sm:$0xff]
    %v2935 = vld [vmem:[#allocation11 + $0x15e8] sm:$0xff]
    %v2936 = vld [vmem:[#allocation11 + $0x15f0] sm:$0xff]
    %v2937 = vld [vmem:[#allocation11 + $0x15f8] sm:$0xff]
    %v2938 = vld [vmem:[#allocation11 + $0x1600] sm:$0xff]
    %v2939 = vld [vmem:[#allocation11 + $0x1608] sm:$0xff]
    %v2940 = vld [vmem:[#allocation11 + $0x1610] sm:$0xff]
    %v2941 = vld [vmem:[#allocation11 + $0x1618] sm:$0xff]
    %v2942 = vld [vmem:[#allocation11 + $0x1620] sm:$0xff]
    %v2943 = vld [vmem:[#allocation11 + $0x1628] sm:$0xff]
    %v2944 = vld [vmem:[#allocation11 + $0x1630] sm:$0xff]
    %v2945 = vld [vmem:[#allocation11 + $0x1638] sm:$0xff]
    %v2946 = vld [vmem:[#allocation11 + $0x1640] sm:$0xff]
    %v2947 = vld [vmem:[#allocation11 + $0x1648] sm:$0xff]
    %v2948 = vld [vmem:[#allocation11 + $0x1650] sm:$0xff]
    %v2949 = vld [vmem:[#allocation11 + $0x1658] sm:$0xff]
    %v2950 = vld [vmem:[#allocation11 + $0x1660] sm:$0xff]
    %v2951 = vld [vmem:[#allocation11 + $0x1668] sm:$0xff]
    %v2952 = vld [vmem:[#allocation11 + $0x1670] sm:$0xff]
    %v2953 = vld [vmem:[#allocation11 + $0x1678] sm:$0xff]
    %v2954 = vld [vmem:[#allocation11 + $0x1680] sm:$0xff]
    %v2955 = vld [vmem:[#allocation11 + $0x1688] sm:$0xff]
    %v2956 = vld [vmem:[#allocation11 + $0x1690] sm:$0xff]
    %v2957 = vld [vmem:[#allocation11 + $0x1698] sm:$0xff]
    %v2958 = vld [vmem:[#allocation11 + $0x16a0] sm:$0xff]
    %v2959 = vld [vmem:[#allocation11 + $0x16a8] sm:$0xff]
    %v2960 = vld [vmem:[#allocation11 + $0x16b0] sm:$0xff]
    %v2961 = vld [vmem:[#allocation11 + $0x16b8] sm:$0xff]
    %v2962 = vld [vmem:[#allocation11 + $0x16c0] sm:$0xff]
    %v2963 = vld [vmem:[#allocation11 + $0x16c8] sm:$0xff]
    %v2964 = vld [vmem:[#allocation11 + $0x16d0] sm:$0xff]
    %v2965 = vld [vmem:[#allocation11 + $0x16d8] sm:$0xff]
    %v2966 = vld [vmem:[#allocation11 + $0x16e0] sm:$0xff]
    %v2967 = vld [vmem:[#allocation11 + $0x16e8] sm:$0xff]
    %v2968 = vld [vmem:[#allocation11 + $0x16f0] sm:$0xff]
    %v2969 = vld [vmem:[#allocation11 + $0x16f8] sm:$0xff]
    %v2970 = vld [vmem:[#allocation11 + $0x1700] sm:$0xff]
    %v2971 = vld [vmem:[#allocation11 + $0x1708] sm:$0xff]
    %v2972 = vld [vmem:[#allocation11 + $0x1710] sm:$0xff]
    %v2973 = vld [vmem:[#allocation11 + $0x1718] sm:$0xff]
    %v2974 = vld [vmem:[#allocation11 + $0x1720] sm:$0xff]
    %v2975 = vld [vmem:[#allocation11 + $0x1728] sm:$0xff]
    %v2976 = vld [vmem:[#allocation11 + $0x1730] sm:$0xff]
    %v2977 = vld [vmem:[#allocation11 + $0x1738] sm:$0xff]
    %v2978 = vld [vmem:[#allocation11 + $0x1740] sm:$0xff]
    %v2979 = vld [vmem:[#allocation11 + $0x1748] sm:$0xff]
    %v2980 = vld [vmem:[#allocation11 + $0x1750] sm:$0xff]
    %v2981 = vld [vmem:[#allocation11 + $0x1758] sm:$0xff]
    %v2982 = vld [vmem:[#allocation11 + $0x1760] sm:$0xff]
    %v2983 = vld [vmem:[#allocation11 + $0x1768] sm:$0xff]
    %v2984 = vld [vmem:[#allocation11 + $0x1770] sm:$0xff]
    %v2985 = vld [vmem:[#allocation11 + $0x1778] sm:$0xff]
    %v2986 = vld [vmem:[#allocation11 + $0x1780] sm:$0xff]
    %v2987 = vld [vmem:[#allocation11 + $0x1788] sm:$0xff]
    %v2988 = vld [vmem:[#allocation11 + $0x1790] sm:$0xff]
    %v2989 = vld [vmem:[#allocation11 + $0x1798] sm:$0xff]
    %v2990 = vld [vmem:[#allocation11 + $0x17a0] sm:$0xff]
    %v2991 = vld [vmem:[#allocation11 + $0x17a8] sm:$0xff]
    %v2992 = vld [vmem:[#allocation11 + $0x17b0] sm:$0xff]
    %v2993 = vld [vmem:[#allocation11 + $0x17b8] sm:$0xff]
    %v2994 = vld [vmem:[#allocation11 + $0x17c0] sm:$0xff]
    %v2995 = vld [vmem:[#allocation11 + $0x17c8] sm:$0xff]
    %v2996 = vld [vmem:[#allocation11 + $0x17d0] sm:$0xff]
    %v2997 = vld [vmem:[#allocation11 + $0x17d8] sm:$0xff]
    %v2998 = vld [vmem:[#allocation11 + $0x17e0] sm:$0xff]
    %v2999 = vld [vmem:[#allocation11 + $0x17e8] sm:$0xff]
    %v3000 = vld [vmem:[#allocation11 + $0x17f0] sm:$0xff]
    %v3001 = vld [vmem:[#allocation11 + $0x17f8] sm:$0xff]
    %v3002 = vld [vmem:[#allocation11 + $0x1800] sm:$0xff]
    %v3003 = vld [vmem:[#allocation11 + $0x1808] sm:$0xff]
    %v3004 = vld [vmem:[#allocation11 + $0x1810] sm:$0xff]
    %v3005 = vld [vmem:[#allocation11 + $0x1818] sm:$0xff]
    %v3006 = vld [vmem:[#allocation11 + $0x1820] sm:$0xff]
    %v3007 = vld [vmem:[#allocation11 + $0x1828] sm:$0xff]
    %v3008 = vld [vmem:[#allocation11 + $0x1830] sm:$0xff]
    %v3009 = vld [vmem:[#allocation11 + $0x1838] sm:$0xff]
    %v3010 = vld [vmem:[#allocation11 + $0x1840] sm:$0xff]
    %v3011 = vld [vmem:[#allocation11 + $0x1848] sm:$0xff]
    %v3012 = vld [vmem:[#allocation11 + $0x1850] sm:$0xff]
    %v3013 = vld [vmem:[#allocation11 + $0x1858] sm:$0xff]
    %v3014 = vld [vmem:[#allocation11 + $0x1860] sm:$0xff]
    %v3015 = vld [vmem:[#allocation11 + $0x1868] sm:$0xff]
    %v3016 = vld [vmem:[#allocation11 + $0x1870] sm:$0xff]
    %v3017 = vld [vmem:[#allocation11 + $0x1878] sm:$0xff]
    %v3018 = vld [vmem:[#allocation11 + $0x1880] sm:$0xff]
    %v3019 = vld [vmem:[#allocation11 + $0x1888] sm:$0xff]
    %v3020 = vld [vmem:[#allocation11 + $0x1890] sm:$0xff]
    %v3021 = vld [vmem:[#allocation11 + $0x1898] sm:$0xff]
    %v3022 = vld [vmem:[#allocation11 + $0x18a0] sm:$0xff]
    %v3023 = vld [vmem:[#allocation11 + $0x18a8] sm:$0xff]
    %v3024 = vld [vmem:[#allocation11 + $0x18b0] sm:$0xff]
    %v3025 = vld [vmem:[#allocation11 + $0x18b8] sm:$0xff]
    %v3026 = vld [vmem:[#allocation11 + $0x18c0] sm:$0xff]
    %v3027 = vld [vmem:[#allocation11 + $0x18c8] sm:$0xff]
    %v3028 = vld [vmem:[#allocation11 + $0x18d0] sm:$0xff]
    %v3029 = vld [vmem:[#allocation11 + $0x18d8] sm:$0xff]
    %v3030 = vld [vmem:[#allocation11 + $0x18e0] sm:$0xff]
    %v3031 = vld [vmem:[#allocation11 + $0x18e8] sm:$0xff]
    %v3032 = vld [vmem:[#allocation11 + $0x18f0] sm:$0xff]
    %v3033 = vld [vmem:[#allocation11 + $0x18f8] sm:$0xff]
    %v3034 = vld [vmem:[#allocation11 + $0x1900] sm:$0xff]
    %v3035 = vld [vmem:[#allocation11 + $0x1908] sm:$0xff]
    %v3036 = vld [vmem:[#allocation11 + $0x1910] sm:$0xff]
    %v3037 = vld [vmem:[#allocation11 + $0x1918] sm:$0xff]
    %v3038 = vld [vmem:[#allocation11 + $0x1920] sm:$0xff]
    %v3039 = vld [vmem:[#allocation11 + $0x1928] sm:$0xff]
    %v3040 = vld [vmem:[#allocation11 + $0x1930] sm:$0xff]
    %v3041 = vld [vmem:[#allocation11 + $0x1938] sm:$0xff]
    %v3042 = vld [vmem:[#allocation11 + $0x1940] sm:$0xff]
    %v3043 = vld [vmem:[#allocation11 + $0x1948] sm:$0xff]
    %v3044 = vld [vmem:[#allocation11 + $0x1950] sm:$0xff]
    %v3045 = vld [vmem:[#allocation11 + $0x1958] sm:$0xff]
    %v3046 = vld [vmem:[#allocation11 + $0x1960] sm:$0xff]
    %v3047 = vld [vmem:[#allocation11 + $0x1968] sm:$0xff]
    %v3048 = vld [vmem:[#allocation11 + $0x1970] sm:$0xff]
    %v3049 = vld [vmem:[#allocation11 + $0x1978] sm:$0xff]
    %v3050 = vld [vmem:[#allocation11 + $0x1980] sm:$0xff]
    %v3051 = vld [vmem:[#allocation11 + $0x1988] sm:$0xff]
    %v3052 = vld [vmem:[#allocation11 + $0x1990] sm:$0xff]
    %v3053 = vld [vmem:[#allocation11 + $0x1998] sm:$0xff]
    %v3054 = vld [vmem:[#allocation11 + $0x19a0] sm:$0xff]
    %v3055 = vld [vmem:[#allocation11 + $0x19a8] sm:$0xff]
    %v3056 = vld [vmem:[#allocation11 + $0x19b0] sm:$0xff]
    %v3057 = vld [vmem:[#allocation11 + $0x19b8] sm:$0xff]
    %v3058 = vld [vmem:[#allocation11 + $0x19c0] sm:$0xff]
    %v3059 = vld [vmem:[#allocation11 + $0x19c8] sm:$0xff]
    %v3060 = vld [vmem:[#allocation11 + $0x19d0] sm:$0xff]
    %v3061 = vld [vmem:[#allocation11 + $0x19d8] sm:$0xff]
    %v3062 = vld [vmem:[#allocation11 + $0x19e0] sm:$0xff]
    %v3063 = vld [vmem:[#allocation11 + $0x19e8] sm:$0xff]
    %v3064 = vld [vmem:[#allocation11 + $0x19f0] sm:$0xff]
    %v3065 = vld [vmem:[#allocation11 + $0x19f8] sm:$0xff]
    %v3066 = vld [vmem:[#allocation11 + $0x1a00] sm:$0xff]
    %v3067 = vld [vmem:[#allocation11 + $0x1a08] sm:$0xff]
    %v3068 = vld [vmem:[#allocation11 + $0x1a10] sm:$0xff]
    %v3069 = vld [vmem:[#allocation11 + $0x1a18] sm:$0xff]
    %v3070 = vld [vmem:[#allocation11 + $0x1a20] sm:$0xff]
    %v3071 = vld [vmem:[#allocation11 + $0x1a28] sm:$0xff]
    %v3072 = vld [vmem:[#allocation11 + $0x1a30] sm:$0xff]
    %v3073 = vld [vmem:[#allocation11 + $0x1a38] sm:$0xff]
    %v3074 = vld [vmem:[#allocation11 + $0x1a40] sm:$0xff]
    %v3075 = vld [vmem:[#allocation11 + $0x1a48] sm:$0xff]
    %v3076 = vld [vmem:[#allocation11 + $0x1a50] sm:$0xff]
    %v3077 = vld [vmem:[#allocation11 + $0x1a58] sm:$0xff]
    %v3078 = vld [vmem:[#allocation11 + $0x1a60] sm:$0xff]
    %v3079 = vld [vmem:[#allocation11 + $0x1a68] sm:$0xff]
    %v3080 = vld [vmem:[#allocation11 + $0x1a70] sm:$0xff]
    %v3081 = vld [vmem:[#allocation11 + $0x1a78] sm:$0xff]
    %v3082 = vld [vmem:[#allocation11 + $0x1a80] sm:$0xff]
    %v3083 = vld [vmem:[#allocation11 + $0x1a88] sm:$0xff]
    %v3084 = vld [vmem:[#allocation11 + $0x1a90] sm:$0xff]
    %v3085 = vld [vmem:[#allocation11 + $0x1a98] sm:$0xff]
    %v3086 = vld [vmem:[#allocation11 + $0x1aa0] sm:$0xff]
    %v3087 = vld [vmem:[#allocation11 + $0x1aa8] sm:$0xff]
    %v3088 = vld [vmem:[#allocation11 + $0x1ab0] sm:$0xff]
    %v3089 = vld [vmem:[#allocation11 + $0x1ab8] sm:$0xff]
    %v3090 = vld [vmem:[#allocation11 + $0x1ac0] sm:$0xff]
    %v3091 = vld [vmem:[#allocation11 + $0x1ac8] sm:$0xff]
    %v3092 = vld [vmem:[#allocation11 + $0x1ad0] sm:$0xff]
    %v3093 = vld [vmem:[#allocation11 + $0x1ad8] sm:$0xff]
    %v3094 = vld [vmem:[#allocation11 + $0x1ae0] sm:$0xff]
    %v3095 = vld [vmem:[#allocation11 + $0x1ae8] sm:$0xff]
    %v3096 = vld [vmem:[#allocation11 + $0x1af0] sm:$0xff]
    %v3097 = vld [vmem:[#allocation11 + $0x1af8] sm:$0xff]
    %v3098 = vld [vmem:[#allocation11 + $0x1b00] sm:$0xff]
    %v3099 = vld [vmem:[#allocation11 + $0x1b08] sm:$0xff]
    %v3100 = vld [vmem:[#allocation11 + $0x1b10] sm:$0xff]
    %v3101 = vld [vmem:[#allocation11 + $0x1b18] sm:$0xff]
    %v3102 = vld [vmem:[#allocation11 + $0x1b20] sm:$0xff]
    %v3103 = vld [vmem:[#allocation11 + $0x1b28] sm:$0xff]
    %v3104 = vld [vmem:[#allocation11 + $0x1b30] sm:$0xff]
    %v3105 = vld [vmem:[#allocation11 + $0x1b38] sm:$0xff]
    %v3106 = vld [vmem:[#allocation11 + $0x1b40] sm:$0xff]
    %v3107 = vld [vmem:[#allocation11 + $0x1b48] sm:$0xff]
    %v3108 = vld [vmem:[#allocation11 + $0x1b50] sm:$0xff]
    %v3109 = vld [vmem:[#allocation11 + $0x1b58] sm:$0xff]
    %v3110 = vld [vmem:[#allocation11 + $0x1b60] sm:$0xff]
    %v3111 = vld [vmem:[#allocation11 + $0x1b68] sm:$0xff]
    %v3112 = vld [vmem:[#allocation11 + $0x1b70] sm:$0xff]
    %v3113 = vld [vmem:[#allocation11 + $0x1b78] sm:$0xff]
    %v3114 = vld [vmem:[#allocation11 + $0x1b80] sm:$0xff]
    %v3115 = vld [vmem:[#allocation11 + $0x1b88] sm:$0xff]
    %v3116 = vld [vmem:[#allocation11 + $0x1b90] sm:$0xff]
    %v3117 = vld [vmem:[#allocation11 + $0x1b98] sm:$0xff]
    %v3118 = vld [vmem:[#allocation11 + $0x1ba0] sm:$0xff]
    %v3119 = vld [vmem:[#allocation11 + $0x1ba8] sm:$0xff]
    %v3120 = vld [vmem:[#allocation11 + $0x1bb0] sm:$0xff]
    %v3121 = vld [vmem:[#allocation11 + $0x1bb8] sm:$0xff]
    %v3122 = vld [vmem:[#allocation11 + $0x1bc0] sm:$0xff]
    %v3123 = vld [vmem:[#allocation11 + $0x1bc8] sm:$0xff]
    %v3124 = vld [vmem:[#allocation11 + $0x1bd0] sm:$0xff]
    %v3125 = vld [vmem:[#allocation11 + $0x1bd8] sm:$0xff]
    %v3126 = vld [vmem:[#allocation11 + $0x1be0] sm:$0xff]
    %v3127 = vld [vmem:[#allocation11 + $0x1be8] sm:$0xff]
    %v3128 = vld [vmem:[#allocation11 + $0x1bf0] sm:$0xff]
    %v3129 = vld [vmem:[#allocation11 + $0x1bf8] sm:$0xff]
    %v3130 = vld [vmem:[#allocation11 + $0x1c00] sm:$0xff]
    %v3131 = vld [vmem:[#allocation11 + $0x1c08] sm:$0xff]
    %v3132 = vld [vmem:[#allocation11 + $0x1c10] sm:$0xff]
    %v3133 = vld [vmem:[#allocation11 + $0x1c18] sm:$0xff]
    %v3134 = vld [vmem:[#allocation11 + $0x1c20] sm:$0xff]
    %v3135 = vld [vmem:[#allocation11 + $0x1c28] sm:$0xff]
    %v3136 = vld [vmem:[#allocation11 + $0x1c30] sm:$0xff]
    %v3137 = vld [vmem:[#allocation11 + $0x1c38] sm:$0xff]
    %v3138 = vld [vmem:[#allocation11 + $0x1c40] sm:$0xff]
    %v3139 = vld [vmem:[#allocation11 + $0x1c48] sm:$0xff]
    %v3140 = vld [vmem:[#allocation11 + $0x1c50] sm:$0xff]
    %v3141 = vld [vmem:[#allocation11 + $0x1c58] sm:$0xff]
    %v3142 = vld [vmem:[#allocation11 + $0x1c60] sm:$0xff]
    %v3143 = vld [vmem:[#allocation11 + $0x1c68] sm:$0xff]
    %v3144 = vld [vmem:[#allocation11 + $0x1c70] sm:$0xff]
    %v3145 = vld [vmem:[#allocation11 + $0x1c78] sm:$0xff]
    %v3146 = vld [vmem:[#allocation11 + $0x1c80] sm:$0xff]
    %v3147 = vld [vmem:[#allocation11 + $0x1c88] sm:$0xff]
    %v3148 = vld [vmem:[#allocation11 + $0x1c90] sm:$0xff]
    %v3149 = vld [vmem:[#allocation11 + $0x1c98] sm:$0xff]
    %v3150 = vld [vmem:[#allocation11 + $0x1ca0] sm:$0xff]
    %v3151 = vld [vmem:[#allocation11 + $0x1ca8] sm:$0xff]
    %v3152 = vld [vmem:[#allocation11 + $0x1cb0] sm:$0xff]
    %v3153 = vld [vmem:[#allocation11 + $0x1cb8] sm:$0xff]
    %v3154 = vld [vmem:[#allocation11 + $0x1cc0] sm:$0xff]
    %v3155 = vld [vmem:[#allocation11 + $0x1cc8] sm:$0xff]
    %v3156 = vld [vmem:[#allocation11 + $0x1cd0] sm:$0xff]
    %v3157 = vld [vmem:[#allocation11 + $0x1cd8] sm:$0xff]
    %v3158 = vld [vmem:[#allocation11 + $0x1ce0] sm:$0xff]
    %v3159 = vld [vmem:[#allocation11 + $0x1ce8] sm:$0xff]
    %v3160 = vld [vmem:[#allocation11 + $0x1cf0] sm:$0xff]
    %v3161 = vld [vmem:[#allocation11 + $0x1cf8] sm:$0xff]
    %v3162 = vld [vmem:[#allocation11 + $0x1d00] sm:$0xff]
    %v3163 = vld [vmem:[#allocation11 + $0x1d08] sm:$0xff]
    %v3164 = vld [vmem:[#allocation11 + $0x1d10] sm:$0xff]
    %v3165 = vld [vmem:[#allocation11 + $0x1d18] sm:$0xff]
    %v3166 = vld [vmem:[#allocation11 + $0x1d20] sm:$0xff]
    %v3167 = vld [vmem:[#allocation11 + $0x1d28] sm:$0xff]
    %v3168 = vld [vmem:[#allocation11 + $0x1d30] sm:$0xff]
    %v3169 = vld [vmem:[#allocation11 + $0x1d38] sm:$0xff]
    %v3170 = vld [vmem:[#allocation11 + $0x1d40] sm:$0xff]
    %v3171 = vld [vmem:[#allocation11 + $0x1d48] sm:$0xff]
    %v3172 = vld [vmem:[#allocation11 + $0x1d50] sm:$0xff]
    %v3173 = vld [vmem:[#allocation11 + $0x1d58] sm:$0xff]
    %v3174 = vld [vmem:[#allocation11 + $0x1d60] sm:$0xff]
    %v3175 = vld [vmem:[#allocation11 + $0x1d68] sm:$0xff]
    %v3176 = vld [vmem:[#allocation11 + $0x1d70] sm:$0xff]
    %v3177 = vld [vmem:[#allocation11 + $0x1d78] sm:$0xff]
    %v3178 = vld [vmem:[#allocation11 + $0x1d80] sm:$0xff]
    %v3179 = vld [vmem:[#allocation11 + $0x1d88] sm:$0xff]
    %v3180 = vld [vmem:[#allocation11 + $0x1d90] sm:$0xff]
    %v3181 = vld [vmem:[#allocation11 + $0x1d98] sm:$0xff]
    %v3182 = vld [vmem:[#allocation11 + $0x1da0] sm:$0xff]
    %v3183 = vld [vmem:[#allocation11 + $0x1da8] sm:$0xff]
    %v3184 = vld [vmem:[#allocation11 + $0x1db0] sm:$0xff]
    %v3185 = vld [vmem:[#allocation11 + $0x1db8] sm:$0xff]
    %v3186 = vld [vmem:[#allocation11 + $0x1dc0] sm:$0xff]
    %v3187 = vld [vmem:[#allocation11 + $0x1dc8] sm:$0xff]
    %v3188 = vld [vmem:[#allocation11 + $0x1dd0] sm:$0xff]
    %v3189 = vld [vmem:[#allocation11 + $0x1dd8] sm:$0xff]
    %v3190 = vld [vmem:[#allocation11 + $0x1de0] sm:$0xff]
    %v3191 = vld [vmem:[#allocation11 + $0x1de8] sm:$0xff]
    %v3192 = vld [vmem:[#allocation11 + $0x1df0] sm:$0xff]
    %v3193 = vld [vmem:[#allocation11 + $0x1df8] sm:$0xff]
    %v3194 = vld [vmem:[#allocation11 + $0x1e00] sm:$0xff]
    %v3195 = vld [vmem:[#allocation11 + $0x1e08] sm:$0xff]
    %v3196 = vld [vmem:[#allocation11 + $0x1e10] sm:$0xff]
    %v3197 = vld [vmem:[#allocation11 + $0x1e18] sm:$0xff]
    %v3198 = vld [vmem:[#allocation11 + $0x1e20] sm:$0xff]
    %v3199 = vld [vmem:[#allocation11 + $0x1e28] sm:$0xff]
    %v3200 = vld [vmem:[#allocation11 + $0x1e30] sm:$0xff]
    %v3201 = vld [vmem:[#allocation11 + $0x1e38] sm:$0xff]
    %v3202 = vld [vmem:[#allocation11 + $0x1e40] sm:$0xff]
    %v3203 = vld [vmem:[#allocation11 + $0x1e48] sm:$0xff]
    %v3204 = vld [vmem:[#allocation11 + $0x1e50] sm:$0xff]
    %v3205 = vld [vmem:[#allocation11 + $0x1e58] sm:$0xff]
    %v3206 = vld [vmem:[#allocation11 + $0x1e60] sm:$0xff]
    %v3207 = vld [vmem:[#allocation11 + $0x1e68] sm:$0xff]
    %v3208 = vld [vmem:[#allocation11 + $0x1e70] sm:$0xff]
    %v3209 = vld [vmem:[#allocation11 + $0x1e78] sm:$0xff]
    %v3210 = vld [vmem:[#allocation11 + $0x1e80] sm:$0xff]
    %v3211 = vld [vmem:[#allocation11 + $0x1e88] sm:$0xff]
    %v3212 = vld [vmem:[#allocation11 + $0x1e90] sm:$0xff]
    %v3213 = vld [vmem:[#allocation11 + $0x1e98] sm:$0xff]
    %v3214 = vld [vmem:[#allocation11 + $0x1ea0] sm:$0xff]
    %v3215 = vld [vmem:[#allocation11 + $0x1ea8] sm:$0xff]
    %v3216 = vld [vmem:[#allocation11 + $0x1eb0] sm:$0xff]
    %v3217 = vld [vmem:[#allocation11 + $0x1eb8] sm:$0xff]
    %v3218 = vld [vmem:[#allocation11 + $0x1ec0] sm:$0xff]
    %v3219 = vld [vmem:[#allocation11 + $0x1ec8] sm:$0xff]
    %v3220 = vld [vmem:[#allocation11 + $0x1ed0] sm:$0xff]
    %v3221 = vld [vmem:[#allocation11 + $0x1ed8] sm:$0xff]
    %v3222 = vld [vmem:[#allocation11 + $0x1ee0] sm:$0xff]
    %v3223 = vld [vmem:[#allocation11 + $0x1ee8] sm:$0xff]
    %v3224 = vld [vmem:[#allocation11 + $0x1ef0] sm:$0xff]
    %v3225 = vld [vmem:[#allocation11 + $0x1ef8] sm:$0xff]
    %v3226 = vld [vmem:[#allocation11 + $0x1f00] sm:$0xff]
    %v3227 = vld [vmem:[#allocation11 + $0x1f08] sm:$0xff]
    %v3228 = vld [vmem:[#allocation11 + $0x1f10] sm:$0xff]
    %v3229 = vld [vmem:[#allocation11 + $0x1f18] sm:$0xff]
    %v3230 = vld [vmem:[#allocation11 + $0x1f20] sm:$0xff]
    %v3231 = vld [vmem:[#allocation11 + $0x1f28] sm:$0xff]
    %v3232 = vld [vmem:[#allocation11 + $0x1f30] sm:$0xff]
    %v3233 = vld [vmem:[#allocation11 + $0x1f38] sm:$0xff]
    %v3234 = vld [vmem:[#allocation11 + $0x1f40] sm:$0xff]
    %v3235 = vld [vmem:[#allocation11 + $0x1f48] sm:$0xff]
    %v3236 = vld [vmem:[#allocation11 + $0x1f50] sm:$0xff]
    %v3237 = vld [vmem:[#allocation11 + $0x1f58] sm:$0xff]
    %v3238 = vld [vmem:[#allocation11 + $0x1f60] sm:$0xff]
    %v3239 = vld [vmem:[#allocation11 + $0x1f68] sm:$0xff]
    %v3240 = vld [vmem:[#allocation11 + $0x1f70] sm:$0xff]
    %v3241 = vld [vmem:[#allocation11 + $0x1f78] sm:$0xff]
    %v3242 = vld [vmem:[#allocation11 + $0x1f80] sm:$0xff]
    %v3243 = vld [vmem:[#allocation11 + $0x1f88] sm:$0xff]
    %v3244 = vld [vmem:[#allocation11 + $0x1f90] sm:$0xff]
    %v3245 = vld [vmem:[#allocation11 + $0x1f98] sm:$0xff]
    %v3246 = vld [vmem:[#allocation11 + $0x1fa0] sm:$0xff]
    %v3247 = vld [vmem:[#allocation11 + $0x1fa8] sm:$0xff]
    %v3248 = vld [vmem:[#allocation11 + $0x1fb0] sm:$0xff]
    %v3249 = vld [vmem:[#allocation11 + $0x1fb8] sm:$0xff]
    %v3250 = vld [vmem:[#allocation11 + $0x1fc0] sm:$0xff]
    %v3251 = vld [vmem:[#allocation11 + $0x1fc8] sm:$0xff]
    %v3252 = vld [vmem:[#allocation11 + $0x1fd0] sm:$0xff]
    %v3253 = vld [vmem:[#allocation11 + $0x1fd8] sm:$0xff]
    %v3254 = vld [vmem:[#allocation11 + $0x1fe0] sm:$0xff]
    %v3255 = vld [vmem:[#allocation11 + $0x1fe8] sm:$0xff]
    %v3256 = vld [vmem:[#allocation11 + $0x1ff0] sm:$0xff]
    %v3257 = vld [vmem:[#allocation11 + $0x1ff8] sm:$0xff]
    %v3258 = vld [vmem:[#allocation13] sm:$0xff]
    %v3259 = vld [vmem:[#allocation13 + $0x8] sm:$0xff]
    %v3262 = vlaneseq
    %v3263 = vshrl.u32 %v3262, 7
    %v3264 = vsub.s32 0, %v3263
    %v3265 = vrot.slane %v3258, %v3264
    %v3266 = vlaneseq
    %v3267 = vshrl.u32 %v3266, 7
    %v3268 = vsub.s32 1, %v3267
    %v3269 = vrot.slane %v3258, %v3268
    %v3270 = vlaneseq
    %v3271 = vshrl.u32 %v3270, 7
    %v3272 = vsub.s32 2, %v3271
    %v3273 = vrot.slane %v3258, %v3272
    %v3274 = vlaneseq
    %v3275 = vshrl.u32 %v3274, 7
    %v3276 = vsub.s32 3, %v3275
    %v3277 = vrot.slane %v3258, %v3276
    %v3278 = vlaneseq
    %v3279 = vshrl.u32 %v3278, 7
    %v3280 = vsub.s32 4, %v3279
    %v3281 = vrot.slane %v3258, %v3280
    %v3282 = vlaneseq
    %v3283 = vshrl.u32 %v3282, 7
    %v3284 = vsub.s32 5, %v3283
    %v3285 = vrot.slane %v3258, %v3284
    %v3286 = vlaneseq
    %v3287 = vshrl.u32 %v3286, 7
    %v3288 = vsub.s32 6, %v3287
    %v3289 = vrot.slane %v3258, %v3288
    %v3290 = vlaneseq
    %v3291 = vshrl.u32 %v3290, 7
    %v3292 = vsub.s32 7, %v3291
    %v3293 = vrot.slane %v3258, %v3292
    %v3294 = vlaneseq
    %v3295 = vshrl.u32 %v3294, 7
    %v3296 = vsub.s32 0, %v3295
    %v3297 = vrot.slane %v3259, %v3296
    %v3298 = vlaneseq
    %v3299 = vshrl.u32 %v3298, 7
    %v3300 = vsub.s32 1, %v3299
    %v3301 = vrot.slane %v3259, %v3300
    %v3302 = vlaneseq
    %v3303 = vshrl.u32 %v3302, 7
    %v3304 = vsub.s32 2, %v3303
    %v3305 = vrot.slane %v3259, %v3304
    %v3306 = vlaneseq
    %v3307 = vshrl.u32 %v3306, 7
    %v3308 = vsub.s32 3, %v3307
    %v3309 = vrot.slane %v3259, %v3308
    %v3310 = vlaneseq
    %v3311 = vshrl.u32 %v3310, 7
    %v3312 = vsub.s32 4, %v3311
    %v3313 = vrot.slane %v3259, %v3312
    %v3314 = vlaneseq
    %v3315 = vshrl.u32 %v3314, 7
    %v3316 = vsub.s32 5, %v3315
    %v3317 = vrot.slane %v3259, %v3316
    %v3318 = vlaneseq
    %v3319 = vshrl.u32 %v3318, 7
    %v3320 = vsub.s32 6, %v3319
    %v3321 = vrot.slane %v3259, %v3320
    %v3322 = vlaneseq
    %v3323 = vshrl.u32 %v3322, 7
    %v3324 = vsub.s32 7, %v3323
    %v3325 = vrot.slane %v3259, %v3324
    %v4366 = vunpack.c.l.b16 %v2234
    %v4367 = vunpack.c.h.b16 %v2234
    %v4368 = vunpack.c.l.b16 %v2235
    %v4369 = vunpack.c.h.b16 %v2235
    %v4370 = vunpack.c.l.b16 %v2236
    %v4371 = vunpack.c.h.b16 %v2236
    %v4372 = vunpack.c.l.b16 %v2237
    %v4373 = vunpack.c.h.b16 %v2237
    %v4374 = vunpack.c.l.b16 %v2238
    %v4375 = vunpack.c.h.b16 %v2238
    %v4376 = vunpack.c.l.b16 %v2239
    %v4377 = vunpack.c.h.b16 %v2239
    %v4378 = vunpack.c.l.b16 %v2240
    %v4379 = vunpack.c.h.b16 %v2240
    %v4380 = vunpack.c.l.b16 %v2241
    %v4381 = vunpack.c.h.b16 %v2241
    %v4382 = vunpack.c.l.b16 %v2242
    %v4383 = vunpack.c.h.b16 %v2242
    %v4384 = vunpack.c.l.b16 %v2243
    %v4385 = vunpack.c.h.b16 %v2243
    %v4386 = vunpack.c.l.b16 %v2244
    %v4387 = vunpack.c.h.b16 %v2244
    %v4388 = vunpack.c.l.b16 %v2245
    %v4389 = vunpack.c.h.b16 %v2245
    %v4390 = vunpack.c.l.b16 %v2246
    %v4391 = vunpack.c.h.b16 %v2246
    %v4392 = vunpack.c.l.b16 %v2247
    %v4393 = vunpack.c.h.b16 %v2247
    %v4394 = vunpack.c.l.b16 %v2248
    %v4395 = vunpack.c.h.b16 %v2248
    %v4396 = vunpack.c.l.b16 %v2249
    %v4397 = vunpack.c.h.b16 %v2249
    %v4398 = vunpack.c.l.b16 %v2250
    %v4399 = vunpack.c.h.b16 %v2250
    %v4400 = vunpack.c.l.b16 %v2251
    %v4401 = vunpack.c.h.b16 %v2251
    %v4402 = vunpack.c.l.b16 %v2252
    %v4403 = vunpack.c.h.b16 %v2252
    %v4404 = vunpack.c.l.b16 %v2253
    %v4405 = vunpack.c.h.b16 %v2253
    %v4406 = vunpack.c.l.b16 %v2254
    %v4407 = vunpack.c.h.b16 %v2254
    %v4408 = vunpack.c.l.b16 %v2255
    %v4409 = vunpack.c.h.b16 %v2255
    %v4410 = vunpack.c.l.b16 %v2256
    %v4411 = vunpack.c.h.b16 %v2256
    %v4412 = vunpack.c.l.b16 %v2257
    %v4413 = vunpack.c.h.b16 %v2257
    %v4414 = vunpack.c.l.b16 %v2258
    %v4415 = vunpack.c.h.b16 %v2258
    %v4416 = vunpack.c.l.b16 %v2259
    %v4417 = vunpack.c.h.b16 %v2259
    %v4418 = vunpack.c.l.b16 %v2260
    %v4419 = vunpack.c.h.b16 %v2260
    %v4420 = vunpack.c.l.b16 %v2261
    %v4421 = vunpack.c.h.b16 %v2261
    %v4422 = vunpack.c.l.b16 %v2262
    %v4423 = vunpack.c.h.b16 %v2262
    %v4424 = vunpack.c.l.b16 %v2263
    %v4425 = vunpack.c.h.b16 %v2263
    %v4426 = vunpack.c.l.b16 %v2264
    %v4427 = vunpack.c.h.b16 %v2264
    %v4428 = vunpack.c.l.b16 %v2265
    %v4429 = vunpack.c.h.b16 %v2265
    %v4430 = vunpack.c.l.b16 %v2266
    %v4431 = vunpack.c.h.b16 %v2266
    %v4432 = vunpack.c.l.b16 %v2267
    %v4433 = vunpack.c.h.b16 %v2267
    %v4434 = vunpack.c.l.b16 %v2268
    %v4435 = vunpack.c.h.b16 %v2268
    %v4436 = vunpack.c.l.b16 %v2269
    %v4437 = vunpack.c.h.b16 %v2269
    %v4438 = vunpack.c.l.b16 %v2270
    %v4439 = vunpack.c.h.b16 %v2270
    %v4440 = vunpack.c.l.b16 %v2271
    %v4441 = vunpack.c.h.b16 %v2271
    %v4442 = vunpack.c.l.b16 %v2272
    %v4443 = vunpack.c.h.b16 %v2272
    %v4444 = vunpack.c.l.b16 %v2273
    %v4445 = vunpack.c.h.b16 %v2273
    %v4446 = vunpack.c.l.b16 %v2274
    %v4447 = vunpack.c.h.b16 %v2274
    %v4448 = vunpack.c.l.b16 %v2275
    %v4449 = vunpack.c.h.b16 %v2275
    %v4450 = vunpack.c.l.b16 %v2276
    %v4451 = vunpack.c.h.b16 %v2276
    %v4452 = vunpack.c.l.b16 %v2277
    %v4453 = vunpack.c.h.b16 %v2277
    %v4454 = vunpack.c.l.b16 %v2278
    %v4455 = vunpack.c.h.b16 %v2278
    %v4456 = vunpack.c.l.b16 %v2279
    %v4457 = vunpack.c.h.b16 %v2279
    %v4458 = vunpack.c.l.b16 %v2280
    %v4459 = vunpack.c.h.b16 %v2280
    %v4460 = vunpack.c.l.b16 %v2281
    %v4461 = vunpack.c.h.b16 %v2281
    %v4462 = vunpack.c.l.b16 %v2282
    %v4463 = vunpack.c.h.b16 %v2282
    %v4464 = vunpack.c.l.b16 %v2283
    %v4465 = vunpack.c.h.b16 %v2283
    %v4466 = vunpack.c.l.b16 %v2284
    %v4467 = vunpack.c.h.b16 %v2284
    %v4468 = vunpack.c.l.b16 %v2285
    %v4469 = vunpack.c.h.b16 %v2285
    %v4470 = vunpack.c.l.b16 %v2286
    %v4471 = vunpack.c.h.b16 %v2286
    %v4472 = vunpack.c.l.b16 %v2287
    %v4473 = vunpack.c.h.b16 %v2287
    %v4474 = vunpack.c.l.b16 %v2288
    %v4475 = vunpack.c.h.b16 %v2288
    %v4476 = vunpack.c.l.b16 %v2289
    %v4477 = vunpack.c.h.b16 %v2289
    %v4478 = vunpack.c.l.b16 %v2290
    %v4479 = vunpack.c.h.b16 %v2290
    %v4480 = vunpack.c.l.b16 %v2291
    %v4481 = vunpack.c.h.b16 %v2291
    %v4482 = vunpack.c.l.b16 %v2292
    %v4483 = vunpack.c.h.b16 %v2292
    %v4484 = vunpack.c.l.b16 %v2293
    %v4485 = vunpack.c.h.b16 %v2293
    %v4486 = vunpack.c.l.b16 %v2294
    %v4487 = vunpack.c.h.b16 %v2294
    %v4488 = vunpack.c.l.b16 %v2295
    %v4489 = vunpack.c.h.b16 %v2295
    %v4490 = vunpack.c.l.b16 %v2296
    %v4491 = vunpack.c.h.b16 %v2296
    %v4492 = vunpack.c.l.b16 %v2297
    %v4493 = vunpack.c.h.b16 %v2297
    %v4494 = vunpack.c.l.b16 %v2298
    %v4495 = vunpack.c.h.b16 %v2298
    %v4496 = vunpack.c.l.b16 %v2299
    %v4497 = vunpack.c.h.b16 %v2299
    %v4498 = vunpack.c.l.b16 %v2300
    %v4499 = vunpack.c.h.b16 %v2300
    %v4500 = vunpack.c.l.b16 %v2301
    %v4501 = vunpack.c.h.b16 %v2301
    %v4502 = vunpack.c.l.b16 %v2302
    %v4503 = vunpack.c.h.b16 %v2302
    %v4504 = vunpack.c.l.b16 %v2303
    %v4505 = vunpack.c.h.b16 %v2303
    %v4506 = vunpack.c.l.b16 %v2304
    %v4507 = vunpack.c.h.b16 %v2304
    %v4508 = vunpack.c.l.b16 %v2305
    %v4509 = vunpack.c.h.b16 %v2305
    %v4510 = vunpack.c.l.b16 %v2306
    %v4511 = vunpack.c.h.b16 %v2306
    %v4512 = vunpack.c.l.b16 %v2307
    %v4513 = vunpack.c.h.b16 %v2307
    %v4514 = vunpack.c.l.b16 %v2308
    %v4515 = vunpack.c.h.b16 %v2308
    %v4516 = vunpack.c.l.b16 %v2309
    %v4517 = vunpack.c.h.b16 %v2309
    %v4518 = vunpack.c.l.b16 %v2310
    %v4519 = vunpack.c.h.b16 %v2310
    %v4520 = vunpack.c.l.b16 %v2311
    %v4521 = vunpack.c.h.b16 %v2311
    %v4522 = vunpack.c.l.b16 %v2312
    %v4523 = vunpack.c.h.b16 %v2312
    %v4524 = vunpack.c.l.b16 %v2313
    %v4525 = vunpack.c.h.b16 %v2313
    %v4526 = vunpack.c.l.b16 %v2314
    %v4527 = vunpack.c.h.b16 %v2314
    %v4528 = vunpack.c.l.b16 %v2315
    %v4529 = vunpack.c.h.b16 %v2315
    %v4530 = vunpack.c.l.b16 %v2316
    %v4531 = vunpack.c.h.b16 %v2316
    %v4532 = vunpack.c.l.b16 %v2317
    %v4533 = vunpack.c.h.b16 %v2317
    %v4534 = vunpack.c.l.b16 %v2318
    %v4535 = vunpack.c.h.b16 %v2318
    %v4536 = vunpack.c.l.b16 %v2319
    %v4537 = vunpack.c.h.b16 %v2319
    %v4538 = vunpack.c.l.b16 %v2320
    %v4539 = vunpack.c.h.b16 %v2320
    %v4540 = vunpack.c.l.b16 %v2321
    %v4541 = vunpack.c.h.b16 %v2321
    %v4542 = vunpack.c.l.b16 %v2322
    %v4543 = vunpack.c.h.b16 %v2322
    %v4544 = vunpack.c.l.b16 %v2323
    %v4545 = vunpack.c.h.b16 %v2323
    %v4546 = vunpack.c.l.b16 %v2324
    %v4547 = vunpack.c.h.b16 %v2324
    %v4548 = vunpack.c.l.b16 %v2325
    %v4549 = vunpack.c.h.b16 %v2325
    %v4550 = vunpack.c.l.b16 %v2326
    %v4551 = vunpack.c.h.b16 %v2326
    %v4552 = vunpack.c.l.b16 %v2327
    %v4553 = vunpack.c.h.b16 %v2327
    %v4554 = vunpack.c.l.b16 %v2328
    %v4555 = vunpack.c.h.b16 %v2328
    %v4556 = vunpack.c.l.b16 %v2329
    %v4557 = vunpack.c.h.b16 %v2329
    %v4558 = vunpack.c.l.b16 %v2330
    %v4559 = vunpack.c.h.b16 %v2330
    %v4560 = vunpack.c.l.b16 %v2331
    %v4561 = vunpack.c.h.b16 %v2331
    %v4562 = vunpack.c.l.b16 %v2332
    %v4563 = vunpack.c.h.b16 %v2332
    %v4564 = vunpack.c.l.b16 %v2333
    %v4565 = vunpack.c.h.b16 %v2333
    %v4566 = vunpack.c.l.b16 %v2334
    %v4567 = vunpack.c.h.b16 %v2334
    %v4568 = vunpack.c.l.b16 %v2335
    %v4569 = vunpack.c.h.b16 %v2335
    %v4570 = vunpack.c.l.b16 %v2336
    %v4571 = vunpack.c.h.b16 %v2336
    %v4572 = vunpack.c.l.b16 %v2337
    %v4573 = vunpack.c.h.b16 %v2337
    %v4574 = vunpack.c.l.b16 %v2338
    %v4575 = vunpack.c.h.b16 %v2338
    %v4576 = vunpack.c.l.b16 %v2339
    %v4577 = vunpack.c.h.b16 %v2339
    %v4578 = vunpack.c.l.b16 %v2340
    %v4579 = vunpack.c.h.b16 %v2340
    %v4580 = vunpack.c.l.b16 %v2341
    %v4581 = vunpack.c.h.b16 %v2341
    %v4582 = vunpack.c.l.b16 %v2342
    %v4583 = vunpack.c.h.b16 %v2342
    %v4584 = vunpack.c.l.b16 %v2343
    %v4585 = vunpack.c.h.b16 %v2343
    %v4586 = vunpack.c.l.b16 %v2344
    %v4587 = vunpack.c.h.b16 %v2344
    %v4588 = vunpack.c.l.b16 %v2345
    %v4589 = vunpack.c.h.b16 %v2345
    %v4590 = vunpack.c.l.b16 %v2346
    %v4591 = vunpack.c.h.b16 %v2346
    %v4592 = vunpack.c.l.b16 %v2347
    %v4593 = vunpack.c.h.b16 %v2347
    %v4594 = vunpack.c.l.b16 %v2348
    %v4595 = vunpack.c.h.b16 %v2348
    %v4596 = vunpack.c.l.b16 %v2349
    %v4597 = vunpack.c.h.b16 %v2349
    %v4598 = vunpack.c.l.b16 %v2350
    %v4599 = vunpack.c.h.b16 %v2350
    %v4600 = vunpack.c.l.b16 %v2351
    %v4601 = vunpack.c.h.b16 %v2351
    %v4602 = vunpack.c.l.b16 %v2352
    %v4603 = vunpack.c.h.b16 %v2352
    %v4604 = vunpack.c.l.b16 %v2353
    %v4605 = vunpack.c.h.b16 %v2353
    %v4606 = vunpack.c.l.b16 %v2354
    %v4607 = vunpack.c.h.b16 %v2354
    %v4608 = vunpack.c.l.b16 %v2355
    %v4609 = vunpack.c.h.b16 %v2355
    %v4610 = vunpack.c.l.b16 %v2356
    %v4611 = vunpack.c.h.b16 %v2356
    %v4612 = vunpack.c.l.b16 %v2357
    %v4613 = vunpack.c.h.b16 %v2357
    %v4614 = vunpack.c.l.b16 %v2358
    %v4615 = vunpack.c.h.b16 %v2358
    %v4616 = vunpack.c.l.b16 %v2359
    %v4617 = vunpack.c.h.b16 %v2359
    %v4618 = vunpack.c.l.b16 %v2360
    %v4619 = vunpack.c.h.b16 %v2360
    %v4620 = vunpack.c.l.b16 %v2361
    %v4621 = vunpack.c.h.b16 %v2361
    %v4622 = vunpack.c.l.b16 %v2362
    %v4623 = vunpack.c.h.b16 %v2362
    %v4624 = vunpack.c.l.b16 %v2363
    %v4625 = vunpack.c.h.b16 %v2363
    %v4626 = vunpack.c.l.b16 %v2364
    %v4627 = vunpack.c.h.b16 %v2364
    %v4628 = vunpack.c.l.b16 %v2365
    %v4629 = vunpack.c.h.b16 %v2365
    %v4630 = vunpack.c.l.b16 %v2366
    %v4631 = vunpack.c.h.b16 %v2366
    %v4632 = vunpack.c.l.b16 %v2367
    %v4633 = vunpack.c.h.b16 %v2367
    %v4634 = vunpack.c.l.b16 %v2368
    %v4635 = vunpack.c.h.b16 %v2368
    %v4636 = vunpack.c.l.b16 %v2369
    %v4637 = vunpack.c.h.b16 %v2369
    %v4638 = vunpack.c.l.b16 %v2370
    %v4639 = vunpack.c.h.b16 %v2370
    %v4640 = vunpack.c.l.b16 %v2371
    %v4641 = vunpack.c.h.b16 %v2371
    %v4642 = vunpack.c.l.b16 %v2372
    %v4643 = vunpack.c.h.b16 %v2372
    %v4644 = vunpack.c.l.b16 %v2373
    %v4645 = vunpack.c.h.b16 %v2373
    %v4646 = vunpack.c.l.b16 %v2374
    %v4647 = vunpack.c.h.b16 %v2374
    %v4648 = vunpack.c.l.b16 %v2375
    %v4649 = vunpack.c.h.b16 %v2375
    %v4650 = vunpack.c.l.b16 %v2376
    %v4651 = vunpack.c.h.b16 %v2376
    %v4652 = vunpack.c.l.b16 %v2377
    %v4653 = vunpack.c.h.b16 %v2377
    %v4654 = vunpack.c.l.b16 %v2378
    %v4655 = vunpack.c.h.b16 %v2378
    %v4656 = vunpack.c.l.b16 %v2379
    %v4657 = vunpack.c.h.b16 %v2379
    %v4658 = vunpack.c.l.b16 %v2380
    %v4659 = vunpack.c.h.b16 %v2380
    %v4660 = vunpack.c.l.b16 %v2381
    %v4661 = vunpack.c.h.b16 %v2381
    %v4662 = vunpack.c.l.b16 %v2382
    %v4663 = vunpack.c.h.b16 %v2382
    %v4664 = vunpack.c.l.b16 %v2383
    %v4665 = vunpack.c.h.b16 %v2383
    %v4666 = vunpack.c.l.b16 %v2384
    %v4667 = vunpack.c.h.b16 %v2384
    %v4668 = vunpack.c.l.b16 %v2385
    %v4669 = vunpack.c.h.b16 %v2385
    %v4670 = vunpack.c.l.b16 %v2386
    %v4671 = vunpack.c.h.b16 %v2386
    %v4672 = vunpack.c.l.b16 %v2387
    %v4673 = vunpack.c.h.b16 %v2387
    %v4674 = vunpack.c.l.b16 %v2388
    %v4675 = vunpack.c.h.b16 %v2388
    %v4676 = vunpack.c.l.b16 %v2389
    %v4677 = vunpack.c.h.b16 %v2389
    %v4678 = vunpack.c.l.b16 %v2390
    %v4679 = vunpack.c.h.b16 %v2390
    %v4680 = vunpack.c.l.b16 %v2391
    %v4681 = vunpack.c.h.b16 %v2391
    %v4682 = vunpack.c.l.b16 %v2392
    %v4683 = vunpack.c.h.b16 %v2392
    %v4684 = vunpack.c.l.b16 %v2393
    %v4685 = vunpack.c.h.b16 %v2393
    %v4686 = vunpack.c.l.b16 %v2394
    %v4687 = vunpack.c.h.b16 %v2394
    %v4688 = vunpack.c.l.b16 %v2395
    %v4689 = vunpack.c.h.b16 %v2395
    %v4690 = vunpack.c.l.b16 %v2396
    %v4691 = vunpack.c.h.b16 %v2396
    %v4692 = vunpack.c.l.b16 %v2397
    %v4693 = vunpack.c.h.b16 %v2397
    %v4694 = vunpack.c.l.b16 %v2398
    %v4695 = vunpack.c.h.b16 %v2398
    %v4696 = vunpack.c.l.b16 %v2399
    %v4697 = vunpack.c.h.b16 %v2399
    %v4698 = vunpack.c.l.b16 %v2400
    %v4699 = vunpack.c.h.b16 %v2400
    %v4700 = vunpack.c.l.b16 %v2401
    %v4701 = vunpack.c.h.b16 %v2401
    %v4702 = vunpack.c.l.b16 %v2402
    %v4703 = vunpack.c.h.b16 %v2402
    %v4704 = vunpack.c.l.b16 %v2403
    %v4705 = vunpack.c.h.b16 %v2403
    %v4706 = vunpack.c.l.b16 %v2404
    %v4707 = vunpack.c.h.b16 %v2404
    %v4708 = vunpack.c.l.b16 %v2405
    %v4709 = vunpack.c.h.b16 %v2405
    %v4710 = vunpack.c.l.b16 %v2406
    %v4711 = vunpack.c.h.b16 %v2406
    %v4712 = vunpack.c.l.b16 %v2407
    %v4713 = vunpack.c.h.b16 %v2407
    %v4714 = vunpack.c.l.b16 %v2408
    %v4715 = vunpack.c.h.b16 %v2408
    %v4716 = vunpack.c.l.b16 %v2409
    %v4717 = vunpack.c.h.b16 %v2409
    %v4718 = vunpack.c.l.b16 %v2410
    %v4719 = vunpack.c.h.b16 %v2410
    %v4720 = vunpack.c.l.b16 %v2411
    %v4721 = vunpack.c.h.b16 %v2411
    %v4722 = vunpack.c.l.b16 %v2412
    %v4723 = vunpack.c.h.b16 %v2412
    %v4724 = vunpack.c.l.b16 %v2413
    %v4725 = vunpack.c.h.b16 %v2413
    %v4726 = vunpack.c.l.b16 %v2414
    %v4727 = vunpack.c.h.b16 %v2414
    %v4728 = vunpack.c.l.b16 %v2415
    %v4729 = vunpack.c.h.b16 %v2415
    %v4730 = vunpack.c.l.b16 %v2416
    %v4731 = vunpack.c.h.b16 %v2416
    %v4732 = vunpack.c.l.b16 %v2417
    %v4733 = vunpack.c.h.b16 %v2417
    %v4734 = vunpack.c.l.b16 %v2418
    %v4735 = vunpack.c.h.b16 %v2418
    %v4736 = vunpack.c.l.b16 %v2419
    %v4737 = vunpack.c.h.b16 %v2419
    %v4738 = vunpack.c.l.b16 %v2420
    %v4739 = vunpack.c.h.b16 %v2420
    %v4740 = vunpack.c.l.b16 %v2421
    %v4741 = vunpack.c.h.b16 %v2421
    %v4742 = vunpack.c.l.b16 %v2422
    %v4743 = vunpack.c.h.b16 %v2422
    %v4744 = vunpack.c.l.b16 %v2423
    %v4745 = vunpack.c.h.b16 %v2423
    %v4746 = vunpack.c.l.b16 %v2424
    %v4747 = vunpack.c.h.b16 %v2424
    %v4748 = vunpack.c.l.b16 %v2425
    %v4749 = vunpack.c.h.b16 %v2425
    %v4750 = vunpack.c.l.b16 %v2426
    %v4751 = vunpack.c.h.b16 %v2426
    %v4752 = vunpack.c.l.b16 %v2427
    %v4753 = vunpack.c.h.b16 %v2427
    %v4754 = vunpack.c.l.b16 %v2428
    %v4755 = vunpack.c.h.b16 %v2428
    %v4756 = vunpack.c.l.b16 %v2429
    %v4757 = vunpack.c.h.b16 %v2429
    %v4758 = vunpack.c.l.b16 %v2430
    %v4759 = vunpack.c.h.b16 %v2430
    %v4760 = vunpack.c.l.b16 %v2431
    %v4761 = vunpack.c.h.b16 %v2431
    %v4762 = vunpack.c.l.b16 %v2432
    %v4763 = vunpack.c.h.b16 %v2432
    %v4764 = vunpack.c.l.b16 %v2433
    %v4765 = vunpack.c.h.b16 %v2433
    %v4766 = vunpack.c.l.b16 %v2434
    %v4767 = vunpack.c.h.b16 %v2434
    %v4768 = vunpack.c.l.b16 %v2435
    %v4769 = vunpack.c.h.b16 %v2435
    %v4770 = vunpack.c.l.b16 %v2436
    %v4771 = vunpack.c.h.b16 %v2436
    %v4772 = vunpack.c.l.b16 %v2437
    %v4773 = vunpack.c.h.b16 %v2437
    %v4774 = vunpack.c.l.b16 %v2438
    %v4775 = vunpack.c.h.b16 %v2438
    %v4776 = vunpack.c.l.b16 %v2439
    %v4777 = vunpack.c.h.b16 %v2439
    %v4778 = vunpack.c.l.b16 %v2440
    %v4779 = vunpack.c.h.b16 %v2440
    %v4780 = vunpack.c.l.b16 %v2441
    %v4781 = vunpack.c.h.b16 %v2441
    %v4782 = vunpack.c.l.b16 %v2442
    %v4783 = vunpack.c.h.b16 %v2442
    %v4784 = vunpack.c.l.b16 %v2443
    %v4785 = vunpack.c.h.b16 %v2443
    %v4786 = vunpack.c.l.b16 %v2444
    %v4787 = vunpack.c.h.b16 %v2444
    %v4788 = vunpack.c.l.b16 %v2445
    %v4789 = vunpack.c.h.b16 %v2445
    %v4790 = vunpack.c.l.b16 %v2446
    %v4791 = vunpack.c.h.b16 %v2446
    %v4792 = vunpack.c.l.b16 %v2447
    %v4793 = vunpack.c.h.b16 %v2447
    %v4794 = vunpack.c.l.b16 %v2448
    %v4795 = vunpack.c.h.b16 %v2448
    %v4796 = vunpack.c.l.b16 %v2449
    %v4797 = vunpack.c.h.b16 %v2449
    %v4798 = vunpack.c.l.b16 %v2450
    %v4799 = vunpack.c.h.b16 %v2450
    %v4800 = vunpack.c.l.b16 %v2451
    %v4801 = vunpack.c.h.b16 %v2451
    %v4802 = vunpack.c.l.b16 %v2452
    %v4803 = vunpack.c.h.b16 %v2452
    %v4804 = vunpack.c.l.b16 %v2453
    %v4805 = vunpack.c.h.b16 %v2453
    %v4806 = vunpack.c.l.b16 %v2454
    %v4807 = vunpack.c.h.b16 %v2454
    %v4808 = vunpack.c.l.b16 %v2455
    %v4809 = vunpack.c.h.b16 %v2455
    %v4810 = vunpack.c.l.b16 %v2456
    %v4811 = vunpack.c.h.b16 %v2456
    %v4812 = vunpack.c.l.b16 %v2457
    %v4813 = vunpack.c.h.b16 %v2457
    %v4814 = vunpack.c.l.b16 %v2458
    %v4815 = vunpack.c.h.b16 %v2458
    %v4816 = vunpack.c.l.b16 %v2459
    %v4817 = vunpack.c.h.b16 %v2459
    %v4818 = vunpack.c.l.b16 %v2460
    %v4819 = vunpack.c.h.b16 %v2460
    %v4820 = vunpack.c.l.b16 %v2461
    %v4821 = vunpack.c.h.b16 %v2461
    %v4822 = vunpack.c.l.b16 %v2462
    %v4823 = vunpack.c.h.b16 %v2462
    %v4824 = vunpack.c.l.b16 %v2463
    %v4825 = vunpack.c.h.b16 %v2463
    %v4826 = vunpack.c.l.b16 %v2464
    %v4827 = vunpack.c.h.b16 %v2464
    %v4828 = vunpack.c.l.b16 %v2465
    %v4829 = vunpack.c.h.b16 %v2465
    %v4830 = vunpack.c.l.b16 %v2466
    %v4831 = vunpack.c.h.b16 %v2466
    %v4832 = vunpack.c.l.b16 %v2467
    %v4833 = vunpack.c.h.b16 %v2467
    %v4834 = vunpack.c.l.b16 %v2468
    %v4835 = vunpack.c.h.b16 %v2468
    %v4836 = vunpack.c.l.b16 %v2469
    %v4837 = vunpack.c.h.b16 %v2469
    %v4838 = vunpack.c.l.b16 %v2470
    %v4839 = vunpack.c.h.b16 %v2470
    %v4840 = vunpack.c.l.b16 %v2471
    %v4841 = vunpack.c.h.b16 %v2471
    %v4842 = vunpack.c.l.b16 %v2472
    %v4843 = vunpack.c.h.b16 %v2472
    %v4844 = vunpack.c.l.b16 %v2473
    %v4845 = vunpack.c.h.b16 %v2473
    %v4846 = vunpack.c.l.b16 %v2474
    %v4847 = vunpack.c.h.b16 %v2474
    %v4848 = vunpack.c.l.b16 %v2475
    %v4849 = vunpack.c.h.b16 %v2475
    %v4850 = vunpack.c.l.b16 %v2476
    %v4851 = vunpack.c.h.b16 %v2476
    %v4852 = vunpack.c.l.b16 %v2477
    %v4853 = vunpack.c.h.b16 %v2477
    %v4854 = vunpack.c.l.b16 %v2478
    %v4855 = vunpack.c.h.b16 %v2478
    %v4856 = vunpack.c.l.b16 %v2479
    %v4857 = vunpack.c.h.b16 %v2479
    %v4858 = vunpack.c.l.b16 %v2480
    %v4859 = vunpack.c.h.b16 %v2480
    %v4860 = vunpack.c.l.b16 %v2481
    %v4861 = vunpack.c.h.b16 %v2481
    %v4862 = vunpack.c.l.b16 %v2482
    %v4863 = vunpack.c.h.b16 %v2482
    %v4864 = vunpack.c.l.b16 %v2483
    %v4865 = vunpack.c.h.b16 %v2483
    %v4866 = vunpack.c.l.b16 %v2484
    %v4867 = vunpack.c.h.b16 %v2484
    %v4868 = vunpack.c.l.b16 %v2485
    %v4869 = vunpack.c.h.b16 %v2485
    %v4870 = vunpack.c.l.b16 %v2486
    %v4871 = vunpack.c.h.b16 %v2486
    %v4872 = vunpack.c.l.b16 %v2487
    %v4873 = vunpack.c.h.b16 %v2487
    %v4874 = vunpack.c.l.b16 %v2488
    %v4875 = vunpack.c.h.b16 %v2488
    %v4876 = vunpack.c.l.b16 %v2489
    %v4877 = vunpack.c.h.b16 %v2489
    %v4878 = vunpack.c.l.b16 %v2490
    %v4879 = vunpack.c.h.b16 %v2490
    %v4880 = vunpack.c.l.b16 %v2491
    %v4881 = vunpack.c.h.b16 %v2491
    %v4882 = vunpack.c.l.b16 %v2492
    %v4883 = vunpack.c.h.b16 %v2492
    %v4884 = vunpack.c.l.b16 %v2493
    %v4885 = vunpack.c.h.b16 %v2493
    %v4886 = vunpack.c.l.b16 %v2494
    %v4887 = vunpack.c.h.b16 %v2494
    %v4888 = vunpack.c.l.b16 %v2495
    %v4889 = vunpack.c.h.b16 %v2495
    %v4890 = vunpack.c.l.b16 %v2496
    %v4891 = vunpack.c.h.b16 %v2496
    %v4892 = vunpack.c.l.b16 %v2497
    %v4893 = vunpack.c.h.b16 %v2497
    %v4894 = vunpack.c.l.b16 %v2498
    %v4895 = vunpack.c.h.b16 %v2498
    %v4896 = vunpack.c.l.b16 %v2499
    %v4897 = vunpack.c.h.b16 %v2499
    %v4898 = vunpack.c.l.b16 %v2500
    %v4899 = vunpack.c.h.b16 %v2500
    %v4900 = vunpack.c.l.b16 %v2501
    %v4901 = vunpack.c.h.b16 %v2501
    %v4902 = vunpack.c.l.b16 %v2502
    %v4903 = vunpack.c.h.b16 %v2502
    %v4904 = vunpack.c.l.b16 %v2503
    %v4905 = vunpack.c.h.b16 %v2503
    %v4906 = vunpack.c.l.b16 %v2504
    %v4907 = vunpack.c.h.b16 %v2504
    %v4908 = vunpack.c.l.b16 %v2505
    %v4909 = vunpack.c.h.b16 %v2505
    %v4910 = vunpack.c.l.b16 %v2506
    %v4911 = vunpack.c.h.b16 %v2506
    %v4912 = vunpack.c.l.b16 %v2507
    %v4913 = vunpack.c.h.b16 %v2507
    %v4914 = vunpack.c.l.b16 %v2508
    %v4915 = vunpack.c.h.b16 %v2508
    %v4916 = vunpack.c.l.b16 %v2509
    %v4917 = vunpack.c.h.b16 %v2509
    %v4918 = vunpack.c.l.b16 %v2510
    %v4919 = vunpack.c.h.b16 %v2510
    %v4920 = vunpack.c.l.b16 %v2511
    %v4921 = vunpack.c.h.b16 %v2511
    %v4922 = vunpack.c.l.b16 %v2512
    %v4923 = vunpack.c.h.b16 %v2512
    %v4924 = vunpack.c.l.b16 %v2513
    %v4925 = vunpack.c.h.b16 %v2513
    %v4926 = vunpack.c.l.b16 %v2514
    %v4927 = vunpack.c.h.b16 %v2514
    %v4928 = vunpack.c.l.b16 %v2515
    %v4929 = vunpack.c.h.b16 %v2515
    %v4930 = vunpack.c.l.b16 %v2516
    %v4931 = vunpack.c.h.b16 %v2516
    %v4932 = vunpack.c.l.b16 %v2517
    %v4933 = vunpack.c.h.b16 %v2517
    %v4934 = vunpack.c.l.b16 %v2518
    %v4935 = vunpack.c.h.b16 %v2518
    %v4936 = vunpack.c.l.b16 %v2519
    %v4937 = vunpack.c.h.b16 %v2519
    %v4938 = vunpack.c.l.b16 %v2520
    %v4939 = vunpack.c.h.b16 %v2520
    %v4940 = vunpack.c.l.b16 %v2521
    %v4941 = vunpack.c.h.b16 %v2521
    %v4942 = vunpack.c.l.b16 %v2522
    %v4943 = vunpack.c.h.b16 %v2522
    %v4944 = vunpack.c.l.b16 %v2523
    %v4945 = vunpack.c.h.b16 %v2523
    %v4946 = vunpack.c.l.b16 %v2524
    %v4947 = vunpack.c.h.b16 %v2524
    %v4948 = vunpack.c.l.b16 %v2525
    %v4949 = vunpack.c.h.b16 %v2525
    %v4950 = vunpack.c.l.b16 %v2526
    %v4951 = vunpack.c.h.b16 %v2526
    %v4952 = vunpack.c.l.b16 %v2527
    %v4953 = vunpack.c.h.b16 %v2527
    %v4954 = vunpack.c.l.b16 %v2528
    %v4955 = vunpack.c.h.b16 %v2528
    %v4956 = vunpack.c.l.b16 %v2529
    %v4957 = vunpack.c.h.b16 %v2529
    %v4958 = vunpack.c.l.b16 %v2530
    %v4959 = vunpack.c.h.b16 %v2530
    %v4960 = vunpack.c.l.b16 %v2531
    %v4961 = vunpack.c.h.b16 %v2531
    %v4962 = vunpack.c.l.b16 %v2532
    %v4963 = vunpack.c.h.b16 %v2532
    %v4964 = vunpack.c.l.b16 %v2533
    %v4965 = vunpack.c.h.b16 %v2533
    %v4966 = vunpack.c.l.b16 %v2534
    %v4967 = vunpack.c.h.b16 %v2534
    %v4968 = vunpack.c.l.b16 %v2535
    %v4969 = vunpack.c.h.b16 %v2535
    %v4970 = vunpack.c.l.b16 %v2536
    %v4971 = vunpack.c.h.b16 %v2536
    %v4972 = vunpack.c.l.b16 %v2537
    %v4973 = vunpack.c.h.b16 %v2537
    %v4974 = vunpack.c.l.b16 %v2538
    %v4975 = vunpack.c.h.b16 %v2538
    %v4976 = vunpack.c.l.b16 %v2539
    %v4977 = vunpack.c.h.b16 %v2539
    %v4978 = vunpack.c.l.b16 %v2540
    %v4979 = vunpack.c.h.b16 %v2540
    %v4980 = vunpack.c.l.b16 %v2541
    %v4981 = vunpack.c.h.b16 %v2541
    %v4982 = vunpack.c.l.b16 %v2542
    %v4983 = vunpack.c.h.b16 %v2542
    %v4984 = vunpack.c.l.b16 %v2543
    %v4985 = vunpack.c.h.b16 %v2543
    %v4986 = vunpack.c.l.b16 %v2544
    %v4987 = vunpack.c.h.b16 %v2544
    %v4988 = vunpack.c.l.b16 %v2545
    %v4989 = vunpack.c.h.b16 %v2545
    %v4990 = vunpack.c.l.b16 %v2546
    %v4991 = vunpack.c.h.b16 %v2546
    %v4992 = vunpack.c.l.b16 %v2547
    %v4993 = vunpack.c.h.b16 %v2547
    %v4994 = vunpack.c.l.b16 %v2548
    %v4995 = vunpack.c.h.b16 %v2548
    %v4996 = vunpack.c.l.b16 %v2549
    %v4997 = vunpack.c.h.b16 %v2549
    %v4998 = vunpack.c.l.b16 %v2550
    %v4999 = vunpack.c.h.b16 %v2550
    %v5000 = vunpack.c.l.b16 %v2551
    %v5001 = vunpack.c.h.b16 %v2551
    %v5002 = vunpack.c.l.b16 %v2552
    %v5003 = vunpack.c.h.b16 %v2552
    %v5004 = vunpack.c.l.b16 %v2553
    %v5005 = vunpack.c.h.b16 %v2553
    %v5006 = vunpack.c.l.b16 %v2554
    %v5007 = vunpack.c.h.b16 %v2554
    %v5008 = vunpack.c.l.b16 %v2555
    %v5009 = vunpack.c.h.b16 %v2555
    %v5010 = vunpack.c.l.b16 %v2556
    %v5011 = vunpack.c.h.b16 %v2556
    %v5012 = vunpack.c.l.b16 %v2557
    %v5013 = vunpack.c.h.b16 %v2557
    %v5014 = vunpack.c.l.b16 %v2558
    %v5015 = vunpack.c.h.b16 %v2558
    %v5016 = vunpack.c.l.b16 %v2559
    %v5017 = vunpack.c.h.b16 %v2559
    %v5018 = vunpack.c.l.b16 %v2560
    %v5019 = vunpack.c.h.b16 %v2560
    %v5020 = vunpack.c.l.b16 %v2561
    %v5021 = vunpack.c.h.b16 %v2561
    %v5022 = vunpack.c.l.b16 %v2562
    %v5023 = vunpack.c.h.b16 %v2562
    %v5024 = vunpack.c.l.b16 %v2563
    %v5025 = vunpack.c.h.b16 %v2563
    %v5026 = vunpack.c.l.b16 %v2564
    %v5027 = vunpack.c.h.b16 %v2564
    %v5028 = vunpack.c.l.b16 %v2565
    %v5029 = vunpack.c.h.b16 %v2565
    %v5030 = vunpack.c.l.b16 %v2566
    %v5031 = vunpack.c.h.b16 %v2566
    %v5032 = vunpack.c.l.b16 %v2567
    %v5033 = vunpack.c.h.b16 %v2567
    %v5034 = vunpack.c.l.b16 %v2568
    %v5035 = vunpack.c.h.b16 %v2568
    %v5036 = vunpack.c.l.b16 %v2569
    %v5037 = vunpack.c.h.b16 %v2569
    %v5038 = vunpack.c.l.b16 %v2570
    %v5039 = vunpack.c.h.b16 %v2570
    %v5040 = vunpack.c.l.b16 %v2571
    %v5041 = vunpack.c.h.b16 %v2571
    %v5042 = vunpack.c.l.b16 %v2572
    %v5043 = vunpack.c.h.b16 %v2572
    %v5044 = vunpack.c.l.b16 %v2573
    %v5045 = vunpack.c.h.b16 %v2573
    %v5046 = vunpack.c.l.b16 %v2574
    %v5047 = vunpack.c.h.b16 %v2574
    %v5048 = vunpack.c.l.b16 %v2575
    %v5049 = vunpack.c.h.b16 %v2575
    %v5050 = vunpack.c.l.b16 %v2576
    %v5051 = vunpack.c.h.b16 %v2576
    %v5052 = vunpack.c.l.b16 %v2577
    %v5053 = vunpack.c.h.b16 %v2577
    %v5054 = vunpack.c.l.b16 %v2578
    %v5055 = vunpack.c.h.b16 %v2578
    %v5056 = vunpack.c.l.b16 %v2579
    %v5057 = vunpack.c.h.b16 %v2579
    %v5058 = vunpack.c.l.b16 %v2580
    %v5059 = vunpack.c.h.b16 %v2580
    %v5060 = vunpack.c.l.b16 %v2581
    %v5061 = vunpack.c.h.b16 %v2581
    %v5062 = vunpack.c.l.b16 %v2582
    %v5063 = vunpack.c.h.b16 %v2582
    %v5064 = vunpack.c.l.b16 %v2583
    %v5065 = vunpack.c.h.b16 %v2583
    %v5066 = vunpack.c.l.b16 %v2584
    %v5067 = vunpack.c.h.b16 %v2584
    %v5068 = vunpack.c.l.b16 %v2585
    %v5069 = vunpack.c.h.b16 %v2585
    %v5070 = vunpack.c.l.b16 %v2586
    %v5071 = vunpack.c.h.b16 %v2586
    %v5072 = vunpack.c.l.b16 %v2587
    %v5073 = vunpack.c.h.b16 %v2587
    %v5074 = vunpack.c.l.b16 %v2588
    %v5075 = vunpack.c.h.b16 %v2588
    %v5076 = vunpack.c.l.b16 %v2589
    %v5077 = vunpack.c.h.b16 %v2589
    %v5078 = vunpack.c.l.b16 %v2590
    %v5079 = vunpack.c.h.b16 %v2590
    %v5080 = vunpack.c.l.b16 %v2591
    %v5081 = vunpack.c.h.b16 %v2591
    %v5082 = vunpack.c.l.b16 %v2592
    %v5083 = vunpack.c.h.b16 %v2592
    %v5084 = vunpack.c.l.b16 %v2593
    %v5085 = vunpack.c.h.b16 %v2593
    %v5086 = vunpack.c.l.b16 %v2594
    %v5087 = vunpack.c.h.b16 %v2594
    %v5088 = vunpack.c.l.b16 %v2595
    %v5089 = vunpack.c.h.b16 %v2595
    %v5090 = vunpack.c.l.b16 %v2596
    %v5091 = vunpack.c.h.b16 %v2596
    %v5092 = vunpack.c.l.b16 %v2597
    %v5093 = vunpack.c.h.b16 %v2597
    %v5094 = vunpack.c.l.b16 %v2598
    %v5095 = vunpack.c.h.b16 %v2598
    %v5096 = vunpack.c.l.b16 %v2599
    %v5097 = vunpack.c.h.b16 %v2599
    %v5098 = vunpack.c.l.b16 %v2600
    %v5099 = vunpack.c.h.b16 %v2600
    %v5100 = vunpack.c.l.b16 %v2601
    %v5101 = vunpack.c.h.b16 %v2601
    %v5102 = vunpack.c.l.b16 %v2602
    %v5103 = vunpack.c.h.b16 %v2602
    %v5104 = vunpack.c.l.b16 %v2603
    %v5105 = vunpack.c.h.b16 %v2603
    %v5106 = vunpack.c.l.b16 %v2604
    %v5107 = vunpack.c.h.b16 %v2604
    %v5108 = vunpack.c.l.b16 %v2605
    %v5109 = vunpack.c.h.b16 %v2605
    %v5110 = vunpack.c.l.b16 %v2606
    %v5111 = vunpack.c.h.b16 %v2606
    %v5112 = vunpack.c.l.b16 %v2607
    %v5113 = vunpack.c.h.b16 %v2607
    %v5114 = vunpack.c.l.b16 %v2608
    %v5115 = vunpack.c.h.b16 %v2608
    %v5116 = vunpack.c.l.b16 %v2609
    %v5117 = vunpack.c.h.b16 %v2609
    %v5118 = vunpack.c.l.b16 %v2610
    %v5119 = vunpack.c.h.b16 %v2610
    %v5120 = vunpack.c.l.b16 %v2611
    %v5121 = vunpack.c.h.b16 %v2611
    %v5122 = vunpack.c.l.b16 %v2612
    %v5123 = vunpack.c.h.b16 %v2612
    %v5124 = vunpack.c.l.b16 %v2613
    %v5125 = vunpack.c.h.b16 %v2613
    %v5126 = vunpack.c.l.b16 %v2614
    %v5127 = vunpack.c.h.b16 %v2614
    %v5128 = vunpack.c.l.b16 %v2615
    %v5129 = vunpack.c.h.b16 %v2615
    %v5130 = vunpack.c.l.b16 %v2616
    %v5131 = vunpack.c.h.b16 %v2616
    %v5132 = vunpack.c.l.b16 %v2617
    %v5133 = vunpack.c.h.b16 %v2617
    %v5134 = vunpack.c.l.b16 %v2618
    %v5135 = vunpack.c.h.b16 %v2618
    %v5136 = vunpack.c.l.b16 %v2619
    %v5137 = vunpack.c.h.b16 %v2619
    %v5138 = vunpack.c.l.b16 %v2620
    %v5139 = vunpack.c.h.b16 %v2620
    %v5140 = vunpack.c.l.b16 %v2621
    %v5141 = vunpack.c.h.b16 %v2621
    %v5142 = vunpack.c.l.b16 %v2622
    %v5143 = vunpack.c.h.b16 %v2622
    %v5144 = vunpack.c.l.b16 %v2623
    %v5145 = vunpack.c.h.b16 %v2623
    %v5146 = vunpack.c.l.b16 %v2624
    %v5147 = vunpack.c.h.b16 %v2624
    %v5148 = vunpack.c.l.b16 %v2625
    %v5149 = vunpack.c.h.b16 %v2625
    %v5150 = vunpack.c.l.b16 %v2626
    %v5151 = vunpack.c.h.b16 %v2626
    %v5152 = vunpack.c.l.b16 %v2627
    %v5153 = vunpack.c.h.b16 %v2627
    %v5154 = vunpack.c.l.b16 %v2628
    %v5155 = vunpack.c.h.b16 %v2628
    %v5156 = vunpack.c.l.b16 %v2629
    %v5157 = vunpack.c.h.b16 %v2629
    %v5158 = vunpack.c.l.b16 %v2630
    %v5159 = vunpack.c.h.b16 %v2630
    %v5160 = vunpack.c.l.b16 %v2631
    %v5161 = vunpack.c.h.b16 %v2631
    %v5162 = vunpack.c.l.b16 %v2632
    %v5163 = vunpack.c.h.b16 %v2632
    %v5164 = vunpack.c.l.b16 %v2633
    %v5165 = vunpack.c.h.b16 %v2633
    %v5166 = vunpack.c.l.b16 %v2634
    %v5167 = vunpack.c.h.b16 %v2634
    %v5168 = vunpack.c.l.b16 %v2635
    %v5169 = vunpack.c.h.b16 %v2635
    %v5170 = vunpack.c.l.b16 %v2636
    %v5171 = vunpack.c.h.b16 %v2636
    %v5172 = vunpack.c.l.b16 %v2637
    %v5173 = vunpack.c.h.b16 %v2637
    %v5174 = vunpack.c.l.b16 %v2638
    %v5175 = vunpack.c.h.b16 %v2638
    %v5176 = vunpack.c.l.b16 %v2639
    %v5177 = vunpack.c.h.b16 %v2639
    %v5178 = vunpack.c.l.b16 %v2640
    %v5179 = vunpack.c.h.b16 %v2640
    %v5180 = vunpack.c.l.b16 %v2641
    %v5181 = vunpack.c.h.b16 %v2641
    %v5182 = vunpack.c.l.b16 %v2642
    %v5183 = vunpack.c.h.b16 %v2642
    %v5184 = vunpack.c.l.b16 %v2643
    %v5185 = vunpack.c.h.b16 %v2643
    %v5186 = vunpack.c.l.b16 %v2644
    %v5187 = vunpack.c.h.b16 %v2644
    %v5188 = vunpack.c.l.b16 %v2645
    %v5189 = vunpack.c.h.b16 %v2645
    %v5190 = vunpack.c.l.b16 %v2646
    %v5191 = vunpack.c.h.b16 %v2646
    %v5192 = vunpack.c.l.b16 %v2647
    %v5193 = vunpack.c.h.b16 %v2647
    %v5194 = vunpack.c.l.b16 %v2648
    %v5195 = vunpack.c.h.b16 %v2648
    %v5196 = vunpack.c.l.b16 %v2649
    %v5197 = vunpack.c.h.b16 %v2649
    %v5198 = vunpack.c.l.b16 %v2650
    %v5199 = vunpack.c.h.b16 %v2650
    %v5200 = vunpack.c.l.b16 %v2651
    %v5201 = vunpack.c.h.b16 %v2651
    %v5202 = vunpack.c.l.b16 %v2652
    %v5203 = vunpack.c.h.b16 %v2652
    %v5204 = vunpack.c.l.b16 %v2653
    %v5205 = vunpack.c.h.b16 %v2653
    %v5206 = vunpack.c.l.b16 %v2654
    %v5207 = vunpack.c.h.b16 %v2654
    %v5208 = vunpack.c.l.b16 %v2655
    %v5209 = vunpack.c.h.b16 %v2655
    %v5210 = vunpack.c.l.b16 %v2656
    %v5211 = vunpack.c.h.b16 %v2656
    %v5212 = vunpack.c.l.b16 %v2657
    %v5213 = vunpack.c.h.b16 %v2657
    %v5214 = vunpack.c.l.b16 %v2658
    %v5215 = vunpack.c.h.b16 %v2658
    %v5216 = vunpack.c.l.b16 %v2659
    %v5217 = vunpack.c.h.b16 %v2659
    %v5218 = vunpack.c.l.b16 %v2660
    %v5219 = vunpack.c.h.b16 %v2660
    %v5220 = vunpack.c.l.b16 %v2661
    %v5221 = vunpack.c.h.b16 %v2661
    %v5222 = vunpack.c.l.b16 %v2662
    %v5223 = vunpack.c.h.b16 %v2662
    %v5224 = vunpack.c.l.b16 %v2663
    %v5225 = vunpack.c.h.b16 %v2663
    %v5226 = vunpack.c.l.b16 %v2664
    %v5227 = vunpack.c.h.b16 %v2664
    %v5228 = vunpack.c.l.b16 %v2665
    %v5229 = vunpack.c.h.b16 %v2665
    %v5230 = vunpack.c.l.b16 %v2666
    %v5231 = vunpack.c.h.b16 %v2666
    %v5232 = vunpack.c.l.b16 %v2667
    %v5233 = vunpack.c.h.b16 %v2667
    %v5234 = vunpack.c.l.b16 %v2668
    %v5235 = vunpack.c.h.b16 %v2668
    %v5236 = vunpack.c.l.b16 %v2669
    %v5237 = vunpack.c.h.b16 %v2669
    %v5238 = vunpack.c.l.b16 %v2670
    %v5239 = vunpack.c.h.b16 %v2670
    %v5240 = vunpack.c.l.b16 %v2671
    %v5241 = vunpack.c.h.b16 %v2671
    %v5242 = vunpack.c.l.b16 %v2672
    %v5243 = vunpack.c.h.b16 %v2672
    %v5244 = vunpack.c.l.b16 %v2673
    %v5245 = vunpack.c.h.b16 %v2673
    %v5246 = vunpack.c.l.b16 %v2674
    %v5247 = vunpack.c.h.b16 %v2674
    %v5248 = vunpack.c.l.b16 %v2675
    %v5249 = vunpack.c.h.b16 %v2675
    %v5250 = vunpack.c.l.b16 %v2676
    %v5251 = vunpack.c.h.b16 %v2676
    %v5252 = vunpack.c.l.b16 %v2677
    %v5253 = vunpack.c.h.b16 %v2677
    %v5254 = vunpack.c.l.b16 %v2678
    %v5255 = vunpack.c.h.b16 %v2678
    %v5256 = vunpack.c.l.b16 %v2679
    %v5257 = vunpack.c.h.b16 %v2679
    %v5258 = vunpack.c.l.b16 %v2680
    %v5259 = vunpack.c.h.b16 %v2680
    %v5260 = vunpack.c.l.b16 %v2681
    %v5261 = vunpack.c.h.b16 %v2681
    %v5262 = vunpack.c.l.b16 %v2682
    %v5263 = vunpack.c.h.b16 %v2682
    %v5264 = vunpack.c.l.b16 %v2683
    %v5265 = vunpack.c.h.b16 %v2683
    %v5266 = vunpack.c.l.b16 %v2684
    %v5267 = vunpack.c.h.b16 %v2684
    %v5268 = vunpack.c.l.b16 %v2685
    %v5269 = vunpack.c.h.b16 %v2685
    %v5270 = vunpack.c.l.b16 %v2686
    %v5271 = vunpack.c.h.b16 %v2686
    %v5272 = vunpack.c.l.b16 %v2687
    %v5273 = vunpack.c.h.b16 %v2687
    %v5274 = vunpack.c.l.b16 %v2688
    %v5275 = vunpack.c.h.b16 %v2688
    %v5276 = vunpack.c.l.b16 %v2689
    %v5277 = vunpack.c.h.b16 %v2689
    %v5278 = vunpack.c.l.b16 %v2690
    %v5279 = vunpack.c.h.b16 %v2690
    %v5280 = vunpack.c.l.b16 %v2691
    %v5281 = vunpack.c.h.b16 %v2691
    %v5282 = vunpack.c.l.b16 %v2692
    %v5283 = vunpack.c.h.b16 %v2692
    %v5284 = vunpack.c.l.b16 %v2693
    %v5285 = vunpack.c.h.b16 %v2693
    %v5286 = vunpack.c.l.b16 %v2694
    %v5287 = vunpack.c.h.b16 %v2694
    %v5288 = vunpack.c.l.b16 %v2695
    %v5289 = vunpack.c.h.b16 %v2695
    %v5290 = vunpack.c.l.b16 %v2696
    %v5291 = vunpack.c.h.b16 %v2696
    %v5292 = vunpack.c.l.b16 %v2697
    %v5293 = vunpack.c.h.b16 %v2697
    %v5294 = vunpack.c.l.b16 %v2698
    %v5295 = vunpack.c.h.b16 %v2698
    %v5296 = vunpack.c.l.b16 %v2699
    %v5297 = vunpack.c.h.b16 %v2699
    %v5298 = vunpack.c.l.b16 %v2700
    %v5299 = vunpack.c.h.b16 %v2700
    %v5300 = vunpack.c.l.b16 %v2701
    %v5301 = vunpack.c.h.b16 %v2701
    %v5302 = vunpack.c.l.b16 %v2702
    %v5303 = vunpack.c.h.b16 %v2702
    %v5304 = vunpack.c.l.b16 %v2703
    %v5305 = vunpack.c.h.b16 %v2703
    %v5306 = vunpack.c.l.b16 %v2704
    %v5307 = vunpack.c.h.b16 %v2704
    %v5308 = vunpack.c.l.b16 %v2705
    %v5309 = vunpack.c.h.b16 %v2705
    %v5310 = vunpack.c.l.b16 %v2706
    %v5311 = vunpack.c.h.b16 %v2706
    %v5312 = vunpack.c.l.b16 %v2707
    %v5313 = vunpack.c.h.b16 %v2707
    %v5314 = vunpack.c.l.b16 %v2708
    %v5315 = vunpack.c.h.b16 %v2708
    %v5316 = vunpack.c.l.b16 %v2709
    %v5317 = vunpack.c.h.b16 %v2709
    %v5318 = vunpack.c.l.b16 %v2710
    %v5319 = vunpack.c.h.b16 %v2710
    %v5320 = vunpack.c.l.b16 %v2711
    %v5321 = vunpack.c.h.b16 %v2711
    %v5322 = vunpack.c.l.b16 %v2712
    %v5323 = vunpack.c.h.b16 %v2712
    %v5324 = vunpack.c.l.b16 %v2713
    %v5325 = vunpack.c.h.b16 %v2713
    %v5326 = vunpack.c.l.b16 %v2714
    %v5327 = vunpack.c.h.b16 %v2714
    %v5328 = vunpack.c.l.b16 %v2715
    %v5329 = vunpack.c.h.b16 %v2715
    %v5330 = vunpack.c.l.b16 %v2716
    %v5331 = vunpack.c.h.b16 %v2716
    %v5332 = vunpack.c.l.b16 %v2717
    %v5333 = vunpack.c.h.b16 %v2717
    %v5334 = vunpack.c.l.b16 %v2718
    %v5335 = vunpack.c.h.b16 %v2718
    %v5336 = vunpack.c.l.b16 %v2719
    %v5337 = vunpack.c.h.b16 %v2719
    %v5338 = vunpack.c.l.b16 %v2720
    %v5339 = vunpack.c.h.b16 %v2720
    %v5340 = vunpack.c.l.b16 %v2721
    %v5341 = vunpack.c.h.b16 %v2721
    %v5342 = vunpack.c.l.b16 %v2722
    %v5343 = vunpack.c.h.b16 %v2722
    %v5344 = vunpack.c.l.b16 %v2723
    %v5345 = vunpack.c.h.b16 %v2723
    %v5346 = vunpack.c.l.b16 %v2724
    %v5347 = vunpack.c.h.b16 %v2724
    %v5348 = vunpack.c.l.b16 %v2725
    %v5349 = vunpack.c.h.b16 %v2725
    %v5350 = vunpack.c.l.b16 %v2726
    %v5351 = vunpack.c.h.b16 %v2726
    %v5352 = vunpack.c.l.b16 %v2727
    %v5353 = vunpack.c.h.b16 %v2727
    %v5354 = vunpack.c.l.b16 %v2728
    %v5355 = vunpack.c.h.b16 %v2728
    %v5356 = vunpack.c.l.b16 %v2729
    %v5357 = vunpack.c.h.b16 %v2729
    %v5358 = vunpack.c.l.b16 %v2730
    %v5359 = vunpack.c.h.b16 %v2730
    %v5360 = vunpack.c.l.b16 %v2731
    %v5361 = vunpack.c.h.b16 %v2731
    %v5362 = vunpack.c.l.b16 %v2732
    %v5363 = vunpack.c.h.b16 %v2732
    %v5364 = vunpack.c.l.b16 %v2733
    %v5365 = vunpack.c.h.b16 %v2733
    %v5366 = vunpack.c.l.b16 %v2734
    %v5367 = vunpack.c.h.b16 %v2734
    %v5368 = vunpack.c.l.b16 %v2735
    %v5369 = vunpack.c.h.b16 %v2735
    %v5370 = vunpack.c.l.b16 %v2736
    %v5371 = vunpack.c.h.b16 %v2736
    %v5372 = vunpack.c.l.b16 %v2737
    %v5373 = vunpack.c.h.b16 %v2737
    %v5374 = vunpack.c.l.b16 %v2738
    %v5375 = vunpack.c.h.b16 %v2738
    %v5376 = vunpack.c.l.b16 %v2739
    %v5377 = vunpack.c.h.b16 %v2739
    %v5378 = vunpack.c.l.b16 %v2740
    %v5379 = vunpack.c.h.b16 %v2740
    %v5380 = vunpack.c.l.b16 %v2741
    %v5381 = vunpack.c.h.b16 %v2741
    %v5382 = vunpack.c.l.b16 %v2742
    %v5383 = vunpack.c.h.b16 %v2742
    %v5384 = vunpack.c.l.b16 %v2743
    %v5385 = vunpack.c.h.b16 %v2743
    %v5386 = vunpack.c.l.b16 %v2744
    %v5387 = vunpack.c.h.b16 %v2744
    %v5388 = vunpack.c.l.b16 %v2745
    %v5389 = vunpack.c.h.b16 %v2745
    %v5390 = vunpack.c.l.b16 %v2746
    %v5391 = vunpack.c.h.b16 %v2746
    %v5392 = vunpack.c.l.b16 %v2747
    %v5393 = vunpack.c.h.b16 %v2747
    %v5394 = vunpack.c.l.b16 %v2748
    %v5395 = vunpack.c.h.b16 %v2748
    %v5396 = vunpack.c.l.b16 %v2749
    %v5397 = vunpack.c.h.b16 %v2749
    %v5398 = vunpack.c.l.b16 %v2750
    %v5399 = vunpack.c.h.b16 %v2750
    %v5400 = vunpack.c.l.b16 %v2751
    %v5401 = vunpack.c.h.b16 %v2751
    %v5402 = vunpack.c.l.b16 %v2752
    %v5403 = vunpack.c.h.b16 %v2752
    %v5404 = vunpack.c.l.b16 %v2753
    %v5405 = vunpack.c.h.b16 %v2753
    %v5406 = vunpack.c.l.b16 %v2754
    %v5407 = vunpack.c.h.b16 %v2754
    %v5408 = vunpack.c.l.b16 %v2755
    %v5409 = vunpack.c.h.b16 %v2755
    %v5410 = vunpack.c.l.b16 %v2756
    %v5411 = vunpack.c.h.b16 %v2756
    %v5412 = vunpack.c.l.b16 %v2757
    %v5413 = vunpack.c.h.b16 %v2757
    %v5414 = vunpack.c.l.b16 %v2758
    %v5415 = vunpack.c.h.b16 %v2758
    %v5416 = vunpack.c.l.b16 %v2759
    %v5417 = vunpack.c.h.b16 %v2759
    %v5418 = vunpack.c.l.b16 %v2760
    %v5419 = vunpack.c.h.b16 %v2760
    %v5420 = vunpack.c.l.b16 %v2761
    %v5421 = vunpack.c.h.b16 %v2761
    %v5422 = vunpack.c.l.b16 %v2762
    %v5423 = vunpack.c.h.b16 %v2762
    %v5424 = vunpack.c.l.b16 %v2763
    %v5425 = vunpack.c.h.b16 %v2763
    %v5426 = vunpack.c.l.b16 %v2764
    %v5427 = vunpack.c.h.b16 %v2764
    %v5428 = vunpack.c.l.b16 %v2765
    %v5429 = vunpack.c.h.b16 %v2765
    %v5430 = vunpack.c.l.b16 %v2766
    %v5431 = vunpack.c.h.b16 %v2766
    %v5432 = vunpack.c.l.b16 %v2767
    %v5433 = vunpack.c.h.b16 %v2767
    %v5434 = vunpack.c.l.b16 %v2768
    %v5435 = vunpack.c.h.b16 %v2768
    %v5436 = vunpack.c.l.b16 %v2769
    %v5437 = vunpack.c.h.b16 %v2769
    %v5438 = vunpack.c.l.b16 %v2770
    %v5439 = vunpack.c.h.b16 %v2770
    %v5440 = vunpack.c.l.b16 %v2771
    %v5441 = vunpack.c.h.b16 %v2771
    %v5442 = vunpack.c.l.b16 %v2772
    %v5443 = vunpack.c.h.b16 %v2772
    %v5444 = vunpack.c.l.b16 %v2773
    %v5445 = vunpack.c.h.b16 %v2773
    %v5446 = vunpack.c.l.b16 %v2774
    %v5447 = vunpack.c.h.b16 %v2774
    %v5448 = vunpack.c.l.b16 %v2775
    %v5449 = vunpack.c.h.b16 %v2775
    %v5450 = vunpack.c.l.b16 %v2776
    %v5451 = vunpack.c.h.b16 %v2776
    %v5452 = vunpack.c.l.b16 %v2777
    %v5453 = vunpack.c.h.b16 %v2777
    %v5454 = vunpack.c.l.b16 %v2778
    %v5455 = vunpack.c.h.b16 %v2778
    %v5456 = vunpack.c.l.b16 %v2779
    %v5457 = vunpack.c.h.b16 %v2779
    %v5458 = vunpack.c.l.b16 %v2780
    %v5459 = vunpack.c.h.b16 %v2780
    %v5460 = vunpack.c.l.b16 %v2781
    %v5461 = vunpack.c.h.b16 %v2781
    %v5462 = vunpack.c.l.b16 %v2782
    %v5463 = vunpack.c.h.b16 %v2782
    %v5464 = vunpack.c.l.b16 %v2783
    %v5465 = vunpack.c.h.b16 %v2783
    %v5466 = vunpack.c.l.b16 %v2784
    %v5467 = vunpack.c.h.b16 %v2784
    %v5468 = vunpack.c.l.b16 %v2785
    %v5469 = vunpack.c.h.b16 %v2785
    %v5470 = vunpack.c.l.b16 %v2786
    %v5471 = vunpack.c.h.b16 %v2786
    %v5472 = vunpack.c.l.b16 %v2787
    %v5473 = vunpack.c.h.b16 %v2787
    %v5474 = vunpack.c.l.b16 %v2788
    %v5475 = vunpack.c.h.b16 %v2788
    %v5476 = vunpack.c.l.b16 %v2789
    %v5477 = vunpack.c.h.b16 %v2789
    %v5478 = vunpack.c.l.b16 %v2790
    %v5479 = vunpack.c.h.b16 %v2790
    %v5480 = vunpack.c.l.b16 %v2791
    %v5481 = vunpack.c.h.b16 %v2791
    %v5482 = vunpack.c.l.b16 %v2792
    %v5483 = vunpack.c.h.b16 %v2792
    %v5484 = vunpack.c.l.b16 %v2793
    %v5485 = vunpack.c.h.b16 %v2793
    %v5486 = vunpack.c.l.b16 %v2794
    %v5487 = vunpack.c.h.b16 %v2794
    %v5488 = vunpack.c.l.b16 %v2795
    %v5489 = vunpack.c.h.b16 %v2795
    %v5490 = vunpack.c.l.b16 %v2796
    %v5491 = vunpack.c.h.b16 %v2796
    %v5492 = vunpack.c.l.b16 %v2797
    %v5493 = vunpack.c.h.b16 %v2797
    %v5494 = vunpack.c.l.b16 %v2798
    %v5495 = vunpack.c.h.b16 %v2798
    %v5496 = vunpack.c.l.b16 %v2799
    %v5497 = vunpack.c.h.b16 %v2799
    %v5498 = vunpack.c.l.b16 %v2800
    %v5499 = vunpack.c.h.b16 %v2800
    %v5500 = vunpack.c.l.b16 %v2801
    %v5501 = vunpack.c.h.b16 %v2801
    %v5502 = vunpack.c.l.b16 %v2802
    %v5503 = vunpack.c.h.b16 %v2802
    %v5504 = vunpack.c.l.b16 %v2803
    %v5505 = vunpack.c.h.b16 %v2803
    %v5506 = vunpack.c.l.b16 %v2804
    %v5507 = vunpack.c.h.b16 %v2804
    %v5508 = vunpack.c.l.b16 %v2805
    %v5509 = vunpack.c.h.b16 %v2805
    %v5510 = vunpack.c.l.b16 %v2806
    %v5511 = vunpack.c.h.b16 %v2806
    %v5512 = vunpack.c.l.b16 %v2807
    %v5513 = vunpack.c.h.b16 %v2807
    %v5514 = vunpack.c.l.b16 %v2808
    %v5515 = vunpack.c.h.b16 %v2808
    %v5516 = vunpack.c.l.b16 %v2809
    %v5517 = vunpack.c.h.b16 %v2809
    %v5518 = vunpack.c.l.b16 %v2810
    %v5519 = vunpack.c.h.b16 %v2810
    %v5520 = vunpack.c.l.b16 %v2811
    %v5521 = vunpack.c.h.b16 %v2811
    %v5522 = vunpack.c.l.b16 %v2812
    %v5523 = vunpack.c.h.b16 %v2812
    %v5524 = vunpack.c.l.b16 %v2813
    %v5525 = vunpack.c.h.b16 %v2813
    %v5526 = vunpack.c.l.b16 %v2814
    %v5527 = vunpack.c.h.b16 %v2814
    %v5528 = vunpack.c.l.b16 %v2815
    %v5529 = vunpack.c.h.b16 %v2815
    %v5530 = vunpack.c.l.b16 %v2816
    %v5531 = vunpack.c.h.b16 %v2816
    %v5532 = vunpack.c.l.b16 %v2817
    %v5533 = vunpack.c.h.b16 %v2817
    %v5534 = vunpack.c.l.b16 %v2818
    %v5535 = vunpack.c.h.b16 %v2818
    %v5536 = vunpack.c.l.b16 %v2819
    %v5537 = vunpack.c.h.b16 %v2819
    %v5538 = vunpack.c.l.b16 %v2820
    %v5539 = vunpack.c.h.b16 %v2820
    %v5540 = vunpack.c.l.b16 %v2821
    %v5541 = vunpack.c.h.b16 %v2821
    %v5542 = vunpack.c.l.b16 %v2822
    %v5543 = vunpack.c.h.b16 %v2822
    %v5544 = vunpack.c.l.b16 %v2823
    %v5545 = vunpack.c.h.b16 %v2823
    %v5546 = vunpack.c.l.b16 %v2824
    %v5547 = vunpack.c.h.b16 %v2824
    %v5548 = vunpack.c.l.b16 %v2825
    %v5549 = vunpack.c.h.b16 %v2825
    %v5550 = vunpack.c.l.b16 %v2826
    %v5551 = vunpack.c.h.b16 %v2826
    %v5552 = vunpack.c.l.b16 %v2827
    %v5553 = vunpack.c.h.b16 %v2827
    %v5554 = vunpack.c.l.b16 %v2828
    %v5555 = vunpack.c.h.b16 %v2828
    %v5556 = vunpack.c.l.b16 %v2829
    %v5557 = vunpack.c.h.b16 %v2829
    %v5558 = vunpack.c.l.b16 %v2830
    %v5559 = vunpack.c.h.b16 %v2830
    %v5560 = vunpack.c.l.b16 %v2831
    %v5561 = vunpack.c.h.b16 %v2831
    %v5562 = vunpack.c.l.b16 %v2832
    %v5563 = vunpack.c.h.b16 %v2832
    %v5564 = vunpack.c.l.b16 %v2833
    %v5565 = vunpack.c.h.b16 %v2833
    %v5566 = vunpack.c.l.b16 %v2834
    %v5567 = vunpack.c.h.b16 %v2834
    %v5568 = vunpack.c.l.b16 %v2835
    %v5569 = vunpack.c.h.b16 %v2835
    %v5570 = vunpack.c.l.b16 %v2836
    %v5571 = vunpack.c.h.b16 %v2836
    %v5572 = vunpack.c.l.b16 %v2837
    %v5573 = vunpack.c.h.b16 %v2837
    %v5574 = vunpack.c.l.b16 %v2838
    %v5575 = vunpack.c.h.b16 %v2838
    %v5576 = vunpack.c.l.b16 %v2839
    %v5577 = vunpack.c.h.b16 %v2839
    %v5578 = vunpack.c.l.b16 %v2840
    %v5579 = vunpack.c.h.b16 %v2840
    %v5580 = vunpack.c.l.b16 %v2841
    %v5581 = vunpack.c.h.b16 %v2841
    %v5582 = vunpack.c.l.b16 %v2842
    %v5583 = vunpack.c.h.b16 %v2842
    %v5584 = vunpack.c.l.b16 %v2843
    %v5585 = vunpack.c.h.b16 %v2843
    %v5586 = vunpack.c.l.b16 %v2844
    %v5587 = vunpack.c.h.b16 %v2844
    %v5588 = vunpack.c.l.b16 %v2845
    %v5589 = vunpack.c.h.b16 %v2845
    %v5590 = vunpack.c.l.b16 %v2846
    %v5591 = vunpack.c.h.b16 %v2846
    %v5592 = vunpack.c.l.b16 %v2847
    %v5593 = vunpack.c.h.b16 %v2847
    %v5594 = vunpack.c.l.b16 %v2848
    %v5595 = vunpack.c.h.b16 %v2848
    %v5596 = vunpack.c.l.b16 %v2849
    %v5597 = vunpack.c.h.b16 %v2849
    %v5598 = vunpack.c.l.b16 %v2850
    %v5599 = vunpack.c.h.b16 %v2850
    %v5600 = vunpack.c.l.b16 %v2851
    %v5601 = vunpack.c.h.b16 %v2851
    %v5602 = vunpack.c.l.b16 %v2852
    %v5603 = vunpack.c.h.b16 %v2852
    %v5604 = vunpack.c.l.b16 %v2853
    %v5605 = vunpack.c.h.b16 %v2853
    %v5606 = vunpack.c.l.b16 %v2854
    %v5607 = vunpack.c.h.b16 %v2854
    %v5608 = vunpack.c.l.b16 %v2855
    %v5609 = vunpack.c.h.b16 %v2855
    %v5610 = vunpack.c.l.b16 %v2856
    %v5611 = vunpack.c.h.b16 %v2856
    %v5612 = vunpack.c.l.b16 %v2857
    %v5613 = vunpack.c.h.b16 %v2857
    %v5614 = vunpack.c.l.b16 %v2858
    %v5615 = vunpack.c.h.b16 %v2858
    %v5616 = vunpack.c.l.b16 %v2859
    %v5617 = vunpack.c.h.b16 %v2859
    %v5618 = vunpack.c.l.b16 %v2860
    %v5619 = vunpack.c.h.b16 %v2860
    %v5620 = vunpack.c.l.b16 %v2861
    %v5621 = vunpack.c.h.b16 %v2861
    %v5622 = vunpack.c.l.b16 %v2862
    %v5623 = vunpack.c.h.b16 %v2862
    %v5624 = vunpack.c.l.b16 %v2863
    %v5625 = vunpack.c.h.b16 %v2863
    %v5626 = vunpack.c.l.b16 %v2864
    %v5627 = vunpack.c.h.b16 %v2864
    %v5628 = vunpack.c.l.b16 %v2865
    %v5629 = vunpack.c.h.b16 %v2865
    %v5630 = vunpack.c.l.b16 %v2866
    %v5631 = vunpack.c.h.b16 %v2866
    %v5632 = vunpack.c.l.b16 %v2867
    %v5633 = vunpack.c.h.b16 %v2867
    %v5634 = vunpack.c.l.b16 %v2868
    %v5635 = vunpack.c.h.b16 %v2868
    %v5636 = vunpack.c.l.b16 %v2869
    %v5637 = vunpack.c.h.b16 %v2869
    %v5638 = vunpack.c.l.b16 %v2870
    %v5639 = vunpack.c.h.b16 %v2870
    %v5640 = vunpack.c.l.b16 %v2871
    %v5641 = vunpack.c.h.b16 %v2871
    %v5642 = vunpack.c.l.b16 %v2872
    %v5643 = vunpack.c.h.b16 %v2872
    %v5644 = vunpack.c.l.b16 %v2873
    %v5645 = vunpack.c.h.b16 %v2873
    %v5646 = vunpack.c.l.b16 %v2874
    %v5647 = vunpack.c.h.b16 %v2874
    %v5648 = vunpack.c.l.b16 %v2875
    %v5649 = vunpack.c.h.b16 %v2875
    %v5650 = vunpack.c.l.b16 %v2876
    %v5651 = vunpack.c.h.b16 %v2876
    %v5652 = vunpack.c.l.b16 %v2877
    %v5653 = vunpack.c.h.b16 %v2877
    %v5654 = vunpack.c.l.b16 %v2878
    %v5655 = vunpack.c.h.b16 %v2878
    %v5656 = vunpack.c.l.b16 %v2879
    %v5657 = vunpack.c.h.b16 %v2879
    %v5658 = vunpack.c.l.b16 %v2880
    %v5659 = vunpack.c.h.b16 %v2880
    %v5660 = vunpack.c.l.b16 %v2881
    %v5661 = vunpack.c.h.b16 %v2881
    %v5662 = vunpack.c.l.b16 %v2882
    %v5663 = vunpack.c.h.b16 %v2882
    %v5664 = vunpack.c.l.b16 %v2883
    %v5665 = vunpack.c.h.b16 %v2883
    %v5666 = vunpack.c.l.b16 %v2884
    %v5667 = vunpack.c.h.b16 %v2884
    %v5668 = vunpack.c.l.b16 %v2885
    %v5669 = vunpack.c.h.b16 %v2885
    %v5670 = vunpack.c.l.b16 %v2886
    %v5671 = vunpack.c.h.b16 %v2886
    %v5672 = vunpack.c.l.b16 %v2887
    %v5673 = vunpack.c.h.b16 %v2887
    %v5674 = vunpack.c.l.b16 %v2888
    %v5675 = vunpack.c.h.b16 %v2888
    %v5676 = vunpack.c.l.b16 %v2889
    %v5677 = vunpack.c.h.b16 %v2889
    %v5678 = vunpack.c.l.b16 %v2890
    %v5679 = vunpack.c.h.b16 %v2890
    %v5680 = vunpack.c.l.b16 %v2891
    %v5681 = vunpack.c.h.b16 %v2891
    %v5682 = vunpack.c.l.b16 %v2892
    %v5683 = vunpack.c.h.b16 %v2892
    %v5684 = vunpack.c.l.b16 %v2893
    %v5685 = vunpack.c.h.b16 %v2893
    %v5686 = vunpack.c.l.b16 %v2894
    %v5687 = vunpack.c.h.b16 %v2894
    %v5688 = vunpack.c.l.b16 %v2895
    %v5689 = vunpack.c.h.b16 %v2895
    %v5690 = vunpack.c.l.b16 %v2896
    %v5691 = vunpack.c.h.b16 %v2896
    %v5692 = vunpack.c.l.b16 %v2897
    %v5693 = vunpack.c.h.b16 %v2897
    %v5694 = vunpack.c.l.b16 %v2898
    %v5695 = vunpack.c.h.b16 %v2898
    %v5696 = vunpack.c.l.b16 %v2899
    %v5697 = vunpack.c.h.b16 %v2899
    %v5698 = vunpack.c.l.b16 %v2900
    %v5699 = vunpack.c.h.b16 %v2900
    %v5700 = vunpack.c.l.b16 %v2901
    %v5701 = vunpack.c.h.b16 %v2901
    %v5702 = vunpack.c.l.b16 %v2902
    %v5703 = vunpack.c.h.b16 %v2902
    %v5704 = vunpack.c.l.b16 %v2903
    %v5705 = vunpack.c.h.b16 %v2903
    %v5706 = vunpack.c.l.b16 %v2904
    %v5707 = vunpack.c.h.b16 %v2904
    %v5708 = vunpack.c.l.b16 %v2905
    %v5709 = vunpack.c.h.b16 %v2905
    %v5710 = vunpack.c.l.b16 %v2906
    %v5711 = vunpack.c.h.b16 %v2906
    %v5712 = vunpack.c.l.b16 %v2907
    %v5713 = vunpack.c.h.b16 %v2907
    %v5714 = vunpack.c.l.b16 %v2908
    %v5715 = vunpack.c.h.b16 %v2908
    %v5716 = vunpack.c.l.b16 %v2909
    %v5717 = vunpack.c.h.b16 %v2909
    %v5718 = vunpack.c.l.b16 %v2910
    %v5719 = vunpack.c.h.b16 %v2910
    %v5720 = vunpack.c.l.b16 %v2911
    %v5721 = vunpack.c.h.b16 %v2911
    %v5722 = vunpack.c.l.b16 %v2912
    %v5723 = vunpack.c.h.b16 %v2912
    %v5724 = vunpack.c.l.b16 %v2913
    %v5725 = vunpack.c.h.b16 %v2913
    %v5726 = vunpack.c.l.b16 %v2914
    %v5727 = vunpack.c.h.b16 %v2914
    %v5728 = vunpack.c.l.b16 %v2915
    %v5729 = vunpack.c.h.b16 %v2915
    %v5730 = vunpack.c.l.b16 %v2916
    %v5731 = vunpack.c.h.b16 %v2916
    %v5732 = vunpack.c.l.b16 %v2917
    %v5733 = vunpack.c.h.b16 %v2917
    %v5734 = vunpack.c.l.b16 %v2918
    %v5735 = vunpack.c.h.b16 %v2918
    %v5736 = vunpack.c.l.b16 %v2919
    %v5737 = vunpack.c.h.b16 %v2919
    %v5738 = vunpack.c.l.b16 %v2920
    %v5739 = vunpack.c.h.b16 %v2920
    %v5740 = vunpack.c.l.b16 %v2921
    %v5741 = vunpack.c.h.b16 %v2921
    %v5742 = vunpack.c.l.b16 %v2922
    %v5743 = vunpack.c.h.b16 %v2922
    %v5744 = vunpack.c.l.b16 %v2923
    %v5745 = vunpack.c.h.b16 %v2923
    %v5746 = vunpack.c.l.b16 %v2924
    %v5747 = vunpack.c.h.b16 %v2924
    %v5748 = vunpack.c.l.b16 %v2925
    %v5749 = vunpack.c.h.b16 %v2925
    %v5750 = vunpack.c.l.b16 %v2926
    %v5751 = vunpack.c.h.b16 %v2926
    %v5752 = vunpack.c.l.b16 %v2927
    %v5753 = vunpack.c.h.b16 %v2927
    %v5754 = vunpack.c.l.b16 %v2928
    %v5755 = vunpack.c.h.b16 %v2928
    %v5756 = vunpack.c.l.b16 %v2929
    %v5757 = vunpack.c.h.b16 %v2929
    %v5758 = vunpack.c.l.b16 %v2930
    %v5759 = vunpack.c.h.b16 %v2930
    %v5760 = vunpack.c.l.b16 %v2931
    %v5761 = vunpack.c.h.b16 %v2931
    %v5762 = vunpack.c.l.b16 %v2932
    %v5763 = vunpack.c.h.b16 %v2932
    %v5764 = vunpack.c.l.b16 %v2933
    %v5765 = vunpack.c.h.b16 %v2933
    %v5766 = vunpack.c.l.b16 %v2934
    %v5767 = vunpack.c.h.b16 %v2934
    %v5768 = vunpack.c.l.b16 %v2935
    %v5769 = vunpack.c.h.b16 %v2935
    %v5770 = vunpack.c.l.b16 %v2936
    %v5771 = vunpack.c.h.b16 %v2936
    %v5772 = vunpack.c.l.b16 %v2937
    %v5773 = vunpack.c.h.b16 %v2937
    %v5774 = vunpack.c.l.b16 %v2938
    %v5775 = vunpack.c.h.b16 %v2938
    %v5776 = vunpack.c.l.b16 %v2939
    %v5777 = vunpack.c.h.b16 %v2939
    %v5778 = vunpack.c.l.b16 %v2940
    %v5779 = vunpack.c.h.b16 %v2940
    %v5780 = vunpack.c.l.b16 %v2941
    %v5781 = vunpack.c.h.b16 %v2941
    %v5782 = vunpack.c.l.b16 %v2942
    %v5783 = vunpack.c.h.b16 %v2942
    %v5784 = vunpack.c.l.b16 %v2943
    %v5785 = vunpack.c.h.b16 %v2943
    %v5786 = vunpack.c.l.b16 %v2944
    %v5787 = vunpack.c.h.b16 %v2944
    %v5788 = vunpack.c.l.b16 %v2945
    %v5789 = vunpack.c.h.b16 %v2945
    %v5790 = vunpack.c.l.b16 %v2946
    %v5791 = vunpack.c.h.b16 %v2946
    %v5792 = vunpack.c.l.b16 %v2947
    %v5793 = vunpack.c.h.b16 %v2947
    %v5794 = vunpack.c.l.b16 %v2948
    %v5795 = vunpack.c.h.b16 %v2948
    %v5796 = vunpack.c.l.b16 %v2949
    %v5797 = vunpack.c.h.b16 %v2949
    %v5798 = vunpack.c.l.b16 %v2950
    %v5799 = vunpack.c.h.b16 %v2950
    %v5800 = vunpack.c.l.b16 %v2951
    %v5801 = vunpack.c.h.b16 %v2951
    %v5802 = vunpack.c.l.b16 %v2952
    %v5803 = vunpack.c.h.b16 %v2952
    %v5804 = vunpack.c.l.b16 %v2953
    %v5805 = vunpack.c.h.b16 %v2953
    %v5806 = vunpack.c.l.b16 %v2954
    %v5807 = vunpack.c.h.b16 %v2954
    %v5808 = vunpack.c.l.b16 %v2955
    %v5809 = vunpack.c.h.b16 %v2955
    %v5810 = vunpack.c.l.b16 %v2956
    %v5811 = vunpack.c.h.b16 %v2956
    %v5812 = vunpack.c.l.b16 %v2957
    %v5813 = vunpack.c.h.b16 %v2957
    %v5814 = vunpack.c.l.b16 %v2958
    %v5815 = vunpack.c.h.b16 %v2958
    %v5816 = vunpack.c.l.b16 %v2959
    %v5817 = vunpack.c.h.b16 %v2959
    %v5818 = vunpack.c.l.b16 %v2960
    %v5819 = vunpack.c.h.b16 %v2960
    %v5820 = vunpack.c.l.b16 %v2961
    %v5821 = vunpack.c.h.b16 %v2961
    %v5822 = vunpack.c.l.b16 %v2962
    %v5823 = vunpack.c.h.b16 %v2962
    %v5824 = vunpack.c.l.b16 %v2963
    %v5825 = vunpack.c.h.b16 %v2963
    %v5826 = vunpack.c.l.b16 %v2964
    %v5827 = vunpack.c.h.b16 %v2964
    %v5828 = vunpack.c.l.b16 %v2965
    %v5829 = vunpack.c.h.b16 %v2965
    %v5830 = vunpack.c.l.b16 %v2966
    %v5831 = vunpack.c.h.b16 %v2966
    %v5832 = vunpack.c.l.b16 %v2967
    %v5833 = vunpack.c.h.b16 %v2967
    %v5834 = vunpack.c.l.b16 %v2968
    %v5835 = vunpack.c.h.b16 %v2968
    %v5836 = vunpack.c.l.b16 %v2969
    %v5837 = vunpack.c.h.b16 %v2969
    %v5838 = vunpack.c.l.b16 %v2970
    %v5839 = vunpack.c.h.b16 %v2970
    %v5840 = vunpack.c.l.b16 %v2971
    %v5841 = vunpack.c.h.b16 %v2971
    %v5842 = vunpack.c.l.b16 %v2972
    %v5843 = vunpack.c.h.b16 %v2972
    %v5844 = vunpack.c.l.b16 %v2973
    %v5845 = vunpack.c.h.b16 %v2973
    %v5846 = vunpack.c.l.b16 %v2974
    %v5847 = vunpack.c.h.b16 %v2974
    %v5848 = vunpack.c.l.b16 %v2975
    %v5849 = vunpack.c.h.b16 %v2975
    %v5850 = vunpack.c.l.b16 %v2976
    %v5851 = vunpack.c.h.b16 %v2976
    %v5852 = vunpack.c.l.b16 %v2977
    %v5853 = vunpack.c.h.b16 %v2977
    %v5854 = vunpack.c.l.b16 %v2978
    %v5855 = vunpack.c.h.b16 %v2978
    %v5856 = vunpack.c.l.b16 %v2979
    %v5857 = vunpack.c.h.b16 %v2979
    %v5858 = vunpack.c.l.b16 %v2980
    %v5859 = vunpack.c.h.b16 %v2980
    %v5860 = vunpack.c.l.b16 %v2981
    %v5861 = vunpack.c.h.b16 %v2981
    %v5862 = vunpack.c.l.b16 %v2982
    %v5863 = vunpack.c.h.b16 %v2982
    %v5864 = vunpack.c.l.b16 %v2983
    %v5865 = vunpack.c.h.b16 %v2983
    %v5866 = vunpack.c.l.b16 %v2984
    %v5867 = vunpack.c.h.b16 %v2984
    %v5868 = vunpack.c.l.b16 %v2985
    %v5869 = vunpack.c.h.b16 %v2985
    %v5870 = vunpack.c.l.b16 %v2986
    %v5871 = vunpack.c.h.b16 %v2986
    %v5872 = vunpack.c.l.b16 %v2987
    %v5873 = vunpack.c.h.b16 %v2987
    %v5874 = vunpack.c.l.b16 %v2988
    %v5875 = vunpack.c.h.b16 %v2988
    %v5876 = vunpack.c.l.b16 %v2989
    %v5877 = vunpack.c.h.b16 %v2989
    %v5878 = vunpack.c.l.b16 %v2990
    %v5879 = vunpack.c.h.b16 %v2990
    %v5880 = vunpack.c.l.b16 %v2991
    %v5881 = vunpack.c.h.b16 %v2991
    %v5882 = vunpack.c.l.b16 %v2992
    %v5883 = vunpack.c.h.b16 %v2992
    %v5884 = vunpack.c.l.b16 %v2993
    %v5885 = vunpack.c.h.b16 %v2993
    %v5886 = vunpack.c.l.b16 %v2994
    %v5887 = vunpack.c.h.b16 %v2994
    %v5888 = vunpack.c.l.b16 %v2995
    %v5889 = vunpack.c.h.b16 %v2995
    %v5890 = vunpack.c.l.b16 %v2996
    %v5891 = vunpack.c.h.b16 %v2996
    %v5892 = vunpack.c.l.b16 %v2997
    %v5893 = vunpack.c.h.b16 %v2997
    %v5894 = vunpack.c.l.b16 %v2998
    %v5895 = vunpack.c.h.b16 %v2998
    %v5896 = vunpack.c.l.b16 %v2999
    %v5897 = vunpack.c.h.b16 %v2999
    %v5898 = vunpack.c.l.b16 %v3000
    %v5899 = vunpack.c.h.b16 %v3000
    %v5900 = vunpack.c.l.b16 %v3001
    %v5901 = vunpack.c.h.b16 %v3001
    %v5902 = vunpack.c.l.b16 %v3002
    %v5903 = vunpack.c.h.b16 %v3002
    %v5904 = vunpack.c.l.b16 %v3003
    %v5905 = vunpack.c.h.b16 %v3003
    %v5906 = vunpack.c.l.b16 %v3004
    %v5907 = vunpack.c.h.b16 %v3004
    %v5908 = vunpack.c.l.b16 %v3005
    %v5909 = vunpack.c.h.b16 %v3005
    %v5910 = vunpack.c.l.b16 %v3006
    %v5911 = vunpack.c.h.b16 %v3006
    %v5912 = vunpack.c.l.b16 %v3007
    %v5913 = vunpack.c.h.b16 %v3007
    %v5914 = vunpack.c.l.b16 %v3008
    %v5915 = vunpack.c.h.b16 %v3008
    %v5916 = vunpack.c.l.b16 %v3009
    %v5917 = vunpack.c.h.b16 %v3009
    %v5918 = vunpack.c.l.b16 %v3010
    %v5919 = vunpack.c.h.b16 %v3010
    %v5920 = vunpack.c.l.b16 %v3011
    %v5921 = vunpack.c.h.b16 %v3011
    %v5922 = vunpack.c.l.b16 %v3012
    %v5923 = vunpack.c.h.b16 %v3012
    %v5924 = vunpack.c.l.b16 %v3013
    %v5925 = vunpack.c.h.b16 %v3013
    %v5926 = vunpack.c.l.b16 %v3014
    %v5927 = vunpack.c.h.b16 %v3014
    %v5928 = vunpack.c.l.b16 %v3015
    %v5929 = vunpack.c.h.b16 %v3015
    %v5930 = vunpack.c.l.b16 %v3016
    %v5931 = vunpack.c.h.b16 %v3016
    %v5932 = vunpack.c.l.b16 %v3017
    %v5933 = vunpack.c.h.b16 %v3017
    %v5934 = vunpack.c.l.b16 %v3018
    %v5935 = vunpack.c.h.b16 %v3018
    %v5936 = vunpack.c.l.b16 %v3019
    %v5937 = vunpack.c.h.b16 %v3019
    %v5938 = vunpack.c.l.b16 %v3020
    %v5939 = vunpack.c.h.b16 %v3020
    %v5940 = vunpack.c.l.b16 %v3021
    %v5941 = vunpack.c.h.b16 %v3021
    %v5942 = vunpack.c.l.b16 %v3022
    %v5943 = vunpack.c.h.b16 %v3022
    %v5944 = vunpack.c.l.b16 %v3023
    %v5945 = vunpack.c.h.b16 %v3023
    %v5946 = vunpack.c.l.b16 %v3024
    %v5947 = vunpack.c.h.b16 %v3024
    %v5948 = vunpack.c.l.b16 %v3025
    %v5949 = vunpack.c.h.b16 %v3025
    %v5950 = vunpack.c.l.b16 %v3026
    %v5951 = vunpack.c.h.b16 %v3026
    %v5952 = vunpack.c.l.b16 %v3027
    %v5953 = vunpack.c.h.b16 %v3027
    %v5954 = vunpack.c.l.b16 %v3028
    %v5955 = vunpack.c.h.b16 %v3028
    %v5956 = vunpack.c.l.b16 %v3029
    %v5957 = vunpack.c.h.b16 %v3029
    %v5958 = vunpack.c.l.b16 %v3030
    %v5959 = vunpack.c.h.b16 %v3030
    %v5960 = vunpack.c.l.b16 %v3031
    %v5961 = vunpack.c.h.b16 %v3031
    %v5962 = vunpack.c.l.b16 %v3032
    %v5963 = vunpack.c.h.b16 %v3032
    %v5964 = vunpack.c.l.b16 %v3033
    %v5965 = vunpack.c.h.b16 %v3033
    %v5966 = vunpack.c.l.b16 %v3034
    %v5967 = vunpack.c.h.b16 %v3034
    %v5968 = vunpack.c.l.b16 %v3035
    %v5969 = vunpack.c.h.b16 %v3035
    %v5970 = vunpack.c.l.b16 %v3036
    %v5971 = vunpack.c.h.b16 %v3036
    %v5972 = vunpack.c.l.b16 %v3037
    %v5973 = vunpack.c.h.b16 %v3037
    %v5974 = vunpack.c.l.b16 %v3038
    %v5975 = vunpack.c.h.b16 %v3038
    %v5976 = vunpack.c.l.b16 %v3039
    %v5977 = vunpack.c.h.b16 %v3039
    %v5978 = vunpack.c.l.b16 %v3040
    %v5979 = vunpack.c.h.b16 %v3040
    %v5980 = vunpack.c.l.b16 %v3041
    %v5981 = vunpack.c.h.b16 %v3041
    %v5982 = vunpack.c.l.b16 %v3042
    %v5983 = vunpack.c.h.b16 %v3042
    %v5984 = vunpack.c.l.b16 %v3043
    %v5985 = vunpack.c.h.b16 %v3043
    %v5986 = vunpack.c.l.b16 %v3044
    %v5987 = vunpack.c.h.b16 %v3044
    %v5988 = vunpack.c.l.b16 %v3045
    %v5989 = vunpack.c.h.b16 %v3045
    %v5990 = vunpack.c.l.b16 %v3046
    %v5991 = vunpack.c.h.b16 %v3046
    %v5992 = vunpack.c.l.b16 %v3047
    %v5993 = vunpack.c.h.b16 %v3047
    %v5994 = vunpack.c.l.b16 %v3048
    %v5995 = vunpack.c.h.b16 %v3048
    %v5996 = vunpack.c.l.b16 %v3049
    %v5997 = vunpack.c.h.b16 %v3049
    %v5998 = vunpack.c.l.b16 %v3050
    %v5999 = vunpack.c.h.b16 %v3050
    %v6000 = vunpack.c.l.b16 %v3051
    %v6001 = vunpack.c.h.b16 %v3051
    %v6002 = vunpack.c.l.b16 %v3052
    %v6003 = vunpack.c.h.b16 %v3052
    %v6004 = vunpack.c.l.b16 %v3053
    %v6005 = vunpack.c.h.b16 %v3053
    %v6006 = vunpack.c.l.b16 %v3054
    %v6007 = vunpack.c.h.b16 %v3054
    %v6008 = vunpack.c.l.b16 %v3055
    %v6009 = vunpack.c.h.b16 %v3055
    %v6010 = vunpack.c.l.b16 %v3056
    %v6011 = vunpack.c.h.b16 %v3056
    %v6012 = vunpack.c.l.b16 %v3057
    %v6013 = vunpack.c.h.b16 %v3057
    %v6014 = vunpack.c.l.b16 %v3058
    %v6015 = vunpack.c.h.b16 %v3058
    %v6016 = vunpack.c.l.b16 %v3059
    %v6017 = vunpack.c.h.b16 %v3059
    %v6018 = vunpack.c.l.b16 %v3060
    %v6019 = vunpack.c.h.b16 %v3060
    %v6020 = vunpack.c.l.b16 %v3061
    %v6021 = vunpack.c.h.b16 %v3061
    %v6022 = vunpack.c.l.b16 %v3062
    %v6023 = vunpack.c.h.b16 %v3062
    %v6024 = vunpack.c.l.b16 %v3063
    %v6025 = vunpack.c.h.b16 %v3063
    %v6026 = vunpack.c.l.b16 %v3064
    %v6027 = vunpack.c.h.b16 %v3064
    %v6028 = vunpack.c.l.b16 %v3065
    %v6029 = vunpack.c.h.b16 %v3065
    %v6030 = vunpack.c.l.b16 %v3066
    %v6031 = vunpack.c.h.b16 %v3066
    %v6032 = vunpack.c.l.b16 %v3067
    %v6033 = vunpack.c.h.b16 %v3067
    %v6034 = vunpack.c.l.b16 %v3068
    %v6035 = vunpack.c.h.b16 %v3068
    %v6036 = vunpack.c.l.b16 %v3069
    %v6037 = vunpack.c.h.b16 %v3069
    %v6038 = vunpack.c.l.b16 %v3070
    %v6039 = vunpack.c.h.b16 %v3070
    %v6040 = vunpack.c.l.b16 %v3071
    %v6041 = vunpack.c.h.b16 %v3071
    %v6042 = vunpack.c.l.b16 %v3072
    %v6043 = vunpack.c.h.b16 %v3072
    %v6044 = vunpack.c.l.b16 %v3073
    %v6045 = vunpack.c.h.b16 %v3073
    %v6046 = vunpack.c.l.b16 %v3074
    %v6047 = vunpack.c.h.b16 %v3074
    %v6048 = vunpack.c.l.b16 %v3075
    %v6049 = vunpack.c.h.b16 %v3075
    %v6050 = vunpack.c.l.b16 %v3076
    %v6051 = vunpack.c.h.b16 %v3076
    %v6052 = vunpack.c.l.b16 %v3077
    %v6053 = vunpack.c.h.b16 %v3077
    %v6054 = vunpack.c.l.b16 %v3078
    %v6055 = vunpack.c.h.b16 %v3078
    %v6056 = vunpack.c.l.b16 %v3079
    %v6057 = vunpack.c.h.b16 %v3079
    %v6058 = vunpack.c.l.b16 %v3080
    %v6059 = vunpack.c.h.b16 %v3080
    %v6060 = vunpack.c.l.b16 %v3081
    %v6061 = vunpack.c.h.b16 %v3081
    %v6062 = vunpack.c.l.b16 %v3082
    %v6063 = vunpack.c.h.b16 %v3082
    %v6064 = vunpack.c.l.b16 %v3083
    %v6065 = vunpack.c.h.b16 %v3083
    %v6066 = vunpack.c.l.b16 %v3084
    %v6067 = vunpack.c.h.b16 %v3084
    %v6068 = vunpack.c.l.b16 %v3085
    %v6069 = vunpack.c.h.b16 %v3085
    %v6070 = vunpack.c.l.b16 %v3086
    %v6071 = vunpack.c.h.b16 %v3086
    %v6072 = vunpack.c.l.b16 %v3087
    %v6073 = vunpack.c.h.b16 %v3087
    %v6074 = vunpack.c.l.b16 %v3088
    %v6075 = vunpack.c.h.b16 %v3088
    %v6076 = vunpack.c.l.b16 %v3089
    %v6077 = vunpack.c.h.b16 %v3089
    %v6078 = vunpack.c.l.b16 %v3090
    %v6079 = vunpack.c.h.b16 %v3090
    %v6080 = vunpack.c.l.b16 %v3091
    %v6081 = vunpack.c.h.b16 %v3091
    %v6082 = vunpack.c.l.b16 %v3092
    %v6083 = vunpack.c.h.b16 %v3092
    %v6084 = vunpack.c.l.b16 %v3093
    %v6085 = vunpack.c.h.b16 %v3093
    %v6086 = vunpack.c.l.b16 %v3094
    %v6087 = vunpack.c.h.b16 %v3094
    %v6088 = vunpack.c.l.b16 %v3095
    %v6089 = vunpack.c.h.b16 %v3095
    %v6090 = vunpack.c.l.b16 %v3096
    %v6091 = vunpack.c.h.b16 %v3096
    %v6092 = vunpack.c.l.b16 %v3097
    %v6093 = vunpack.c.h.b16 %v3097
    %v6094 = vunpack.c.l.b16 %v3098
    %v6095 = vunpack.c.h.b16 %v3098
    %v6096 = vunpack.c.l.b16 %v3099
    %v6097 = vunpack.c.h.b16 %v3099
    %v6098 = vunpack.c.l.b16 %v3100
    %v6099 = vunpack.c.h.b16 %v3100
    %v6100 = vunpack.c.l.b16 %v3101
    %v6101 = vunpack.c.h.b16 %v3101
    %v6102 = vunpack.c.l.b16 %v3102
    %v6103 = vunpack.c.h.b16 %v3102
    %v6104 = vunpack.c.l.b16 %v3103
    %v6105 = vunpack.c.h.b16 %v3103
    %v6106 = vunpack.c.l.b16 %v3104
    %v6107 = vunpack.c.h.b16 %v3104
    %v6108 = vunpack.c.l.b16 %v3105
    %v6109 = vunpack.c.h.b16 %v3105
    %v6110 = vunpack.c.l.b16 %v3106
    %v6111 = vunpack.c.h.b16 %v3106
    %v6112 = vunpack.c.l.b16 %v3107
    %v6113 = vunpack.c.h.b16 %v3107
    %v6114 = vunpack.c.l.b16 %v3108
    %v6115 = vunpack.c.h.b16 %v3108
    %v6116 = vunpack.c.l.b16 %v3109
    %v6117 = vunpack.c.h.b16 %v3109
    %v6118 = vunpack.c.l.b16 %v3110
    %v6119 = vunpack.c.h.b16 %v3110
    %v6120 = vunpack.c.l.b16 %v3111
    %v6121 = vunpack.c.h.b16 %v3111
    %v6122 = vunpack.c.l.b16 %v3112
    %v6123 = vunpack.c.h.b16 %v3112
    %v6124 = vunpack.c.l.b16 %v3113
    %v6125 = vunpack.c.h.b16 %v3113
    %v6126 = vunpack.c.l.b16 %v3114
    %v6127 = vunpack.c.h.b16 %v3114
    %v6128 = vunpack.c.l.b16 %v3115
    %v6129 = vunpack.c.h.b16 %v3115
    %v6130 = vunpack.c.l.b16 %v3116
    %v6131 = vunpack.c.h.b16 %v3116
    %v6132 = vunpack.c.l.b16 %v3117
    %v6133 = vunpack.c.h.b16 %v3117
    %v6134 = vunpack.c.l.b16 %v3118
    %v6135 = vunpack.c.h.b16 %v3118
    %v6136 = vunpack.c.l.b16 %v3119
    %v6137 = vunpack.c.h.b16 %v3119
    %v6138 = vunpack.c.l.b16 %v3120
    %v6139 = vunpack.c.h.b16 %v3120
    %v6140 = vunpack.c.l.b16 %v3121
    %v6141 = vunpack.c.h.b16 %v3121
    %v6142 = vunpack.c.l.b16 %v3122
    %v6143 = vunpack.c.h.b16 %v3122
    %v6144 = vunpack.c.l.b16 %v3123
    %v6145 = vunpack.c.h.b16 %v3123
    %v6146 = vunpack.c.l.b16 %v3124
    %v6147 = vunpack.c.h.b16 %v3124
    %v6148 = vunpack.c.l.b16 %v3125
    %v6149 = vunpack.c.h.b16 %v3125
    %v6150 = vunpack.c.l.b16 %v3126
    %v6151 = vunpack.c.h.b16 %v3126
    %v6152 = vunpack.c.l.b16 %v3127
    %v6153 = vunpack.c.h.b16 %v3127
    %v6154 = vunpack.c.l.b16 %v3128
    %v6155 = vunpack.c.h.b16 %v3128
    %v6156 = vunpack.c.l.b16 %v3129
    %v6157 = vunpack.c.h.b16 %v3129
    %v6158 = vunpack.c.l.b16 %v3130
    %v6159 = vunpack.c.h.b16 %v3130
    %v6160 = vunpack.c.l.b16 %v3131
    %v6161 = vunpack.c.h.b16 %v3131
    %v6162 = vunpack.c.l.b16 %v3132
    %v6163 = vunpack.c.h.b16 %v3132
    %v6164 = vunpack.c.l.b16 %v3133
    %v6165 = vunpack.c.h.b16 %v3133
    %v6166 = vunpack.c.l.b16 %v3134
    %v6167 = vunpack.c.h.b16 %v3134
    %v6168 = vunpack.c.l.b16 %v3135
    %v6169 = vunpack.c.h.b16 %v3135
    %v6170 = vunpack.c.l.b16 %v3136
    %v6171 = vunpack.c.h.b16 %v3136
    %v6172 = vunpack.c.l.b16 %v3137
    %v6173 = vunpack.c.h.b16 %v3137
    %v6174 = vunpack.c.l.b16 %v3138
    %v6175 = vunpack.c.h.b16 %v3138
    %v6176 = vunpack.c.l.b16 %v3139
    %v6177 = vunpack.c.h.b16 %v3139
    %v6178 = vunpack.c.l.b16 %v3140
    %v6179 = vunpack.c.h.b16 %v3140
    %v6180 = vunpack.c.l.b16 %v3141
    %v6181 = vunpack.c.h.b16 %v3141
    %v6182 = vunpack.c.l.b16 %v3142
    %v6183 = vunpack.c.h.b16 %v3142
    %v6184 = vunpack.c.l.b16 %v3143
    %v6185 = vunpack.c.h.b16 %v3143
    %v6186 = vunpack.c.l.b16 %v3144
    %v6187 = vunpack.c.h.b16 %v3144
    %v6188 = vunpack.c.l.b16 %v3145
    %v6189 = vunpack.c.h.b16 %v3145
    %v6190 = vunpack.c.l.b16 %v3146
    %v6191 = vunpack.c.h.b16 %v3146
    %v6192 = vunpack.c.l.b16 %v3147
    %v6193 = vunpack.c.h.b16 %v3147
    %v6194 = vunpack.c.l.b16 %v3148
    %v6195 = vunpack.c.h.b16 %v3148
    %v6196 = vunpack.c.l.b16 %v3149
    %v6197 = vunpack.c.h.b16 %v3149
    %v6198 = vunpack.c.l.b16 %v3150
    %v6199 = vunpack.c.h.b16 %v3150
    %v6200 = vunpack.c.l.b16 %v3151
    %v6201 = vunpack.c.h.b16 %v3151
    %v6202 = vunpack.c.l.b16 %v3152
    %v6203 = vunpack.c.h.b16 %v3152
    %v6204 = vunpack.c.l.b16 %v3153
    %v6205 = vunpack.c.h.b16 %v3153
    %v6206 = vunpack.c.l.b16 %v3154
    %v6207 = vunpack.c.h.b16 %v3154
    %v6208 = vunpack.c.l.b16 %v3155
    %v6209 = vunpack.c.h.b16 %v3155
    %v6210 = vunpack.c.l.b16 %v3156
    %v6211 = vunpack.c.h.b16 %v3156
    %v6212 = vunpack.c.l.b16 %v3157
    %v6213 = vunpack.c.h.b16 %v3157
    %v6214 = vunpack.c.l.b16 %v3158
    %v6215 = vunpack.c.h.b16 %v3158
    %v6216 = vunpack.c.l.b16 %v3159
    %v6217 = vunpack.c.h.b16 %v3159
    %v6218 = vunpack.c.l.b16 %v3160
    %v6219 = vunpack.c.h.b16 %v3160
    %v6220 = vunpack.c.l.b16 %v3161
    %v6221 = vunpack.c.h.b16 %v3161
    %v6222 = vunpack.c.l.b16 %v3162
    %v6223 = vunpack.c.h.b16 %v3162
    %v6224 = vunpack.c.l.b16 %v3163
    %v6225 = vunpack.c.h.b16 %v3163
    %v6226 = vunpack.c.l.b16 %v3164
    %v6227 = vunpack.c.h.b16 %v3164
    %v6228 = vunpack.c.l.b16 %v3165
    %v6229 = vunpack.c.h.b16 %v3165
    %v6230 = vunpack.c.l.b16 %v3166
    %v6231 = vunpack.c.h.b16 %v3166
    %v6232 = vunpack.c.l.b16 %v3167
    %v6233 = vunpack.c.h.b16 %v3167
    %v6234 = vunpack.c.l.b16 %v3168
    %v6235 = vunpack.c.h.b16 %v3168
    %v6236 = vunpack.c.l.b16 %v3169
    %v6237 = vunpack.c.h.b16 %v3169
    %v6238 = vunpack.c.l.b16 %v3170
    %v6239 = vunpack.c.h.b16 %v3170
    %v6240 = vunpack.c.l.b16 %v3171
    %v6241 = vunpack.c.h.b16 %v3171
    %v6242 = vunpack.c.l.b16 %v3172
    %v6243 = vunpack.c.h.b16 %v3172
    %v6244 = vunpack.c.l.b16 %v3173
    %v6245 = vunpack.c.h.b16 %v3173
    %v6246 = vunpack.c.l.b16 %v3174
    %v6247 = vunpack.c.h.b16 %v3174
    %v6248 = vunpack.c.l.b16 %v3175
    %v6249 = vunpack.c.h.b16 %v3175
    %v6250 = vunpack.c.l.b16 %v3176
    %v6251 = vunpack.c.h.b16 %v3176
    %v6252 = vunpack.c.l.b16 %v3177
    %v6253 = vunpack.c.h.b16 %v3177
    %v6254 = vunpack.c.l.b16 %v3178
    %v6255 = vunpack.c.h.b16 %v3178
    %v6256 = vunpack.c.l.b16 %v3179
    %v6257 = vunpack.c.h.b16 %v3179
    %v6258 = vunpack.c.l.b16 %v3180
    %v6259 = vunpack.c.h.b16 %v3180
    %v6260 = vunpack.c.l.b16 %v3181
    %v6261 = vunpack.c.h.b16 %v3181
    %v6262 = vunpack.c.l.b16 %v3182
    %v6263 = vunpack.c.h.b16 %v3182
    %v6264 = vunpack.c.l.b16 %v3183
    %v6265 = vunpack.c.h.b16 %v3183
    %v6266 = vunpack.c.l.b16 %v3184
    %v6267 = vunpack.c.h.b16 %v3184
    %v6268 = vunpack.c.l.b16 %v3185
    %v6269 = vunpack.c.h.b16 %v3185
    %v6270 = vunpack.c.l.b16 %v3186
    %v6271 = vunpack.c.h.b16 %v3186
    %v6272 = vunpack.c.l.b16 %v3187
    %v6273 = vunpack.c.h.b16 %v3187
    %v6274 = vunpack.c.l.b16 %v3188
    %v6275 = vunpack.c.h.b16 %v3188
    %v6276 = vunpack.c.l.b16 %v3189
    %v6277 = vunpack.c.h.b16 %v3189
    %v6278 = vunpack.c.l.b16 %v3190
    %v6279 = vunpack.c.h.b16 %v3190
    %v6280 = vunpack.c.l.b16 %v3191
    %v6281 = vunpack.c.h.b16 %v3191
    %v6282 = vunpack.c.l.b16 %v3192
    %v6283 = vunpack.c.h.b16 %v3192
    %v6284 = vunpack.c.l.b16 %v3193
    %v6285 = vunpack.c.h.b16 %v3193
    %v6286 = vunpack.c.l.b16 %v3194
    %v6287 = vunpack.c.h.b16 %v3194
    %v6288 = vunpack.c.l.b16 %v3195
    %v6289 = vunpack.c.h.b16 %v3195
    %v6290 = vunpack.c.l.b16 %v3196
    %v6291 = vunpack.c.h.b16 %v3196
    %v6292 = vunpack.c.l.b16 %v3197
    %v6293 = vunpack.c.h.b16 %v3197
    %v6294 = vunpack.c.l.b16 %v3198
    %v6295 = vunpack.c.h.b16 %v3198
    %v6296 = vunpack.c.l.b16 %v3199
    %v6297 = vunpack.c.h.b16 %v3199
    %v6298 = vunpack.c.l.b16 %v3200
    %v6299 = vunpack.c.h.b16 %v3200
    %v6300 = vunpack.c.l.b16 %v3201
    %v6301 = vunpack.c.h.b16 %v3201
    %v6302 = vunpack.c.l.b16 %v3202
    %v6303 = vunpack.c.h.b16 %v3202
    %v6304 = vunpack.c.l.b16 %v3203
    %v6305 = vunpack.c.h.b16 %v3203
    %v6306 = vunpack.c.l.b16 %v3204
    %v6307 = vunpack.c.h.b16 %v3204
    %v6308 = vunpack.c.l.b16 %v3205
    %v6309 = vunpack.c.h.b16 %v3205
    %v6310 = vunpack.c.l.b16 %v3206
    %v6311 = vunpack.c.h.b16 %v3206
    %v6312 = vunpack.c.l.b16 %v3207
    %v6313 = vunpack.c.h.b16 %v3207
    %v6314 = vunpack.c.l.b16 %v3208
    %v6315 = vunpack.c.h.b16 %v3208
    %v6316 = vunpack.c.l.b16 %v3209
    %v6317 = vunpack.c.h.b16 %v3209
    %v6318 = vunpack.c.l.b16 %v3210
    %v6319 = vunpack.c.h.b16 %v3210
    %v6320 = vunpack.c.l.b16 %v3211
    %v6321 = vunpack.c.h.b16 %v3211
    %v6322 = vunpack.c.l.b16 %v3212
    %v6323 = vunpack.c.h.b16 %v3212
    %v6324 = vunpack.c.l.b16 %v3213
    %v6325 = vunpack.c.h.b16 %v3213
    %v6326 = vunpack.c.l.b16 %v3214
    %v6327 = vunpack.c.h.b16 %v3214
    %v6328 = vunpack.c.l.b16 %v3215
    %v6329 = vunpack.c.h.b16 %v3215
    %v6330 = vunpack.c.l.b16 %v3216
    %v6331 = vunpack.c.h.b16 %v3216
    %v6332 = vunpack.c.l.b16 %v3217
    %v6333 = vunpack.c.h.b16 %v3217
    %v6334 = vunpack.c.l.b16 %v3218
    %v6335 = vunpack.c.h.b16 %v3218
    %v6336 = vunpack.c.l.b16 %v3219
    %v6337 = vunpack.c.h.b16 %v3219
    %v6338 = vunpack.c.l.b16 %v3220
    %v6339 = vunpack.c.h.b16 %v3220
    %v6340 = vunpack.c.l.b16 %v3221
    %v6341 = vunpack.c.h.b16 %v3221
    %v6342 = vunpack.c.l.b16 %v3222
    %v6343 = vunpack.c.h.b16 %v3222
    %v6344 = vunpack.c.l.b16 %v3223
    %v6345 = vunpack.c.h.b16 %v3223
    %v6346 = vunpack.c.l.b16 %v3224
    %v6347 = vunpack.c.h.b16 %v3224
    %v6348 = vunpack.c.l.b16 %v3225
    %v6349 = vunpack.c.h.b16 %v3225
    %v6350 = vunpack.c.l.b16 %v3226
    %v6351 = vunpack.c.h.b16 %v3226
    %v6352 = vunpack.c.l.b16 %v3227
    %v6353 = vunpack.c.h.b16 %v3227
    %v6354 = vunpack.c.l.b16 %v3228
    %v6355 = vunpack.c.h.b16 %v3228
    %v6356 = vunpack.c.l.b16 %v3229
    %v6357 = vunpack.c.h.b16 %v3229
    %v6358 = vunpack.c.l.b16 %v3230
    %v6359 = vunpack.c.h.b16 %v3230
    %v6360 = vunpack.c.l.b16 %v3231
    %v6361 = vunpack.c.h.b16 %v3231
    %v6362 = vunpack.c.l.b16 %v3232
    %v6363 = vunpack.c.h.b16 %v3232
    %v6364 = vunpack.c.l.b16 %v3233
    %v6365 = vunpack.c.h.b16 %v3233
    %v6366 = vunpack.c.l.b16 %v3234
    %v6367 = vunpack.c.h.b16 %v3234
    %v6368 = vunpack.c.l.b16 %v3235
    %v6369 = vunpack.c.h.b16 %v3235
    %v6370 = vunpack.c.l.b16 %v3236
    %v6371 = vunpack.c.h.b16 %v3236
    %v6372 = vunpack.c.l.b16 %v3237
    %v6373 = vunpack.c.h.b16 %v3237
    %v6374 = vunpack.c.l.b16 %v3238
    %v6375 = vunpack.c.h.b16 %v3238
    %v6376 = vunpack.c.l.b16 %v3239
    %v6377 = vunpack.c.h.b16 %v3239
    %v6378 = vunpack.c.l.b16 %v3240
    %v6379 = vunpack.c.h.b16 %v3240
    %v6380 = vunpack.c.l.b16 %v3241
    %v6381 = vunpack.c.h.b16 %v3241
    %v6382 = vunpack.c.l.b16 %v3242
    %v6383 = vunpack.c.h.b16 %v3242
    %v6384 = vunpack.c.l.b16 %v3243
    %v6385 = vunpack.c.h.b16 %v3243
    %v6386 = vunpack.c.l.b16 %v3244
    %v6387 = vunpack.c.h.b16 %v3244
    %v6388 = vunpack.c.l.b16 %v3245
    %v6389 = vunpack.c.h.b16 %v3245
    %v6390 = vunpack.c.l.b16 %v3246
    %v6391 = vunpack.c.h.b16 %v3246
    %v6392 = vunpack.c.l.b16 %v3247
    %v6393 = vunpack.c.h.b16 %v3247
    %v6394 = vunpack.c.l.b16 %v3248
    %v6395 = vunpack.c.h.b16 %v3248
    %v6396 = vunpack.c.l.b16 %v3249
    %v6397 = vunpack.c.h.b16 %v3249
    %v6398 = vunpack.c.l.b16 %v3250
    %v6399 = vunpack.c.h.b16 %v3250
    %v6400 = vunpack.c.l.b16 %v3251
    %v6401 = vunpack.c.h.b16 %v3251
    %v6402 = vunpack.c.l.b16 %v3252
    %v6403 = vunpack.c.h.b16 %v3252
    %v6404 = vunpack.c.l.b16 %v3253
    %v6405 = vunpack.c.h.b16 %v3253
    %v6406 = vunpack.c.l.b16 %v3254
    %v6407 = vunpack.c.h.b16 %v3254
    %v6408 = vunpack.c.l.b16 %v3255
    %v6409 = vunpack.c.h.b16 %v3255
    %v6410 = vunpack.c.l.b16 %v3256
    %v6411 = vunpack.c.h.b16 %v3256
    %v6412 = vunpack.c.l.b16 %v3257
    %v6413 = vunpack.c.h.b16 %v3257
    %v6414 = vpack.c.b16 %v4382, %v4366
    %v6415 = vpack.c.b16 %v4383, %v4367
    %v6416 = vpack.c.b16 %v4384, %v4368
    %v6417 = vpack.c.b16 %v4385, %v4369
    %v6418 = vpack.c.b16 %v4386, %v4370
    %v6419 = vpack.c.b16 %v4387, %v4371
    %v6420 = vpack.c.b16 %v4388, %v4372
    %v6421 = vpack.c.b16 %v4389, %v4373
    %v6422 = vpack.c.b16 %v4390, %v4374
    %v6423 = vpack.c.b16 %v4391, %v4375
    %v6424 = vpack.c.b16 %v4392, %v4376
    %v6425 = vpack.c.b16 %v4393, %v4377
    %v6426 = vpack.c.b16 %v4394, %v4378
    %v6427 = vpack.c.b16 %v4395, %v4379
    %v6428 = vpack.c.b16 %v4396, %v4380
    %v6429 = vpack.c.b16 %v4397, %v4381
    %v6430 = vpack.c.b16 %v4414, %v4398
    %v6431 = vpack.c.b16 %v4415, %v4399
    %v6432 = vpack.c.b16 %v4416, %v4400
    %v6433 = vpack.c.b16 %v4417, %v4401
    %v6434 = vpack.c.b16 %v4418, %v4402
    %v6435 = vpack.c.b16 %v4419, %v4403
    %v6436 = vpack.c.b16 %v4420, %v4404
    %v6437 = vpack.c.b16 %v4421, %v4405
    %v6438 = vpack.c.b16 %v4422, %v4406
    %v6439 = vpack.c.b16 %v4423, %v4407
    %v6440 = vpack.c.b16 %v4424, %v4408
    %v6441 = vpack.c.b16 %v4425, %v4409
    %v6442 = vpack.c.b16 %v4426, %v4410
    %v6443 = vpack.c.b16 %v4427, %v4411
    %v6444 = vpack.c.b16 %v4428, %v4412
    %v6445 = vpack.c.b16 %v4429, %v4413
    %v6446 = vpack.c.b16 %v4446, %v4430
    %v6447 = vpack.c.b16 %v4447, %v4431
    %v6448 = vpack.c.b16 %v4448, %v4432
    %v6449 = vpack.c.b16 %v4449, %v4433
    %v6450 = vpack.c.b16 %v4450, %v4434
    %v6451 = vpack.c.b16 %v4451, %v4435
    %v6452 = vpack.c.b16 %v4452, %v4436
    %v6453 = vpack.c.b16 %v4453, %v4437
    %v6454 = vpack.c.b16 %v4454, %v4438
    %v6455 = vpack.c.b16 %v4455, %v4439
    %v6456 = vpack.c.b16 %v4456, %v4440
    %v6457 = vpack.c.b16 %v4457, %v4441
    %v6458 = vpack.c.b16 %v4458, %v4442
    %v6459 = vpack.c.b16 %v4459, %v4443
    %v6460 = vpack.c.b16 %v4460, %v4444
    %v6461 = vpack.c.b16 %v4461, %v4445
    %v6462 = vpack.c.b16 %v4478, %v4462
    %v6463 = vpack.c.b16 %v4479, %v4463
    %v6464 = vpack.c.b16 %v4480, %v4464
    %v6465 = vpack.c.b16 %v4481, %v4465
    %v6466 = vpack.c.b16 %v4482, %v4466
    %v6467 = vpack.c.b16 %v4483, %v4467
    %v6468 = vpack.c.b16 %v4484, %v4468
    %v6469 = vpack.c.b16 %v4485, %v4469
    %v6470 = vpack.c.b16 %v4486, %v4470
    %v6471 = vpack.c.b16 %v4487, %v4471
    %v6472 = vpack.c.b16 %v4488, %v4472
    %v6473 = vpack.c.b16 %v4489, %v4473
    %v6474 = vpack.c.b16 %v4490, %v4474
    %v6475 = vpack.c.b16 %v4491, %v4475
    %v6476 = vpack.c.b16 %v4492, %v4476
    %v6477 = vpack.c.b16 %v4493, %v4477
    %v6478 = vpack.c.b16 %v4510, %v4494
    %v6479 = vpack.c.b16 %v4511, %v4495
    %v6480 = vpack.c.b16 %v4512, %v4496
    %v6481 = vpack.c.b16 %v4513, %v4497
    %v6482 = vpack.c.b16 %v4514, %v4498
    %v6483 = vpack.c.b16 %v4515, %v4499
    %v6484 = vpack.c.b16 %v4516, %v4500
    %v6485 = vpack.c.b16 %v4517, %v4501
    %v6486 = vpack.c.b16 %v4518, %v4502
    %v6487 = vpack.c.b16 %v4519, %v4503
    %v6488 = vpack.c.b16 %v4520, %v4504
    %v6489 = vpack.c.b16 %v4521, %v4505
    %v6490 = vpack.c.b16 %v4522, %v4506
    %v6491 = vpack.c.b16 %v4523, %v4507
    %v6492 = vpack.c.b16 %v4524, %v4508
    %v6493 = vpack.c.b16 %v4525, %v4509
    %v6494 = vpack.c.b16 %v4542, %v4526
    %v6495 = vpack.c.b16 %v4543, %v4527
    %v6496 = vpack.c.b16 %v4544, %v4528
    %v6497 = vpack.c.b16 %v4545, %v4529
    %v6498 = vpack.c.b16 %v4546, %v4530
    %v6499 = vpack.c.b16 %v4547, %v4531
    %v6500 = vpack.c.b16 %v4548, %v4532
    %v6501 = vpack.c.b16 %v4549, %v4533
    %v6502 = vpack.c.b16 %v4550, %v4534
    %v6503 = vpack.c.b16 %v4551, %v4535
    %v6504 = vpack.c.b16 %v4552, %v4536
    %v6505 = vpack.c.b16 %v4553, %v4537
    %v6506 = vpack.c.b16 %v4554, %v4538
    %v6507 = vpack.c.b16 %v4555, %v4539
    %v6508 = vpack.c.b16 %v4556, %v4540
    %v6509 = vpack.c.b16 %v4557, %v4541
    %v6510 = vpack.c.b16 %v4574, %v4558
    %v6511 = vpack.c.b16 %v4575, %v4559
    %v6512 = vpack.c.b16 %v4576, %v4560
    %v6513 = vpack.c.b16 %v4577, %v4561
    %v6514 = vpack.c.b16 %v4578, %v4562
    %v6515 = vpack.c.b16 %v4579, %v4563
    %v6516 = vpack.c.b16 %v4580, %v4564
    %v6517 = vpack.c.b16 %v4581, %v4565
    %v6518 = vpack.c.b16 %v4582, %v4566
    %v6519 = vpack.c.b16 %v4583, %v4567
    %v6520 = vpack.c.b16 %v4584, %v4568
    %v6521 = vpack.c.b16 %v4585, %v4569
    %v6522 = vpack.c.b16 %v4586, %v4570
    %v6523 = vpack.c.b16 %v4587, %v4571
    %v6524 = vpack.c.b16 %v4588, %v4572
    %v6525 = vpack.c.b16 %v4589, %v4573
    %v6526 = vpack.c.b16 %v4606, %v4590
    %v6527 = vpack.c.b16 %v4607, %v4591
    %v6528 = vpack.c.b16 %v4608, %v4592
    %v6529 = vpack.c.b16 %v4609, %v4593
    %v6530 = vpack.c.b16 %v4610, %v4594
    %v6531 = vpack.c.b16 %v4611, %v4595
    %v6532 = vpack.c.b16 %v4612, %v4596
    %v6533 = vpack.c.b16 %v4613, %v4597
    %v6534 = vpack.c.b16 %v4614, %v4598
    %v6535 = vpack.c.b16 %v4615, %v4599
    %v6536 = vpack.c.b16 %v4616, %v4600
    %v6537 = vpack.c.b16 %v4617, %v4601
    %v6538 = vpack.c.b16 %v4618, %v4602
    %v6539 = vpack.c.b16 %v4619, %v4603
    %v6540 = vpack.c.b16 %v4620, %v4604
    %v6541 = vpack.c.b16 %v4621, %v4605
    %v6542 = vpack.c.b16 %v4638, %v4622
    %v6543 = vpack.c.b16 %v4639, %v4623
    %v6544 = vpack.c.b16 %v4640, %v4624
    %v6545 = vpack.c.b16 %v4641, %v4625
    %v6546 = vpack.c.b16 %v4642, %v4626
    %v6547 = vpack.c.b16 %v4643, %v4627
    %v6548 = vpack.c.b16 %v4644, %v4628
    %v6549 = vpack.c.b16 %v4645, %v4629
    %v6550 = vpack.c.b16 %v4646, %v4630
    %v6551 = vpack.c.b16 %v4647, %v4631
    %v6552 = vpack.c.b16 %v4648, %v4632
    %v6553 = vpack.c.b16 %v4649, %v4633
    %v6554 = vpack.c.b16 %v4650, %v4634
    %v6555 = vpack.c.b16 %v4651, %v4635
    %v6556 = vpack.c.b16 %v4652, %v4636
    %v6557 = vpack.c.b16 %v4653, %v4637
    %v6558 = vpack.c.b16 %v4670, %v4654
    %v6559 = vpack.c.b16 %v4671, %v4655
    %v6560 = vpack.c.b16 %v4672, %v4656
    %v6561 = vpack.c.b16 %v4673, %v4657
    %v6562 = vpack.c.b16 %v4674, %v4658
    %v6563 = vpack.c.b16 %v4675, %v4659
    %v6564 = vpack.c.b16 %v4676, %v4660
    %v6565 = vpack.c.b16 %v4677, %v4661
    %v6566 = vpack.c.b16 %v4678, %v4662
    %v6567 = vpack.c.b16 %v4679, %v4663
    %v6568 = vpack.c.b16 %v4680, %v4664
    %v6569 = vpack.c.b16 %v4681, %v4665
    %v6570 = vpack.c.b16 %v4682, %v4666
    %v6571 = vpack.c.b16 %v4683, %v4667
    %v6572 = vpack.c.b16 %v4684, %v4668
    %v6573 = vpack.c.b16 %v4685, %v4669
    %v6574 = vpack.c.b16 %v4702, %v4686
    %v6575 = vpack.c.b16 %v4703, %v4687
    %v6576 = vpack.c.b16 %v4704, %v4688
    %v6577 = vpack.c.b16 %v4705, %v4689
    %v6578 = vpack.c.b16 %v4706, %v4690
    %v6579 = vpack.c.b16 %v4707, %v4691
    %v6580 = vpack.c.b16 %v4708, %v4692
    %v6581 = vpack.c.b16 %v4709, %v4693
    %v6582 = vpack.c.b16 %v4710, %v4694
    %v6583 = vpack.c.b16 %v4711, %v4695
    %v6584 = vpack.c.b16 %v4712, %v4696
    %v6585 = vpack.c.b16 %v4713, %v4697
    %v6586 = vpack.c.b16 %v4714, %v4698
    %v6587 = vpack.c.b16 %v4715, %v4699
    %v6588 = vpack.c.b16 %v4716, %v4700
    %v6589 = vpack.c.b16 %v4717, %v4701
    %v6590 = vpack.c.b16 %v4734, %v4718
    %v6591 = vpack.c.b16 %v4735, %v4719
    %v6592 = vpack.c.b16 %v4736, %v4720
    %v6593 = vpack.c.b16 %v4737, %v4721
    %v6594 = vpack.c.b16 %v4738, %v4722
    %v6595 = vpack.c.b16 %v4739, %v4723
    %v6596 = vpack.c.b16 %v4740, %v4724
    %v6597 = vpack.c.b16 %v4741, %v4725
    %v6598 = vpack.c.b16 %v4742, %v4726
    %v6599 = vpack.c.b16 %v4743, %v4727
    %v6600 = vpack.c.b16 %v4744, %v4728
    %v6601 = vpack.c.b16 %v4745, %v4729
    %v6602 = vpack.c.b16 %v4746, %v4730
    %v6603 = vpack.c.b16 %v4747, %v4731
    %v6604 = vpack.c.b16 %v4748, %v4732
    %v6605 = vpack.c.b16 %v4749, %v4733
    %v6606 = vpack.c.b16 %v4766, %v4750
    %v6607 = vpack.c.b16 %v4767, %v4751
    %v6608 = vpack.c.b16 %v4768, %v4752
    %v6609 = vpack.c.b16 %v4769, %v4753
    %v6610 = vpack.c.b16 %v4770, %v4754
    %v6611 = vpack.c.b16 %v4771, %v4755
    %v6612 = vpack.c.b16 %v4772, %v4756
    %v6613 = vpack.c.b16 %v4773, %v4757
    %v6614 = vpack.c.b16 %v4774, %v4758
    %v6615 = vpack.c.b16 %v4775, %v4759
    %v6616 = vpack.c.b16 %v4776, %v4760
    %v6617 = vpack.c.b16 %v4777, %v4761
    %v6618 = vpack.c.b16 %v4778, %v4762
    %v6619 = vpack.c.b16 %v4779, %v4763
    %v6620 = vpack.c.b16 %v4780, %v4764
    %v6621 = vpack.c.b16 %v4781, %v4765
    %v6622 = vpack.c.b16 %v4798, %v4782
    %v6623 = vpack.c.b16 %v4799, %v4783
    %v6624 = vpack.c.b16 %v4800, %v4784
    %v6625 = vpack.c.b16 %v4801, %v4785
    %v6626 = vpack.c.b16 %v4802, %v4786
    %v6627 = vpack.c.b16 %v4803, %v4787
    %v6628 = vpack.c.b16 %v4804, %v4788
    %v6629 = vpack.c.b16 %v4805, %v4789
    %v6630 = vpack.c.b16 %v4806, %v4790
    %v6631 = vpack.c.b16 %v4807, %v4791
    %v6632 = vpack.c.b16 %v4808, %v4792
    %v6633 = vpack.c.b16 %v4809, %v4793
    %v6634 = vpack.c.b16 %v4810, %v4794
    %v6635 = vpack.c.b16 %v4811, %v4795
    %v6636 = vpack.c.b16 %v4812, %v4796
    %v6637 = vpack.c.b16 %v4813, %v4797
    %v6638 = vpack.c.b16 %v4830, %v4814
    %v6639 = vpack.c.b16 %v4831, %v4815
    %v6640 = vpack.c.b16 %v4832, %v4816
    %v6641 = vpack.c.b16 %v4833, %v4817
    %v6642 = vpack.c.b16 %v4834, %v4818
    %v6643 = vpack.c.b16 %v4835, %v4819
    %v6644 = vpack.c.b16 %v4836, %v4820
    %v6645 = vpack.c.b16 %v4837, %v4821
    %v6646 = vpack.c.b16 %v4838, %v4822
    %v6647 = vpack.c.b16 %v4839, %v4823
    %v6648 = vpack.c.b16 %v4840, %v4824
    %v6649 = vpack.c.b16 %v4841, %v4825
    %v6650 = vpack.c.b16 %v4842, %v4826
    %v6651 = vpack.c.b16 %v4843, %v4827
    %v6652 = vpack.c.b16 %v4844, %v4828
    %v6653 = vpack.c.b16 %v4845, %v4829
    %v6654 = vpack.c.b16 %v4862, %v4846
    %v6655 = vpack.c.b16 %v4863, %v4847
    %v6656 = vpack.c.b16 %v4864, %v4848
    %v6657 = vpack.c.b16 %v4865, %v4849
    %v6658 = vpack.c.b16 %v4866, %v4850
    %v6659 = vpack.c.b16 %v4867, %v4851
    %v6660 = vpack.c.b16 %v4868, %v4852
    %v6661 = vpack.c.b16 %v4869, %v4853
    %v6662 = vpack.c.b16 %v4870, %v4854
    %v6663 = vpack.c.b16 %v4871, %v4855
    %v6664 = vpack.c.b16 %v4872, %v4856
    %v6665 = vpack.c.b16 %v4873, %v4857
    %v6666 = vpack.c.b16 %v4874, %v4858
    %v6667 = vpack.c.b16 %v4875, %v4859
    %v6668 = vpack.c.b16 %v4876, %v4860
    %v6669 = vpack.c.b16 %v4877, %v4861
    %v6670 = vpack.c.b16 %v4894, %v4878
    %v6671 = vpack.c.b16 %v4895, %v4879
    %v6672 = vpack.c.b16 %v4896, %v4880
    %v6673 = vpack.c.b16 %v4897, %v4881
    %v6674 = vpack.c.b16 %v4898, %v4882
    %v6675 = vpack.c.b16 %v4899, %v4883
    %v6676 = vpack.c.b16 %v4900, %v4884
    %v6677 = vpack.c.b16 %v4901, %v4885
    %v6678 = vpack.c.b16 %v4902, %v4886
    %v6679 = vpack.c.b16 %v4903, %v4887
    %v6680 = vpack.c.b16 %v4904, %v4888
    %v6681 = vpack.c.b16 %v4905, %v4889
    %v6682 = vpack.c.b16 %v4906, %v4890
    %v6683 = vpack.c.b16 %v4907, %v4891
    %v6684 = vpack.c.b16 %v4908, %v4892
    %v6685 = vpack.c.b16 %v4909, %v4893
    %v6686 = vpack.c.b16 %v4926, %v4910
    %v6687 = vpack.c.b16 %v4927, %v4911
    %v6688 = vpack.c.b16 %v4928, %v4912
    %v6689 = vpack.c.b16 %v4929, %v4913
    %v6690 = vpack.c.b16 %v4930, %v4914
    %v6691 = vpack.c.b16 %v4931, %v4915
    %v6692 = vpack.c.b16 %v4932, %v4916
    %v6693 = vpack.c.b16 %v4933, %v4917
    %v6694 = vpack.c.b16 %v4934, %v4918
    %v6695 = vpack.c.b16 %v4935, %v4919
    %v6696 = vpack.c.b16 %v4936, %v4920
    %v6697 = vpack.c.b16 %v4937, %v4921
    %v6698 = vpack.c.b16 %v4938, %v4922
    %v6699 = vpack.c.b16 %v4939, %v4923
    %v6700 = vpack.c.b16 %v4940, %v4924
    %v6701 = vpack.c.b16 %v4941, %v4925
    %v6702 = vpack.c.b16 %v4958, %v4942
    %v6703 = vpack.c.b16 %v4959, %v4943
    %v6704 = vpack.c.b16 %v4960, %v4944
    %v6705 = vpack.c.b16 %v4961, %v4945
    %v6706 = vpack.c.b16 %v4962, %v4946
    %v6707 = vpack.c.b16 %v4963, %v4947
    %v6708 = vpack.c.b16 %v4964, %v4948
    %v6709 = vpack.c.b16 %v4965, %v4949
    %v6710 = vpack.c.b16 %v4966, %v4950
    %v6711 = vpack.c.b16 %v4967, %v4951
    %v6712 = vpack.c.b16 %v4968, %v4952
    %v6713 = vpack.c.b16 %v4969, %v4953
    %v6714 = vpack.c.b16 %v4970, %v4954
    %v6715 = vpack.c.b16 %v4971, %v4955
    %v6716 = vpack.c.b16 %v4972, %v4956
    %v6717 = vpack.c.b16 %v4973, %v4957
    %v6718 = vpack.c.b16 %v4990, %v4974
    %v6719 = vpack.c.b16 %v4991, %v4975
    %v6720 = vpack.c.b16 %v4992, %v4976
    %v6721 = vpack.c.b16 %v4993, %v4977
    %v6722 = vpack.c.b16 %v4994, %v4978
    %v6723 = vpack.c.b16 %v4995, %v4979
    %v6724 = vpack.c.b16 %v4996, %v4980
    %v6725 = vpack.c.b16 %v4997, %v4981
    %v6726 = vpack.c.b16 %v4998, %v4982
    %v6727 = vpack.c.b16 %v4999, %v4983
    %v6728 = vpack.c.b16 %v5000, %v4984
    %v6729 = vpack.c.b16 %v5001, %v4985
    %v6730 = vpack.c.b16 %v5002, %v4986
    %v6731 = vpack.c.b16 %v5003, %v4987
    %v6732 = vpack.c.b16 %v5004, %v4988
    %v6733 = vpack.c.b16 %v5005, %v4989
    %v6734 = vpack.c.b16 %v5022, %v5006
    %v6735 = vpack.c.b16 %v5023, %v5007
    %v6736 = vpack.c.b16 %v5024, %v5008
    %v6737 = vpack.c.b16 %v5025, %v5009
    %v6738 = vpack.c.b16 %v5026, %v5010
    %v6739 = vpack.c.b16 %v5027, %v5011
    %v6740 = vpack.c.b16 %v5028, %v5012
    %v6741 = vpack.c.b16 %v5029, %v5013
    %v6742 = vpack.c.b16 %v5030, %v5014
    %v6743 = vpack.c.b16 %v5031, %v5015
    %v6744 = vpack.c.b16 %v5032, %v5016
    %v6745 = vpack.c.b16 %v5033, %v5017
    %v6746 = vpack.c.b16 %v5034, %v5018
    %v6747 = vpack.c.b16 %v5035, %v5019
    %v6748 = vpack.c.b16 %v5036, %v5020
    %v6749 = vpack.c.b16 %v5037, %v5021
    %v6750 = vpack.c.b16 %v5054, %v5038
    %v6751 = vpack.c.b16 %v5055, %v5039
    %v6752 = vpack.c.b16 %v5056, %v5040
    %v6753 = vpack.c.b16 %v5057, %v5041
    %v6754 = vpack.c.b16 %v5058, %v5042
    %v6755 = vpack.c.b16 %v5059, %v5043
    %v6756 = vpack.c.b16 %v5060, %v5044
    %v6757 = vpack.c.b16 %v5061, %v5045
    %v6758 = vpack.c.b16 %v5062, %v5046
    %v6759 = vpack.c.b16 %v5063, %v5047
    %v6760 = vpack.c.b16 %v5064, %v5048
    %v6761 = vpack.c.b16 %v5065, %v5049
    %v6762 = vpack.c.b16 %v5066, %v5050
    %v6763 = vpack.c.b16 %v5067, %v5051
    %v6764 = vpack.c.b16 %v5068, %v5052
    %v6765 = vpack.c.b16 %v5069, %v5053
    %v6766 = vpack.c.b16 %v5086, %v5070
    %v6767 = vpack.c.b16 %v5087, %v5071
    %v6768 = vpack.c.b16 %v5088, %v5072
    %v6769 = vpack.c.b16 %v5089, %v5073
    %v6770 = vpack.c.b16 %v5090, %v5074
    %v6771 = vpack.c.b16 %v5091, %v5075
    %v6772 = vpack.c.b16 %v5092, %v5076
    %v6773 = vpack.c.b16 %v5093, %v5077
    %v6774 = vpack.c.b16 %v5094, %v5078
    %v6775 = vpack.c.b16 %v5095, %v5079
    %v6776 = vpack.c.b16 %v5096, %v5080
    %v6777 = vpack.c.b16 %v5097, %v5081
    %v6778 = vpack.c.b16 %v5098, %v5082
    %v6779 = vpack.c.b16 %v5099, %v5083
    %v6780 = vpack.c.b16 %v5100, %v5084
    %v6781 = vpack.c.b16 %v5101, %v5085
    %v6782 = vpack.c.b16 %v5118, %v5102
    %v6783 = vpack.c.b16 %v5119, %v5103
    %v6784 = vpack.c.b16 %v5120, %v5104
    %v6785 = vpack.c.b16 %v5121, %v5105
    %v6786 = vpack.c.b16 %v5122, %v5106
    %v6787 = vpack.c.b16 %v5123, %v5107
    %v6788 = vpack.c.b16 %v5124, %v5108
    %v6789 = vpack.c.b16 %v5125, %v5109
    %v6790 = vpack.c.b16 %v5126, %v5110
    %v6791 = vpack.c.b16 %v5127, %v5111
    %v6792 = vpack.c.b16 %v5128, %v5112
    %v6793 = vpack.c.b16 %v5129, %v5113
    %v6794 = vpack.c.b16 %v5130, %v5114
    %v6795 = vpack.c.b16 %v5131, %v5115
    %v6796 = vpack.c.b16 %v5132, %v5116
    %v6797 = vpack.c.b16 %v5133, %v5117
    %v6798 = vpack.c.b16 %v5150, %v5134
    %v6799 = vpack.c.b16 %v5151, %v5135
    %v6800 = vpack.c.b16 %v5152, %v5136
    %v6801 = vpack.c.b16 %v5153, %v5137
    %v6802 = vpack.c.b16 %v5154, %v5138
    %v6803 = vpack.c.b16 %v5155, %v5139
    %v6804 = vpack.c.b16 %v5156, %v5140
    %v6805 = vpack.c.b16 %v5157, %v5141
    %v6806 = vpack.c.b16 %v5158, %v5142
    %v6807 = vpack.c.b16 %v5159, %v5143
    %v6808 = vpack.c.b16 %v5160, %v5144
    %v6809 = vpack.c.b16 %v5161, %v5145
    %v6810 = vpack.c.b16 %v5162, %v5146
    %v6811 = vpack.c.b16 %v5163, %v5147
    %v6812 = vpack.c.b16 %v5164, %v5148
    %v6813 = vpack.c.b16 %v5165, %v5149
    %v6814 = vpack.c.b16 %v5182, %v5166
    %v6815 = vpack.c.b16 %v5183, %v5167
    %v6816 = vpack.c.b16 %v5184, %v5168
    %v6817 = vpack.c.b16 %v5185, %v5169
    %v6818 = vpack.c.b16 %v5186, %v5170
    %v6819 = vpack.c.b16 %v5187, %v5171
    %v6820 = vpack.c.b16 %v5188, %v5172
    %v6821 = vpack.c.b16 %v5189, %v5173
    %v6822 = vpack.c.b16 %v5190, %v5174
    %v6823 = vpack.c.b16 %v5191, %v5175
    %v6824 = vpack.c.b16 %v5192, %v5176
    %v6825 = vpack.c.b16 %v5193, %v5177
    %v6826 = vpack.c.b16 %v5194, %v5178
    %v6827 = vpack.c.b16 %v5195, %v5179
    %v6828 = vpack.c.b16 %v5196, %v5180
    %v6829 = vpack.c.b16 %v5197, %v5181
    %v6830 = vpack.c.b16 %v5214, %v5198
    %v6831 = vpack.c.b16 %v5215, %v5199
    %v6832 = vpack.c.b16 %v5216, %v5200
    %v6833 = vpack.c.b16 %v5217, %v5201
    %v6834 = vpack.c.b16 %v5218, %v5202
    %v6835 = vpack.c.b16 %v5219, %v5203
    %v6836 = vpack.c.b16 %v5220, %v5204
    %v6837 = vpack.c.b16 %v5221, %v5205
    %v6838 = vpack.c.b16 %v5222, %v5206
    %v6839 = vpack.c.b16 %v5223, %v5207
    %v6840 = vpack.c.b16 %v5224, %v5208
    %v6841 = vpack.c.b16 %v5225, %v5209
    %v6842 = vpack.c.b16 %v5226, %v5210
    %v6843 = vpack.c.b16 %v5227, %v5211
    %v6844 = vpack.c.b16 %v5228, %v5212
    %v6845 = vpack.c.b16 %v5229, %v5213
    %v6846 = vpack.c.b16 %v5246, %v5230
    %v6847 = vpack.c.b16 %v5247, %v5231
    %v6848 = vpack.c.b16 %v5248, %v5232
    %v6849 = vpack.c.b16 %v5249, %v5233
    %v6850 = vpack.c.b16 %v5250, %v5234
    %v6851 = vpack.c.b16 %v5251, %v5235
    %v6852 = vpack.c.b16 %v5252, %v5236
    %v6853 = vpack.c.b16 %v5253, %v5237
    %v6854 = vpack.c.b16 %v5254, %v5238
    %v6855 = vpack.c.b16 %v5255, %v5239
    %v6856 = vpack.c.b16 %v5256, %v5240
    %v6857 = vpack.c.b16 %v5257, %v5241
    %v6858 = vpack.c.b16 %v5258, %v5242
    %v6859 = vpack.c.b16 %v5259, %v5243
    %v6860 = vpack.c.b16 %v5260, %v5244
    %v6861 = vpack.c.b16 %v5261, %v5245
    %v6862 = vpack.c.b16 %v5278, %v5262
    %v6863 = vpack.c.b16 %v5279, %v5263
    %v6864 = vpack.c.b16 %v5280, %v5264
    %v6865 = vpack.c.b16 %v5281, %v5265
    %v6866 = vpack.c.b16 %v5282, %v5266
    %v6867 = vpack.c.b16 %v5283, %v5267
    %v6868 = vpack.c.b16 %v5284, %v5268
    %v6869 = vpack.c.b16 %v5285, %v5269
    %v6870 = vpack.c.b16 %v5286, %v5270
    %v6871 = vpack.c.b16 %v5287, %v5271
    %v6872 = vpack.c.b16 %v5288, %v5272
    %v6873 = vpack.c.b16 %v5289, %v5273
    %v6874 = vpack.c.b16 %v5290, %v5274
    %v6875 = vpack.c.b16 %v5291, %v5275
    %v6876 = vpack.c.b16 %v5292, %v5276
    %v6877 = vpack.c.b16 %v5293, %v5277
    %v6878 = vpack.c.b16 %v5310, %v5294
    %v6879 = vpack.c.b16 %v5311, %v5295
    %v6880 = vpack.c.b16 %v5312, %v5296
    %v6881 = vpack.c.b16 %v5313, %v5297
    %v6882 = vpack.c.b16 %v5314, %v5298
    %v6883 = vpack.c.b16 %v5315, %v5299
    %v6884 = vpack.c.b16 %v5316, %v5300
    %v6885 = vpack.c.b16 %v5317, %v5301
    %v6886 = vpack.c.b16 %v5318, %v5302
    %v6887 = vpack.c.b16 %v5319, %v5303
    %v6888 = vpack.c.b16 %v5320, %v5304
    %v6889 = vpack.c.b16 %v5321, %v5305
    %v6890 = vpack.c.b16 %v5322, %v5306
    %v6891 = vpack.c.b16 %v5323, %v5307
    %v6892 = vpack.c.b16 %v5324, %v5308
    %v6893 = vpack.c.b16 %v5325, %v5309
    %v6894 = vpack.c.b16 %v5342, %v5326
    %v6895 = vpack.c.b16 %v5343, %v5327
    %v6896 = vpack.c.b16 %v5344, %v5328
    %v6897 = vpack.c.b16 %v5345, %v5329
    %v6898 = vpack.c.b16 %v5346, %v5330
    %v6899 = vpack.c.b16 %v5347, %v5331
    %v6900 = vpack.c.b16 %v5348, %v5332
    %v6901 = vpack.c.b16 %v5349, %v5333
    %v6902 = vpack.c.b16 %v5350, %v5334
    %v6903 = vpack.c.b16 %v5351, %v5335
    %v6904 = vpack.c.b16 %v5352, %v5336
    %v6905 = vpack.c.b16 %v5353, %v5337
    %v6906 = vpack.c.b16 %v5354, %v5338
    %v6907 = vpack.c.b16 %v5355, %v5339
    %v6908 = vpack.c.b16 %v5356, %v5340
    %v6909 = vpack.c.b16 %v5357, %v5341
    %v6910 = vpack.c.b16 %v5374, %v5358
    %v6911 = vpack.c.b16 %v5375, %v5359
    %v6912 = vpack.c.b16 %v5376, %v5360
    %v6913 = vpack.c.b16 %v5377, %v5361
    %v6914 = vpack.c.b16 %v5378, %v5362
    %v6915 = vpack.c.b16 %v5379, %v5363
    %v6916 = vpack.c.b16 %v5380, %v5364
    %v6917 = vpack.c.b16 %v5381, %v5365
    %v6918 = vpack.c.b16 %v5382, %v5366
    %v6919 = vpack.c.b16 %v5383, %v5367
    %v6920 = vpack.c.b16 %v5384, %v5368
    %v6921 = vpack.c.b16 %v5385, %v5369
    %v6922 = vpack.c.b16 %v5386, %v5370
    %v6923 = vpack.c.b16 %v5387, %v5371
    %v6924 = vpack.c.b16 %v5388, %v5372
    %v6925 = vpack.c.b16 %v5389, %v5373
    %v6926 = vpack.c.b16 %v5406, %v5390
    %v6927 = vpack.c.b16 %v5407, %v5391
    %v6928 = vpack.c.b16 %v5408, %v5392
    %v6929 = vpack.c.b16 %v5409, %v5393
    %v6930 = vpack.c.b16 %v5410, %v5394
    %v6931 = vpack.c.b16 %v5411, %v5395
    %v6932 = vpack.c.b16 %v5412, %v5396
    %v6933 = vpack.c.b16 %v5413, %v5397
    %v6934 = vpack.c.b16 %v5414, %v5398
    %v6935 = vpack.c.b16 %v5415, %v5399
    %v6936 = vpack.c.b16 %v5416, %v5400
    %v6937 = vpack.c.b16 %v5417, %v5401
    %v6938 = vpack.c.b16 %v5418, %v5402
    %v6939 = vpack.c.b16 %v5419, %v5403
    %v6940 = vpack.c.b16 %v5420, %v5404
    %v6941 = vpack.c.b16 %v5421, %v5405
    %v6942 = vpack.c.b16 %v5438, %v5422
    %v6943 = vpack.c.b16 %v5439, %v5423
    %v6944 = vpack.c.b16 %v5440, %v5424
    %v6945 = vpack.c.b16 %v5441, %v5425
    %v6946 = vpack.c.b16 %v5442, %v5426
    %v6947 = vpack.c.b16 %v5443, %v5427
    %v6948 = vpack.c.b16 %v5444, %v5428
    %v6949 = vpack.c.b16 %v5445, %v5429
    %v6950 = vpack.c.b16 %v5446, %v5430
    %v6951 = vpack.c.b16 %v5447, %v5431
    %v6952 = vpack.c.b16 %v5448, %v5432
    %v6953 = vpack.c.b16 %v5449, %v5433
    %v6954 = vpack.c.b16 %v5450, %v5434
    %v6955 = vpack.c.b16 %v5451, %v5435
    %v6956 = vpack.c.b16 %v5452, %v5436
    %v6957 = vpack.c.b16 %v5453, %v5437
    %v6958 = vpack.c.b16 %v5470, %v5454
    %v6959 = vpack.c.b16 %v5471, %v5455
    %v6960 = vpack.c.b16 %v5472, %v5456
    %v6961 = vpack.c.b16 %v5473, %v5457
    %v6962 = vpack.c.b16 %v5474, %v5458
    %v6963 = vpack.c.b16 %v5475, %v5459
    %v6964 = vpack.c.b16 %v5476, %v5460
    %v6965 = vpack.c.b16 %v5477, %v5461
    %v6966 = vpack.c.b16 %v5478, %v5462
    %v6967 = vpack.c.b16 %v5479, %v5463
    %v6968 = vpack.c.b16 %v5480, %v5464
    %v6969 = vpack.c.b16 %v5481, %v5465
    %v6970 = vpack.c.b16 %v5482, %v5466
    %v6971 = vpack.c.b16 %v5483, %v5467
    %v6972 = vpack.c.b16 %v5484, %v5468
    %v6973 = vpack.c.b16 %v5485, %v5469
    %v6974 = vpack.c.b16 %v5502, %v5486
    %v6975 = vpack.c.b16 %v5503, %v5487
    %v6976 = vpack.c.b16 %v5504, %v5488
    %v6977 = vpack.c.b16 %v5505, %v5489
    %v6978 = vpack.c.b16 %v5506, %v5490
    %v6979 = vpack.c.b16 %v5507, %v5491
    %v6980 = vpack.c.b16 %v5508, %v5492
    %v6981 = vpack.c.b16 %v5509, %v5493
    %v6982 = vpack.c.b16 %v5510, %v5494
    %v6983 = vpack.c.b16 %v5511, %v5495
    %v6984 = vpack.c.b16 %v5512, %v5496
    %v6985 = vpack.c.b16 %v5513, %v5497
    %v6986 = vpack.c.b16 %v5514, %v5498
    %v6987 = vpack.c.b16 %v5515, %v5499
    %v6988 = vpack.c.b16 %v5516, %v5500
    %v6989 = vpack.c.b16 %v5517, %v5501
    %v6990 = vpack.c.b16 %v5534, %v5518
    %v6991 = vpack.c.b16 %v5535, %v5519
    %v6992 = vpack.c.b16 %v5536, %v5520
    %v6993 = vpack.c.b16 %v5537, %v5521
    %v6994 = vpack.c.b16 %v5538, %v5522
    %v6995 = vpack.c.b16 %v5539, %v5523
    %v6996 = vpack.c.b16 %v5540, %v5524
    %v6997 = vpack.c.b16 %v5541, %v5525
    %v6998 = vpack.c.b16 %v5542, %v5526
    %v6999 = vpack.c.b16 %v5543, %v5527
    %v7000 = vpack.c.b16 %v5544, %v5528
    %v7001 = vpack.c.b16 %v5545, %v5529
    %v7002 = vpack.c.b16 %v5546, %v5530
    %v7003 = vpack.c.b16 %v5547, %v5531
    %v7004 = vpack.c.b16 %v5548, %v5532
    %v7005 = vpack.c.b16 %v5549, %v5533
    %v7006 = vpack.c.b16 %v5566, %v5550
    %v7007 = vpack.c.b16 %v5567, %v5551
    %v7008 = vpack.c.b16 %v5568, %v5552
    %v7009 = vpack.c.b16 %v5569, %v5553
    %v7010 = vpack.c.b16 %v5570, %v5554
    %v7011 = vpack.c.b16 %v5571, %v5555
    %v7012 = vpack.c.b16 %v5572, %v5556
    %v7013 = vpack.c.b16 %v5573, %v5557
    %v7014 = vpack.c.b16 %v5574, %v5558
    %v7015 = vpack.c.b16 %v5575, %v5559
    %v7016 = vpack.c.b16 %v5576, %v5560
    %v7017 = vpack.c.b16 %v5577, %v5561
    %v7018 = vpack.c.b16 %v5578, %v5562
    %v7019 = vpack.c.b16 %v5579, %v5563
    %v7020 = vpack.c.b16 %v5580, %v5564
    %v7021 = vpack.c.b16 %v5581, %v5565
    %v7022 = vpack.c.b16 %v5598, %v5582
    %v7023 = vpack.c.b16 %v5599, %v5583
    %v7024 = vpack.c.b16 %v5600, %v5584
    %v7025 = vpack.c.b16 %v5601, %v5585
    %v7026 = vpack.c.b16 %v5602, %v5586
    %v7027 = vpack.c.b16 %v5603, %v5587
    %v7028 = vpack.c.b16 %v5604, %v5588
    %v7029 = vpack.c.b16 %v5605, %v5589
    %v7030 = vpack.c.b16 %v5606, %v5590
    %v7031 = vpack.c.b16 %v5607, %v5591
    %v7032 = vpack.c.b16 %v5608, %v5592
    %v7033 = vpack.c.b16 %v5609, %v5593
    %v7034 = vpack.c.b16 %v5610, %v5594
    %v7035 = vpack.c.b16 %v5611, %v5595
    %v7036 = vpack.c.b16 %v5612, %v5596
    %v7037 = vpack.c.b16 %v5613, %v5597
    %v7038 = vpack.c.b16 %v5630, %v5614
    %v7039 = vpack.c.b16 %v5631, %v5615
    %v7040 = vpack.c.b16 %v5632, %v5616
    %v7041 = vpack.c.b16 %v5633, %v5617
    %v7042 = vpack.c.b16 %v5634, %v5618
    %v7043 = vpack.c.b16 %v5635, %v5619
    %v7044 = vpack.c.b16 %v5636, %v5620
    %v7045 = vpack.c.b16 %v5637, %v5621
    %v7046 = vpack.c.b16 %v5638, %v5622
    %v7047 = vpack.c.b16 %v5639, %v5623
    %v7048 = vpack.c.b16 %v5640, %v5624
    %v7049 = vpack.c.b16 %v5641, %v5625
    %v7050 = vpack.c.b16 %v5642, %v5626
    %v7051 = vpack.c.b16 %v5643, %v5627
    %v7052 = vpack.c.b16 %v5644, %v5628
    %v7053 = vpack.c.b16 %v5645, %v5629
    %v7054 = vpack.c.b16 %v5662, %v5646
    %v7055 = vpack.c.b16 %v5663, %v5647
    %v7056 = vpack.c.b16 %v5664, %v5648
    %v7057 = vpack.c.b16 %v5665, %v5649
    %v7058 = vpack.c.b16 %v5666, %v5650
    %v7059 = vpack.c.b16 %v5667, %v5651
    %v7060 = vpack.c.b16 %v5668, %v5652
    %v7061 = vpack.c.b16 %v5669, %v5653
    %v7062 = vpack.c.b16 %v5670, %v5654
    %v7063 = vpack.c.b16 %v5671, %v5655
    %v7064 = vpack.c.b16 %v5672, %v5656
    %v7065 = vpack.c.b16 %v5673, %v5657
    %v7066 = vpack.c.b16 %v5674, %v5658
    %v7067 = vpack.c.b16 %v5675, %v5659
    %v7068 = vpack.c.b16 %v5676, %v5660
    %v7069 = vpack.c.b16 %v5677, %v5661
    %v7070 = vpack.c.b16 %v5694, %v5678
    %v7071 = vpack.c.b16 %v5695, %v5679
    %v7072 = vpack.c.b16 %v5696, %v5680
    %v7073 = vpack.c.b16 %v5697, %v5681
    %v7074 = vpack.c.b16 %v5698, %v5682
    %v7075 = vpack.c.b16 %v5699, %v5683
    %v7076 = vpack.c.b16 %v5700, %v5684
    %v7077 = vpack.c.b16 %v5701, %v5685
    %v7078 = vpack.c.b16 %v5702, %v5686
    %v7079 = vpack.c.b16 %v5703, %v5687
    %v7080 = vpack.c.b16 %v5704, %v5688
    %v7081 = vpack.c.b16 %v5705, %v5689
    %v7082 = vpack.c.b16 %v5706, %v5690
    %v7083 = vpack.c.b16 %v5707, %v5691
    %v7084 = vpack.c.b16 %v5708, %v5692
    %v7085 = vpack.c.b16 %v5709, %v5693
    %v7086 = vpack.c.b16 %v5726, %v5710
    %v7087 = vpack.c.b16 %v5727, %v5711
    %v7088 = vpack.c.b16 %v5728, %v5712
    %v7089 = vpack.c.b16 %v5729, %v5713
    %v7090 = vpack.c.b16 %v5730, %v5714
    %v7091 = vpack.c.b16 %v5731, %v5715
    %v7092 = vpack.c.b16 %v5732, %v5716
    %v7093 = vpack.c.b16 %v5733, %v5717
    %v7094 = vpack.c.b16 %v5734, %v5718
    %v7095 = vpack.c.b16 %v5735, %v5719
    %v7096 = vpack.c.b16 %v5736, %v5720
    %v7097 = vpack.c.b16 %v5737, %v5721
    %v7098 = vpack.c.b16 %v5738, %v5722
    %v7099 = vpack.c.b16 %v5739, %v5723
    %v7100 = vpack.c.b16 %v5740, %v5724
    %v7101 = vpack.c.b16 %v5741, %v5725
    %v7102 = vpack.c.b16 %v5758, %v5742
    %v7103 = vpack.c.b16 %v5759, %v5743
    %v7104 = vpack.c.b16 %v5760, %v5744
    %v7105 = vpack.c.b16 %v5761, %v5745
    %v7106 = vpack.c.b16 %v5762, %v5746
    %v7107 = vpack.c.b16 %v5763, %v5747
    %v7108 = vpack.c.b16 %v5764, %v5748
    %v7109 = vpack.c.b16 %v5765, %v5749
    %v7110 = vpack.c.b16 %v5766, %v5750
    %v7111 = vpack.c.b16 %v5767, %v5751
    %v7112 = vpack.c.b16 %v5768, %v5752
    %v7113 = vpack.c.b16 %v5769, %v5753
    %v7114 = vpack.c.b16 %v5770, %v5754
    %v7115 = vpack.c.b16 %v5771, %v5755
    %v7116 = vpack.c.b16 %v5772, %v5756
    %v7117 = vpack.c.b16 %v5773, %v5757
    %v7118 = vpack.c.b16 %v5790, %v5774
    %v7119 = vpack.c.b16 %v5791, %v5775
    %v7120 = vpack.c.b16 %v5792, %v5776
    %v7121 = vpack.c.b16 %v5793, %v5777
    %v7122 = vpack.c.b16 %v5794, %v5778
    %v7123 = vpack.c.b16 %v5795, %v5779
    %v7124 = vpack.c.b16 %v5796, %v5780
    %v7125 = vpack.c.b16 %v5797, %v5781
    %v7126 = vpack.c.b16 %v5798, %v5782
    %v7127 = vpack.c.b16 %v5799, %v5783
    %v7128 = vpack.c.b16 %v5800, %v5784
    %v7129 = vpack.c.b16 %v5801, %v5785
    %v7130 = vpack.c.b16 %v5802, %v5786
    %v7131 = vpack.c.b16 %v5803, %v5787
    %v7132 = vpack.c.b16 %v5804, %v5788
    %v7133 = vpack.c.b16 %v5805, %v5789
    %v7134 = vpack.c.b16 %v5822, %v5806
    %v7135 = vpack.c.b16 %v5823, %v5807
    %v7136 = vpack.c.b16 %v5824, %v5808
    %v7137 = vpack.c.b16 %v5825, %v5809
    %v7138 = vpack.c.b16 %v5826, %v5810
    %v7139 = vpack.c.b16 %v5827, %v5811
    %v7140 = vpack.c.b16 %v5828, %v5812
    %v7141 = vpack.c.b16 %v5829, %v5813
    %v7142 = vpack.c.b16 %v5830, %v5814
    %v7143 = vpack.c.b16 %v5831, %v5815
    %v7144 = vpack.c.b16 %v5832, %v5816
    %v7145 = vpack.c.b16 %v5833, %v5817
    %v7146 = vpack.c.b16 %v5834, %v5818
    %v7147 = vpack.c.b16 %v5835, %v5819
    %v7148 = vpack.c.b16 %v5836, %v5820
    %v7149 = vpack.c.b16 %v5837, %v5821
    %v7150 = vpack.c.b16 %v5854, %v5838
    %v7151 = vpack.c.b16 %v5855, %v5839
    %v7152 = vpack.c.b16 %v5856, %v5840
    %v7153 = vpack.c.b16 %v5857, %v5841
    %v7154 = vpack.c.b16 %v5858, %v5842
    %v7155 = vpack.c.b16 %v5859, %v5843
    %v7156 = vpack.c.b16 %v5860, %v5844
    %v7157 = vpack.c.b16 %v5861, %v5845
    %v7158 = vpack.c.b16 %v5862, %v5846
    %v7159 = vpack.c.b16 %v5863, %v5847
    %v7160 = vpack.c.b16 %v5864, %v5848
    %v7161 = vpack.c.b16 %v5865, %v5849
    %v7162 = vpack.c.b16 %v5866, %v5850
    %v7163 = vpack.c.b16 %v5867, %v5851
    %v7164 = vpack.c.b16 %v5868, %v5852
    %v7165 = vpack.c.b16 %v5869, %v5853
    %v7166 = vpack.c.b16 %v5886, %v5870
    %v7167 = vpack.c.b16 %v5887, %v5871
    %v7168 = vpack.c.b16 %v5888, %v5872
    %v7169 = vpack.c.b16 %v5889, %v5873
    %v7170 = vpack.c.b16 %v5890, %v5874
    %v7171 = vpack.c.b16 %v5891, %v5875
    %v7172 = vpack.c.b16 %v5892, %v5876
    %v7173 = vpack.c.b16 %v5893, %v5877
    %v7174 = vpack.c.b16 %v5894, %v5878
    %v7175 = vpack.c.b16 %v5895, %v5879
    %v7176 = vpack.c.b16 %v5896, %v5880
    %v7177 = vpack.c.b16 %v5897, %v5881
    %v7178 = vpack.c.b16 %v5898, %v5882
    %v7179 = vpack.c.b16 %v5899, %v5883
    %v7180 = vpack.c.b16 %v5900, %v5884
    %v7181 = vpack.c.b16 %v5901, %v5885
    %v7182 = vpack.c.b16 %v5918, %v5902
    %v7183 = vpack.c.b16 %v5919, %v5903
    %v7184 = vpack.c.b16 %v5920, %v5904
    %v7185 = vpack.c.b16 %v5921, %v5905
    %v7186 = vpack.c.b16 %v5922, %v5906
    %v7187 = vpack.c.b16 %v5923, %v5907
    %v7188 = vpack.c.b16 %v5924, %v5908
    %v7189 = vpack.c.b16 %v5925, %v5909
    %v7190 = vpack.c.b16 %v5926, %v5910
    %v7191 = vpack.c.b16 %v5927, %v5911
    %v7192 = vpack.c.b16 %v5928, %v5912
    %v7193 = vpack.c.b16 %v5929, %v5913
    %v7194 = vpack.c.b16 %v5930, %v5914
    %v7195 = vpack.c.b16 %v5931, %v5915
    %v7196 = vpack.c.b16 %v5932, %v5916
    %v7197 = vpack.c.b16 %v5933, %v5917
    %v7198 = vpack.c.b16 %v5950, %v5934
    %v7199 = vpack.c.b16 %v5951, %v5935
    %v7200 = vpack.c.b16 %v5952, %v5936
    %v7201 = vpack.c.b16 %v5953, %v5937
    %v7202 = vpack.c.b16 %v5954, %v5938
    %v7203 = vpack.c.b16 %v5955, %v5939
    %v7204 = vpack.c.b16 %v5956, %v5940
    %v7205 = vpack.c.b16 %v5957, %v5941
    %v7206 = vpack.c.b16 %v5958, %v5942
    %v7207 = vpack.c.b16 %v5959, %v5943
    %v7208 = vpack.c.b16 %v5960, %v5944
    %v7209 = vpack.c.b16 %v5961, %v5945
    %v7210 = vpack.c.b16 %v5962, %v5946
    %v7211 = vpack.c.b16 %v5963, %v5947
    %v7212 = vpack.c.b16 %v5964, %v5948
    %v7213 = vpack.c.b16 %v5965, %v5949
    %v7214 = vpack.c.b16 %v5982, %v5966
    %v7215 = vpack.c.b16 %v5983, %v5967
    %v7216 = vpack.c.b16 %v5984, %v5968
    %v7217 = vpack.c.b16 %v5985, %v5969
    %v7218 = vpack.c.b16 %v5986, %v5970
    %v7219 = vpack.c.b16 %v5987, %v5971
    %v7220 = vpack.c.b16 %v5988, %v5972
    %v7221 = vpack.c.b16 %v5989, %v5973
    %v7222 = vpack.c.b16 %v5990, %v5974
    %v7223 = vpack.c.b16 %v5991, %v5975
    %v7224 = vpack.c.b16 %v5992, %v5976
    %v7225 = vpack.c.b16 %v5993, %v5977
    %v7226 = vpack.c.b16 %v5994, %v5978
    %v7227 = vpack.c.b16 %v5995, %v5979
    %v7228 = vpack.c.b16 %v5996, %v5980
    %v7229 = vpack.c.b16 %v5997, %v5981
    %v7230 = vpack.c.b16 %v6014, %v5998
    %v7231 = vpack.c.b16 %v6015, %v5999
    %v7232 = vpack.c.b16 %v6016, %v6000
    %v7233 = vpack.c.b16 %v6017, %v6001
    %v7234 = vpack.c.b16 %v6018, %v6002
    %v7235 = vpack.c.b16 %v6019, %v6003
    %v7236 = vpack.c.b16 %v6020, %v6004
    %v7237 = vpack.c.b16 %v6021, %v6005
    %v7238 = vpack.c.b16 %v6022, %v6006
    %v7239 = vpack.c.b16 %v6023, %v6007
    %v7240 = vpack.c.b16 %v6024, %v6008
    %v7241 = vpack.c.b16 %v6025, %v6009
    %v7242 = vpack.c.b16 %v6026, %v6010
    %v7243 = vpack.c.b16 %v6027, %v6011
    %v7244 = vpack.c.b16 %v6028, %v6012
    %v7245 = vpack.c.b16 %v6029, %v6013
    %v7246 = vpack.c.b16 %v6046, %v6030
    %v7247 = vpack.c.b16 %v6047, %v6031
    %v7248 = vpack.c.b16 %v6048, %v6032
    %v7249 = vpack.c.b16 %v6049, %v6033
    %v7250 = vpack.c.b16 %v6050, %v6034
    %v7251 = vpack.c.b16 %v6051, %v6035
    %v7252 = vpack.c.b16 %v6052, %v6036
    %v7253 = vpack.c.b16 %v6053, %v6037
    %v7254 = vpack.c.b16 %v6054, %v6038
    %v7255 = vpack.c.b16 %v6055, %v6039
    %v7256 = vpack.c.b16 %v6056, %v6040
    %v7257 = vpack.c.b16 %v6057, %v6041
    %v7258 = vpack.c.b16 %v6058, %v6042
    %v7259 = vpack.c.b16 %v6059, %v6043
    %v7260 = vpack.c.b16 %v6060, %v6044
    %v7261 = vpack.c.b16 %v6061, %v6045
    %v7262 = vpack.c.b16 %v6078, %v6062
    %v7263 = vpack.c.b16 %v6079, %v6063
    %v7264 = vpack.c.b16 %v6080, %v6064
    %v7265 = vpack.c.b16 %v6081, %v6065
    %v7266 = vpack.c.b16 %v6082, %v6066
    %v7267 = vpack.c.b16 %v6083, %v6067
    %v7268 = vpack.c.b16 %v6084, %v6068
    %v7269 = vpack.c.b16 %v6085, %v6069
    %v7270 = vpack.c.b16 %v6086, %v6070
    %v7271 = vpack.c.b16 %v6087, %v6071
    %v7272 = vpack.c.b16 %v6088, %v6072
    %v7273 = vpack.c.b16 %v6089, %v6073
    %v7274 = vpack.c.b16 %v6090, %v6074
    %v7275 = vpack.c.b16 %v6091, %v6075
    %v7276 = vpack.c.b16 %v6092, %v6076
    %v7277 = vpack.c.b16 %v6093, %v6077
    %v7278 = vpack.c.b16 %v6110, %v6094
    %v7279 = vpack.c.b16 %v6111, %v6095
    %v7280 = vpack.c.b16 %v6112, %v6096
    %v7281 = vpack.c.b16 %v6113, %v6097
    %v7282 = vpack.c.b16 %v6114, %v6098
    %v7283 = vpack.c.b16 %v6115, %v6099
    %v7284 = vpack.c.b16 %v6116, %v6100
    %v7285 = vpack.c.b16 %v6117, %v6101
    %v7286 = vpack.c.b16 %v6118, %v6102
    %v7287 = vpack.c.b16 %v6119, %v6103
    %v7288 = vpack.c.b16 %v6120, %v6104
    %v7289 = vpack.c.b16 %v6121, %v6105
    %v7290 = vpack.c.b16 %v6122, %v6106
    %v7291 = vpack.c.b16 %v6123, %v6107
    %v7292 = vpack.c.b16 %v6124, %v6108
    %v7293 = vpack.c.b16 %v6125, %v6109
    %v7294 = vpack.c.b16 %v6142, %v6126
    %v7295 = vpack.c.b16 %v6143, %v6127
    %v7296 = vpack.c.b16 %v6144, %v6128
    %v7297 = vpack.c.b16 %v6145, %v6129
    %v7298 = vpack.c.b16 %v6146, %v6130
    %v7299 = vpack.c.b16 %v6147, %v6131
    %v7300 = vpack.c.b16 %v6148, %v6132
    %v7301 = vpack.c.b16 %v6149, %v6133
    %v7302 = vpack.c.b16 %v6150, %v6134
    %v7303 = vpack.c.b16 %v6151, %v6135
    %v7304 = vpack.c.b16 %v6152, %v6136
    %v7305 = vpack.c.b16 %v6153, %v6137
    %v7306 = vpack.c.b16 %v6154, %v6138
    %v7307 = vpack.c.b16 %v6155, %v6139
    %v7308 = vpack.c.b16 %v6156, %v6140
    %v7309 = vpack.c.b16 %v6157, %v6141
    %v7310 = vpack.c.b16 %v6174, %v6158
    %v7311 = vpack.c.b16 %v6175, %v6159
    %v7312 = vpack.c.b16 %v6176, %v6160
    %v7313 = vpack.c.b16 %v6177, %v6161
    %v7314 = vpack.c.b16 %v6178, %v6162
    %v7315 = vpack.c.b16 %v6179, %v6163
    %v7316 = vpack.c.b16 %v6180, %v6164
    %v7317 = vpack.c.b16 %v6181, %v6165
    %v7318 = vpack.c.b16 %v6182, %v6166
    %v7319 = vpack.c.b16 %v6183, %v6167
    %v7320 = vpack.c.b16 %v6184, %v6168
    %v7321 = vpack.c.b16 %v6185, %v6169
    %v7322 = vpack.c.b16 %v6186, %v6170
    %v7323 = vpack.c.b16 %v6187, %v6171
    %v7324 = vpack.c.b16 %v6188, %v6172
    %v7325 = vpack.c.b16 %v6189, %v6173
    %v7326 = vpack.c.b16 %v6206, %v6190
    %v7327 = vpack.c.b16 %v6207, %v6191
    %v7328 = vpack.c.b16 %v6208, %v6192
    %v7329 = vpack.c.b16 %v6209, %v6193
    %v7330 = vpack.c.b16 %v6210, %v6194
    %v7331 = vpack.c.b16 %v6211, %v6195
    %v7332 = vpack.c.b16 %v6212, %v6196
    %v7333 = vpack.c.b16 %v6213, %v6197
    %v7334 = vpack.c.b16 %v6214, %v6198
    %v7335 = vpack.c.b16 %v6215, %v6199
    %v7336 = vpack.c.b16 %v6216, %v6200
    %v7337 = vpack.c.b16 %v6217, %v6201
    %v7338 = vpack.c.b16 %v6218, %v6202
    %v7339 = vpack.c.b16 %v6219, %v6203
    %v7340 = vpack.c.b16 %v6220, %v6204
    %v7341 = vpack.c.b16 %v6221, %v6205
    %v7342 = vpack.c.b16 %v6238, %v6222
    %v7343 = vpack.c.b16 %v6239, %v6223
    %v7344 = vpack.c.b16 %v6240, %v6224
    %v7345 = vpack.c.b16 %v6241, %v6225
    %v7346 = vpack.c.b16 %v6242, %v6226
    %v7347 = vpack.c.b16 %v6243, %v6227
    %v7348 = vpack.c.b16 %v6244, %v6228
    %v7349 = vpack.c.b16 %v6245, %v6229
    %v7350 = vpack.c.b16 %v6246, %v6230
    %v7351 = vpack.c.b16 %v6247, %v6231
    %v7352 = vpack.c.b16 %v6248, %v6232
    %v7353 = vpack.c.b16 %v6249, %v6233
    %v7354 = vpack.c.b16 %v6250, %v6234
    %v7355 = vpack.c.b16 %v6251, %v6235
    %v7356 = vpack.c.b16 %v6252, %v6236
    %v7357 = vpack.c.b16 %v6253, %v6237
    %v7358 = vpack.c.b16 %v6270, %v6254
    %v7359 = vpack.c.b16 %v6271, %v6255
    %v7360 = vpack.c.b16 %v6272, %v6256
    %v7361 = vpack.c.b16 %v6273, %v6257
    %v7362 = vpack.c.b16 %v6274, %v6258
    %v7363 = vpack.c.b16 %v6275, %v6259
    %v7364 = vpack.c.b16 %v6276, %v6260
    %v7365 = vpack.c.b16 %v6277, %v6261
    %v7366 = vpack.c.b16 %v6278, %v6262
    %v7367 = vpack.c.b16 %v6279, %v6263
    %v7368 = vpack.c.b16 %v6280, %v6264
    %v7369 = vpack.c.b16 %v6281, %v6265
    %v7370 = vpack.c.b16 %v6282, %v6266
    %v7371 = vpack.c.b16 %v6283, %v6267
    %v7372 = vpack.c.b16 %v6284, %v6268
    %v7373 = vpack.c.b16 %v6285, %v6269
    %v7374 = vpack.c.b16 %v6302, %v6286
    %v7375 = vpack.c.b16 %v6303, %v6287
    %v7376 = vpack.c.b16 %v6304, %v6288
    %v7377 = vpack.c.b16 %v6305, %v6289
    %v7378 = vpack.c.b16 %v6306, %v6290
    %v7379 = vpack.c.b16 %v6307, %v6291
    %v7380 = vpack.c.b16 %v6308, %v6292
    %v7381 = vpack.c.b16 %v6309, %v6293
    %v7382 = vpack.c.b16 %v6310, %v6294
    %v7383 = vpack.c.b16 %v6311, %v6295
    %v7384 = vpack.c.b16 %v6312, %v6296
    %v7385 = vpack.c.b16 %v6313, %v6297
    %v7386 = vpack.c.b16 %v6314, %v6298
    %v7387 = vpack.c.b16 %v6315, %v6299
    %v7388 = vpack.c.b16 %v6316, %v6300
    %v7389 = vpack.c.b16 %v6317, %v6301
    %v7390 = vpack.c.b16 %v6334, %v6318
    %v7391 = vpack.c.b16 %v6335, %v6319
    %v7392 = vpack.c.b16 %v6336, %v6320
    %v7393 = vpack.c.b16 %v6337, %v6321
    %v7394 = vpack.c.b16 %v6338, %v6322
    %v7395 = vpack.c.b16 %v6339, %v6323
    %v7396 = vpack.c.b16 %v6340, %v6324
    %v7397 = vpack.c.b16 %v6341, %v6325
    %v7398 = vpack.c.b16 %v6342, %v6326
    %v7399 = vpack.c.b16 %v6343, %v6327
    %v7400 = vpack.c.b16 %v6344, %v6328
    %v7401 = vpack.c.b16 %v6345, %v6329
    %v7402 = vpack.c.b16 %v6346, %v6330
    %v7403 = vpack.c.b16 %v6347, %v6331
    %v7404 = vpack.c.b16 %v6348, %v6332
    %v7405 = vpack.c.b16 %v6349, %v6333
    %v7406 = vpack.c.b16 %v6366, %v6350
    %v7407 = vpack.c.b16 %v6367, %v6351
    %v7408 = vpack.c.b16 %v6368, %v6352
    %v7409 = vpack.c.b16 %v6369, %v6353
    %v7410 = vpack.c.b16 %v6370, %v6354
    %v7411 = vpack.c.b16 %v6371, %v6355
    %v7412 = vpack.c.b16 %v6372, %v6356
    %v7413 = vpack.c.b16 %v6373, %v6357
    %v7414 = vpack.c.b16 %v6374, %v6358
    %v7415 = vpack.c.b16 %v6375, %v6359
    %v7416 = vpack.c.b16 %v6376, %v6360
    %v7417 = vpack.c.b16 %v6377, %v6361
    %v7418 = vpack.c.b16 %v6378, %v6362
    %v7419 = vpack.c.b16 %v6379, %v6363
    %v7420 = vpack.c.b16 %v6380, %v6364
    %v7421 = vpack.c.b16 %v6381, %v6365
    %v7422 = vpack.c.b16 %v6398, %v6382
    %v7423 = vpack.c.b16 %v6399, %v6383
    %v7424 = vpack.c.b16 %v6400, %v6384
    %v7425 = vpack.c.b16 %v6401, %v6385
    %v7426 = vpack.c.b16 %v6402, %v6386
    %v7427 = vpack.c.b16 %v6403, %v6387
    %v7428 = vpack.c.b16 %v6404, %v6388
    %v7429 = vpack.c.b16 %v6405, %v6389
    %v7430 = vpack.c.b16 %v6406, %v6390
    %v7431 = vpack.c.b16 %v6407, %v6391
    %v7432 = vpack.c.b16 %v6408, %v6392
    %v7433 = vpack.c.b16 %v6409, %v6393
    %v7434 = vpack.c.b16 %v6410, %v6394
    %v7435 = vpack.c.b16 %v6411, %v6395
    %v7436 = vpack.c.b16 %v6412, %v6396
    %v7437 = vpack.c.b16 %v6413, %v6397
    %8462 = vmatprep.subr.bf16.mxu0 %v6415
    %8463 = vmatpush1.bf16.msra.mxu0 %v6414
    %8464 = vmatprep.subr.bf16.mxu0 %v6431
    %8465 = vmatpush1.bf16.msra.mxu0 %v6430
    %8466 = vmatprep.subr.bf16.mxu0 %v6447
    %8467 = vmatpush1.bf16.msra.mxu0 %v6446
    %8468 = vmatprep.subr.bf16.mxu0 %v6463
    %8469 = vmatpush1.bf16.msra.mxu0 %v6462
    %8470 = vmatprep.subr.bf16.mxu0 %v6479
    %8471 = vmatpush1.bf16.msra.mxu0 %v6478
    %8472 = vmatprep.subr.bf16.mxu0 %v6495
    %8473 = vmatpush1.bf16.msra.mxu0 %v6494
    %8474 = vmatprep.subr.bf16.mxu0 %v6511
    %8475 = vmatpush1.bf16.msra.mxu0 %v6510
    %8476 = vmatprep.subr.bf16.mxu0 %v6527
    %8477 = vmatpush1.bf16.msra.mxu0 %v6526
    %8478 = vmatprep.subr.bf16.mxu0 %v6543
    %8479 = vmatpush1.bf16.msra.mxu0 %v6542
    %8480 = vmatprep.subr.bf16.mxu0 %v6559
    %8481 = vmatpush1.bf16.msra.mxu0 %v6558
    %8482 = vmatprep.subr.bf16.mxu0 %v6575
    %8483 = vmatpush1.bf16.msra.mxu0 %v6574
    %8484 = vmatprep.subr.bf16.mxu0 %v6591
    %8485 = vmatpush1.bf16.msra.mxu0 %v6590
    %8486 = vmatprep.subr.bf16.mxu0 %v6607
    %8487 = vmatpush1.bf16.msra.mxu0 %v6606
    %8488 = vmatprep.subr.bf16.mxu0 %v6623
    %8489 = vmatpush1.bf16.msra.mxu0 %v6622
    %8490 = vmatprep.subr.bf16.mxu0 %v6639
    %8491 = vmatpush1.bf16.msra.mxu0 %v6638
    %8492 = vmatprep.subr.bf16.mxu0 %v6655
    %8493 = vmatpush1.bf16.msra.mxu0 %v6654
    %8494 = vmatprep.mubr.bf16.mxu0 %v2227
    %8495 = vmatmul.mubr.bf16.gmra.mrb[0].mxu0 %v2226
    %v8496 = vpop.f32.mrb[0].mxu0
    %v8497 = vadd.f32 %v3265, %v8496
    %v8498 = vpop.f32.mrb[0].mxu0
    %v8499 = vadd.f32 %v3269, %v8498
    %v8500 = vpop.f32.mrb[0].mxu0
    %v8501 = vpop.f32.mrb[0].mxu0
    %8502 = vdwg.mxu0
    %8503 = vmatprep.subr.bf16.mxu0 %v6671
    %8504 = vmatpush1.bf16.msra.mxu0 %v6670
    %8505 = vmatprep.subr.bf16.mxu0 %v6687
    %8506 = vmatpush1.bf16.msra.mxu0 %v6686
    %8507 = vmatprep.subr.bf16.mxu0 %v6703
    %8508 = vmatpush1.bf16.msra.mxu0 %v6702
    %8509 = vmatprep.subr.bf16.mxu0 %v6719
    %8510 = vmatpush1.bf16.msra.mxu0 %v6718
    %8511 = vmatprep.subr.bf16.mxu0 %v6735
    %8512 = vmatpush1.bf16.msra.mxu0 %v6734
    %8513 = vmatprep.subr.bf16.mxu0 %v6751
    %8514 = vmatpush1.bf16.msra.mxu0 %v6750
    %8515 = vmatprep.subr.bf16.mxu0 %v6767
    %8516 = vmatpush1.bf16.msra.mxu0 %v6766
    %8517 = vmatprep.subr.bf16.mxu0 %v6783
    %8518 = vmatpush1.bf16.msra.mxu0 %v6782
    %8519 = vmatprep.subr.bf16.mxu0 %v6799
    %8520 = vmatpush1.bf16.msra.mxu0 %v6798
    %8521 = vmatprep.subr.bf16.mxu0 %v6815
    %8522 = vmatpush1.bf16.msra.mxu0 %v6814
    %8523 = vmatprep.subr.bf16.mxu0 %v6831
    %8524 = vmatpush1.bf16.msra.mxu0 %v6830
    %8525 = vmatprep.subr.bf16.mxu0 %v6847
    %8526 = vmatpush1.bf16.msra.mxu0 %v6846
    %8527 = vmatprep.subr.bf16.mxu0 %v6863
    %8528 = vmatpush1.bf16.msra.mxu0 %v6862
    %8529 = vmatprep.subr.bf16.mxu0 %v6879
    %8530 = vmatpush1.bf16.msra.mxu0 %v6878
    %8531 = vmatprep.subr.bf16.mxu0 %v6895
    %8532 = vmatpush1.bf16.msra.mxu0 %v6894
    %8533 = vmatprep.subr.bf16.mxu0 %v6911
    %8534 = vmatpush1.bf16.msra.mxu0 %v6910
    %8535 = vmatprep.mubr.bf16.mxu0 %v2229
    %8536 = vmatmul.mubr.bf16.gmra.mrb[0].mxu0 %v2228
    %v8537 = vpop.f32.mrb[0].mxu0
    %v8538 = vadd.f32 %v8497, %v8537
    %v8539 = vpop.f32.mrb[0].mxu0
    %v8540 = vadd.f32 %v8499, %v8539
    %v8541 = vpop.f32.mrb[0].mxu0
    %v8542 = vpop.f32.mrb[0].mxu0
    %8543 = vdwg.mxu0
    %8544 = vmatprep.subr.bf16.mxu0 %v6927
    %8545 = vmatpush1.bf16.msra.mxu0 %v6926
    %8546 = vmatprep.subr.bf16.mxu0 %v6943
    %8547 = vmatpush1.bf16.msra.mxu0 %v6942
    %8548 = vmatprep.subr.bf16.mxu0 %v6959
    %8549 = vmatpush1.bf16.msra.mxu0 %v6958
    %8550 = vmatprep.subr.bf16.mxu0 %v6975
    %8551 = vmatpush1.bf16.msra.mxu0 %v6974
    %8552 = vmatprep.subr.bf16.mxu0 %v6991
    %8553 = vmatpush1.bf16.msra.mxu0 %v6990
    %8554 = vmatprep.subr.bf16.mxu0 %v7007
    %8555 = vmatpush1.bf16.msra.mxu0 %v7006
    %8556 = vmatprep.subr.bf16.mxu0 %v7023
    %8557 = vmatpush1.bf16.msra.mxu0 %v7022
    %8558 = vmatprep.subr.bf16.mxu0 %v7039
    %8559 = vmatpush1.bf16.msra.mxu0 %v7038
    %8560 = vmatprep.subr.bf16.mxu0 %v7055
    %8561 = vmatpush1.bf16.msra.mxu0 %v7054
    %8562 = vmatprep.subr.bf16.mxu0 %v7071
    %8563 = vmatpush1.bf16.msra.mxu0 %v7070
    %8564 = vmatprep.subr.bf16.mxu0 %v7087
    %8565 = vmatpush1.bf16.msra.mxu0 %v7086
    %8566 = vmatprep.subr.bf16.mxu0 %v7103
    %8567 = vmatpush1.bf16.msra.mxu0 %v7102
    %8568 = vmatprep.subr.bf16.mxu0 %v7119
    %8569 = vmatpush1.bf16.msra.mxu0 %v7118
    %8570 = vmatprep.subr.bf16.mxu0 %v7135
    %8571 = vmatpush1.bf16.msra.mxu0 %v7134
    %8572 = vmatprep.subr.bf16.mxu0 %v7151
    %8573 = vmatpush1.bf16.msra.mxu0 %v7150
    %8574 = vmatprep.subr.bf16.mxu0 %v7167
    %8575 = vmatpush1.bf16.msra.mxu0 %v7166
    %8576 = vmatprep.mubr.bf16.mxu0 %v2231
    %8577 = vmatmul.mubr.bf16.gmra.mrb[0].mxu0 %v2230
    %v8578 = vpop.f32.mrb[0].mxu0
    %v8579 = vadd.f32 %v8538, %v8578
    %v8580 = vpop.f32.mrb[0].mxu0
    %v8581 = vadd.f32 %v8540, %v8580
    %v8582 = vpop.f32.mrb[0].mxu0
    %v8583 = vpop.f32.mrb[0].mxu0
    %8584 = vdwg.mxu0
    %8585 = vmatprep.subr.bf16.mxu0 %v7183
    %8586 = vmatpush1.bf16.msra.mxu0 %v7182
    %8587 = vmatprep.subr.bf16.mxu0 %v7199
    %8588 = vmatpush1.bf16.msra.mxu0 %v7198
    %8589 = vmatprep.subr.bf16.mxu0 %v7215
    %8590 = vmatpush1.bf16.msra.mxu0 %v7214
    %8591 = vmatprep.subr.bf16.mxu0 %v7231
    %8592 = vmatpush1.bf16.msra.mxu0 %v7230
    %8593 = vmatprep.subr.bf16.mxu0 %v7247
    %8594 = vmatpush1.bf16.msra.mxu0 %v7246
    %8595 = vmatprep.subr.bf16.mxu0 %v7263
    %8596 = vmatpush1.bf16.msra.mxu0 %v7262
    %8597 = vmatprep.subr.bf16.mxu0 %v7279
    %8598 = vmatpush1.bf16.msra.mxu0 %v7278
    %8599 = vmatprep.subr.bf16.mxu0 %v7295
    %8600 = vmatpush1.bf16.msra.mxu0 %v7294
    %8601 = vmatprep.subr.bf16.mxu0 %v7311
    %8602 = vmatpush1.bf16.msra.mxu0 %v7310
    %8603 = vmatprep.subr.bf16.mxu0 %v7327
    %8604 = vmatpush1.bf16.msra.mxu0 %v7326
    %8605 = vmatprep.subr.bf16.mxu0 %v7343
    %8606 = vmatpush1.bf16.msra.mxu0 %v7342
    %8607 = vmatprep.subr.bf16.mxu0 %v7359
    %8608 = vmatpush1.bf16.msra.mxu0 %v7358
    %8609 = vmatprep.subr.bf16.mxu0 %v7375
    %8610 = vmatpush1.bf16.msra.mxu0 %v7374
    %8611 = vmatprep.subr.bf16.mxu0 %v7391
    %8612 = vmatpush1.bf16.msra.mxu0 %v7390
    %8613 = vmatprep.subr.bf16.mxu0 %v7407
    %8614 = vmatpush1.bf16.msra.mxu0 %v7406
    %8615 = vmatprep.subr.bf16.mxu0 %v7423
    %8616 = vmatpush1.bf16.msra.mxu0 %v7422
    %8617 = vmatprep.mubr.bf16.mxu0 %v2233
    %8618 = vmatmul.mubr.bf16.gmra.mrb[0].mxu0 %v2232
    %v8619 = vpop.f32.mrb[0].mxu0
    %v8620 = vadd.f32 %v8579, %v8619
    %v8621 = vpop.f32.mrb[0].mxu0
    %v8622 = vadd.f32 %v8581, %v8621
    %v8623 = vpop.f32.mrb[0].mxu0
    %v8624 = vpop.f32.mrb[0].mxu0
    %8625 = vdwg.mxu0
    %8626 = vmatprep.subr.bf16.mxu0 %v6417
    %8627 = vmatpush1.bf16.msra.mxu0 %v6416
    %8628 = vmatprep.subr.bf16.mxu0 %v6433
    %8629 = vmatpush1.bf16.msra.mxu0 %v6432
    %8630 = vmatprep.subr.bf16.mxu0 %v6449
    %8631 = vmatpush1.bf16.msra.mxu0 %v6448
    %8632 = vmatprep.subr.bf16.mxu0 %v6465
    %8633 = vmatpush1.bf16.msra.mxu0 %v6464
    %8634 = vmatprep.subr.bf16.mxu0 %v6481
    %8635 = vmatpush1.bf16.msra.mxu0 %v6480
    %8636 = vmatprep.subr.bf16.mxu0 %v6497
    %8637 = vmatpush1.bf16.msra.mxu0 %v6496
    %8638 = vmatprep.subr.bf16.mxu0 %v6513
    %8639 = vmatpush1.bf16.msra.mxu0 %v6512
    %8640 = vmatprep.subr.bf16.mxu0 %v6529
    %8641 = vmatpush1.bf16.msra.mxu0 %v6528
    %8642 = vmatprep.subr.bf16.mxu0 %v6545
    %8643 = vmatpush1.bf16.msra.mxu0 %v6544
    %8644 = vmatprep.subr.bf16.mxu0 %v6561
    %8645 = vmatpush1.bf16.msra.mxu0 %v6560
    %8646 = vmatprep.subr.bf16.mxu0 %v6577
    %8647 = vmatpush1.bf16.msra.mxu0 %v6576
    %8648 = vmatprep.subr.bf16.mxu0 %v6593
    %8649 = vmatpush1.bf16.msra.mxu0 %v6592
    %8650 = vmatprep.subr.bf16.mxu0 %v6609
    %8651 = vmatpush1.bf16.msra.mxu0 %v6608
    %8652 = vmatprep.subr.bf16.mxu0 %v6625
    %8653 = vmatpush1.bf16.msra.mxu0 %v6624
    %8654 = vmatprep.subr.bf16.mxu0 %v6641
    %8655 = vmatpush1.bf16.msra.mxu0 %v6640
    %8656 = vmatprep.subr.bf16.mxu0 %v6657
    %8657 = vmatpush1.bf16.msra.mxu0 %v6656
    %8658 = vmatprep.mubr.bf16.mxu0 %v2227
    %8659 = vmatmul.mubr.bf16.gmra.mrb[0].mxu0 %v2226
    %v8660 = vpop.f32.mrb[0].mxu0
    %v8661 = vadd.f32 %v3273, %v8660
    %v8662 = vpop.f32.mrb[0].mxu0
    %v8663 = vadd.f32 %v3277, %v8662
    %v8664 = vpop.f32.mrb[0].mxu0
    %v8665 = vpop.f32.mrb[0].mxu0
    %8666 = vdwg.mxu0
    %8667 = vmatprep.subr.bf16.mxu0 %v6673
    %8668 = vmatpush1.bf16.msra.mxu0 %v6672
    %8669 = vmatprep.subr.bf16.mxu0 %v6689
    %8670 = vmatpush1.bf16.msra.mxu0 %v6688
    %8671 = vmatprep.subr.bf16.mxu0 %v6705
    %8672 = vmatpush1.bf16.msra.mxu0 %v6704
    %8673 = vmatprep.subr.bf16.mxu0 %v6721
    %8674 = vmatpush1.bf16.msra.mxu0 %v6720
    %8675 = vmatprep.subr.bf16.mxu0 %v6737
    %8676 = vmatpush1.bf16.msra.mxu0 %v6736
    %8677 = vmatprep.subr.bf16.mxu0 %v6753
    %8678 = vmatpush1.bf16.msra.mxu0 %v6752
    %8679 = vmatprep.subr.bf16.mxu0 %v6769
    %8680 = vmatpush1.bf16.msra.mxu0 %v6768
    %8681 = vmatprep.subr.bf16.mxu0 %v6785
    %8682 = vmatpush1.bf16.msra.mxu0 %v6784
    %8683 = vmatprep.subr.bf16.mxu0 %v6801
    %8684 = vmatpush1.bf16.msra.mxu0 %v6800
    %8685 = vmatprep.subr.bf16.mxu0 %v6817
    %8686 = vmatpush1.bf16.msra.mxu0 %v6816
    %8687 = vmatprep.subr.bf16.mxu0 %v6833
    %8688 = vmatpush1.bf16.msra.mxu0 %v6832
    %8689 = vmatprep.subr.bf16.mxu0 %v6849
    %8690 = vmatpush1.bf16.msra.mxu0 %v6848
    %8691 = vmatprep.subr.bf16.mxu0 %v6865
    %8692 = vmatpush1.bf16.msra.mxu0 %v6864
    %8693 = vmatprep.subr.bf16.mxu0 %v6881
    %8694 = vmatpush1.bf16.msra.mxu0 %v6880
    %8695 = vmatprep.subr.bf16.mxu0 %v6897
    %8696 = vmatpush1.bf16.msra.mxu0 %v6896
    %8697 = vmatprep.subr.bf16.mxu0 %v6913
    %8698 = vmatpush1.bf16.msra.mxu0 %v6912
    %8699 = vmatprep.mubr.bf16.mxu0 %v2229
    %8700 = vmatmul.mubr.bf16.gmra.mrb[0].mxu0 %v2228
    %v8701 = vpop.f32.mrb[0].mxu0
    %v8702 = vadd.f32 %v8661, %v8701
    %v8703 = vpop.f32.mrb[0].mxu0
    %v8704 = vadd.f32 %v8663, %v8703
    %v8705 = vpop.f32.mrb[0].mxu0
    %v8706 = vpop.f32.mrb[0].mxu0
    %8707 = vdwg.mxu0
    %8708 = vmatprep.subr.bf16.mxu0 %v6929
    %8709 = vmatpush1.bf16.msra.mxu0 %v6928
    %8710 = vmatprep.subr.bf16.mxu0 %v6945
    %8711 = vmatpush1.bf16.msra.mxu0 %v6944
    %8712 = vmatprep.subr.bf16.mxu0 %v6961
    %8713 = vmatpush1.bf16.msra.mxu0 %v6960
    %8714 = vmatprep.subr.bf16.mxu0 %v6977
    %8715 = vmatpush1.bf16.msra.mxu0 %v6976
    %8716 = vmatprep.subr.bf16.mxu0 %v6993
    %8717 = vmatpush1.bf16.msra.mxu0 %v6992
    %8718 = vmatprep.subr.bf16.mxu0 %v7009
    %8719 = vmatpush1.bf16.msra.mxu0 %v7008
    %8720 = vmatprep.subr.bf16.mxu0 %v7025
    %8721 = vmatpush1.bf16.msra.mxu0 %v7024
    %8722 = vmatprep.subr.bf16.mxu0 %v7041
    %8723 = vmatpush1.bf16.msra.mxu0 %v7040
    %8724 = vmatprep.subr.bf16.mxu0 %v7057
    %8725 = vmatpush1.bf16.msra.mxu0 %v7056
    %8726 = vmatprep.subr.bf16.mxu0 %v7073
    %8727 = vmatpush1.bf16.msra.mxu0 %v7072
    %8728 = vmatprep.subr.bf16.mxu0 %v7089
    %8729 = vmatpush1.bf16.msra.mxu0 %v7088
    %8730 = vmatprep.subr.bf16.mxu0 %v7105
    %8731 = vmatpush1.bf16.msra.mxu0 %v7104
    %8732 = vmatprep.subr.bf16.mxu0 %v7121
    %8733 = vmatpush1.bf16.msra.mxu0 %v7120
    %8734 = vmatprep.subr.bf16.mxu0 %v7137
    %8735 = vmatpush1.bf16.msra.mxu0 %v7136
    %8736 = vmatprep.subr.bf16.mxu0 %v7153
    %8737 = vmatpush1.bf16.msra.mxu0 %v7152
    %8738 = vmatprep.subr.bf16.mxu0 %v7169
    %8739 = vmatpush1.bf16.msra.mxu0 %v7168
    %8740 = vmatprep.mubr.bf16.mxu0 %v2231
    %8741 = vmatmul.mubr.bf16.gmra.mrb[0].mxu0 %v2230
    %v8742 = vpop.f32.mrb[0].mxu0
    %v8743 = vadd.f32 %v8702, %v8742
    %v8744 = vpop.f32.mrb[0].mxu0
    %v8745 = vadd.f32 %v8704, %v8744
    %v8746 = vpop.f32.mrb[0].mxu0
    %v8747 = vpop.f32.mrb[0].mxu0
    %8748 = vdwg.mxu0
    %8749 = vmatprep.subr.bf16.mxu0 %v7185
    %8750 = vmatpush1.bf16.msra.mxu0 %v7184
    %8751 = vmatprep.subr.bf16.mxu0 %v7201
    %8752 = vmatpush1.bf16.msra.mxu0 %v7200
    %8753 = vmatprep.subr.bf16.mxu0 %v7217
    %8754 = vmatpush1.bf16.msra.mxu0 %v7216
    %8755 = vmatprep.subr.bf16.mxu0 %v7233
    %8756 = vmatpush1.bf16.msra.mxu0 %v7232
    %8757 = vmatprep.subr.bf16.mxu0 %v7249
    %8758 = vmatpush1.bf16.msra.mxu0 %v7248
    %8759 = vmatprep.subr.bf16.mxu0 %v7265
    %8760 = vmatpush1.bf16.msra.mxu0 %v7264
    %8761 = vmatprep.subr.bf16.mxu0 %v7281
    %8762 = vmatpush1.bf16.msra.mxu0 %v7280
    %8763 = vmatprep.subr.bf16.mxu0 %v7297
    %8764 = vmatpush1.bf16.msra.mxu0 %v7296
    %8765 = vmatprep.subr.bf16.mxu0 %v7313
    %8766 = vmatpush1.bf16.msra.mxu0 %v7312
    %8767 = vmatprep.subr.bf16.mxu0 %v7329
    %8768 = vmatpush1.bf16.msra.mxu0 %v7328
    %8769 = vmatprep.subr.bf16.mxu0 %v7345
    %8770 = vmatpush1.bf16.msra.mxu0 %v7344
    %8771 = vmatprep.subr.bf16.mxu0 %v7361
    %8772 = vmatpush1.bf16.msra.mxu0 %v7360
    %8773 = vmatprep.subr.bf16.mxu0 %v7377
    %8774 = vmatpush1.bf16.msra.mxu0 %v7376
    %8775 = vmatprep.subr.bf16.mxu0 %v7393
    %8776 = vmatpush1.bf16.msra.mxu0 %v7392
    %8777 = vmatprep.subr.bf16.mxu0 %v7409
    %8778 = vmatpush1.bf16.msra.mxu0 %v7408
    %8779 = vmatprep.subr.bf16.mxu0 %v7425
    %8780 = vmatpush1.bf16.msra.mxu0 %v7424
    %8781 = vmatprep.mubr.bf16.mxu0 %v2233
    %8782 = vmatmul.mubr.bf16.gmra.mrb[0].mxu0 %v2232
    %v8783 = vpop.f32.mrb[0].mxu0
    %v8784 = vadd.f32 %v8743, %v8783
    %v8785 = vpop.f32.mrb[0].mxu0
    %v8786 = vadd.f32 %v8745, %v8785
    %v8787 = vpop.f32.mrb[0].mxu0
    %v8788 = vpop.f32.mrb[0].mxu0
    %8789 = vdwg.mxu0
    %8790 = vmatprep.subr.bf16.mxu0 %v6419
    %8791 = vmatpush1.bf16.msra.mxu0 %v6418
    %8792 = vmatprep.subr.bf16.mxu0 %v6435
    %8793 = vmatpush1.bf16.msra.mxu0 %v6434
    %8794 = vmatprep.subr.bf16.mxu0 %v6451
    %8795 = vmatpush1.bf16.msra.mxu0 %v6450
    %8796 = vmatprep.subr.bf16.mxu0 %v6467
    %8797 = vmatpush1.bf16.msra.mxu0 %v6466
    %8798 = vmatprep.subr.bf16.mxu0 %v6483
    %8799 = vmatpush1.bf16.msra.mxu0 %v6482
    %8800 = vmatprep.subr.bf16.mxu0 %v6499
    %8801 = vmatpush1.bf16.msra.mxu0 %v6498
    %8802 = vmatprep.subr.bf16.mxu0 %v6515
    %8803 = vmatpush1.bf16.msra.mxu0 %v6514
    %8804 = vmatprep.subr.bf16.mxu0 %v6531
    %8805 = vmatpush1.bf16.msra.mxu0 %v6530
    %8806 = vmatprep.subr.bf16.mxu0 %v6547
    %8807 = vmatpush1.bf16.msra.mxu0 %v6546
    %8808 = vmatprep.subr.bf16.mxu0 %v6563
    %8809 = vmatpush1.bf16.msra.mxu0 %v6562
    %8810 = vmatprep.subr.bf16.mxu0 %v6579
    %8811 = vmatpush1.bf16.msra.mxu0 %v6578
    %8812 = vmatprep.subr.bf16.mxu0 %v6595
    %8813 = vmatpush1.bf16.msra.mxu0 %v6594
    %8814 = vmatprep.subr.bf16.mxu0 %v6611
    %8815 = vmatpush1.bf16.msra.mxu0 %v6610
    %8816 = vmatprep.subr.bf16.mxu0 %v6627
    %8817 = vmatpush1.bf16.msra.mxu0 %v6626
    %8818 = vmatprep.subr.bf16.mxu0 %v6643
    %8819 = vmatpush1.bf16.msra.mxu0 %v6642
    %8820 = vmatprep.subr.bf16.mxu0 %v6659
    %8821 = vmatpush1.bf16.msra.mxu0 %v6658
    %8822 = vmatprep.mubr.bf16.mxu0 %v2227
    %8823 = vmatmul.mubr.bf16.gmra.mrb[0].mxu0 %v2226
    %v8824 = vpop.f32.mrb[0].mxu0
    %v8825 = vadd.f32 %v3281, %v8824
    %v8826 = vpop.f32.mrb[0].mxu0
    %v8827 = vadd.f32 %v3285, %v8826
    %v8828 = vpop.f32.mrb[0].mxu0
    %v8829 = vpop.f32.mrb[0].mxu0
    %8830 = vdwg.mxu0
    %8831 = vmatprep.subr.bf16.mxu0 %v6675
    %8832 = vmatpush1.bf16.msra.mxu0 %v6674
    %8833 = vmatprep.subr.bf16.mxu0 %v6691
    %8834 = vmatpush1.bf16.msra.mxu0 %v6690
    %8835 = vmatprep.subr.bf16.mxu0 %v6707
    %8836 = vmatpush1.bf16.msra.mxu0 %v6706
    %8837 = vmatprep.subr.bf16.mxu0 %v6723
    %8838 = vmatpush1.bf16.msra.mxu0 %v6722
    %8839 = vmatprep.subr.bf16.mxu0 %v6739
    %8840 = vmatpush1.bf16.msra.mxu0 %v6738
    %8841 = vmatprep.subr.bf16.mxu0 %v6755
    %8842 = vmatpush1.bf16.msra.mxu0 %v6754
    %8843 = vmatprep.subr.bf16.mxu0 %v6771
    %8844 = vmatpush1.bf16.msra.mxu0 %v6770
    %8845 = vmatprep.subr.bf16.mxu0 %v6787
    %8846 = vmatpush1.bf16.msra.mxu0 %v6786
    %8847 = vmatprep.subr.bf16.mxu0 %v6803
    %8848 = vmatpush1.bf16.msra.mxu0 %v6802
    %8849 = vmatprep.subr.bf16.mxu0 %v6819
    %8850 = vmatpush1.bf16.msra.mxu0 %v6818
    %8851 = vmatprep.subr.bf16.mxu0 %v6835
    %8852 = vmatpush1.bf16.msra.mxu0 %v6834
    %8853 = vmatprep.subr.bf16.mxu0 %v6851
    %8854 = vmatpush1.bf16.msra.mxu0 %v6850
    %8855 = vmatprep.subr.bf16.mxu0 %v6867
    %8856 = vmatpush1.bf16.msra.mxu0 %v6866
    %8857 = vmatprep.subr.bf16.mxu0 %v6883
    %8858 = vmatpush1.bf16.msra.mxu0 %v6882
    %8859 = vmatprep.subr.bf16.mxu0 %v6899
    %8860 = vmatpush1.bf16.msra.mxu0 %v6898
    %8861 = vmatprep.subr.bf16.mxu0 %v6915
    %8862 = vmatpush1.bf16.msra.mxu0 %v6914
    %8863 = vmatprep.mubr.bf16.mxu0 %v2229
    %8864 = vmatmul.mubr.bf16.gmra.mrb[0].mxu0 %v2228
    %v8865 = vpop.f32.mrb[0].mxu0
    %v8866 = vadd.f32 %v8825, %v8865
    %v8867 = vpop.f32.mrb[0].mxu0
    %v8868 = vadd.f32 %v8827, %v8867
    %v8869 = vpop.f32.mrb[0].mxu0
    %v8870 = vpop.f32.mrb[0].mxu0
    %8871 = vdwg.mxu0
    %8872 = vmatprep.subr.bf16.mxu0 %v6931
    %8873 = vmatpush1.bf16.msra.mxu0 %v6930
    %8874 = vmatprep.subr.bf16.mxu0 %v6947
    %8875 = vmatpush1.bf16.msra.mxu0 %v6946
    %8876 = vmatprep.subr.bf16.mxu0 %v6963
    %8877 = vmatpush1.bf16.msra.mxu0 %v6962
    %8878 = vmatprep.subr.bf16.mxu0 %v6979
    %8879 = vmatpush1.bf16.msra.mxu0 %v6978
    %8880 = vmatprep.subr.bf16.mxu0 %v6995
    %8881 = vmatpush1.bf16.msra.mxu0 %v6994
    %8882 = vmatprep.subr.bf16.mxu0 %v7011
    %8883 = vmatpush1.bf16.msra.mxu0 %v7010
    %8884 = vmatprep.subr.bf16.mxu0 %v7027
    %8885 = vmatpush1.bf16.msra.mxu0 %v7026
    %8886 = vmatprep.subr.bf16.mxu0 %v7043
    %8887 = vmatpush1.bf16.msra.mxu0 %v7042
    %8888 = vmatprep.subr.bf16.mxu0 %v7059
    %8889 = vmatpush1.bf16.msra.mxu0 %v7058
    %8890 = vmatprep.subr.bf16.mxu0 %v7075
    %8891 = vmatpush1.bf16.msra.mxu0 %v7074
    %8892 = vmatprep.subr.bf16.mxu0 %v7091
    %8893 = vmatpush1.bf16.msra.mxu0 %v7090
    %8894 = vmatprep.subr.bf16.mxu0 %v7107
    %8895 = vmatpush1.bf16.msra.mxu0 %v7106
    %8896 = vmatprep.subr.bf16.mxu0 %v7123
    %8897 = vmatpush1.bf16.msra.mxu0 %v7122
    %8898 = vmatprep.subr.bf16.mxu0 %v7139
    %8899 = vmatpush1.bf16.msra.mxu0 %v7138
    %8900 = vmatprep.subr.bf16.mxu0 %v7155
    %8901 = vmatpush1.bf16.msra.mxu0 %v7154
    %8902 = vmatprep.subr.bf16.mxu0 %v7171
    %8903 = vmatpush1.bf16.msra.mxu0 %v7170
    %8904 = vmatprep.mubr.bf16.mxu0 %v2231
    %8905 = vmatmul.mubr.bf16.gmra.mrb[0].mxu0 %v2230
    %v8906 = vpop.f32.mrb[0].mxu0
    %v8907 = vadd.f32 %v8866, %v8906
    %v8908 = vpop.f32.mrb[0].mxu0
    %v8909 = vadd.f32 %v8868, %v8908
    %v8910 = vpop.f32.mrb[0].mxu0
    %v8911 = vpop.f32.mrb[0].mxu0
    %8912 = vdwg.mxu0
    %8913 = vmatprep.subr.bf16.mxu0 %v7187
    %8914 = vmatpush1.bf16.msra.mxu0 %v7186
    %8915 = vmatprep.subr.bf16.mxu0 %v7203
    %8916 = vmatpush1.bf16.msra.mxu0 %v7202
    %8917 = vmatprep.subr.bf16.mxu0 %v7219
    %8918 = vmatpush1.bf16.msra.mxu0 %v7218
    %8919 = vmatprep.subr.bf16.mxu0 %v7235
    %8920 = vmatpush1.bf16.msra.mxu0 %v7234
    %8921 = vmatprep.subr.bf16.mxu0 %v7251
    %8922 = vmatpush1.bf16.msra.mxu0 %v7250
    %8923 = vmatprep.subr.bf16.mxu0 %v7267
    %8924 = vmatpush1.bf16.msra.mxu0 %v7266
    %8925 = vmatprep.subr.bf16.mxu0 %v7283
    %8926 = vmatpush1.bf16.msra.mxu0 %v7282
    %8927 = vmatprep.subr.bf16.mxu0 %v7299
    %8928 = vmatpush1.bf16.msra.mxu0 %v7298
    %8929 = vmatprep.subr.bf16.mxu0 %v7315
    %8930 = vmatpush1.bf16.msra.mxu0 %v7314
    %8931 = vmatprep.subr.bf16.mxu0 %v7331
    %8932 = vmatpush1.bf16.msra.mxu0 %v7330
    %8933 = vmatprep.subr.bf16.mxu0 %v7347
    %8934 = vmatpush1.bf16.msra.mxu0 %v7346
    %8935 = vmatprep.subr.bf16.mxu0 %v7363
    %8936 = vmatpush1.bf16.msra.mxu0 %v7362
    %8937 = vmatprep.subr.bf16.mxu0 %v7379
    %8938 = vmatpush1.bf16.msra.mxu0 %v7378
    %8939 = vmatprep.subr.bf16.mxu0 %v7395
    %8940 = vmatpush1.bf16.msra.mxu0 %v7394
    %8941 = vmatprep.subr.bf16.mxu0 %v7411
    %8942 = vmatpush1.bf16.msra.mxu0 %v7410
    %8943 = vmatprep.subr.bf16.mxu0 %v7427
    %8944 = vmatpush1.bf16.msra.mxu0 %v7426
    %8945 = vmatprep.mubr.bf16.mxu0 %v2233
    %8946 = vmatmul.mubr.bf16.gmra.mrb[0].mxu0 %v2232
    %v8947 = vpop.f32.mrb[0].mxu0
    %v8948 = vadd.f32 %v8907, %v8947
    %v8949 = vpop.f32.mrb[0].mxu0
    %v8950 = vadd.f32 %v8909, %v8949
    %v8951 = vpop.f32.mrb[0].mxu0
    %v8952 = vpop.f32.mrb[0].mxu0
    %8953 = vdwg.mxu0
    %8954 = vmatprep.subr.bf16.mxu0 %v6421
    %8955 = vmatpush1.bf16.msra.mxu0 %v6420
    %8956 = vmatprep.subr.bf16.mxu0 %v6437
    %8957 = vmatpush1.bf16.msra.mxu0 %v6436
    %8958 = vmatprep.subr.bf16.mxu0 %v6453
    %8959 = vmatpush1.bf16.msra.mxu0 %v6452
    %8960 = vmatprep.subr.bf16.mxu0 %v6469
    %8961 = vmatpush1.bf16.msra.mxu0 %v6468
    %8962 = vmatprep.subr.bf16.mxu0 %v6485
    %8963 = vmatpush1.bf16.msra.mxu0 %v6484
    %8964 = vmatprep.subr.bf16.mxu0 %v6501
    %8965 = vmatpush1.bf16.msra.mxu0 %v6500
    %8966 = vmatprep.subr.bf16.mxu0 %v6517
    %8967 = vmatpush1.bf16.msra.mxu0 %v6516
    %8968 = vmatprep.subr.bf16.mxu0 %v6533
    %8969 = vmatpush1.bf16.msra.mxu0 %v6532
    %8970 = vmatprep.subr.bf16.mxu0 %v6549
    %8971 = vmatpush1.bf16.msra.mxu0 %v6548
    %8972 = vmatprep.subr.bf16.mxu0 %v6565
    %8973 = vmatpush1.bf16.msra.mxu0 %v6564
    %8974 = vmatprep.subr.bf16.mxu0 %v6581
    %8975 = vmatpush1.bf16.msra.mxu0 %v6580
    %8976 = vmatprep.subr.bf16.mxu0 %v6597
    %8977 = vmatpush1.bf16.msra.mxu0 %v6596
    %8978 = vmatprep.subr.bf16.mxu0 %v6613
    %8979 = vmatpush1.bf16.msra.mxu0 %v6612
    %8980 = vmatprep.subr.bf16.mxu0 %v6629
    %8981 = vmatpush1.bf16.msra.mxu0 %v6628
    %8982 = vmatprep.subr.bf16.mxu0 %v6645
    %8983 = vmatpush1.bf16.msra.mxu0 %v6644
    %8984 = vmatprep.subr.bf16.mxu0 %v6661
    %8985 = vmatpush1.bf16.msra.mxu0 %v6660
    %8986 = vmatprep.mubr.bf16.mxu0 %v2227
    %8987 = vmatmul.mubr.bf16.gmra.mrb[0].mxu0 %v2226
    %v8988 = vpop.f32.mrb[0].mxu0
    %v8989 = vadd.f32 %v3289, %v8988
    %v8990 = vpop.f32.mrb[0].mxu0
    %v8991 = vadd.f32 %v3293, %v8990
    %v8992 = vpop.f32.mrb[0].mxu0
    %v8993 = vpop.f32.mrb[0].mxu0
    %8994 = vdwg.mxu0
    %8995 = vmatprep.subr.bf16.mxu0 %v6677
    %8996 = vmatpush1.bf16.msra.mxu0 %v6676
    %8997 = vmatprep.subr.bf16.mxu0 %v6693
    %8998 = vmatpush1.bf16.msra.mxu0 %v6692
    %8999 = vmatprep.subr.bf16.mxu0 %v6709
    %9000 = vmatpush1.bf16.msra.mxu0 %v6708
    %9001 = vmatprep.subr.bf16.mxu0 %v6725
    %9002 = vmatpush1.bf16.msra.mxu0 %v6724
    %9003 = vmatprep.subr.bf16.mxu0 %v6741
    %9004 = vmatpush1.bf16.msra.mxu0 %v6740
    %9005 = vmatprep.subr.bf16.mxu0 %v6757
    %9006 = vmatpush1.bf16.msra.mxu0 %v6756
    %9007 = vmatprep.subr.bf16.mxu0 %v6773
    %9008 = vmatpush1.bf16.msra.mxu0 %v6772
    %9009 = vmatprep.subr.bf16.mxu0 %v6789
    %9010 = vmatpush1.bf16.msra.mxu0 %v6788
    %9011 = vmatprep.subr.bf16.mxu0 %v6805
    %9012 = vmatpush1.bf16.msra.mxu0 %v6804
    %9013 = vmatprep.subr.bf16.mxu0 %v6821
    %9014 = vmatpush1.bf16.msra.mxu0 %v6820
    %9015 = vmatprep.subr.bf16.mxu0 %v6837
    %9016 = vmatpush1.bf16.msra.mxu0 %v6836
    %9017 = vmatprep.subr.bf16.mxu0 %v6853
    %9018 = vmatpush1.bf16.msra.mxu0 %v6852
    %9019 = vmatprep.subr.bf16.mxu0 %v6869
    %9020 = vmatpush1.bf16.msra.mxu0 %v6868
    %9021 = vmatprep.subr.bf16.mxu0 %v6885
    %9022 = vmatpush1.bf16.msra.mxu0 %v6884
    %9023 = vmatprep.subr.bf16.mxu0 %v6901
    %9024 = vmatpush1.bf16.msra.mxu0 %v6900
    %9025 = vmatprep.subr.bf16.mxu0 %v6917
    %9026 = vmatpush1.bf16.msra.mxu0 %v6916
    %9027 = vmatprep.mubr.bf16.mxu0 %v2229
    %9028 = vmatmul.mubr.bf16.gmra.mrb[0].mxu0 %v2228
    %v9029 = vpop.f32.mrb[0].mxu0
    %v9030 = vadd.f32 %v8989, %v9029
    %v9031 = vpop.f32.mrb[0].mxu0
    %v9032 = vadd.f32 %v8991, %v9031
    %v9033 = vpop.f32.mrb[0].mxu0
    %v9034 = vpop.f32.mrb[0].mxu0
    %9035 = vdwg.mxu0
    %9036 = vmatprep.subr.bf16.mxu0 %v6933
    %9037 = vmatpush1.bf16.msra.mxu0 %v6932
    %9038 = vmatprep.subr.bf16.mxu0 %v6949
    %9039 = vmatpush1.bf16.msra.mxu0 %v6948
    %9040 = vmatprep.subr.bf16.mxu0 %v6965
    %9041 = vmatpush1.bf16.msra.mxu0 %v6964
    %9042 = vmatprep.subr.bf16.mxu0 %v6981
    %9043 = vmatpush1.bf16.msra.mxu0 %v6980
    %9044 = vmatprep.subr.bf16.mxu0 %v6997
    %9045 = vmatpush1.bf16.msra.mxu0 %v6996
    %9046 = vmatprep.subr.bf16.mxu0 %v7013
    %9047 = vmatpush1.bf16.msra.mxu0 %v7012
    %9048 = vmatprep.subr.bf16.mxu0 %v7029
    %9049 = vmatpush1.bf16.msra.mxu0 %v7028
    %9050 = vmatprep.subr.bf16.mxu0 %v7045
    %9051 = vmatpush1.bf16.msra.mxu0 %v7044
    %9052 = vmatprep.subr.bf16.mxu0 %v7061
    %9053 = vmatpush1.bf16.msra.mxu0 %v7060
    %9054 = vmatprep.subr.bf16.mxu0 %v7077
    %9055 = vmatpush1.bf16.msra.mxu0 %v7076
    %9056 = vmatprep.subr.bf16.mxu0 %v7093
    %9057 = vmatpush1.bf16.msra.mxu0 %v7092
    %9058 = vmatprep.subr.bf16.mxu0 %v7109
    %9059 = vmatpush1.bf16.msra.mxu0 %v7108
    %9060 = vmatprep.subr.bf16.mxu0 %v7125
    %9061 = vmatpush1.bf16.msra.mxu0 %v7124
    %9062 = vmatprep.subr.bf16.mxu0 %v7141
    %9063 = vmatpush1.bf16.msra.mxu0 %v7140
    %9064 = vmatprep.subr.bf16.mxu0 %v7157
    %9065 = vmatpush1.bf16.msra.mxu0 %v7156
    %9066 = vmatprep.subr.bf16.mxu0 %v7173
    %9067 = vmatpush1.bf16.msra.mxu0 %v7172
    %9068 = vmatprep.mubr.bf16.mxu0 %v2231
    %9069 = vmatmul.mubr.bf16.gmra.mrb[0].mxu0 %v2230
    %v9070 = vpop.f32.mrb[0].mxu0
    %v9071 = vadd.f32 %v9030, %v9070
    %v9072 = vpop.f32.mrb[0].mxu0
    %v9073 = vadd.f32 %v9032, %v9072
    %v9074 = vpop.f32.mrb[0].mxu0
    %v9075 = vpop.f32.mrb[0].mxu0
    %9076 = vdwg.mxu0
    %9077 = vmatprep.subr.bf16.mxu0 %v7189
    %9078 = vmatpush1.bf16.msra.mxu0 %v7188
    %9079 = vmatprep.subr.bf16.mxu0 %v7205
    %9080 = vmatpush1.bf16.msra.mxu0 %v7204
    %9081 = vmatprep.subr.bf16.mxu0 %v7221
    %9082 = vmatpush1.bf16.msra.mxu0 %v7220
    %9083 = vmatprep.subr.bf16.mxu0 %v7237
    %9084 = vmatpush1.bf16.msra.mxu0 %v7236
    %9085 = vmatprep.subr.bf16.mxu0 %v7253
    %9086 = vmatpush1.bf16.msra.mxu0 %v7252
    %9087 = vmatprep.subr.bf16.mxu0 %v7269
    %9088 = vmatpush1.bf16.msra.mxu0 %v7268
    %9089 = vmatprep.subr.bf16.mxu0 %v7285
    %9090 = vmatpush1.bf16.msra.mxu0 %v7284
    %9091 = vmatprep.subr.bf16.mxu0 %v7301
    %9092 = vmatpush1.bf16.msra.mxu0 %v7300
    %9093 = vmatprep.subr.bf16.mxu0 %v7317
    %9094 = vmatpush1.bf16.msra.mxu0 %v7316
    %9095 = vmatprep.subr.bf16.mxu0 %v7333
    %9096 = vmatpush1.bf16.msra.mxu0 %v7332
    %9097 = vmatprep.subr.bf16.mxu0 %v7349
    %9098 = vmatpush1.bf16.msra.mxu0 %v7348
    %9099 = vmatprep.subr.bf16.mxu0 %v7365
    %9100 = vmatpush1.bf16.msra.mxu0 %v7364
    %9101 = vmatprep.subr.bf16.mxu0 %v7381
    %9102 = vmatpush1.bf16.msra.mxu0 %v7380
    %9103 = vmatprep.subr.bf16.mxu0 %v7397
    %9104 = vmatpush1.bf16.msra.mxu0 %v7396
    %9105 = vmatprep.subr.bf16.mxu0 %v7413
    %9106 = vmatpush1.bf16.msra.mxu0 %v7412
    %9107 = vmatprep.subr.bf16.mxu0 %v7429
    %9108 = vmatpush1.bf16.msra.mxu0 %v7428
    %9109 = vmatprep.mubr.bf16.mxu0 %v2233
    %9110 = vmatmul.mubr.bf16.gmra.mrb[0].mxu0 %v2232
    %v9111 = vpop.f32.mrb[0].mxu0
    %v9112 = vadd.f32 %v9071, %v9111
    %v9113 = vpop.f32.mrb[0].mxu0
    %v9114 = vadd.f32 %v9073, %v9113
    %v9115 = vpop.f32.mrb[0].mxu0
    %v9116 = vpop.f32.mrb[0].mxu0
    %9117 = vdwg.mxu0
    %9118 = vmatprep.subr.bf16.mxu0 %v6423
    %9119 = vmatpush1.bf16.msra.mxu0 %v6422
    %9120 = vmatprep.subr.bf16.mxu0 %v6439
    %9121 = vmatpush1.bf16.msra.mxu0 %v6438
    %9122 = vmatprep.subr.bf16.mxu0 %v6455
    %9123 = vmatpush1.bf16.msra.mxu0 %v6454
    %9124 = vmatprep.subr.bf16.mxu0 %v6471
    %9125 = vmatpush1.bf16.msra.mxu0 %v6470
    %9126 = vmatprep.subr.bf16.mxu0 %v6487
    %9127 = vmatpush1.bf16.msra.mxu0 %v6486
    %9128 = vmatprep.subr.bf16.mxu0 %v6503
    %9129 = vmatpush1.bf16.msra.mxu0 %v6502
    %9130 = vmatprep.subr.bf16.mxu0 %v6519
    %9131 = vmatpush1.bf16.msra.mxu0 %v6518
    %9132 = vmatprep.subr.bf16.mxu0 %v6535
    %9133 = vmatpush1.bf16.msra.mxu0 %v6534
    %9134 = vmatprep.subr.bf16.mxu0 %v6551
    %9135 = vmatpush1.bf16.msra.mxu0 %v6550
    %9136 = vmatprep.subr.bf16.mxu0 %v6567
    %9137 = vmatpush1.bf16.msra.mxu0 %v6566
    %9138 = vmatprep.subr.bf16.mxu0 %v6583
    %9139 = vmatpush1.bf16.msra.mxu0 %v6582
    %9140 = vmatprep.subr.bf16.mxu0 %v6599
    %9141 = vmatpush1.bf16.msra.mxu0 %v6598
    %9142 = vmatprep.subr.bf16.mxu0 %v6615
    %9143 = vmatpush1.bf16.msra.mxu0 %v6614
    %9144 = vmatprep.subr.bf16.mxu0 %v6631
    %9145 = vmatpush1.bf16.msra.mxu0 %v6630
    %9146 = vmatprep.subr.bf16.mxu0 %v6647
    %9147 = vmatpush1.bf16.msra.mxu0 %v6646
    %9148 = vmatprep.subr.bf16.mxu0 %v6663
    %9149 = vmatpush1.bf16.msra.mxu0 %v6662
    %9150 = vmatprep.mubr.bf16.mxu0 %v2227
    %9151 = vmatmul.mubr.bf16.gmra.mrb[0].mxu0 %v2226
    %v9152 = vpop.f32.mrb[0].mxu0
    %v9153 = vadd.f32 %v3297, %v9152
    %v9154 = vpop.f32.mrb[0].mxu0
    %v9155 = vadd.f32 %v3301, %v9154
    %v9156 = vpop.f32.mrb[0].mxu0
    %v9157 = vpop.f32.mrb[0].mxu0
    %9158 = vdwg.mxu0
    %9159 = vmatprep.subr.bf16.mxu0 %v6679
    %9160 = vmatpush1.bf16.msra.mxu0 %v6678
    %9161 = vmatprep.subr.bf16.mxu0 %v6695
    %9162 = vmatpush1.bf16.msra.mxu0 %v6694
    %9163 = vmatprep.subr.bf16.mxu0 %v6711
    %9164 = vmatpush1.bf16.msra.mxu0 %v6710
    %9165 = vmatprep.subr.bf16.mxu0 %v6727
    %9166 = vmatpush1.bf16.msra.mxu0 %v6726
    %9167 = vmatprep.subr.bf16.mxu0 %v6743
    %9168 = vmatpush1.bf16.msra.mxu0 %v6742
    %9169 = vmatprep.subr.bf16.mxu0 %v6759
    %9170 = vmatpush1.bf16.msra.mxu0 %v6758
    %9171 = vmatprep.subr.bf16.mxu0 %v6775
    %9172 = vmatpush1.bf16.msra.mxu0 %v6774
    %9173 = vmatprep.subr.bf16.mxu0 %v6791
    %9174 = vmatpush1.bf16.msra.mxu0 %v6790
    %9175 = vmatprep.subr.bf16.mxu0 %v6807
    %9176 = vmatpush1.bf16.msra.mxu0 %v6806
    %9177 = vmatprep.subr.bf16.mxu0 %v6823
    %9178 = vmatpush1.bf16.msra.mxu0 %v6822
    %9179 = vmatprep.subr.bf16.mxu0 %v6839
    %9180 = vmatpush1.bf16.msra.mxu0 %v6838
    %9181 = vmatprep.subr.bf16.mxu0 %v6855
    %9182 = vmatpush1.bf16.msra.mxu0 %v6854
    %9183 = vmatprep.subr.bf16.mxu0 %v6871
    %9184 = vmatpush1.bf16.msra.mxu0 %v6870
    %9185 = vmatprep.subr.bf16.mxu0 %v6887
    %9186 = vmatpush1.bf16.msra.mxu0 %v6886
    %9187 = vmatprep.subr.bf16.mxu0 %v6903
    %9188 = vmatpush1.bf16.msra.mxu0 %v6902
    %9189 = vmatprep.subr.bf16.mxu0 %v6919
    %9190 = vmatpush1.bf16.msra.mxu0 %v6918
    %9191 = vmatprep.mubr.bf16.mxu0 %v2229
    %9192 = vmatmul.mubr.bf16.gmra.mrb[0].mxu0 %v2228
    %v9193 = vpop.f32.mrb[0].mxu0
    %v9194 = vadd.f32 %v9153, %v9193
    %v9195 = vpop.f32.mrb[0].mxu0
    %v9196 = vadd.f32 %v9155, %v9195
    %v9197 = vpop.f32.mrb[0].mxu0
    %v9198 = vpop.f32.mrb[0].mxu0
    %9199 = vdwg.mxu0
    %9200 = vmatprep.subr.bf16.mxu0 %v6935
    %9201 = vmatpush1.bf16.msra.mxu0 %v6934
    %9202 = vmatprep.subr.bf16.mxu0 %v6951
    %9203 = vmatpush1.bf16.msra.mxu0 %v6950
    %9204 = vmatprep.subr.bf16.mxu0 %v6967
    %9205 = vmatpush1.bf16.msra.mxu0 %v6966
    %9206 = vmatprep.subr.bf16.mxu0 %v6983
    %9207 = vmatpush1.bf16.msra.mxu0 %v6982
    %9208 = vmatprep.subr.bf16.mxu0 %v6999
    %9209 = vmatpush1.bf16.msra.mxu0 %v6998
    %9210 = vmatprep.subr.bf16.mxu0 %v7015
    %9211 = vmatpush1.bf16.msra.mxu0 %v7014
    %9212 = vmatprep.subr.bf16.mxu0 %v7031
    %9213 = vmatpush1.bf16.msra.mxu0 %v7030
    %9214 = vmatprep.subr.bf16.mxu0 %v7047
    %9215 = vmatpush1.bf16.msra.mxu0 %v7046
    %9216 = vmatprep.subr.bf16.mxu0 %v7063
    %9217 = vmatpush1.bf16.msra.mxu0 %v7062
    %9218 = vmatprep.subr.bf16.mxu0 %v7079
    %9219 = vmatpush1.bf16.msra.mxu0 %v7078
    %9220 = vmatprep.subr.bf16.mxu0 %v7095
    %9221 = vmatpush1.bf16.msra.mxu0 %v7094
    %9222 = vmatprep.subr.bf16.mxu0 %v7111
    %9223 = vmatpush1.bf16.msra.mxu0 %v7110
    %9224 = vmatprep.subr.bf16.mxu0 %v7127
    %9225 = vmatpush1.bf16.msra.mxu0 %v7126
    %9226 = vmatprep.subr.bf16.mxu0 %v7143
    %9227 = vmatpush1.bf16.msra.mxu0 %v7142
    %9228 = vmatprep.subr.bf16.mxu0 %v7159
    %9229 = vmatpush1.bf16.msra.mxu0 %v7158
    %9230 = vmatprep.subr.bf16.mxu0 %v7175
    %9231 = vmatpush1.bf16.msra.mxu0 %v7174
    %9232 = vmatprep.mubr.bf16.mxu0 %v2231
    %9233 = vmatmul.mubr.bf16.gmra.mrb[0].mxu0 %v2230
    %v9234 = vpop.f32.mrb[0].mxu0
    %v9235 = vadd.f32 %v9194, %v9234
    %v9236 = vpop.f32.mrb[0].mxu0
    %v9237 = vadd.f32 %v9196, %v9236
    %v9238 = vpop.f32.mrb[0].mxu0
    %v9239 = vpop.f32.mrb[0].mxu0
    %9240 = vdwg.mxu0
    %9241 = vmatprep.subr.bf16.mxu0 %v7191
    %9242 = vmatpush1.bf16.msra.mxu0 %v7190
    %9243 = vmatprep.subr.bf16.mxu0 %v7207
    %9244 = vmatpush1.bf16.msra.mxu0 %v7206
    %9245 = vmatprep.subr.bf16.mxu0 %v7223
    %9246 = vmatpush1.bf16.msra.mxu0 %v7222
    %9247 = vmatprep.subr.bf16.mxu0 %v7239
    %9248 = vmatpush1.bf16.msra.mxu0 %v7238
    %9249 = vmatprep.subr.bf16.mxu0 %v7255
    %9250 = vmatpush1.bf16.msra.mxu0 %v7254
    %9251 = vmatprep.subr.bf16.mxu0 %v7271
    %9252 = vmatpush1.bf16.msra.mxu0 %v7270
    %9253 = vmatprep.subr.bf16.mxu0 %v7287
    %9254 = vmatpush1.bf16.msra.mxu0 %v7286
    %9255 = vmatprep.subr.bf16.mxu0 %v7303
    %9256 = vmatpush1.bf16.msra.mxu0 %v7302
    %9257 = vmatprep.subr.bf16.mxu0 %v7319
    %9258 = vmatpush1.bf16.msra.mxu0 %v7318
    %9259 = vmatprep.subr.bf16.mxu0 %v7335
    %9260 = vmatpush1.bf16.msra.mxu0 %v7334
    %9261 = vmatprep.subr.bf16.mxu0 %v7351
    %9262 = vmatpush1.bf16.msra.mxu0 %v7350
    %9263 = vmatprep.subr.bf16.mxu0 %v7367
    %9264 = vmatpush1.bf16.msra.mxu0 %v7366
    %9265 = vmatprep.subr.bf16.mxu0 %v7383
    %9266 = vmatpush1.bf16.msra.mxu0 %v7382
    %9267 = vmatprep.subr.bf16.mxu0 %v7399
    %9268 = vmatpush1.bf16.msra.mxu0 %v7398
    %9269 = vmatprep.subr.bf16.mxu0 %v7415
    %9270 = vmatpush1.bf16.msra.mxu0 %v7414
    %9271 = vmatprep.subr.bf16.mxu0 %v7431
    %9272 = vmatpush1.bf16.msra.mxu0 %v7430
    %9273 = vmatprep.mubr.bf16.mxu0 %v2233
    %9274 = vmatmul.mubr.bf16.gmra.mrb[0].mxu0 %v2232
    %v9275 = vpop.f32.mrb[0].mxu0
    %v9276 = vadd.f32 %v9235, %v9275
    %v9277 = vpop.f32.mrb[0].mxu0
    %v9278 = vadd.f32 %v9237, %v9277
    %v9279 = vpop.f32.mrb[0].mxu0
    %v9280 = vpop.f32.mrb[0].mxu0
    %9281 = vdwg.mxu0
    %9282 = vmatprep.subr.bf16.mxu0 %v6425
    %9283 = vmatpush1.bf16.msra.mxu0 %v6424
    %9284 = vmatprep.subr.bf16.mxu0 %v6441
    %9285 = vmatpush1.bf16.msra.mxu0 %v6440
    %9286 = vmatprep.subr.bf16.mxu0 %v6457
    %9287 = vmatpush1.bf16.msra.mxu0 %v6456
    %9288 = vmatprep.subr.bf16.mxu0 %v6473
    %9289 = vmatpush1.bf16.msra.mxu0 %v6472
    %9290 = vmatprep.subr.bf16.mxu0 %v6489
    %9291 = vmatpush1.bf16.msra.mxu0 %v6488
    %9292 = vmatprep.subr.bf16.mxu0 %v6505
    %9293 = vmatpush1.bf16.msra.mxu0 %v6504
    %9294 = vmatprep.subr.bf16.mxu0 %v6521
    %9295 = vmatpush1.bf16.msra.mxu0 %v6520
    %9296 = vmatprep.subr.bf16.mxu0 %v6537
    %9297 = vmatpush1.bf16.msra.mxu0 %v6536
    %9298 = vmatprep.subr.bf16.mxu0 %v6553
    %9299 = vmatpush1.bf16.msra.mxu0 %v6552
    %9300 = vmatprep.subr.bf16.mxu0 %v6569
    %9301 = vmatpush1.bf16.msra.mxu0 %v6568
    %9302 = vmatprep.subr.bf16.mxu0 %v6585
    %9303 = vmatpush1.bf16.msra.mxu0 %v6584
    %9304 = vmatprep.subr.bf16.mxu0 %v6601
    %9305 = vmatpush1.bf16.msra.mxu0 %v6600
    %9306 = vmatprep.subr.bf16.mxu0 %v6617
    %9307 = vmatpush1.bf16.msra.mxu0 %v6616
    %9308 = vmatprep.subr.bf16.mxu0 %v6633
    %9309 = vmatpush1.bf16.msra.mxu0 %v6632
    %9310 = vmatprep.subr.bf16.mxu0 %v6649
    %9311 = vmatpush1.bf16.msra.mxu0 %v6648
    %9312 = vmatprep.subr.bf16.mxu0 %v6665
    %9313 = vmatpush1.bf16.msra.mxu0 %v6664
    %9314 = vmatprep.mubr.bf16.mxu0 %v2227
    %9315 = vmatmul.mubr.bf16.gmra.mrb[0].mxu0 %v2226
    %v9316 = vpop.f32.mrb[0].mxu0
    %v9317 = vadd.f32 %v3305, %v9316
    %v9318 = vpop.f32.mrb[0].mxu0
    %v9319 = vadd.f32 %v3309, %v9318
    %v9320 = vpop.f32.mrb[0].mxu0
    %v9321 = vpop.f32.mrb[0].mxu0
    %9322 = vdwg.mxu0
    %9323 = vmatprep.subr.bf16.mxu0 %v6681
    %9324 = vmatpush1.bf16.msra.mxu0 %v6680
    %9325 = vmatprep.subr.bf16.mxu0 %v6697
    %9326 = vmatpush1.bf16.msra.mxu0 %v6696
    %9327 = vmatprep.subr.bf16.mxu0 %v6713
    %9328 = vmatpush1.bf16.msra.mxu0 %v6712
    %9329 = vmatprep.subr.bf16.mxu0 %v6729
    %9330 = vmatpush1.bf16.msra.mxu0 %v6728
    %9331 = vmatprep.subr.bf16.mxu0 %v6745
    %9332 = vmatpush1.bf16.msra.mxu0 %v6744
    %9333 = vmatprep.subr.bf16.mxu0 %v6761
    %9334 = vmatpush1.bf16.msra.mxu0 %v6760
    %9335 = vmatprep.subr.bf16.mxu0 %v6777
    %9336 = vmatpush1.bf16.msra.mxu0 %v6776
    %9337 = vmatprep.subr.bf16.mxu0 %v6793
    %9338 = vmatpush1.bf16.msra.mxu0 %v6792
    %9339 = vmatprep.subr.bf16.mxu0 %v6809
    %9340 = vmatpush1.bf16.msra.mxu0 %v6808
    %9341 = vmatprep.subr.bf16.mxu0 %v6825
    %9342 = vmatpush1.bf16.msra.mxu0 %v6824
    %9343 = vmatprep.subr.bf16.mxu0 %v6841
    %9344 = vmatpush1.bf16.msra.mxu0 %v6840
    %9345 = vmatprep.subr.bf16.mxu0 %v6857
    %9346 = vmatpush1.bf16.msra.mxu0 %v6856
    %9347 = vmatprep.subr.bf16.mxu0 %v6873
    %9348 = vmatpush1.bf16.msra.mxu0 %v6872
    %9349 = vmatprep.subr.bf16.mxu0 %v6889
    %9350 = vmatpush1.bf16.msra.mxu0 %v6888
    %9351 = vmatprep.subr.bf16.mxu0 %v6905
    %9352 = vmatpush1.bf16.msra.mxu0 %v6904
    %9353 = vmatprep.subr.bf16.mxu0 %v6921
    %9354 = vmatpush1.bf16.msra.mxu0 %v6920
    %9355 = vmatprep.mubr.bf16.mxu0 %v2229
    %9356 = vmatmul.mubr.bf16.gmra.mrb[0].mxu0 %v2228
    %v9357 = vpop.f32.mrb[0].mxu0
    %v9358 = vadd.f32 %v9317, %v9357
    %v9359 = vpop.f32.mrb[0].mxu0
    %v9360 = vadd.f32 %v9319, %v9359
    %v9361 = vpop.f32.mrb[0].mxu0
    %v9362 = vpop.f32.mrb[0].mxu0
    %9363 = vdwg.mxu0
    %9364 = vmatprep.subr.bf16.mxu0 %v6937
    %9365 = vmatpush1.bf16.msra.mxu0 %v6936
    %9366 = vmatprep.subr.bf16.mxu0 %v6953
    %9367 = vmatpush1.bf16.msra.mxu0 %v6952
    %9368 = vmatprep.subr.bf16.mxu0 %v6969
    %9369 = vmatpush1.bf16.msra.mxu0 %v6968
    %9370 = vmatprep.subr.bf16.mxu0 %v6985
    %9371 = vmatpush1.bf16.msra.mxu0 %v6984
    %9372 = vmatprep.subr.bf16.mxu0 %v7001
    %9373 = vmatpush1.bf16.msra.mxu0 %v7000
    %9374 = vmatprep.subr.bf16.mxu0 %v7017
    %9375 = vmatpush1.bf16.msra.mxu0 %v7016
    %9376 = vmatprep.subr.bf16.mxu0 %v7033
    %9377 = vmatpush1.bf16.msra.mxu0 %v7032
    %9378 = vmatprep.subr.bf16.mxu0 %v7049
    %9379 = vmatpush1.bf16.msra.mxu0 %v7048
    %9380 = vmatprep.subr.bf16.mxu0 %v7065
    %9381 = vmatpush1.bf16.msra.mxu0 %v7064
    %9382 = vmatprep.subr.bf16.mxu0 %v7081
    %9383 = vmatpush1.bf16.msra.mxu0 %v7080
    %9384 = vmatprep.subr.bf16.mxu0 %v7097
    %9385 = vmatpush1.bf16.msra.mxu0 %v7096
    %9386 = vmatprep.subr.bf16.mxu0 %v7113
    %9387 = vmatpush1.bf16.msra.mxu0 %v7112
    %9388 = vmatprep.subr.bf16.mxu0 %v7129
    %9389 = vmatpush1.bf16.msra.mxu0 %v7128
    %9390 = vmatprep.subr.bf16.mxu0 %v7145
    %9391 = vmatpush1.bf16.msra.mxu0 %v7144
    %9392 = vmatprep.subr.bf16.mxu0 %v7161
    %9393 = vmatpush1.bf16.msra.mxu0 %v7160
    %9394 = vmatprep.subr.bf16.mxu0 %v7177
    %9395 = vmatpush1.bf16.msra.mxu0 %v7176
    %9396 = vmatprep.mubr.bf16.mxu0 %v2231
    %9397 = vmatmul.mubr.bf16.gmra.mrb[0].mxu0 %v2230
    %v9398 = vpop.f32.mrb[0].mxu0
    %v9399 = vadd.f32 %v9358, %v9398
    %v9400 = vpop.f32.mrb[0].mxu0
    %v9401 = vadd.f32 %v9360, %v9400
    %v9402 = vpop.f32.mrb[0].mxu0
    %v9403 = vpop.f32.mrb[0].mxu0
    %9404 = vdwg.mxu0
    %9405 = vmatprep.subr.bf16.mxu0 %v7193
    %9406 = vmatpush1.bf16.msra.mxu0 %v7192
    %9407 = vmatprep.subr.bf16.mxu0 %v7209
    %9408 = vmatpush1.bf16.msra.mxu0 %v7208
    %9409 = vmatprep.subr.bf16.mxu0 %v7225
    %9410 = vmatpush1.bf16.msra.mxu0 %v7224
    %9411 = vmatprep.subr.bf16.mxu0 %v7241
    %9412 = vmatpush1.bf16.msra.mxu0 %v7240
    %9413 = vmatprep.subr.bf16.mxu0 %v7257
    %9414 = vmatpush1.bf16.msra.mxu0 %v7256
    %9415 = vmatprep.subr.bf16.mxu0 %v7273
    %9416 = vmatpush1.bf16.msra.mxu0 %v7272
    %9417 = vmatprep.subr.bf16.mxu0 %v7289
    %9418 = vmatpush1.bf16.msra.mxu0 %v7288
    %9419 = vmatprep.subr.bf16.mxu0 %v7305
    %9420 = vmatpush1.bf16.msra.mxu0 %v7304
    %9421 = vmatprep.subr.bf16.mxu0 %v7321
    %9422 = vmatpush1.bf16.msra.mxu0 %v7320
    %9423 = vmatprep.subr.bf16.mxu0 %v7337
    %9424 = vmatpush1.bf16.msra.mxu0 %v7336
    %9425 = vmatprep.subr.bf16.mxu0 %v7353
    %9426 = vmatpush1.bf16.msra.mxu0 %v7352
    %9427 = vmatprep.subr.bf16.mxu0 %v7369
    %9428 = vmatpush1.bf16.msra.mxu0 %v7368
    %9429 = vmatprep.subr.bf16.mxu0 %v7385
    %9430 = vmatpush1.bf16.msra.mxu0 %v7384
    %9431 = vmatprep.subr.bf16.mxu0 %v7401
    %9432 = vmatpush1.bf16.msra.mxu0 %v7400
    %9433 = vmatprep.subr.bf16.mxu0 %v7417
    %9434 = vmatpush1.bf16.msra.mxu0 %v7416
    %9435 = vmatprep.subr.bf16.mxu0 %v7433
    %9436 = vmatpush1.bf16.msra.mxu0 %v7432
    %9437 = vmatprep.mubr.bf16.mxu0 %v2233
    %9438 = vmatmul.mubr.bf16.gmra.mrb[0].mxu0 %v2232
    %v9439 = vpop.f32.mrb[0].mxu0
    %v9440 = vadd.f32 %v9399, %v9439
    %v9441 = vpop.f32.mrb[0].mxu0
    %v9442 = vadd.f32 %v9401, %v9441
    %v9443 = vpop.f32.mrb[0].mxu0
    %v9444 = vpop.f32.mrb[0].mxu0
    %9445 = vdwg.mxu0
    %9446 = vmatprep.subr.bf16.mxu0 %v6427
    %9447 = vmatpush1.bf16.msra.mxu0 %v6426
    %9448 = vmatprep.subr.bf16.mxu0 %v6443
    %9449 = vmatpush1.bf16.msra.mxu0 %v6442
    %9450 = vmatprep.subr.bf16.mxu0 %v6459
    %9451 = vmatpush1.bf16.msra.mxu0 %v6458
    %9452 = vmatprep.subr.bf16.mxu0 %v6475
    %9453 = vmatpush1.bf16.msra.mxu0 %v6474
    %9454 = vmatprep.subr.bf16.mxu0 %v6491
    %9455 = vmatpush1.bf16.msra.mxu0 %v6490
    %9456 = vmatprep.subr.bf16.mxu0 %v6507
    %9457 = vmatpush1.bf16.msra.mxu0 %v6506
    %9458 = vmatprep.subr.bf16.mxu0 %v6523
    %9459 = vmatpush1.bf16.msra.mxu0 %v6522
    %9460 = vmatprep.subr.bf16.mxu0 %v6539
    %9461 = vmatpush1.bf16.msra.mxu0 %v6538
    %9462 = vmatprep.subr.bf16.mxu0 %v6555
    %9463 = vmatpush1.bf16.msra.mxu0 %v6554
    %9464 = vmatprep.subr.bf16.mxu0 %v6571
    %9465 = vmatpush1.bf16.msra.mxu0 %v6570
    %9466 = vmatprep.subr.bf16.mxu0 %v6587
    %9467 = vmatpush1.bf16.msra.mxu0 %v6586
    %9468 = vmatprep.subr.bf16.mxu0 %v6603
    %9469 = vmatpush1.bf16.msra.mxu0 %v6602
    %9470 = vmatprep.subr.bf16.mxu0 %v6619
    %9471 = vmatpush1.bf16.msra.mxu0 %v6618
    %9472 = vmatprep.subr.bf16.mxu0 %v6635
    %9473 = vmatpush1.bf16.msra.mxu0 %v6634
    %9474 = vmatprep.subr.bf16.mxu0 %v6651
    %9475 = vmatpush1.bf16.msra.mxu0 %v6650
    %9476 = vmatprep.subr.bf16.mxu0 %v6667
    %9477 = vmatpush1.bf16.msra.mxu0 %v6666
    %9478 = vmatprep.mubr.bf16.mxu0 %v2227
    %9479 = vmatmul.mubr.bf16.gmra.mrb[0].mxu0 %v2226
    %v9480 = vpop.f32.mrb[0].mxu0
    %v9481 = vadd.f32 %v3313, %v9480
    %v9482 = vpop.f32.mrb[0].mxu0
    %v9483 = vadd.f32 %v3317, %v9482
    %v9484 = vpop.f32.mrb[0].mxu0
    %v9485 = vpop.f32.mrb[0].mxu0
    %9486 = vdwg.mxu0
    %9487 = vmatprep.subr.bf16.mxu0 %v6683
    %9488 = vmatpush1.bf16.msra.mxu0 %v6682
    %9489 = vmatprep.subr.bf16.mxu0 %v6699
    %9490 = vmatpush1.bf16.msra.mxu0 %v6698
    %9491 = vmatprep.subr.bf16.mxu0 %v6715
    %9492 = vmatpush1.bf16.msra.mxu0 %v6714
    %9493 = vmatprep.subr.bf16.mxu0 %v6731
    %9494 = vmatpush1.bf16.msra.mxu0 %v6730
    %9495 = vmatprep.subr.bf16.mxu0 %v6747
    %9496 = vmatpush1.bf16.msra.mxu0 %v6746
    %9497 = vmatprep.subr.bf16.mxu0 %v6763
    %9498 = vmatpush1.bf16.msra.mxu0 %v6762
    %9499 = vmatprep.subr.bf16.mxu0 %v6779
    %9500 = vmatpush1.bf16.msra.mxu0 %v6778
    %9501 = vmatprep.subr.bf16.mxu0 %v6795
    %9502 = vmatpush1.bf16.msra.mxu0 %v6794
    %9503 = vmatprep.subr.bf16.mxu0 %v6811
    %9504 = vmatpush1.bf16.msra.mxu0 %v6810
    %9505 = vmatprep.subr.bf16.mxu0 %v6827
    %9506 = vmatpush1.bf16.msra.mxu0 %v6826
    %9507 = vmatprep.subr.bf16.mxu0 %v6843
    %9508 = vmatpush1.bf16.msra.mxu0 %v6842
    %9509 = vmatprep.subr.bf16.mxu0 %v6859
    %9510 = vmatpush1.bf16.msra.mxu0 %v6858
    %9511 = vmatprep.subr.bf16.mxu0 %v6875
    %9512 = vmatpush1.bf16.msra.mxu0 %v6874
    %9513 = vmatprep.subr.bf16.mxu0 %v6891
    %9514 = vmatpush1.bf16.msra.mxu0 %v6890
    %9515 = vmatprep.subr.bf16.mxu0 %v6907
    %9516 = vmatpush1.bf16.msra.mxu0 %v6906
    %9517 = vmatprep.subr.bf16.mxu0 %v6923
    %9518 = vmatpush1.bf16.msra.mxu0 %v6922
    %9519 = vmatprep.mubr.bf16.mxu0 %v2229
    %9520 = vmatmul.mubr.bf16.gmra.mrb[0].mxu0 %v2228
    %v9521 = vpop.f32.mrb[0].mxu0
    %v9522 = vadd.f32 %v9481, %v9521
    %v9523 = vpop.f32.mrb[0].mxu0
    %v9524 = vadd.f32 %v9483, %v9523
    %v9525 = vpop.f32.mrb[0].mxu0
    %v9526 = vpop.f32.mrb[0].mxu0
    %9527 = vdwg.mxu0
    %9528 = vmatprep.subr.bf16.mxu0 %v6939
    %9529 = vmatpush1.bf16.msra.mxu0 %v6938
    %9530 = vmatprep.subr.bf16.mxu0 %v6955
    %9531 = vmatpush1.bf16.msra.mxu0 %v6954
    %9532 = vmatprep.subr.bf16.mxu0 %v6971
    %9533 = vmatpush1.bf16.msra.mxu0 %v6970
    %9534 = vmatprep.subr.bf16.mxu0 %v6987
    %9535 = vmatpush1.bf16.msra.mxu0 %v6986
    %9536 = vmatprep.subr.bf16.mxu0 %v7003
    %9537 = vmatpush1.bf16.msra.mxu0 %v7002
    %9538 = vmatprep.subr.bf16.mxu0 %v7019
    %9539 = vmatpush1.bf16.msra.mxu0 %v7018
    %9540 = vmatprep.subr.bf16.mxu0 %v7035
    %9541 = vmatpush1.bf16.msra.mxu0 %v7034
    %9542 = vmatprep.subr.bf16.mxu0 %v7051
    %9543 = vmatpush1.bf16.msra.mxu0 %v7050
    %9544 = vmatprep.subr.bf16.mxu0 %v7067
    %9545 = vmatpush1.bf16.msra.mxu0 %v7066
    %9546 = vmatprep.subr.bf16.mxu0 %v7083
    %9547 = vmatpush1.bf16.msra.mxu0 %v7082
    %9548 = vmatprep.subr.bf16.mxu0 %v7099
    %9549 = vmatpush1.bf16.msra.mxu0 %v7098
    %9550 = vmatprep.subr.bf16.mxu0 %v7115
    %9551 = vmatpush1.bf16.msra.mxu0 %v7114
    %9552 = vmatprep.subr.bf16.mxu0 %v7131
    %9553 = vmatpush1.bf16.msra.mxu0 %v7130
    %9554 = vmatprep.subr.bf16.mxu0 %v7147
    %9555 = vmatpush1.bf16.msra.mxu0 %v7146
    %9556 = vmatprep.subr.bf16.mxu0 %v7163
    %9557 = vmatpush1.bf16.msra.mxu0 %v7162
    %9558 = vmatprep.subr.bf16.mxu0 %v7179
    %9559 = vmatpush1.bf16.msra.mxu0 %v7178
    %9560 = vmatprep.mubr.bf16.mxu0 %v2231
    %9561 = vmatmul.mubr.bf16.gmra.mrb[0].mxu0 %v2230
    %v9562 = vpop.f32.mrb[0].mxu0
    %v9563 = vadd.f32 %v9522, %v9562
    %v9564 = vpop.f32.mrb[0].mxu0
    %v9565 = vadd.f32 %v9524, %v9564
    %v9566 = vpop.f32.mrb[0].mxu0
    %v9567 = vpop.f32.mrb[0].mxu0
    %9568 = vdwg.mxu0
    %9569 = vmatprep.subr.bf16.mxu0 %v7195
    %9570 = vmatpush1.bf16.msra.mxu0 %v7194
    %9571 = vmatprep.subr.bf16.mxu0 %v7211
    %9572 = vmatpush1.bf16.msra.mxu0 %v7210
    %9573 = vmatprep.subr.bf16.mxu0 %v7227
    %9574 = vmatpush1.bf16.msra.mxu0 %v7226
    %9575 = vmatprep.subr.bf16.mxu0 %v7243
    %9576 = vmatpush1.bf16.msra.mxu0 %v7242
    %9577 = vmatprep.subr.bf16.mxu0 %v7259
    %9578 = vmatpush1.bf16.msra.mxu0 %v7258
    %9579 = vmatprep.subr.bf16.mxu0 %v7275
    %9580 = vmatpush1.bf16.msra.mxu0 %v7274
    %9581 = vmatprep.subr.bf16.mxu0 %v7291
    %9582 = vmatpush1.bf16.msra.mxu0 %v7290
    %9583 = vmatprep.subr.bf16.mxu0 %v7307
    %9584 = vmatpush1.bf16.msra.mxu0 %v7306
    %9585 = vmatprep.subr.bf16.mxu0 %v7323
    %9586 = vmatpush1.bf16.msra.mxu0 %v7322
    %9587 = vmatprep.subr.bf16.mxu0 %v7339
    %9588 = vmatpush1.bf16.msra.mxu0 %v7338
    %9589 = vmatprep.subr.bf16.mxu0 %v7355
    %9590 = vmatpush1.bf16.msra.mxu0 %v7354
    %9591 = vmatprep.subr.bf16.mxu0 %v7371
    %9592 = vmatpush1.bf16.msra.mxu0 %v7370
    %9593 = vmatprep.subr.bf16.mxu0 %v7387
    %9594 = vmatpush1.bf16.msra.mxu0 %v7386
    %9595 = vmatprep.subr.bf16.mxu0 %v7403
    %9596 = vmatpush1.bf16.msra.mxu0 %v7402
    %9597 = vmatprep.subr.bf16.mxu0 %v7419
    %9598 = vmatpush1.bf16.msra.mxu0 %v7418
    %9599 = vmatprep.subr.bf16.mxu0 %v7435
    %9600 = vmatpush1.bf16.msra.mxu0 %v7434
    %9601 = vmatprep.mubr.bf16.mxu0 %v2233
    %9602 = vmatmul.mubr.bf16.gmra.mrb[0].mxu0 %v2232
    %v9603 = vpop.f32.mrb[0].mxu0
    %v9604 = vadd.f32 %v9563, %v9603
    %v9605 = vpop.f32.mrb[0].mxu0
    %v9606 = vadd.f32 %v9565, %v9605
    %v9607 = vpop.f32.mrb[0].mxu0
    %v9608 = vpop.f32.mrb[0].mxu0
    %9609 = vdwg.mxu0
    %9610 = vmatprep.subr.bf16.mxu0 %v6429
    %9611 = vmatpush1.bf16.msra.mxu0 %v6428
    %9612 = vmatprep.subr.bf16.mxu0 %v6445
    %9613 = vmatpush1.bf16.msra.mxu0 %v6444
    %9614 = vmatprep.subr.bf16.mxu0 %v6461
    %9615 = vmatpush1.bf16.msra.mxu0 %v6460
    %9616 = vmatprep.subr.bf16.mxu0 %v6477
    %9617 = vmatpush1.bf16.msra.mxu0 %v6476
    %9618 = vmatprep.subr.bf16.mxu0 %v6493
    %9619 = vmatpush1.bf16.msra.mxu0 %v6492
    %9620 = vmatprep.subr.bf16.mxu0 %v6509
    %9621 = vmatpush1.bf16.msra.mxu0 %v6508
    %9622 = vmatprep.subr.bf16.mxu0 %v6525
    %9623 = vmatpush1.bf16.msra.mxu0 %v6524
    %9624 = vmatprep.subr.bf16.mxu0 %v6541
    %9625 = vmatpush1.bf16.msra.mxu0 %v6540
    %9626 = vmatprep.subr.bf16.mxu0 %v6557
    %9627 = vmatpush1.bf16.msra.mxu0 %v6556
    %9628 = vmatprep.subr.bf16.mxu0 %v6573
    %9629 = vmatpush1.bf16.msra.mxu0 %v6572
    %9630 = vmatprep.subr.bf16.mxu0 %v6589
    %9631 = vmatpush1.bf16.msra.mxu0 %v6588
    %9632 = vmatprep.subr.bf16.mxu0 %v6605
    %9633 = vmatpush1.bf16.msra.mxu0 %v6604
    %9634 = vmatprep.subr.bf16.mxu0 %v6621
    %9635 = vmatpush1.bf16.msra.mxu0 %v6620
    %9636 = vmatprep.subr.bf16.mxu0 %v6637
    %9637 = vmatpush1.bf16.msra.mxu0 %v6636
    %9638 = vmatprep.subr.bf16.mxu0 %v6653
    %9639 = vmatpush1.bf16.msra.mxu0 %v6652
    %9640 = vmatprep.subr.bf16.mxu0 %v6669
    %9641 = vmatpush1.bf16.msra.mxu0 %v6668
    %9642 = vmatprep.mubr.bf16.mxu0 %v2227
    %9643 = vmatmul.mubr.bf16.gmra.mrb[0].mxu0 %v2226
    %v9644 = vpop.f32.mrb[0].mxu0
    %v9645 = vadd.f32 %v3321, %v9644
    %v9646 = vpop.f32.mrb[0].mxu0
    %v9647 = vadd.f32 %v3325, %v9646
    %v9648 = vpop.f32.mrb[0].mxu0
    %v9649 = vpop.f32.mrb[0].mxu0
    %9650 = vdwg.mxu0
    %9651 = vmatprep.subr.bf16.mxu0 %v6685
    %9652 = vmatpush1.bf16.msra.mxu0 %v6684
    %9653 = vmatprep.subr.bf16.mxu0 %v6701
    %9654 = vmatpush1.bf16.msra.mxu0 %v6700
    %9655 = vmatprep.subr.bf16.mxu0 %v6717
    %9656 = vmatpush1.bf16.msra.mxu0 %v6716
    %9657 = vmatprep.subr.bf16.mxu0 %v6733
    %9658 = vmatpush1.bf16.msra.mxu0 %v6732
    %9659 = vmatprep.subr.bf16.mxu0 %v6749
    %9660 = vmatpush1.bf16.msra.mxu0 %v6748
    %9661 = vmatprep.subr.bf16.mxu0 %v6765
    %9662 = vmatpush1.bf16.msra.mxu0 %v6764
    %9663 = vmatprep.subr.bf16.mxu0 %v6781
    %9664 = vmatpush1.bf16.msra.mxu0 %v6780
    %9665 = vmatprep.subr.bf16.mxu0 %v6797
    %9666 = vmatpush1.bf16.msra.mxu0 %v6796
    %9667 = vmatprep.subr.bf16.mxu0 %v6813
    %9668 = vmatpush1.bf16.msra.mxu0 %v6812
    %9669 = vmatprep.subr.bf16.mxu0 %v6829
    %9670 = vmatpush1.bf16.msra.mxu0 %v6828
    %9671 = vmatprep.subr.bf16.mxu0 %v6845
    %9672 = vmatpush1.bf16.msra.mxu0 %v6844
    %9673 = vmatprep.subr.bf16.mxu0 %v6861
    %9674 = vmatpush1.bf16.msra.mxu0 %v6860
    %9675 = vmatprep.subr.bf16.mxu0 %v6877
    %9676 = vmatpush1.bf16.msra.mxu0 %v6876
    %9677 = vmatprep.subr.bf16.mxu0 %v6893
    %9678 = vmatpush1.bf16.msra.mxu0 %v6892
    %9679 = vmatprep.subr.bf16.mxu0 %v6909
    %9680 = vmatpush1.bf16.msra.mxu0 %v6908
    %9681 = vmatprep.subr.bf16.mxu0 %v6925
    %9682 = vmatpush1.bf16.msra.mxu0 %v6924
    %9683 = vmatprep.mubr.bf16.mxu0 %v2229
    %9684 = vmatmul.mubr.bf16.gmra.mrb[0].mxu0 %v2228
    %v9685 = vpop.f32.mrb[0].mxu0
    %v9686 = vadd.f32 %v9645, %v9685
    %v9687 = vpop.f32.mrb[0].mxu0
    %v9688 = vadd.f32 %v9647, %v9687
    %v9689 = vpop.f32.mrb[0].mxu0
    %v9690 = vpop.f32.mrb[0].mxu0
    %9691 = vdwg.mxu0
    %9692 = vmatprep.subr.bf16.mxu0 %v6941
    %9693 = vmatpush1.bf16.msra.mxu0 %v6940
    %9694 = vmatprep.subr.bf16.mxu0 %v6957
    %9695 = vmatpush1.bf16.msra.mxu0 %v6956
    %9696 = vmatprep.subr.bf16.mxu0 %v6973
    %9697 = vmatpush1.bf16.msra.mxu0 %v6972
    %9698 = vmatprep.subr.bf16.mxu0 %v6989
    %9699 = vmatpush1.bf16.msra.mxu0 %v6988
    %9700 = vmatprep.subr.bf16.mxu0 %v7005
    %9701 = vmatpush1.bf16.msra.mxu0 %v7004
    %9702 = vmatprep.subr.bf16.mxu0 %v7021
    %9703 = vmatpush1.bf16.msra.mxu0 %v7020
    %9704 = vmatprep.subr.bf16.mxu0 %v7037
    %9705 = vmatpush1.bf16.msra.mxu0 %v7036
    %9706 = vmatprep.subr.bf16.mxu0 %v7053
    %9707 = vmatpush1.bf16.msra.mxu0 %v7052
    %9708 = vmatprep.subr.bf16.mxu0 %v7069
    %9709 = vmatpush1.bf16.msra.mxu0 %v7068
    %9710 = vmatprep.subr.bf16.mxu0 %v7085
    %9711 = vmatpush1.bf16.msra.mxu0 %v7084
    %9712 = vmatprep.subr.bf16.mxu0 %v7101
    %9713 = vmatpush1.bf16.msra.mxu0 %v7100
    %9714 = vmatprep.subr.bf16.mxu0 %v7117
    %9715 = vmatpush1.bf16.msra.mxu0 %v7116
    %9716 = vmatprep.subr.bf16.mxu0 %v7133
    %9717 = vmatpush1.bf16.msra.mxu0 %v7132
    %9718 = vmatprep.subr.bf16.mxu0 %v7149
    %9719 = vmatpush1.bf16.msra.mxu0 %v7148
    %9720 = vmatprep.subr.bf16.mxu0 %v7165
    %9721 = vmatpush1.bf16.msra.mxu0 %v7164
    %9722 = vmatprep.subr.bf16.mxu0 %v7181
    %9723 = vmatpush1.bf16.msra.mxu0 %v7180
    %9724 = vmatprep.mubr.bf16.mxu0 %v2231
    %9725 = vmatmul.mubr.bf16.gmra.mrb[0].mxu0 %v2230
    %v9726 = vpop.f32.mrb[0].mxu0
    %v9727 = vadd.f32 %v9686, %v9726
    %v9728 = vpop.f32.mrb[0].mxu0
    %v9729 = vadd.f32 %v9688, %v9728
    %v9730 = vpop.f32.mrb[0].mxu0
    %v9731 = vpop.f32.mrb[0].mxu0
    %9732 = vdwg.mxu0
    %9733 = vmatprep.subr.bf16.mxu0 %v7197
    %9734 = vmatpush1.bf16.msra.mxu0 %v7196
    %9735 = vmatprep.subr.bf16.mxu0 %v7213
    %9736 = vmatpush1.bf16.msra.mxu0 %v7212
    %9737 = vmatprep.subr.bf16.mxu0 %v7229
    %9738 = vmatpush1.bf16.msra.mxu0 %v7228
    %9739 = vmatprep.subr.bf16.mxu0 %v7245
    %9740 = vmatpush1.bf16.msra.mxu0 %v7244
    %9741 = vmatprep.subr.bf16.mxu0 %v7261
    %9742 = vmatpush1.bf16.msra.mxu0 %v7260
    %9743 = vmatprep.subr.bf16.mxu0 %v7277
    %9744 = vmatpush1.bf16.msra.mxu0 %v7276
    %9745 = vmatprep.subr.bf16.mxu0 %v7293
    %9746 = vmatpush1.bf16.msra.mxu0 %v7292
    %9747 = vmatprep.subr.bf16.mxu0 %v7309
    %9748 = vmatpush1.bf16.msra.mxu0 %v7308
    %9749 = vmatprep.subr.bf16.mxu0 %v7325
    %9750 = vmatpush1.bf16.msra.mxu0 %v7324
    %9751 = vmatprep.subr.bf16.mxu0 %v7341
    %9752 = vmatpush1.bf16.msra.mxu0 %v7340
    %9753 = vmatprep.subr.bf16.mxu0 %v7357
    %9754 = vmatpush1.bf16.msra.mxu0 %v7356
    %9755 = vmatprep.subr.bf16.mxu0 %v7373
    %9756 = vmatpush1.bf16.msra.mxu0 %v7372
    %9757 = vmatprep.subr.bf16.mxu0 %v7389
    %9758 = vmatpush1.bf16.msra.mxu0 %v7388
    %9759 = vmatprep.subr.bf16.mxu0 %v7405
    %9760 = vmatpush1.bf16.msra.mxu0 %v7404
    %9761 = vmatprep.subr.bf16.mxu0 %v7421
    %9762 = vmatpush1.bf16.msra.mxu0 %v7420
    %9763 = vmatprep.subr.bf16.mxu0 %v7437
    %9764 = vmatpush1.bf16.msra.mxu0 %v7436
    %9765 = vmatprep.mubr.bf16.mxu0 %v2233
    %9766 = vmatmul.mubr.bf16.gmra.mrb[0].mxu0 %v2232
    %v9767 = vpop.f32.mrb[0].mxu0
    %v9768 = vadd.f32 %v9727, %v9767
    %v9769 = vpop.f32.mrb[0].mxu0
    %v9770 = vadd.f32 %v9729, %v9769
    %v9771 = vpop.f32.mrb[0].mxu0
    %v9772 = vpop.f32.mrb[0].mxu0
    %9773 = vdwg.mxu0
    %v9774 = vmul.f32 %v8620, 0.2
    %v9775 = vmul.f32 %v8622, 0.2
    %v9776 = vmul.f32 %v8784, 0.2
    %v9777 = vmul.f32 %v8786, 0.2
    %v9778 = vmul.f32 %v8948, 0.2
    %v9779 = vmul.f32 %v8950, 0.2
    %v9780 = vmul.f32 %v9112, 0.2
    %v9781 = vmul.f32 %v9114, 0.2
    %v9782 = vmul.f32 %v9276, 0.2
    %v9783 = vmul.f32 %v9278, 0.2
    %v9784 = vmul.f32 %v9440, 0.2
    %v9785 = vmul.f32 %v9442, 0.2
    %v9786 = vmul.f32 %v9604, 0.2
    %v9787 = vmul.f32 %v9606, 0.2
    %v9788 = vmul.f32 %v9768, 0.2
    %v9789 = vmul.f32 %v9770, 0.2
    %v9790 = vmax.f32 %v8620, %v9774
    %v9791 = vmax.f32 %v8622, %v9775
    %v9792 = vmax.f32 %v8784, %v9776
    %v9793 = vmax.f32 %v8786, %v9777
    %v9794 = vmax.f32 %v8948, %v9778
    %v9795 = vmax.f32 %v8950, %v9779
    %v9796 = vmax.f32 %v9112, %v9780
    %v9797 = vmax.f32 %v9114, %v9781
    %v9798 = vmax.f32 %v9276, %v9782
    %v9799 = vmax.f32 %v9278, %v9783
    %v9800 = vmax.f32 %v9440, %v9784
    %v9801 = vmax.f32 %v9442, %v9785
    %v9802 = vmax.f32 %v9604, %v9786
    %v9803 = vmax.f32 %v9606, %v9787
    %v9804 = vmax.f32 %v9768, %v9788
    %v9805 = vmax.f32 %v9770, %v9789
    %v9806 = vld [vmem:[#allocation14] sm:$0xff]
    %v9807 = vld [vmem:[#allocation14 + $0x8] sm:$0xff]
    %v9810 = vlaneseq
    %v9811 = vshrl.u32 %v9810, 7
    %v9812 = vsub.s32 0, %v9811
    %v9813 = vrot.slane %v9806, %v9812
    %v9814 = vlaneseq
    %v9815 = vshrl.u32 %v9814, 7
    %v9816 = vsub.s32 1, %v9815
    %v9817 = vrot.slane %v9806, %v9816
    %v9818 = vlaneseq
    %v9819 = vshrl.u32 %v9818, 7
    %v9820 = vsub.s32 2, %v9819
    %v9821 = vrot.slane %v9806, %v9820
    %v9822 = vlaneseq
    %v9823 = vshrl.u32 %v9822, 7
    %v9824 = vsub.s32 3, %v9823
    %v9825 = vrot.slane %v9806, %v9824
    %v9826 = vlaneseq
    %v9827 = vshrl.u32 %v9826, 7
    %v9828 = vsub.s32 4, %v9827
    %v9829 = vrot.slane %v9806, %v9828
    %v9830 = vlaneseq
    %v9831 = vshrl.u32 %v9830, 7
    %v9832 = vsub.s32 5, %v9831
    %v9833 = vrot.slane %v9806, %v9832
    %v9834 = vlaneseq
    %v9835 = vshrl.u32 %v9834, 7
    %v9836 = vsub.s32 6, %v9835
    %v9837 = vrot.slane %v9806, %v9836
    %v9838 = vlaneseq
    %v9839 = vshrl.u32 %v9838, 7
    %v9840 = vsub.s32 7, %v9839
    %v9841 = vrot.slane %v9806, %v9840
    %v9842 = vlaneseq
    %v9843 = vshrl.u32 %v9842, 7
    %v9844 = vsub.s32 0, %v9843
    %v9845 = vrot.slane %v9807, %v9844
    %v9846 = vlaneseq
    %v9847 = vshrl.u32 %v9846, 7
    %v9848 = vsub.s32 1, %v9847
    %v9849 = vrot.slane %v9807, %v9848
    %v9850 = vlaneseq
    %v9851 = vshrl.u32 %v9850, 7
    %v9852 = vsub.s32 2, %v9851
    %v9853 = vrot.slane %v9807, %v9852
    %v9854 = vlaneseq
    %v9855 = vshrl.u32 %v9854, 7
    %v9856 = vsub.s32 3, %v9855
    %v9857 = vrot.slane %v9807, %v9856
    %v9858 = vlaneseq
    %v9859 = vshrl.u32 %v9858, 7
    %v9860 = vsub.s32 4, %v9859
    %v9861 = vrot.slane %v9807, %v9860
    %v9862 = vlaneseq
    %v9863 = vshrl.u32 %v9862, 7
    %v9864 = vsub.s32 5, %v9863
    %v9865 = vrot.slane %v9807, %v9864
    %v9866 = vlaneseq
    %v9867 = vshrl.u32 %v9866, 7
    %v9868 = vsub.s32 6, %v9867
    %v9869 = vrot.slane %v9807, %v9868
    %v9870 = vlaneseq
    %v9871 = vshrl.u32 %v9870, 7
    %v9872 = vsub.s32 7, %v9871
    %v9873 = vrot.slane %v9807, %v9872
    %v9890 = vmul.f32 %v9790, %v9813
    %v9891 = vmul.f32 %v9791, %v9817
    %v9892 = vmul.f32 %v9792, %v9821
    %v9893 = vmul.f32 %v9793, %v9825
    %v9894 = vmul.f32 %v9794, %v9829
    %v9895 = vmul.f32 %v9795, %v9833
    %v9896 = vmul.f32 %v9796, %v9837
    %v9897 = vmul.f32 %v9797, %v9841
    %v9898 = vmul.f32 %v9798, %v9845
    %v9899 = vmul.f32 %v9799, %v9849
    %v9900 = vmul.f32 %v9800, %v9853
    %v9901 = vmul.f32 %v9801, %v9857
    %v9902 = vmul.f32 %v9802, %v9861
    %v9903 = vmul.f32 %v9803, %v9865
    %v9904 = vmul.f32 %v9804, %v9869
    %v9905 = vmul.f32 %v9805, %v9873
    %v9906 = vadd.f32 %v9890, %v9891
    %v9907 = vadd.f32 %v9906, %v9892
    %v9908 = vadd.f32 %v9907, %v9893
    %v9909 = vadd.f32 %v9908, %v9894
    %v9910 = vadd.f32 %v9909, %v9895
    %v9911 = vadd.f32 %v9910, %v9896
    %v9912 = vadd.f32 %v9911, %v9897
    %v9913 = vadd.f32 %v9912, %v9898
    %v9914 = vadd.f32 %v9913, %v9899
    %v9915 = vadd.f32 %v9914, %v9900
    %v9916 = vadd.f32 %v9915, %v9901
    %v9917 = vadd.f32 %v9916, %v9902
    %v9918 = vadd.f32 %v9917, %v9903
    %v9919 = vadd.f32 %v9918, %v9904
    %v9920 = vadd.f32 %v9919, %v9905
    %9921 = vadd.xlane.f32.xlu0 %v9920
    %v9922 = vpop.xlane.xlu0 %9921
    %v9923 = vld [vmem:[#allocation2] sm:$0x1]
    %v9925 = vlaneseq
    %v9926 = vshrl.u32 %v9925, 7
    %v9927 = vsub.s32 0, %v9926
    %v9928 = vrot.slane %v9923, %v9927
    %v9930 = vadd.f32 %v9922, %v9928
    %v9931 = vand.u32 2147483647, %v9930
    %v9932 = vsub.f32 0.0, %v9931
    %v9933 = vmul.f32 %v9932, 1.442695
    %v9934 = vpow.pop %v9933
    %vm9935 = vcmp.ge.f32.partialorder %v9930, 0.0
    %v9936 = vadd.f32 %v9934, 1.0
    %v9937 = vrcp.pop %v9936
    %v9938 = vmul.f32 1.0, %v9937
    %v9939 = vmul.f32 %v9934, %v9937
    %v9940 = vsel %vm9935, %v9938, %v9939
    %vm9941 = vcmask 7168
    %9942 = vst.msk [vmem:[%s9] sm:$0xff] %vm9941, %v9940
    // Predicated region
    $region70: #{tpu_custom_call.1} parent=1 // pred_check
      _
    $region71: #{tpu_custom_call.1} parent=1 // pred_check_branch
      %9944 = sbr.rel (0) target = $region73
    $region72: #{tpu_custom_call.1} parent=1 // pred_region
      _
    $region73: #{tpu_custom_call.1} parent=1 // pred_fallthru
      _
    // Predicated region
    $region74: #{tpu_custom_call.1} parent=1 // pred_check
      _
    $region75: #{tpu_custom_call.1} parent=1 // pred_check_branch
      %9946 = sbr.rel (0) target = $region77
    $region76: #{tpu_custom_call.1} parent=1 // pred_region
      _
    $region77: #{tpu_custom_call.1} parent=1 // pred_fallthru
      _
    %9947 = vsyncpa [#allocation4], 1
    %9948 = vsyncpa [#allocation6], 1
    %9949 = vsyncpa [#allocation9], 1
    %9950 = vsyncpa [#allocation12], 1
    %9951 = vsyncpa [#allocation15], 1

</llo_original>
